<compile_context>
chip_gen: v7x
topology: tpu7x:2x2x1
jax: 0.10.0
libtpu: 0.0.40
codegen_flags: <defaults>
</compile_context>

<pallas_src>
import functools
import math

import jax
import jax.numpy as jnp
from jax.experimental import pallas as pl
from jax.experimental.pallas import tpu as pltpu

# ---------------- configuration (small but faithful BSRoformer instance) ----------------
DIM = 32
DEPTH = 1                    # number of (time_transformer, freq_transformer) pairs
TIME_DEPTH = 1
FREQ_DEPTH = 1
HEADS = 4
DIM_HEAD = 8
FF_MULT = 4
MLP_EXPANSION = 4            # mask-estimator hidden = DIM * 4
NUM_STEMS = 1
STEREO = False               # mono -> audio_channels = 1
N_FFT = 32
HOP = 8
WIN_LENGTH = 32
NUM_FREQS = N_FFT // 2 + 1   # 17 stft freq bins
FREQS_PER_BANDS = (2, 2, 2, 2, 2, 2, 2, 3)   # sums to 17
assert sum(FREQS_PER_BANDS) == NUM_FREQS and len(FREQS_PER_BANDS) > 1
AUDIO_CHANNELS = 2 if STEREO else 1
DIMS_IN = tuple(2 * f * AUDIO_CHANNELS for f in FREQS_PER_BANDS)   # (4,...,4,6)
NUM_BANDS = len(DIMS_IN)
KBAND = max(DIMS_IN)          # padded per-band input width for the banded band-split kernel
DOUT_MAX = max(DIMS_IN)       # padded per-band mask width (post-GLU)
HID = DIM * MLP_EXPANSION     # 128
QKV_COLS = 3 * HEADS * DIM_HEAD            # 96
ATT_PROJ_COLS = 128                        # qkv(96) + gates(4) zero-padded to lane-dense 128
EPS = 1e-12

# bf16 matmul operands / f32 accumulation (v6e/v7x MXU native; set to jnp.float32 for exact
# f32 parity with the PyTorch reference).  Elementwise & softmax math stays f32 (v5e-safe).
MM_DTYPE = jnp.bfloat16

# num_residual_streams = 1 -> hyper-connections disabled (plain pre-norm residuals)
# TODO(synk): learned value-residual mix (add_value_residual for layer_index > 0) is
#             not exercised with DEPTH=1 (is_first layer => to_value_residual_mix=None).


def _compiler(*sem):
    return pltpu.CompilerParams(dimension_semantics=sem,
                                vmem_limit_bytes=32 * 1024 * 1024)


def _row_tile(m, cap=256):
    """Largest multiple-of-8 divisor of m that is <= cap (else m itself)."""
    if m <= cap:
        return m
    best = None
    for t in range(8, cap + 1, 8):
        if m % t == 0:
            best = t
    return best if best is not None else m


# ============================== Pallas kernels ==============================

def _norm_linear_kernel(x_ref, g_ref, w_ref, b_ref, o_ref, *, use_norm):
    # y = RMSNorm(x) @ W + b   (norm optional; gamma_eff already includes sqrt(dim))
    x = x_ref[...].astype(jnp.float32)
    if use_norm:
        nrm = jnp.sqrt(jnp.sum(x * x, axis=-1, keepdims=True))
        x = (x / jnp.maximum(nrm, EPS)) * g_ref[...]
    y = jnp.dot(x.astype(MM_DTYPE), w_ref[...].astype(MM_DTYPE),
                preferred_element_type=jnp.float32)
    y = y + b_ref[...]
    o_ref[...] = y.astype(o_ref.dtype)


def fused_linear(x, w, b, gamma=None):
    """(optionally RMS-normalized) x @ w + b, row-tiled over M with 'parallel' semantics."""
    shp = x.shape
    k = shp[-1]
    n = w.shape[1]
    x2 = x.reshape(-1, k)
    m = x2.shape[0]
    tm = _row_tile(m)
    use_norm = gamma is not None
    if gamma is None:
        gamma = jnp.ones((k,), jnp.float32)
    out = pl.pallas_call(
        functools.partial(_norm_linear_kernel, use_norm=use_norm),
        out_shape=jax.ShapeDtypeStruct((m, n), x.dtype),
        grid=(m // tm,),
        in_specs=[pl.BlockSpec((tm, k), lambda i: (i, 0)),
                  pl.BlockSpec((1, k), lambda i: (0, 0)),
                  pl.BlockSpec((k, n), lambda i: (0, 0)),
                  pl.BlockSpec((1, n), lambda i: (0, 0))],
        out_specs=pl.BlockSpec((tm, n), lambda i: (i, 0)),
        compiler_params=_compiler("parallel"),
    )(x2, gamma.reshape(1, k), w, b.reshape(1, n))
    return out.reshape(shp[:-1] + (n,))


def _attention_kernel(q_ref, k_ref, v_ref, g_ref, cos_ref, sin_ref, w_ref, o_ref, *, scale):
    # One grid step = one row of the axial transformer: all HEADS heads, fused
    # rotary + softmax + gating + head-merge + output projection.
    hh = DIM_HEAD // 2
    cos = cos_ref[...]                                   # (n, hh)
    sin = sin_ref[...]
    q = q_ref[0].astype(jnp.float32) * scale             # (H, n, hd)
    k = k_ref[0].astype(jnp.float32)
    v = v_ref[0].astype(MM_DTYPE)

    # Half-split rotary (q/k weight columns were pre-permuted to this rotate-half-free
    # layout, so attention scores match the reference's interleaved rotary exactly).
    q1, q2 = q[..., :hh], q[..., hh:]
    k1, k2 = k[..., :hh], k[..., hh:]
    qa = (q1 * cos - q2 * sin).astype(MM_DTYPE)
    qb = (q2 * cos + q1 * sin).astype(MM_DTYPE)
    ka = (k1 * cos - k2 * sin).astype(MM_DTYPE)
    kb = (k2 * cos + k1 * sin).astype(MM_DTYPE)

    # q_rot . k_rot decomposed over the two halves -> no lane concat needed in-kernel
    s = (jnp.einsum('hqd,hkd->hqk', qa, ka, preferred_element_type=jnp.float32)
         + jnp.einsum('hqd,hkd->hqk', qb, kb, preferred_element_type=jnp.float32))

    m = jnp.max(s, axis=-1, keepdims=True)
    p = jnp.exp(s - m)
    l = jnp.sum(p, axis=-1, keepdims=True)
    o = jnp.einsum('hqk,hkd->hqd', p.astype(MM_DTYPE), v,
                   preferred_element_type=jnp.float32)
    o = o * pl.reciprocal(l, approx=True)                # scale after PV matmul (EUP recip)

    gate = jax.nn.sigmoid(g_ref[0].astype(jnp.float32))  # (H, n)
    o = (o * gate[..., None]).astype(MM_DTYPE)

    # fused head-merge + output projection: sum_h o[h] @ w_out[h]
    n_q = o.shape[1]
    acc = jnp.zeros((n_q, DIM), jnp.float32)
    for h in range(HEADS):
        acc = acc + jnp.dot(o[h], w_ref[h].astype(MM_DTYPE),
                            preferred_element_type=jnp.float32)
    o_ref[0] = acc.astype(o_ref.dtype)


def attention_core(q, k, v, gates, cos, sin, w_out):
    # q,k,v: (B', H, n, hd); gates: (B', H, n); cos/sin: (n, hd//2); w_out: (H, hd, DIM)
    bp, h, n, hd = q.shape
    scale = DIM_HEAD ** -0.5
    return pl.pallas_call(
        functools.partial(_attention_kernel, scale=scale),
        out_shape=jax.ShapeDtypeStruct((bp, n, DIM), q.dtype),
        grid=(bp,),
        in_specs=[pl.BlockSpec((1, h, n, hd), lambda i: (i, 0, 0, 0)),
                  pl.BlockSpec((1, h, n, hd), lambda i: (i, 0, 0, 0)),
                  pl.BlockSpec((1, h, n, hd), lambda i: (i, 0, 0, 0)),
                  pl.BlockSpec((1, h, n), lambda i: (i, 0, 0)),
                  pl.BlockSpec((n, hd // 2), lambda i: (0, 0)),
                  pl.BlockSpec((n, hd // 2), lambda i: (0, 0)),
                  pl.BlockSpec((h, hd, DIM), lambda i: (0, 0, 0))],
        out_specs=pl.BlockSpec((1, n, DIM), lambda i: (i, 0, 0)),
        compiler_params=_compiler("parallel"),
    )(q, k, v, gates, cos, sin, w_out)


def _band_split_kernel(x_ref, g_ref, w_ref, b_ref, o_ref):
    # per-band RMSNorm + Linear; x / gamma / W zero-padded to KBAND (padding is inert).
    x = x_ref[0].astype(jnp.float32)
    nrm = jnp.sqrt(jnp.sum(x * x, axis=-1, keepdims=True))
    xn = (x / jnp.maximum(nrm, EPS)) * g_ref[0]
    y = jnp.dot(xn.astype(MM_DTYPE), w_ref[0].astype(MM_DTYPE),
                preferred_element_type=jnp.float32) + b_ref[0]
    o_ref[0] = y.astype(o_ref.dtype)


def band_split(x2, pk):
    # x2: (M, sum(DIMS_IN))  ->  (NUM_BANDS, M, DIM); single banded pallas_call
    m = x2.shape[0]
    segs, off = [], 0
    for din in DIMS_IN:
        seg = x2[:, off:off + din]
        off += din
        segs.append(jnp.pad(seg, ((0, 0), (0, KBAND - din))))
    xb = jnp.stack(segs, axis=0)                      # (NB, M, KBAND)
    return pl.pallas_call(
        _band_split_kernel,
        out_shape=jax.ShapeDtypeStruct((NUM_BANDS, m, DIM), x2.dtype),
        grid=(NUM_BANDS,),
        in_specs=[pl.BlockSpec((1, m, KBAND), lambda i: (i, 0, 0)),
                  pl.BlockSpec((1, 1, KBAND), lambda i: (i, 0, 0)),
                  pl.BlockSpec((1, KBAND, DIM), lambda i: (i, 0, 0)),
                  pl.BlockSpec((1, 1, DIM), lambda i: (i, 0, 0))],
        out_specs=pl.BlockSpec((1, m, DIM), lambda i: (i, 0, 0)),
        compiler_params=_compiler("parallel"),
    )(xb, pk["gamma"], pk["w"], pk["b"])


def _mask_estimator_kernel(x_ref, g_ref, w1_ref, b1_ref, w2_ref, b2_ref, o_ref):
    # fused final RMSNorm + per-band MLP(tanh) + GLU (value/gate halves padded separately)
    x = x_ref[0].astype(jnp.float32)
    nrm = jnp.sqrt(jnp.sum(x * x, axis=-1, keepdims=True))
    xn = (x / jnp.maximum(nrm, EPS)) * g_ref[...]
    h = jnp.dot(xn.astype(MM_DTYPE), w1_ref[0].astype(MM_DTYPE),
                preferred_element_type=jnp.float32) + b1_ref[0]
    h = jnp.tanh(h)
    y = jnp.dot(h.astype(MM_DTYPE), w2_ref[0].astype(MM_DTYPE),
                preferred_element_type=jnp.float32) + b2_ref[0]
    val = y[:, :DOUT_MAX]
    gate = y[:, DOUT_MAX:]
    o_ref[0] = (val * jax.nn.sigmoid(gate)).astype(o_ref.dtype)


def mask_estimator(xb, final_gamma_eff, pk):
    # xb: (NB, M, DIM) -> (NB, M, DOUT_MAX); only first DIMS_IN[i] columns valid per band
    m = xb.shape[1]
    return pl.pallas_call(
        _mask_estimator_kernel,
        out_shape=jax.ShapeDtypeStruct((NUM_BANDS, m, DOUT_MAX), xb.dtype),
        grid=(NUM_BANDS,),
        in_specs=[pl.BlockSpec((1, m, DIM), lambda i: (i, 0, 0)),
                  pl.BlockSpec((1, DIM), lambda i: (0, 0)),
                  pl.BlockSpec((1, DIM, HID), lambda i: (i, 0, 0)),
                  pl.BlockSpec((1, 1, HID), lambda i: (i, 0, 0)),
                  pl.BlockSpec((1, HID, 2 * DOUT_MAX), lambda i: (i, 0, 0)),
                  pl.BlockSpec((1, 1, 2 * DOUT_MAX), lambda i: (i, 0, 0))],
        out_specs=pl.BlockSpec((1, m, DOUT_MAX), lambda i: (i, 0, 0)),
        compiler_params=_compiler("parallel"),
    )(xb, final_gamma_eff.reshape(1, DIM), pk["w1"], pk["b1"], pk["w2"], pk["b2"])


# ============================== JAX glue ==============================

def hann_window(n):
    i = jnp.arange(n, dtype=jnp.float32)
    return 0.5 - 0.5 * jnp.cos(2.0 * jnp.pi * i / n)


def stft(x, n_fft, hop, window):
    # matches torch.stft(center=True, pad_mode='reflect', onesided=True, normalized=False)
    pad = n_fft // 2
    xp = jnp.pad(x, ((0, 0), (pad, pad)), mode="reflect")
    n_frames = 1 + (xp.shape[-1] - n_fft) // hop
    idx = jnp.arange(n_frames)[:, None] * hop + jnp.arange(n_fft)[None, :]
    frames = xp[:, idx] * window[None, None, :]
    spec = jnp.fft.rfft(frames, axis=-1)
    return jnp.transpose(spec, (0, 2, 1))                 # (B, freqs, frames)


def istft(spec, n_fft, hop, window, length):
    # matches torch.istft(center=True, onesided=True, normalized=False)
    frames = jnp.fft.irfft(jnp.transpose(spec, (0, 2, 1)), n=n_fft, axis=-1)
    frames = frames * window[None, None, :]
    b, n_frames, _ = frames.shape
    out_len = n_fft + hop * (n_frames - 1)
    idx = (jnp.arange(n_frames)[:, None] * hop + jnp.arange(n_fft)[None, :]).reshape(-1)
    sig = jnp.zeros((b, out_len), dtype=frames.dtype)
    sig = sig.at[:, idx].add(frames.reshape(b, -1))
    wsq = jnp.zeros((out_len,), dtype=frames.dtype)
    wsq = wsq.at[idx].add(jnp.tile(window ** 2, (n_frames,)))
    pad = n_fft // 2
    sig = sig[:, pad:pad + length]
    wsq = jnp.maximum(wsq[pad:pad + length], 1e-11)       # guard degenerate normalization
    return sig / wsq


def rotary_half_cos_sin(n, dim_head, theta=10000.0):
    # cos/sin for pair i of the reference's interleaved rotary; consumed in the
    # half-split (rotate-half-free) layout inside the attention kernel.
    inv = 1.0 / (theta ** (jnp.arange(0, dim_head, 2, dtype=jnp.float32) / dim_head))
    t = jnp.arange(n, dtype=jnp.float32)
    freqs = t[:, None] * inv[None, :]                     # (n, d/2)
    return jnp.cos(freqs), jnp.sin(freqs)


# ============================== model blocks ==============================

def attention_block(x, p, cos, sin):
    # x: (B', N, DIM)
    bsz, n, _ = x.shape
    # single fused RMSNorm + (QKV | gates) projection, 128-wide lane-dense output
    y = fused_linear(x, p["w_qkvg"], p["b_qkvg"], gamma=p["norm_gamma_eff"])
    qkv = y[..., :QKV_COLS].reshape(bsz, n, 3, HEADS, DIM_HEAD)
    qkv = jnp.transpose(qkv, (2, 0, 3, 1, 4))              # (3, B', H, N, Dh)
    q, k, v = qkv[0], qkv[1], qkv[2]
    gates = jnp.transpose(y[..., QKV_COLS:QKV_COLS + HEADS], (0, 2, 1))   # (B', H, N)
    out = attention_core(q, k, v, gates, cos, sin, p["w_out"])            # (B', N, DIM)
    return out, v


def feedforward_block(x, p):
    h = fused_linear(x, p["w1"], p["b1"], gamma=p["norm_gamma_eff"])
    # TODO(synk): exact-erf GELU stays in XLA glue (erf not fused into the Pallas kernel).
    h = jax.nn.gelu(h, approximate=False)
    return fused_linear(h, p["w2"], p["b2"], gamma=None)


def transformer(x, layers_params, cos, sin):
    first_values = None
    for p in layers_params:
        attn_out, vals = attention_block(x, p["attn"], cos, sin)
        x = x + attn_out
        if first_values is None:
            first_values = vals
        x = x + feedforward_block(x, p["ff"])
    return x, first_values      # norm_output=False inside BSRoformer layers


def bs_roformer_forward(params, raw_audio):
    # raw_audio: (B, T) mono
    b, _ = raw_audio.shape
    window = hann_window(WIN_LENGTH)
    spec = stft(raw_audio, N_FFT, HOP, window)                     # (B, 17, T) complex
    t_frames = spec.shape[-1]
    stft_real = jnp.stack([spec.real, spec.imag], axis=-1)         # (B, F, T, 2)

    # 'b f t c -> b t (f c)'
    x = jnp.transpose(stft_real, (0, 2, 1, 3)).reshape(b, t_frames, NUM_FREQS * 2)

    # ---- BandSplit: one banded pallas_call (per-band RMSNorm + Linear fused) ----
    xb = band_split(x.reshape(b * t_frames, NUM_FREQS * 2), params["band_split"])
    x = jnp.transpose(xb, (1, 0, 2)).reshape(b, t_frames, NUM_BANDS, DIM)
    f_bands = NUM_BANDS

    cos_t, sin_t = rotary_half_cos_sin(t_frames, DIM_HEAD)
    cos_f, sin_f = rotary_half_cos_sin(f_bands, DIM_HEAD)

    # ---- axial transformer layers ----
    for lp in params["layers"]:
        xt = jnp.transpose(x, (0, 2, 1, 3)).reshape(b * f_bands, t_frames, DIM)
        xt, _ = transformer(xt, lp["time"], cos_t, sin_t)
        x = jnp.transpose(xt.reshape(b, f_bands, t_frames, DIM), (0, 2, 1, 3))

        xf = x.reshape(b * t_frames, f_bands, DIM)
        xf, _ = transformer(xf, lp["freq"], cos_f, sin_f)
        x = xf.reshape(b, t_frames, f_bands, DIM)

    # ---- MaskEstimator (num_stems=1) with fused final RMSNorm: one banded pallas_call ----
    xbands = jnp.transpose(x.reshape(b * t_frames, f_bands, DIM), (1, 0, 2))  # (NB, M, DIM)
    mo = mask_estimator(xbands, params["final_norm_gamma_eff"], params["mask_est"][0])
    parts = [mo[i, :, :DIMS_IN[i]] for i in range(NUM_BANDS)]
    mask = jnp.concatenate(parts, axis=-1)                              # (M, 2*F)
    mask = mask.reshape(b, 1, t_frames, NUM_FREQS, 2)                   # 'b n t (f c)'
    mask = jnp.transpose(mask, (0, 1, 3, 2, 4))                         # (B, 1, F, T, 2)
    mask_c = mask[..., 0] + 1j * mask[..., 1]

    prod = spec[:, None] * mask_c                                       # (B, 1, F, T)
    prod = prod.reshape(b * NUM_STEMS * AUDIO_CHANNELS, NUM_FREQS, t_frames)

    recon = istft(prod, N_FFT, HOP, window, length=HOP * (t_frames - 1))
    recon = recon.reshape(b, NUM_STEMS, AUDIO_CHANNELS, -1)
    recon = recon[:, 0]                                                 # 'b 1 s t -> b s t'
    return recon


# ============================== parameter init + packing ==============================

def _init_linear(key, fan_in, fan_out, bias=True):
    k1, k2 = jax.random.split(key)
    bound = 1.0 / math.sqrt(fan_in)
    w = jax.random.uniform(k1, (fan_in, fan_out), jnp.float32, -bound, bound)
    b = jax.random.uniform(k2, (fan_out,), jnp.float32, -bound, bound) if bias else None
    return w, b


def init_params(key):
    """Reference-shaped parameters (mirrors the PyTorch module layout)."""
    keys = iter(jax.random.split(key, 1024))
    nk = lambda: next(keys)
    params = {}

    params["band_split"] = []
    for din in DIMS_IN:
        w, bb = _init_linear(nk(), din, DIM)
        params["band_split"].append(
            {"gamma": jnp.ones((din,), jnp.float32), "w": w, "b": bb})

    def init_transformer(depth):
        layers = []
        for _ in range(depth):
            w_qkv, _ = _init_linear(nk(), DIM, 3 * HEADS * DIM_HEAD, bias=False)
            w_g, b_g = _init_linear(nk(), DIM, HEADS)
            w_o, _ = _init_linear(nk(), HEADS * DIM_HEAD, DIM, bias=False)
            attn = {"norm_gamma": jnp.ones((DIM,), jnp.float32),
                    "w_qkv": w_qkv, "w_gates": w_g, "b_gates": b_g, "w_out": w_o}
            w1, b1 = _init_linear(nk(), DIM, FF_MULT * DIM)
            w2, b2 = _init_linear(nk(), FF_MULT * DIM, DIM)
            ff = {"norm_gamma": jnp.ones((DIM,), jnp.float32),
                  "w1": w1, "b1": b1, "w2": w2, "b2": b2}
            layers.append({"attn": attn, "ff": ff})
        return layers

    params["layers"] = []
    for _ in range(DEPTH):
        params["layers"].append({"time": init_transformer(TIME_DEPTH),
                                 "freq": init_transformer(FREQ_DEPTH)})

    params["final_norm_gamma"] = jnp.ones((DIM,), jnp.float32)

    params["mask_est"] = []
    for _ in range(NUM_STEMS):
        bands = []
        for din in DIMS_IN:
            w1, b1 = _init_linear(nk(), DIM, DIM * MLP_EXPANSION)
            w2, b2 = _init_linear(nk(), DIM * MLP_EXPANSION, din * 2)
            bands.append({"w1": w1, "b1": b1, "w2": w2, "b2": b2})
        params["mask_est"].append(bands)
    return params


def pack_params(raw):
    """Repack reference-shaped params into the fused / stacked / permuted kernel layout."""
    # even-indices-first permutation: maps interleaved rotary to the half-split layout;
    # attention scores are invariant under this joint permutation of q and k columns.
    perm = jnp.asarray(list(range(0, DIM_HEAD, 2)) + list(range(1, DIM_HEAD, 2)), jnp.int32)
    packed = {}

    # --- band split: stacked per-band weights, inputs zero-padded to KBAND ---
    g = jnp.zeros((NUM_BANDS, 1, KBAND), jnp.float32)
    w = jnp.zeros((NUM_BANDS, KBAND, DIM), jnp.float32)
    bb = jnp.zeros((NUM_BANDS, 1, DIM), jnp.float32)
    for i, din in enumerate(DIMS_IN):
        pb = raw["band_split"][i]
        g = g.at[i, 0, :din].set(pb["gamma"] * math.sqrt(din))   # fold RMSNorm sqrt(dim)
        w = w.at[i, :din, :].set(pb["w"])
        bb = bb.at[i, 0, :].set(pb["b"])
    packed["band_split"] = {"gamma": g, "w": w.astype(MM_DTYPE), "b": bb}

    def pack_transformer(layers):
        out = []
        for lyr in layers:
            a = lyr["attn"]
            w_qkv = a["w_qkv"].reshape(DIM, 3, HEADS, DIM_HEAD)
            w_qkv = w_qkv.at[:, 0].set(jnp.take(w_qkv[:, 0], perm, axis=-1))  # q -> half-split
            w_qkv = w_qkv.at[:, 1].set(jnp.take(w_qkv[:, 1], perm, axis=-1))  # k -> half-split
            w_qkv = w_qkv.reshape(DIM, QKV_COLS)
            w_qkvg = jnp.zeros((DIM, ATT_PROJ_COLS), jnp.float32)
            w_qkvg = w_qkvg.at[:, :QKV_COLS].set(w_qkv)
            w_qkvg = w_qkvg.at[:, QKV_COLS:QKV_COLS + HEADS].set(a["w_gates"])
            b_qkvg = jnp.zeros((ATT_PROJ_COLS,), jnp.float32)
            b_qkvg = b_qkvg.at[QKV_COLS:QKV_COLS + HEADS].set(a["b_gates"])
            attn = {"norm_gamma_eff": a["norm_gamma"] * math.sqrt(DIM),
                    "w_qkvg": w_qkvg.astype(MM_DTYPE), "b_qkvg": b_qkvg,
                    "w_out": a["w_out"].reshape(HEADS, DIM_HEAD, DIM).astype(MM_DTYPE)}
            f = lyr["ff"]
            ff = {"norm_gamma_eff": f["norm_gamma"] * math.sqrt(DIM),
                  "w1": f["w1"].astype(MM_DTYPE), "b1": f["b1"],
                  "w2": f["w2"].astype(MM_DTYPE), "b2": f["b2"]}
            out.append({"attn": attn, "ff": ff})
        return out

    packed["layers"] = [{"time": pack_transformer(lp["time"]),
                         "freq": pack_transformer(lp["freq"])}
                        for lp in raw["layers"]]

    packed["final_norm_gamma_eff"] = raw["final_norm_gamma"] * math.sqrt(DIM)

    # --- mask estimator: stacked per-band MLP, GLU value/gate halves padded separately ---
    w1 = jnp.zeros((NUM_BANDS, DIM, HID), jnp.float32)
    b1 = jnp.zeros((NUM_BANDS, 1, HID), jnp.float32)
    w2 = jnp.zeros((NUM_BANDS, HID, 2 * DOUT_MAX), jnp.float32)
    b2 = jnp.zeros((NUM_BANDS, 1, 2 * DOUT_MAX), jnp.float32)
    for i, din in enumerate(DIMS_IN):
        pm = raw["mask_est"][0][i]
        w1 = w1.at[i].set(pm["w1"])
        b1 = b1.at[i, 0].set(pm["b1"])
        w2 = w2.at[i, :, :din].set(pm["w2"][:, :din])                     # GLU value half
        w2 = w2.at[i, :, DOUT_MAX:DOUT_MAX + din].set(pm["w2"][:, din:])  # GLU gate half
        b2 = b2.at[i, 0, :din].set(pm["b2"][:din])
        b2 = b2.at[i, 0, DOUT_MAX:DOUT_MAX + din].set(pm["b2"][din:])
    packed["mask_est"] = [{"w1": w1.astype(MM_DTYPE), "b1": b1,
                           "w2": w2.astype(MM_DTYPE), "b2": b2}]
    return packed


# ============================== main ==============================

if __name__ == "__main__":
    key = jax.random.PRNGKey(0)
    k_audio, k_params = jax.random.split(key)
    raw_audio = jax.random.normal(k_audio, (2, 256), dtype=jnp.float32)  # (B, T) mono
    params = pack_params(init_params(k_params))

    fwd = jax.jit(bs_roformer_forward)
    recon = jax.block_until_ready(fwd(params, raw_audio))
    assert recon.shape == (2, 1, 256), recon.shape
    assert bool(jnp.all(jnp.isfinite(recon)))
    print("KERNEL_OK")
</pallas_src>

<mosaic_0001>
module attributes {stable_mosaic.version = 11 : i64} {
  func.func private @main(%arg0: i32) attributes {dimension_semantics = [#tpu.dimension_semantics<core_parallel>], iteration_bounds = array<i64: 2>, tpu.core_type = #tpu.core_type<sc_scalar_subcore>, window_params = []} {
    return
  }
}

module attributes {stable_mosaic.version = 11 : i64} {
  func.func private @main(%arg0: i32) attributes {dimension_semantics = [#tpu.dimension_semantics<core_parallel>], iteration_bounds = array<i64: 2>, tpu.core_type = #tpu.core_type<sc_scalar_subcore>, window_params = []} {
    return
  }
}

module attributes {stable_mosaic.version = 11 : i64} {
  func.func @_band_split_kernel(%arg0: i32, %arg1: memref<1x66x6xf32, #tpu.memory_space<vmem>>, %arg2: memref<1x1x6xf32, #tpu.memory_space<vmem>>, %arg3: memref<1x6x32xbf16, #tpu.memory_space<vmem>>, %arg4: memref<1x1x32xf32, #tpu.memory_space<vmem>>, %arg5: memref<1x66x32xf32, #tpu.memory_space<vmem>>) attributes {dimension_semantics = [#tpu.dimension_semantics<parallel>], iteration_bounds = array<i64: 8>, scalar_prefetch = 0 : i64, scratch_operands = 0 : i64, tpu.core_type = #tpu.core_type<tc>, window_params = [{transform_indices = @transform_0, window_bounds = array<i64: 1, 66, 6>}, {transform_indices = @transform_1, window_bounds = array<i64: 1, 1, 6>}, {transform_indices = @transform_2, window_bounds = array<i64: 1, 6, 32>}, {transform_indices = @transform_3, window_bounds = array<i64: 1, 1, 32>}, {transform_indices = @transform_4, window_bounds = array<i64: 1, 66, 32>}]} {
    %c0 = arith.constant 0 : index
    %c0_0 = arith.constant 0 : index
    %c0_1 = arith.constant 0 : index
    %0 = vector.load %arg1[%c0, %c0_0, %c0_1] : memref<1x66x6xf32, #tpu.memory_space<vmem>>, vector<1x66x6xf32>
    %1 = vector.shape_cast %0 : vector<1x66x6xf32> to vector<66x6xf32>
    %2 = arith.mulf %1, %1 : vector<66x6xf32>
    %cst = arith.constant dense<0.000000e+00> : vector<66xf32>
    %3 = vector.multi_reduction <add>, %2, %cst [1] : vector<66x6xf32> to vector<66xf32>
    %4 = vector.shape_cast %3 : vector<66xf32> to vector<66x1xf32>
    %5 = math.sqrt %4 : vector<66x1xf32>
    %cst_2 = arith.constant 9.99999996E-13 : f32
    %6 = vector.broadcast %cst_2 : f32 to vector<66x1xf32>
    %7 = arith.maximumf %5, %6 : vector<66x1xf32>
    %8 = vector.broadcast %7 : vector<66x1xf32> to vector<66x6xf32>
    %9 = arith.divf %1, %8 : vector<66x6xf32>
    %c0_3 = arith.constant 0 : index
    %c0_4 = arith.constant 0 : index
    %c0_5 = arith.constant 0 : index
    %10 = vector.load %arg2[%c0_3, %c0_4, %c0_5] : memref<1x1x6xf32, #tpu.memory_space<vmem>>, vector<1x1x6xf32>
    %11 = vector.shape_cast %10 : vector<1x1x6xf32> to vector<1x6xf32>
    %12 = vector.broadcast %11 : vector<1x6xf32> to vector<66x6xf32>
    %13 = arith.mulf %9, %12 : vector<66x6xf32>
    %14 = arith.truncf %13 : vector<66x6xf32> to vector<66x6xbf16>
    %c0_6 = arith.constant 0 : index
    %c0_7 = arith.constant 0 : index
    %c0_8 = arith.constant 0 : index
    %15 = vector.load %arg3[%c0_6, %c0_7, %c0_8] : memref<1x6x32xbf16, #tpu.memory_space<vmem>>, vector<1x6x32xbf16>
    %16 = vector.shape_cast %15 : vector<1x6x32xbf16> to vector<6x32xbf16>
    %cst_9 = arith.constant dense<0.000000e+00> : vector<66x32xf32>
    %17 = tpu.matmul %14, %16, %cst_9 {dimension_numbers = #tpu.dot_dimension_numbers<[1], [0], [0], [1], [0, 0, 1, 1], [], []>} : vector<66x6xbf16>, vector<6x32xbf16>, vector<66x32xf32> -> vector<66x32xf32>
    %c0_10 = arith.constant 0 : index
    %c0_11 = arith.constant 0 : index
    %c0_12 = arith.constant 0 : index
    %18 = vector.load %arg4[%c0_10, %c0_11, %c0_12] : memref<1x1x32xf32, #tpu.memory_space<vmem>>, vector<1x1x32xf32>
    %19 = vector.shape_cast %18 : vector<1x1x32xf32> to vector<1x32xf32>
    %20 = vector.broadcast %19 : vector<1x32xf32> to vector<66x32xf32>
    %21 = arith.addf %17, %20 : vector<66x32xf32>
    %c0_13 = arith.constant 0 : index
    %c0_14 = arith.constant 0 : index
    %c0_15 = arith.constant 0 : index
    %22 = vector.load %arg5[%c0_13, %c0_14, %c0_15] : memref<1x66x32xf32, #tpu.memory_space<vmem>>, vector<1x66x32xf32>
    %23 = vector.shape_cast %22 : vector<1x66x32xf32> to vector<66x32xf32>
    %24 = vector.shape_cast %21 : vector<66x32xf32> to vector<1x66x32xf32>
    tpu.vector_store %arg5[%c0_13, %c0_14, %c0_15], %24 {strides = array<i32>} : memref<1x66x32xf32, #tpu.memory_space<vmem>>, vector<1x66x32xf32>,
    return
  }
  func.func @transform_0(%arg0: i32) -> (i32, i32, i32) {
    %c0_i32 = arith.constant 0 : i32
    %c0_i32_0 = arith.constant 0 : i32
    %c0_i32_1 = arith.constant 0 : i32
    return %arg0, %c0_i32, %c0_i32_0 : i32, i32, i32
  }
  func.func @transform_1(%arg0: i32) -> (i32, i32, i32) {
    %c0_i32 = arith.constant 0 : i32
    %c0_i32_0 = arith.constant 0 : i32
    %c0_i32_1 = arith.constant 0 : i32
    return %arg0, %c0_i32, %c0_i32_0 : i32, i32, i32
  }
  func.func @transform_2(%arg0: i32) -> (i32, i32, i32) {
    %c0_i32 = arith.constant 0 : i32
    %c0_i32_0 = arith.constant 0 : i32
    %c0_i32_1 = arith.constant 0 : i32
    return %arg0, %c0_i32, %c0_i32_0 : i32, i32, i32
  }
  func.func @transform_3(%arg0: i32) -> (i32, i32, i32) {
    %c0_i32 = arith.constant 0 : i32
    %c0_i32_0 = arith.constant 0 : i32
    %c0_i32_1 = arith.constant 0 : i32
    return %arg0, %c0_i32, %c0_i32_0 : i32, i32, i32
  }
  func.func @transform_4(%arg0: i32) -> (i32, i32, i32) {
    %c0_i32 = arith.constant 0 : i32
    %c0_i32_0 = arith.constant 0 : i32
    %c0_i32_1 = arith.constant 0 : i32
    return %arg0, %c0_i32, %c0_i32_0 : i32, i32, i32
  }
}

module attributes {stable_mosaic.version = 11 : i64} {
  func.func @_norm_linear_kernel(%arg0: i32, %arg1: memref<176x32xf32, #tpu.memory_space<vmem>>, %arg2: memref<1x32xf32, #tpu.memory_space<vmem>>, %arg3: memref<32x128xbf16, #tpu.memory_space<vmem>>, %arg4: memref<1x128xf32, #tpu.memory_space<vmem>>, %arg5: memref<176x128xf32, #tpu.memory_space<vmem>>) attributes {dimension_semantics = [#tpu.dimension_semantics<parallel>], iteration_bounds = array<i64: 3>, scalar_prefetch = 0 : i64, scratch_operands = 0 : i64, tpu.core_type = #tpu.core_type<tc>, window_params = [{transform_indices = @transform_0, window_bounds = array<i64: 176, 32>}, {pipeline_mode = #tpu.pipeline_mode<synchronous>, transform_indices = @transform_1, window_bounds = array<i64: 1, 32>}, {pipeline_mode = #tpu.pipeline_mode<synchronous>, transform_indices = @transform_2, window_bounds = array<i64: 32, 128>}, {pipeline_mode = #tpu.pipeline_mode<synchronous>, transform_indices = @transform_3, window_bounds = array<i64: 1, 128>}, {transform_indices = @transform_4, window_bounds = array<i64: 176, 128>}]} {
    %c0 = arith.constant 0 : index
    %c0_0 = arith.constant 0 : index
    %0 = vector.load %arg1[%c0, %c0_0] : memref<176x32xf32, #tpu.memory_space<vmem>>, vector<176x32xf32>
    %1 = arith.mulf %0, %0 : vector<176x32xf32>
    %cst = arith.constant dense<0.000000e+00> : vector<176xf32>
    %2 = vector.multi_reduction <add>, %1, %cst [1] : vector<176x32xf32> to vector<176xf32>
    %3 = vector.shape_cast %2 : vector<176xf32> to vector<176x1xf32>
    %4 = math.sqrt %3 : vector<176x1xf32>
    %cst_1 = arith.constant 9.99999996E-13 : f32
    %5 = vector.broadcast %cst_1 : f32 to vector<176x1xf32>
    %6 = arith.maximumf %4, %5 : vector<176x1xf32>
    %7 = vector.broadcast %6 : vector<176x1xf32> to vector<176x32xf32>
    %8 = arith.divf %0, %7 : vector<176x32xf32>
    %c0_2 = arith.constant 0 : index
    %c0_3 = arith.constant 0 : index
    %9 = vector.load %arg2[%c0_2, %c0_3] : memref<1x32xf32, #tpu.memory_space<vmem>>, vector<1x32xf32>
    %10 = vector.broadcast %9 : vector<1x32xf32> to vector<176x32xf32>
    %11 = arith.mulf %8, %10 : vector<176x32xf32>
    %12 = arith.truncf %11 : vector<176x32xf32> to vector<176x32xbf16>
    %c0_4 = arith.constant 0 : index
    %c0_5 = arith.constant 0 : index
    %13 = vector.load %arg3[%c0_4, %c0_5] : memref<32x128xbf16, #tpu.memory_space<vmem>>, vector<32x128xbf16>
    %cst_6 = arith.constant dense<0.000000e+00> : vector<176x128xf32>
    %14 = tpu.matmul %12, %13, %cst_6 {dimension_numbers = #tpu.dot_dimension_numbers<[1], [0], [0], [1], [0, 0, 1, 1], [], []>} : vector<176x32xbf16>, vector<32x128xbf16>, vector<176x128xf32> -> vector<176x128xf32>
    %c0_7 = arith.constant 0 : index
    %c0_8 = arith.constant 0 : index
    %15 = vector.load %arg4[%c0_7, %c0_8] : memref<1x128xf32, #tpu.memory_space<vmem>>, vector<1x128xf32>
    %16 = vector.broadcast %15 : vector<1x128xf32> to vector<176x128xf32>
    %17 = arith.addf %14, %16 : vector<176x128xf32>
    %c0_9 = arith.constant 0 : index
    %c0_10 = arith.constant 0 : index
    %18 = vector.load %arg5[%c0_9, %c0_10] : memref<176x128xf32, #tpu.memory_space<vmem>>, vector<176x128xf32>
    tpu.vector_store %arg5[%c0_9, %c0_10], %17 {strides = array<i32>} : memref<176x128xf32, #tpu.memory_space<vmem>>, vector<176x128xf32>,
    return
  }
  func.func @transform_0(%arg0: i32) -> (i32, i32) {
    %c0_i32 = arith.constant 0 : i32
    %c0_i32_0 = arith.constant 0 : i32
    return %arg0, %c0_i32 : i32, i32
  }
  func.func @transform_1(%arg0: i32) -> (i32, i32) {
    %c0_i32 = arith.constant 0 : i32
    %c0_i32_0 = arith.constant 0 : i32
    %c0_i32_1 = arith.constant 0 : i32
    return %c0_i32, %c0_i32_0 : i32, i32
  }
  func.func @transform_2(%arg0: i32) -> (i32, i32) {
    %c0_i32 = arith.constant 0 : i32
    %c0_i32_0 = arith.constant 0 : i32
    %c0_i32_1 = arith.constant 0 : i32
    return %c0_i32, %c0_i32_0 : i32, i32
  }
  func.func @transform_3(%arg0: i32) -> (i32, i32) {
    %c0_i32 = arith.constant 0 : i32
    %c0_i32_0 = arith.constant 0 : i32
    %c0_i32_1 = arith.constant 0 : i32
    return %c0_i32, %c0_i32_0 : i32, i32
  }
  func.func @transform_4(%arg0: i32) -> (i32, i32) {
    %c0_i32 = arith.constant 0 : i32
    %c0_i32_0 = arith.constant 0 : i32
    return %arg0, %c0_i32 : i32, i32
  }
}

module attributes {stable_mosaic.version = 11 : i64} {
  func.func @_attention_kernel(%arg0: i32, %arg1: memref<1x4x33x8xf32, #tpu.memory_space<vmem>>, %arg2: memref<1x4x33x8xf32, #tpu.memory_space<vmem>>, %arg3: memref<1x4x33x8xf32, #tpu.memory_space<vmem>>, %arg4: memref<1x4x33xf32, #tpu.memory_space<vmem>>, %arg5: memref<33x4xf32, #tpu.memory_space<vmem>>, %arg6: memref<33x4xf32, #tpu.memory_space<vmem>>, %arg7: memref<4x8x32xbf16, #tpu.memory_space<vmem>>, %arg8: memref<1x33x32xf32, #tpu.memory_space<vmem>>) attributes {dimension_semantics = [#tpu.dimension_semantics<parallel>], iteration_bounds = array<i64: 16>, scalar_prefetch = 0 : i64, scratch_operands = 0 : i64, tpu.core_type = #tpu.core_type<tc>, window_params = [{transform_indices = @transform_0, window_bounds = array<i64: 1, 4, 33, 8>}, {transform_indices = @transform_1, window_bounds = array<i64: 1, 4, 33, 8>}, {transform_indices = @transform_2, window_bounds = array<i64: 1, 4, 33, 8>}, {transform_indices = @transform_3, window_bounds = array<i64: 1, 4, 33>}, {pipeline_mode = #tpu.pipeline_mode<synchronous>, transform_indices = @transform_4, window_bounds = array<i64: 33, 4>}, {pipeline_mode = #tpu.pipeline_mode<synchronous>, transform_indices = @transform_5, window_bounds = array<i64: 33, 4>}, {pipeline_mode = #tpu.pipeline_mode<synchronous>, transform_indices = @transform_6, window_bounds = array<i64: 4, 8, 32>}, {transform_indices = @transform_7, window_bounds = array<i64: 1, 33, 32>}]} {
    %c0 = arith.constant 0 : index
    %c0_0 = arith.constant 0 : index
    %0 = vector.load %arg5[%c0, %c0_0] : memref<33x4xf32, #tpu.memory_space<vmem>>, vector<33x4xf32>
    %c0_1 = arith.constant 0 : index
    %c0_2 = arith.constant 0 : index
    %1 = vector.load %arg6[%c0_1, %c0_2] : memref<33x4xf32, #tpu.memory_space<vmem>>, vector<33x4xf32>
    %c0_3 = arith.constant 0 : index
    %c0_4 = arith.constant 0 : index
    %c0_5 = arith.constant 0 : index
    %c0_6 = arith.constant 0 : index
    %2 = vector.load %arg1[%c0_3, %c0_4, %c0_5, %c0_6] : memref<1x4x33x8xf32, #tpu.memory_space<vmem>>, vector<1x4x33x8xf32>
    %3 = vector.shape_cast %2 : vector<1x4x33x8xf32> to vector<4x33x8xf32>
    %cst = arith.constant 0.353553385 : f32
    %4 = vector.broadcast %cst : f32 to vector<4x33x8xf32>
    %5 = arith.mulf %3, %4 : vector<4x33x8xf32>
    %c0_7 = arith.constant 0 : index
    %c0_8 = arith.constant 0 : index
    %c0_9 = arith.constant 0 : index
    %c0_10 = arith.constant 0 : index
    %6 = vector.load %arg2[%c0_7, %c0_8, %c0_9, %c0_10] : memref<1x4x33x8xf32, #tpu.memory_space<vmem>>, vector<1x4x33x8xf32>
    %7 = vector.shape_cast %6 : vector<1x4x33x8xf32> to vector<4x33x8xf32>
    %c0_11 = arith.constant 0 : index
    %c0_12 = arith.constant 0 : index
    %c0_13 = arith.constant 0 : index
    %c0_14 = arith.constant 0 : index
    %8 = vector.load %arg3[%c0_11, %c0_12, %c0_13, %c0_14] : memref<1x4x33x8xf32, #tpu.memory_space<vmem>>, vector<1x4x33x8xf32>
    %9 = vector.shape_cast %8 : vector<1x4x33x8xf32> to vector<4x33x8xf32>
    %10 = arith.truncf %9 : vector<4x33x8xf32> to vector<4x33x8xbf16>
    %11 = vector.extract_strided_slice %5 {offsets = [0, 0, 0], sizes = [4, 33, 4], strides = [1, 1, 1]} : vector<4x33x8xf32> to vector<4x33x4xf32>
    %12 = vector.extract_strided_slice %5 {offsets = [0, 0, 4], sizes = [4, 33, 4], strides = [1, 1, 1]} : vector<4x33x8xf32> to vector<4x33x4xf32>
    %13 = vector.extract_strided_slice %7 {offsets = [0, 0, 0], sizes = [4, 33, 4], strides = [1, 1, 1]} : vector<4x33x8xf32> to vector<4x33x4xf32>
    %14 = vector.extract_strided_slice %7 {offsets = [0, 0, 4], sizes = [4, 33, 4], strides = [1, 1, 1]} : vector<4x33x8xf32> to vector<4x33x4xf32>
    %15 = vector.shape_cast %0 : vector<33x4xf32> to vector<1x33x4xf32>
    %16 = vector.broadcast %15 : vector<1x33x4xf32> to vector<4x33x4xf32>
    %17 = arith.mulf %11, %16 : vector<4x33x4xf32>
    %18 = vector.shape_cast %1 : vector<33x4xf32> to vector<1x33x4xf32>
    %19 = vector.broadcast %18 : vector<1x33x4xf32> to vector<4x33x4xf32>
    %20 = arith.mulf %12, %19 : vector<4x33x4xf32>
    %21 = arith.subf %17, %20 : vector<4x33x4xf32>
    %22 = arith.truncf %21 : vector<4x33x4xf32> to vector<4x33x4xbf16>
    %23 = vector.shape_cast %0 : vector<33x4xf32> to vector<1x33x4xf32>
    %24 = vector.broadcast %23 : vector<1x33x4xf32> to vector<4x33x4xf32>
    %25 = arith.mulf %12, %24 : vector<4x33x4xf32>
    %26 = vector.shape_cast %1 : vector<33x4xf32> to vector<1x33x4xf32>
    %27 = vector.broadcast %26 : vector<1x33x4xf32> to vector<4x33x4xf32>
    %28 = arith.mulf %11, %27 : vector<4x33x4xf32>
    %29 = arith.addf %25, %28 : vector<4x33x4xf32>
    %30 = arith.truncf %29 : vector<4x33x4xf32> to vector<4x33x4xbf16>
    %31 = vector.shape_cast %0 : vector<33x4xf32> to vector<1x33x4xf32>
    %32 = vector.broadcast %31 : vector<1x33x4xf32> to vector<4x33x4xf32>
    %33 = arith.mulf %13, %32 : vector<4x33x4xf32>
    %34 = vector.shape_cast %1 : vector<33x4xf32> to vector<1x33x4xf32>
    %35 = vector.broadcast %34 : vector<1x33x4xf32> to vector<4x33x4xf32>
    %36 = arith.mulf %14, %35 : vector<4x33x4xf32>
    %37 = arith.subf %33, %36 : vector<4x33x4xf32>
    %38 = arith.truncf %37 : vector<4x33x4xf32> to vector<4x33x4xbf16>
    %39 = vector.shape_cast %0 : vector<33x4xf32> to vector<1x33x4xf32>
    %40 = vector.broadcast %39 : vector<1x33x4xf32> to vector<4x33x4xf32>
    %41 = arith.mulf %14, %40 : vector<4x33x4xf32>
    %42 = vector.shape_cast %1 : vector<33x4xf32> to vector<1x33x4xf32>
    %43 = vector.broadcast %42 : vector<1x33x4xf32> to vector<4x33x4xf32>
    %44 = arith.mulf %13, %43 : vector<4x33x4xf32>
    %45 = arith.addf %41, %44 : vector<4x33x4xf32>
    %46 = arith.truncf %45 : vector<4x33x4xf32> to vector<4x33x4xbf16>
    "tpu.trace_start"() <{level = 10 : i32, message = "hqd,hkd->hqk"}> : () -> ()
    %cst_15 = arith.constant dense<0.000000e+00> : vector<4x33x33xf32>
    %47 = tpu.matmul %22, %38, %cst_15 {dimension_numbers = #tpu.dot_dimension_numbers<[2], [2], [1], [1], [0, 0, 0, 1, 1, 1], [0], [0]>} : vector<4x33x4xbf16>, vector<4x33x4xbf16>, vector<4x33x33xf32> -> vector<4x33x33xf32>
    %cst_16 = arith.constant dense<0.000000e+00> : vector<4x33x33xf32>
    %48 = tpu.matmul %30, %46, %cst_16 {dimension_numbers = #tpu.dot_dimension_numbers<[2], [2], [1], [1], [0, 0, 0, 1, 1, 1], [0], [0]>} : vector<4x33x4xbf16>, vector<4x33x4xbf16>, vector<4x33x33xf32> -> vector<4x33x33xf32>
    "tpu.trace_stop"() : () -> ()
    %49 = arith.addf %47, %48 : vector<4x33x33xf32>
    %cst_17 = arith.constant dense<0xFF800000> : vector<4x33xf32>
    %50 = vector.multi_reduction <maximumf>, %49, %cst_17 [2] : vector<4x33x33xf32> to vector<4x33xf32>
    %51 = vector.shape_cast %50 : vector<4x33xf32> to vector<4x33x1xf32>
    %52 = vector.broadcast %51 : vector<4x33x1xf32> to vector<4x33x33xf32>
    %53 = arith.subf %49, %52 : vector<4x33x33xf32>
    %54 = math.exp %53 : vector<4x33x33xf32>
    %cst_18 = arith.constant dense<0.000000e+00> : vector<4x33xf32>
    %55 = vector.multi_reduction <add>, %54, %cst_18 [2] : vector<4x33x33xf32> to vector<4x33xf32>
    %56 = vector.shape_cast %55 : vector<4x33xf32> to vector<4x33x1xf32>
    %57 = arith.truncf %54 : vector<4x33x33xf32> to vector<4x33x33xbf16>
    "tpu.trace_start"() <{level = 10 : i32, message = "hqk,hkd->hqd"}> : () -> ()
    %cst_19 = arith.constant dense<0.000000e+00> : vector<4x33x8xf32>
    %58 = tpu.matmul %57, %10, %cst_19 {dimension_numbers = #tpu.dot_dimension_numbers<[2], [1], [1], [2], [0, 0, 0, 1, 1, 2], [0], [0]>} : vector<4x33x33xbf16>, vector<4x33x8xbf16>, vector<4x33x8xf32> -> vector<4x33x8xf32>
    "tpu.trace_stop"() : () -> ()
    %59 = tpu.reciprocal %56 {approx = true} : vector<4x33x1xf32> -> vector<4x33x1xf32>
    %60 = vector.broadcast %59 : vector<4x33x1xf32> to vector<4x33x8xf32>
    %61 = arith.mulf %58, %60 : vector<4x33x8xf32>
    %c0_20 = arith.constant 0 : index
    %c0_21 = arith.constant 0 : index
    %c0_22 = arith.constant 0 : index
    %62 = vector.load %arg4[%c0_20, %c0_21, %c0_22] : memref<1x4x33xf32, #tpu.memory_space<vmem>>, vector<1x4x33xf32>
    %63 = vector.shape_cast %62 : vector<1x4x33xf32> to vector<4x33xf32>
    %64 = arith.negf %63 : vector<4x33xf32>
    %65 = math.exp %64 : vector<4x33xf32>
    %cst_23 = arith.constant 1.000000e+00 : f32
    %66 = vector.broadcast %cst_23 : f32 to vector<4x33xf32>
    %67 = arith.addf %66, %65 : vector<4x33xf32>
    %68 = arith.divf %66, %67 : vector<4x33xf32>
    %69 = vector.shape_cast %68 : vector<4x33xf32> to vector<4x33x1xf32>
    %70 = vector.broadcast %69 : vector<4x33x1xf32> to vector<4x33x8xf32>
    %71 = arith.mulf %61, %70 : vector<4x33x8xf32>
    %72 = arith.truncf %71 : vector<4x33x8xf32> to vector<4x33x8xbf16>
    %cst_24 = arith.constant 0.000000e+00 : f32
    %73 = vector.broadcast %cst_24 : f32 to vector<33x32xf32>
    %74 = vector.extract_strided_slice %72 {offsets = [0, 0, 0], sizes = [1, 33, 8], strides = [1, 1, 1]} : vector<4x33x8xbf16> to vector<1x33x8xbf16>
    %75 = vector.shape_cast %74 : vector<1x33x8xbf16> to vector<33x8xbf16>
    %c0_25 = arith.constant 0 : index
    %c0_26 = arith.constant 0 : index
    %c0_27 = arith.constant 0 : index
    %76 = vector.load %arg7[%c0_25, %c0_26, %c0_27] : memref<4x8x32xbf16, #tpu.memory_space<vmem>>, vector<1x8x32xbf16>
    %77 = vector.shape_cast %76 : vector<1x8x32xbf16> to vector<8x32xbf16>
    %cst_28 = arith.constant dense<0.000000e+00> : vector<33x32xf32>
    %78 = tpu.matmul %75, %77, %cst_28 {dimension_numbers = #tpu.dot_dimension_numbers<[1], [0], [0], [1], [0, 0, 1, 1], [], []>} : vector<33x8xbf16>, vector<8x32xbf16>, vector<33x32xf32> -> vector<33x32xf32>
    %79 = arith.addf %73, %78 : vector<33x32xf32>
    %80 = vector.extract_strided_slice %72 {offsets = [1, 0, 0], sizes = [1, 33, 8], strides = [1, 1, 1]} : vector<4x33x8xbf16> to vector<1x33x8xbf16>
    %81 = vector.shape_cast %80 : vector<1x33x8xbf16> to vector<33x8xbf16>
    %c1 = arith.constant 1 : index
    %c0_29 = arith.constant 0 : index
    %c0_30 = arith.constant 0 : index
    %82 = vector.load %arg7[%c1, %c0_29, %c0_30] : memref<4x8x32xbf16, #tpu.memory_space<vmem>>, vector<1x8x32xbf16>
    %83 = vector.shape_cast %82 : vector<1x8x32xbf16> to vector<8x32xbf16>
    %cst_31 = arith.constant dense<0.000000e+00> : vector<33x32xf32>
    %84 = tpu.matmul %81, %83, %cst_31 {dimension_numbers = #tpu.dot_dimension_numbers<[1], [0], [0], [1], [0, 0, 1, 1], [], []>} : vector<33x8xbf16>, vector<8x32xbf16>, vector<33x32xf32> -> vector<33x32xf32>
    %85 = arith.addf %79, %84 : vector<33x32xf32>
    %86 = vector.extract_strided_slice %72 {offsets = [2, 0, 0], sizes = [1, 33, 8], strides = [1, 1, 1]} : vector<4x33x8xbf16> to vector<1x33x8xbf16>
    %87 = vector.shape_cast %86 : vector<1x33x8xbf16> to vector<33x8xbf16>
    %c2 = arith.constant 2 : index
    %c0_32 = arith.constant 0 : index
    %c0_33 = arith.constant 0 : index
    %88 = vector.load %arg7[%c2, %c0_32, %c0_33] : memref<4x8x32xbf16, #tpu.memory_space<vmem>>, vector<1x8x32xbf16>
    %89 = vector.shape_cast %88 : vector<1x8x32xbf16> to vector<8x32xbf16>
    %cst_34 = arith.constant dense<0.000000e+00> : vector<33x32xf32>
    %90 = tpu.matmul %87, %89, %cst_34 {dimension_numbers = #tpu.dot_dimension_numbers<[1], [0], [0], [1], [0, 0, 1, 1], [], []>} : vector<33x8xbf16>, vector<8x32xbf16>, vector<33x32xf32> -> vector<33x32xf32>
    %91 = arith.addf %85, %90 : vector<33x32xf32>
    %92 = vector.extract_strided_slice %72 {offsets = [3, 0, 0], sizes = [1, 33, 8], strides = [1, 1, 1]} : vector<4x33x8xbf16> to vector<1x33x8xbf16>
    %93 = vector.shape_cast %92 : vector<1x33x8xbf16> to vector<33x8xbf16>
    %c3 = arith.constant 3 : index
    %c0_35 = arith.constant 0 : index
    %c0_36 = arith.constant 0 : index
    %94 = vector.load %arg7[%c3, %c0_35, %c0_36] : memref<4x8x32xbf16, #tpu.memory_space<vmem>>, vector<1x8x32xbf16>
    %95 = vector.shape_cast %94 : vector<1x8x32xbf16> to vector<8x32xbf16>
    %cst_37 = arith.constant dense<0.000000e+00> : vector<33x32xf32>
    %96 = tpu.matmul %93, %95, %cst_37 {dimension_numbers = #tpu.dot_dimension_numbers<[1], [0], [0], [1], [0, 0, 1, 1], [], []>} : vector<33x8xbf16>, vector<8x32xbf16>, vector<33x32xf32> -> vector<33x32xf32>
    %97 = arith.addf %91, %96 : vector<33x32xf32>
    %c0_38 = arith.constant 0 : index
    %c0_39 = arith.constant 0 : index
    %c0_40 = arith.constant 0 : index
    %98 = vector.load %arg8[%c0_38, %c0_39, %c0_40] : memref<1x33x32xf32, #tpu.memory_space<vmem>>, vector<1x33x32xf32>
    %99 = vector.shape_cast %98 : vector<1x33x32xf32> to vector<33x32xf32>
    %100 = vector.shape_cast %97 : vector<33x32xf32> to vector<1x33x32xf32>
    tpu.vector_store %arg8[%c0_38, %c0_39, %c0_40], %100 {strides = array<i32>} : memref<1x33x32xf32, #tpu.memory_space<vmem>>, vector<1x33x32xf32>,
    return
  }
  func.func @transform_0(%arg0: i32) -> (i32, i32, i32, i32) {
    %c0_i32 = arith.constant 0 : i32
    %c0_i32_0 = arith.constant 0 : i32
    %c0_i32_1 = arith.constant 0 : i32
    %c0_i32_2 = arith.constant 0 : i32
    return %arg0, %c0_i32, %c0_i32_0, %c0_i32_1 : i32, i32, i32, i32
  }
  func.func @transform_1(%arg0: i32) -> (i32, i32, i32, i32) {
    %c0_i32 = arith.constant 0 : i32
    %c0_i32_0 = arith.constant 0 : i32
    %c0_i32_1 = arith.constant 0 : i32
    %c0_i32_2 = arith.constant 0 : i32
    return %arg0, %c0_i32, %c0_i32_0, %c0_i32_1 : i32, i32, i32, i32
  }
  func.func @transform_2(%arg0: i32) -> (i32, i32, i32, i32) {
    %c0_i32 = arith.constant 0 : i32
    %c0_i32_0 = arith.constant 0 : i32
    %c0_i32_1 = arith.constant 0 : i32
    %c0_i32_2 = arith.constant 0 : i32
    return %arg0, %c0_i32, %c0_i32_0, %c0_i32_1 : i32, i32, i32, i32
  }
  func.func @transform_3(%arg0: i32) -> (i32, i32, i32) {
    %c0_i32 = arith.constant 0 : i32
    %c0_i32_0 = arith.constant 0 : i32
    %c0_i32_1 = arith.constant 0 : i32
    return %arg0, %c0_i32, %c0_i32_0 : i32, i32, i32
  }
  func.func @transform_4(%arg0: i32) -> (i32, i32) {
    %c0_i32 = arith.constant 0 : i32
    %c0_i32_0 = arith.constant 0 : i32
    %c0_i32_1 = arith.constant 0 : i32
    return %c0_i32, %c0_i32_0 : i32, i32
  }
  func.func @transform_5(%arg0: i32) -> (i32, i32) {
    %c0_i32 = arith.constant 0 : i32
    %c0_i32_0 = arith.constant 0 : i32
    %c0_i32_1 = arith.constant 0 : i32
    return %c0_i32, %c0_i32_0 : i32, i32
  }
  func.func @transform_6(%arg0: i32) -> (i32, i32, i32) {
    %c0_i32 = arith.constant 0 : i32
    %c0_i32_0 = arith.constant 0 : i32
    %c0_i32_1 = arith.constant 0 : i32
    %c0_i32_2 = arith.constant 0 : i32
    return %c0_i32, %c0_i32_0, %c0_i32_1 : i32, i32, i32
  }
  func.func @transform_7(%arg0: i32) -> (i32, i32, i32) {
    %c0_i32 = arith.constant 0 : i32
    %c0_i32_0 = arith.constant 0 : i32
    %c0_i32_1 = arith.constant 0 : i32
    return %arg0, %c0_i32, %c0_i32_0 : i32, i32, i32
  }
}

module attributes {stable_mosaic.version = 11 : i64} {
  func.func @_norm_linear_kernel(%arg0: i32, %arg1: memref<176x128xf32, #tpu.memory_space<vmem>>, %arg2: memref<1x128xf32, #tpu.memory_space<vmem>>, %arg3: memref<128x32xbf16, #tpu.memory_space<vmem>>, %arg4: memref<1x32xf32, #tpu.memory_space<vmem>>, %arg5: memref<176x32xf32, #tpu.memory_space<vmem>>) attributes {dimension_semantics = [#tpu.dimension_semantics<parallel>], iteration_bounds = array<i64: 3>, scalar_prefetch = 0 : i64, scratch_operands = 0 : i64, tpu.core_type = #tpu.core_type<tc>, window_params = [{transform_indices = @transform_0, window_bounds = array<i64: 176, 128>}, {pipeline_mode = #tpu.pipeline_mode<synchronous>, transform_indices = @transform_1, window_bounds = array<i64: 1, 128>}, {pipeline_mode = #tpu.pipeline_mode<synchronous>, transform_indices = @transform_2, window_bounds = array<i64: 128, 32>}, {pipeline_mode = #tpu.pipeline_mode<synchronous>, transform_indices = @transform_3, window_bounds = array<i64: 1, 32>}, {transform_indices = @transform_4, window_bounds = array<i64: 176, 32>}]} {
    %c0 = arith.constant 0 : index
    %c0_0 = arith.constant 0 : index
    %0 = vector.load %arg1[%c0, %c0_0] : memref<176x128xf32, #tpu.memory_space<vmem>>, vector<176x128xf32>
    %1 = arith.truncf %0 : vector<176x128xf32> to vector<176x128xbf16>
    %c0_1 = arith.constant 0 : index
    %c0_2 = arith.constant 0 : index
    %2 = vector.load %arg3[%c0_1, %c0_2] : memref<128x32xbf16, #tpu.memory_space<vmem>>, vector<128x32xbf16>
    %cst = arith.constant dense<0.000000e+00> : vector<176x32xf32>
    %3 = tpu.matmul %1, %2, %cst {dimension_numbers = #tpu.dot_dimension_numbers<[1], [0], [0], [1], [0, 0, 1, 1], [], []>} : vector<176x128xbf16>, vector<128x32xbf16>, vector<176x32xf32> -> vector<176x32xf32>
    %c0_3 = arith.constant 0 : index
    %c0_4 = arith.constant 0 : index
    %4 = vector.load %arg4[%c0_3, %c0_4] : memref<1x32xf32, #tpu.memory_space<vmem>>, vector<1x32xf32>
    %5 = vector.broadcast %4 : vector<1x32xf32> to vector<176x32xf32>
    %6 = arith.addf %3, %5 : vector<176x32xf32>
    %c0_5 = arith.constant 0 : index
    %c0_6 = arith.constant 0 : index
    %7 = vector.load %arg5[%c0_5, %c0_6] : memref<176x32xf32, #tpu.memory_space<vmem>>, vector<176x32xf32>
    tpu.vector_store %arg5[%c0_5, %c0_6], %6 {strides = array<i32>} : memref<176x32xf32, #tpu.memory_space<vmem>>, vector<176x32xf32>,
    return
  }
  func.func @transform_0(%arg0: i32) -> (i32, i32) {
    %c0_i32 = arith.constant 0 : i32
    %c0_i32_0 = arith.constant 0 : i32
    return %arg0, %c0_i32 : i32, i32
  }
  func.func @transform_1(%arg0: i32) -> (i32, i32) {
    %c0_i32 = arith.constant 0 : i32
    %c0_i32_0 = arith.constant 0 : i32
    %c0_i32_1 = arith.constant 0 : i32
    return %c0_i32, %c0_i32_0 : i32, i32
  }
  func.func @transform_2(%arg0: i32) -> (i32, i32) {
    %c0_i32 = arith.constant 0 : i32
    %c0_i32_0 = arith.constant 0 : i32
    %c0_i32_1 = arith.constant 0 : i32
    return %c0_i32, %c0_i32_0 : i32, i32
  }
  func.func @transform_3(%arg0: i32) -> (i32, i32) {
    %c0_i32 = arith.constant 0 : i32
    %c0_i32_0 = arith.constant 0 : i32
    %c0_i32_1 = arith.constant 0 : i32
    return %c0_i32, %c0_i32_0 : i32, i32
  }
  func.func @transform_4(%arg0: i32) -> (i32, i32) {
    %c0_i32 = arith.constant 0 : i32
    %c0_i32_0 = arith.constant 0 : i32
    return %arg0, %c0_i32 : i32, i32
  }
}

module attributes {stable_mosaic.version = 11 : i64} {
  func.func @_attention_kernel(%arg0: i32, %arg1: memref<1x4x8x8xf32, #tpu.memory_space<vmem>>, %arg2: memref<1x4x8x8xf32, #tpu.memory_space<vmem>>, %arg3: memref<1x4x8x8xf32, #tpu.memory_space<vmem>>, %arg4: memref<1x4x8xf32, #tpu.memory_space<vmem>>, %arg5: memref<8x4xf32, #tpu.memory_space<vmem>>, %arg6: memref<8x4xf32, #tpu.memory_space<vmem>>, %arg7: memref<4x8x32xbf16, #tpu.memory_space<vmem>>, %arg8: memref<1x8x32xf32, #tpu.memory_space<vmem>>) attributes {dimension_semantics = [#tpu.dimension_semantics<parallel>], iteration_bounds = array<i64: 66>, scalar_prefetch = 0 : i64, scratch_operands = 0 : i64, tpu.core_type = #tpu.core_type<tc>, window_params = [{transform_indices = @transform_0, window_bounds = array<i64: 1, 4, 8, 8>}, {transform_indices = @transform_1, window_bounds = array<i64: 1, 4, 8, 8>}, {transform_indices = @transform_2, window_bounds = array<i64: 1, 4, 8, 8>}, {transform_indices = @transform_3, window_bounds = array<i64: 1, 4, 8>}, {pipeline_mode = #tpu.pipeline_mode<synchronous>, transform_indices = @transform_4, window_bounds = array<i64: 8, 4>}, {pipeline_mode = #tpu.pipeline_mode<synchronous>, transform_indices = @transform_5, window_bounds = array<i64: 8, 4>}, {pipeline_mode = #tpu.pipeline_mode<synchronous>, transform_indices = @transform_6, window_bounds = array<i64: 4, 8, 32>}, {transform_indices = @transform_7, window_bounds = array<i64: 1, 8, 32>}]} {
    %c0 = arith.constant 0 : index
    %c0_0 = arith.constant 0 : index
    %0 = vector.load %arg5[%c0, %c0_0] : memref<8x4xf32, #tpu.memory_space<vmem>>, vector<8x4xf32>
    %c0_1 = arith.constant 0 : index
    %c0_2 = arith.constant 0 : index
    %1 = vector.load %arg6[%c0_1, %c0_2] : memref<8x4xf32, #tpu.memory_space<vmem>>, vector<8x4xf32>
    %c0_3 = arith.constant 0 : index
    %c0_4 = arith.constant 0 : index
    %c0_5 = arith.constant 0 : index
    %c0_6 = arith.constant 0 : index
    %2 = vector.load %arg1[%c0_3, %c0_4, %c0_5, %c0_6] : memref<1x4x8x8xf32, #tpu.memory_space<vmem>>, vector<1x4x8x8xf32>
    %3 = vector.shape_cast %2 : vector<1x4x8x8xf32> to vector<4x8x8xf32>
    %cst = arith.constant 0.353553385 : f32
    %4 = vector.broadcast %cst : f32 to vector<4x8x8xf32>
    %5 = arith.mulf %3, %4 : vector<4x8x8xf32>
    %c0_7 = arith.constant 0 : index
    %c0_8 = arith.constant 0 : index
    %c0_9 = arith.constant 0 : index
    %c0_10 = arith.constant 0 : index
    %6 = vector.load %arg2[%c0_7, %c0_8, %c0_9, %c0_10] : memref<1x4x8x8xf32, #tpu.memory_space<vmem>>, vector<1x4x8x8xf32>
    %7 = vector.shape_cast %6 : vector<1x4x8x8xf32> to vector<4x8x8xf32>
    %c0_11 = arith.constant 0 : index
    %c0_12 = arith.constant 0 : index
    %c0_13 = arith.constant 0 : index
    %c0_14 = arith.constant 0 : index
    %8 = vector.load %arg3[%c0_11, %c0_12, %c0_13, %c0_14] : memref<1x4x8x8xf32, #tpu.memory_space<vmem>>, vector<1x4x8x8xf32>
    %9 = vector.shape_cast %8 : vector<1x4x8x8xf32> to vector<4x8x8xf32>
    %10 = arith.truncf %9 : vector<4x8x8xf32> to vector<4x8x8xbf16>
    %11 = vector.extract_strided_slice %5 {offsets = [0, 0, 0], sizes = [4, 8, 4], strides = [1, 1, 1]} : vector<4x8x8xf32> to vector<4x8x4xf32>
    %12 = vector.extract_strided_slice %5 {offsets = [0, 0, 4], sizes = [4, 8, 4], strides = [1, 1, 1]} : vector<4x8x8xf32> to vector<4x8x4xf32>
    %13 = vector.extract_strided_slice %7 {offsets = [0, 0, 0], sizes = [4, 8, 4], strides = [1, 1, 1]} : vector<4x8x8xf32> to vector<4x8x4xf32>
    %14 = vector.extract_strided_slice %7 {offsets = [0, 0, 4], sizes = [4, 8, 4], strides = [1, 1, 1]} : vector<4x8x8xf32> to vector<4x8x4xf32>
    %15 = vector.shape_cast %0 : vector<8x4xf32> to vector<1x8x4xf32>
    %16 = vector.broadcast %15 : vector<1x8x4xf32> to vector<4x8x4xf32>
    %17 = arith.mulf %11, %16 : vector<4x8x4xf32>
    %18 = vector.shape_cast %1 : vector<8x4xf32> to vector<1x8x4xf32>
    %19 = vector.broadcast %18 : vector<1x8x4xf32> to vector<4x8x4xf32>
    %20 = arith.mulf %12, %19 : vector<4x8x4xf32>
    %21 = arith.subf %17, %20 : vector<4x8x4xf32>
    %22 = arith.truncf %21 : vector<4x8x4xf32> to vector<4x8x4xbf16>
    %23 = vector.shape_cast %0 : vector<8x4xf32> to vector<1x8x4xf32>
    %24 = vector.broadcast %23 : vector<1x8x4xf32> to vector<4x8x4xf32>
    %25 = arith.mulf %12, %24 : vector<4x8x4xf32>
    %26 = vector.shape_cast %1 : vector<8x4xf32> to vector<1x8x4xf32>
    %27 = vector.broadcast %26 : vector<1x8x4xf32> to vector<4x8x4xf32>
    %28 = arith.mulf %11, %27 : vector<4x8x4xf32>
    %29 = arith.addf %25, %28 : vector<4x8x4xf32>
    %30 = arith.truncf %29 : vector<4x8x4xf32> to vector<4x8x4xbf16>
    %31 = vector.shape_cast %0 : vector<8x4xf32> to vector<1x8x4xf32>
    %32 = vector.broadcast %31 : vector<1x8x4xf32> to vector<4x8x4xf32>
    %33 = arith.mulf %13, %32 : vector<4x8x4xf32>
    %34 = vector.shape_cast %1 : vector<8x4xf32> to vector<1x8x4xf32>
    %35 = vector.broadcast %34 : vector<1x8x4xf32> to vector<4x8x4xf32>
    %36 = arith.mulf %14, %35 : vector<4x8x4xf32>
    %37 = arith.subf %33, %36 : vector<4x8x4xf32>
    %38 = arith.truncf %37 : vector<4x8x4xf32> to vector<4x8x4xbf16>
    %39 = vector.shape_cast %0 : vector<8x4xf32> to vector<1x8x4xf32>
    %40 = vector.broadcast %39 : vector<1x8x4xf32> to vector<4x8x4xf32>
    %41 = arith.mulf %14, %40 : vector<4x8x4xf32>
    %42 = vector.shape_cast %1 : vector<8x4xf32> to vector<1x8x4xf32>
    %43 = vector.broadcast %42 : vector<1x8x4xf32> to vector<4x8x4xf32>
    %44 = arith.mulf %13, %43 : vector<4x8x4xf32>
    %45 = arith.addf %41, %44 : vector<4x8x4xf32>
    %46 = arith.truncf %45 : vector<4x8x4xf32> to vector<4x8x4xbf16>
    "tpu.trace_start"() <{level = 10 : i32, message = "hqd,hkd->hqk"}> : () -> ()
    %cst_15 = arith.constant dense<0.000000e+00> : vector<4x8x8xf32>
    %47 = tpu.matmul %22, %38, %cst_15 {dimension_numbers = #tpu.dot_dimension_numbers<[2], [2], [1], [1], [0, 0, 0, 1, 1, 1], [0], [0]>} : vector<4x8x4xbf16>, vector<4x8x4xbf16>, vector<4x8x8xf32> -> vector<4x8x8xf32>
    %cst_16 = arith.constant dense<0.000000e+00> : vector<4x8x8xf32>
    %48 = tpu.matmul %30, %46, %cst_16 {dimension_numbers = #tpu.dot_dimension_numbers<[2], [2], [1], [1], [0, 0, 0, 1, 1, 1], [0], [0]>} : vector<4x8x4xbf16>, vector<4x8x4xbf16>, vector<4x8x8xf32> -> vector<4x8x8xf32>
    "tpu.trace_stop"() : () -> ()
    %49 = arith.addf %47, %48 : vector<4x8x8xf32>
    %cst_17 = arith.constant dense<0xFF800000> : vector<4x8xf32>
    %50 = vector.multi_reduction <maximumf>, %49, %cst_17 [2] : vector<4x8x8xf32> to vector<4x8xf32>
    %51 = vector.shape_cast %50 : vector<4x8xf32> to vector<4x8x1xf32>
    %52 = vector.broadcast %51 : vector<4x8x1xf32> to vector<4x8x8xf32>
    %53 = arith.subf %49, %52 : vector<4x8x8xf32>
    %54 = math.exp %53 : vector<4x8x8xf32>
    %cst_18 = arith.constant dense<0.000000e+00> : vector<4x8xf32>
    %55 = vector.multi_reduction <add>, %54, %cst_18 [2] : vector<4x8x8xf32> to vector<4x8xf32>
    %56 = vector.shape_cast %55 : vector<4x8xf32> to vector<4x8x1xf32>
    %57 = arith.truncf %54 : vector<4x8x8xf32> to vector<4x8x8xbf16>
    "tpu.trace_start"() <{level = 10 : i32, message = "hqk,hkd->hqd"}> : () -> ()
    %cst_19 = arith.constant dense<0.000000e+00> : vector<4x8x8xf32>
    %58 = tpu.matmul %57, %10, %cst_19 {dimension_numbers = #tpu.dot_dimension_numbers<[2], [1], [1], [2], [0, 0, 0, 1, 1, 2], [0], [0]>} : vector<4x8x8xbf16>, vector<4x8x8xbf16>, vector<4x8x8xf32> -> vector<4x8x8xf32>
    "tpu.trace_stop"() : () -> ()
    %59 = tpu.reciprocal %56 {approx = true} : vector<4x8x1xf32> -> vector<4x8x1xf32>
    %60 = vector.broadcast %59 : vector<4x8x1xf32> to vector<4x8x8xf32>
    %61 = arith.mulf %58, %60 : vector<4x8x8xf32>
    %c0_20 = arith.constant 0 : index
    %c0_21 = arith.constant 0 : index
    %c0_22 = arith.constant 0 : index
    %62 = vector.load %arg4[%c0_20, %c0_21, %c0_22] : memref<1x4x8xf32, #tpu.memory_space<vmem>>, vector<1x4x8xf32>
    %63 = vector.shape_cast %62 : vector<1x4x8xf32> to vector<4x8xf32>
    %64 = arith.negf %63 : vector<4x8xf32>
    %65 = math.exp %64 : vector<4x8xf32>
    %cst_23 = arith.constant 1.000000e+00 : f32
    %66 = vector.broadcast %cst_23 : f32 to vector<4x8xf32>
    %67 = arith.addf %66, %65 : vector<4x8xf32>
    %68 = arith.divf %66, %67 : vector<4x8xf32>
    %69 = vector.shape_cast %68 : vector<4x8xf32> to vector<4x8x1xf32>
    %70 = vector.broadcast %69 : vector<4x8x1xf32> to vector<4x8x8xf32>
    %71 = arith.mulf %61, %70 : vector<4x8x8xf32>
    %72 = arith.truncf %71 : vector<4x8x8xf32> to vector<4x8x8xbf16>
    %cst_24 = arith.constant 0.000000e+00 : f32
    %73 = vector.broadcast %cst_24 : f32 to vector<8x32xf32>
    %74 = vector.extract_strided_slice %72 {offsets = [0, 0, 0], sizes = [1, 8, 8], strides = [1, 1, 1]} : vector<4x8x8xbf16> to vector<1x8x8xbf16>
    %75 = vector.shape_cast %74 : vector<1x8x8xbf16> to vector<8x8xbf16>
    %c0_25 = arith.constant 0 : index
    %c0_26 = arith.constant 0 : index
    %c0_27 = arith.constant 0 : index
    %76 = vector.load %arg7[%c0_25, %c0_26, %c0_27] : memref<4x8x32xbf16, #tpu.memory_space<vmem>>, vector<1x8x32xbf16>
    %77 = vector.shape_cast %76 : vector<1x8x32xbf16> to vector<8x32xbf16>
    %cst_28 = arith.constant dense<0.000000e+00> : vector<8x32xf32>
    %78 = tpu.matmul %75, %77, %cst_28 {dimension_numbers = #tpu.dot_dimension_numbers<[1], [0], [0], [1], [0, 0, 1, 1], [], []>} : vector<8x8xbf16>, vector<8x32xbf16>, vector<8x32xf32> -> vector<8x32xf32>
    %79 = arith.addf %73, %78 : vector<8x32xf32>
    %80 = vector.extract_strided_slice %72 {offsets = [1, 0, 0], sizes = [1, 8, 8], strides = [1, 1, 1]} : vector<4x8x8xbf16> to vector<1x8x8xbf16>
    %81 = vector.shape_cast %80 : vector<1x8x8xbf16> to vector<8x8xbf16>
    %c1 = arith.constant 1 : index
    %c0_29 = arith.constant 0 : index
    %c0_30 = arith.constant 0 : index
    %82 = vector.load %arg7[%c1, %c0_29, %c0_30] : memref<4x8x32xbf16, #tpu.memory_space<vmem>>, vector<1x8x32xbf16>
    %83 = vector.shape_cast %82 : vector<1x8x32xbf16> to vector<8x32xbf16>
    %cst_31 = arith.constant dense<0.000000e+00> : vector<8x32xf32>
    %84 = tpu.matmul %81, %83, %cst_31 {dimension_numbers = #tpu.dot_dimension_numbers<[1], [0], [0], [1], [0, 0, 1, 1], [], []>} : vector<8x8xbf16>, vector<8x32xbf16>, vector<8x32xf32> -> vector<8x32xf32>
    %85 = arith.addf %79, %84 : vector<8x32xf32>
    %86 = vector.extract_strided_slice %72 {offsets = [2, 0, 0], sizes = [1, 8, 8], strides = [1, 1, 1]} : vector<4x8x8xbf16> to vector<1x8x8xbf16>
    %87 = vector.shape_cast %86 : vector<1x8x8xbf16> to vector<8x8xbf16>
    %c2 = arith.constant 2 : index
    %c0_32 = arith.constant 0 : index
    %c0_33 = arith.constant 0 : index
    %88 = vector.load %arg7[%c2, %c0_32, %c0_33] : memref<4x8x32xbf16, #tpu.memory_space<vmem>>, vector<1x8x32xbf16>
    %89 = vector.shape_cast %88 : vector<1x8x32xbf16> to vector<8x32xbf16>
    %cst_34 = arith.constant dense<0.000000e+00> : vector<8x32xf32>
    %90 = tpu.matmul %87, %89, %cst_34 {dimension_numbers = #tpu.dot_dimension_numbers<[1], [0], [0], [1], [0, 0, 1, 1], [], []>} : vector<8x8xbf16>, vector<8x32xbf16>, vector<8x32xf32> -> vector<8x32xf32>
    %91 = arith.addf %85, %90 : vector<8x32xf32>
    %92 = vector.extract_strided_slice %72 {offsets = [3, 0, 0], sizes = [1, 8, 8], strides = [1, 1, 1]} : vector<4x8x8xbf16> to vector<1x8x8xbf16>
    %93 = vector.shape_cast %92 : vector<1x8x8xbf16> to vector<8x8xbf16>
    %c3 = arith.constant 3 : index
    %c0_35 = arith.constant 0 : index
    %c0_36 = arith.constant 0 : index
    %94 = vector.load %arg7[%c3, %c0_35, %c0_36] : memref<4x8x32xbf16, #tpu.memory_space<vmem>>, vector<1x8x32xbf16>
    %95 = vector.shape_cast %94 : vector<1x8x32xbf16> to vector<8x32xbf16>
    %cst_37 = arith.constant dense<0.000000e+00> : vector<8x32xf32>
    %96 = tpu.matmul %93, %95, %cst_37 {dimension_numbers = #tpu.dot_dimension_numbers<[1], [0], [0], [1], [0, 0, 1, 1], [], []>} : vector<8x8xbf16>, vector<8x32xbf16>, vector<8x32xf32> -> vector<8x32xf32>
    %97 = arith.addf %91, %96 : vector<8x32xf32>
    %c0_38 = arith.constant 0 : index
    %c0_39 = arith.constant 0 : index
    %c0_40 = arith.constant 0 : index
    %98 = vector.load %arg8[%c0_38, %c0_39, %c0_40] : memref<1x8x32xf32, #tpu.memory_space<vmem>>, vector<1x8x32xf32>
    %99 = vector.shape_cast %98 : vector<1x8x32xf32> to vector<8x32xf32>
    %100 = vector.shape_cast %97 : vector<8x32xf32> to vector<1x8x32xf32>
    tpu.vector_store %arg8[%c0_38, %c0_39, %c0_40], %100 {strides = array<i32>} : memref<1x8x32xf32, #tpu.memory_space<vmem>>, vector<1x8x32xf32>,
    return
  }
  func.func @transform_0(%arg0: i32) -> (i32, i32, i32, i32) {
    %c0_i32 = arith.constant 0 : i32
    %c0_i32_0 = arith.constant 0 : i32
    %c0_i32_1 = arith.constant 0 : i32
    %c0_i32_2 = arith.constant 0 : i32
    return %arg0, %c0_i32, %c0_i32_0, %c0_i32_1 : i32, i32, i32, i32
  }
  func.func @transform_1(%arg0: i32) -> (i32, i32, i32, i32) {
    %c0_i32 = arith.constant 0 : i32
    %c0_i32_0 = arith.constant 0 : i32
    %c0_i32_1 = arith.constant 0 : i32
    %c0_i32_2 = arith.constant 0 : i32
    return %arg0, %c0_i32, %c0_i32_0, %c0_i32_1 : i32, i32, i32, i32
  }
  func.func @transform_2(%arg0: i32) -> (i32, i32, i32, i32) {
    %c0_i32 = arith.constant 0 : i32
    %c0_i32_0 = arith.constant 0 : i32
    %c0_i32_1 = arith.constant 0 : i32
    %c0_i32_2 = arith.constant 0 : i32
    return %arg0, %c0_i32, %c0_i32_0, %c0_i32_1 : i32, i32, i32, i32
  }
  func.func @transform_3(%arg0: i32) -> (i32, i32, i32) {
    %c0_i32 = arith.constant 0 : i32
    %c0_i32_0 = arith.constant 0 : i32
    %c0_i32_1 = arith.constant 0 : i32
    return %arg0, %c0_i32, %c0_i32_0 : i32, i32, i32
  }
  func.func @transform_4(%arg0: i32) -> (i32, i32) {
    %c0_i32 = arith.constant 0 : i32
    %c0_i32_0 = arith.constant 0 : i32
    %c0_i32_1 = arith.constant 0 : i32
    return %c0_i32, %c0_i32_0 : i32, i32
  }
  func.func @transform_5(%arg0: i32) -> (i32, i32) {
    %c0_i32 = arith.constant 0 : i32
    %c0_i32_0 = arith.constant 0 : i32
    %c0_i32_1 = arith.constant 0 : i32
    return %c0_i32, %c0_i32_0 : i32, i32
  }
  func.func @transform_6(%arg0: i32) -> (i32, i32, i32) {
    %c0_i32 = arith.constant 0 : i32
    %c0_i32_0 = arith.constant 0 : i32
    %c0_i32_1 = arith.constant 0 : i32
    %c0_i32_2 = arith.constant 0 : i32
    return %c0_i32, %c0_i32_0, %c0_i32_1 : i32, i32, i32
  }
  func.func @transform_7(%arg0: i32) -> (i32, i32, i32) {
    %c0_i32 = arith.constant 0 : i32
    %c0_i32_0 = arith.constant 0 : i32
    %c0_i32_1 = arith.constant 0 : i32
    return %arg0, %c0_i32, %c0_i32_0 : i32, i32, i32
  }
}

module attributes {stable_mosaic.version = 11 : i64} {
  func.func @_mask_estimator_kernel(%arg0: i32, %arg1: memref<1x66x32xf32, #tpu.memory_space<vmem>>, %arg2: memref<1x32xf32, #tpu.memory_space<vmem>>, %arg3: memref<1x32x128xbf16, #tpu.memory_space<vmem>>, %arg4: memref<1x1x128xf32, #tpu.memory_space<vmem>>, %arg5: memref<1x128x12xbf16, #tpu.memory_space<vmem>>, %arg6: memref<1x1x12xf32, #tpu.memory_space<vmem>>, %arg7: memref<1x66x6xf32, #tpu.memory_space<vmem>>) attributes {dimension_semantics = [#tpu.dimension_semantics<parallel>], iteration_bounds = array<i64: 8>, scalar_prefetch = 0 : i64, scratch_operands = 0 : i64, tpu.core_type = #tpu.core_type<tc>, window_params = [{transform_indices = @transform_0, window_bounds = array<i64: 1, 66, 32>}, {pipeline_mode = #tpu.pipeline_mode<synchronous>, transform_indices = @transform_1, window_bounds = array<i64: 1, 32>}, {transform_indices = @transform_2, window_bounds = array<i64: 1, 32, 128>}, {transform_indices = @transform_3, window_bounds = array<i64: 1, 1, 128>}, {transform_indices = @transform_4, window_bounds = array<i64: 1, 128, 12>}, {transform_indices = @transform_5, window_bounds = array<i64: 1, 1, 12>}, {transform_indices = @transform_6, window_bounds = array<i64: 1, 66, 6>}]} {
    %c0 = arith.constant 0 : index
    %c0_0 = arith.constant 0 : index
    %c0_1 = arith.constant 0 : index
    %0 = vector.load %arg1[%c0, %c0_0, %c0_1] : memref<1x66x32xf32, #tpu.memory_space<vmem>>, vector<1x66x32xf32>
    %1 = vector.shape_cast %0 : vector<1x66x32xf32> to vector<66x32xf32>
    %2 = arith.mulf %1, %1 : vector<66x32xf32>
    %cst = arith.constant dense<0.000000e+00> : vector<66xf32>
    %3 = vector.multi_reduction <add>, %2, %cst [1] : vector<66x32xf32> to vector<66xf32>
    %4 = vector.shape_cast %3 : vector<66xf32> to vector<66x1xf32>
    %5 = math.sqrt %4 : vector<66x1xf32>
    %cst_2 = arith.constant 9.99999996E-13 : f32
    %6 = vector.broadcast %cst_2 : f32 to vector<66x1xf32>
    %7 = arith.maximumf %5, %6 : vector<66x1xf32>
    %8 = vector.broadcast %7 : vector<66x1xf32> to vector<66x32xf32>
    %9 = arith.divf %1, %8 : vector<66x32xf32>
    %c0_3 = arith.constant 0 : index
    %c0_4 = arith.constant 0 : index
    %10 = vector.load %arg2[%c0_3, %c0_4] : memref<1x32xf32, #tpu.memory_space<vmem>>, vector<1x32xf32>
    %11 = vector.broadcast %10 : vector<1x32xf32> to vector<66x32xf32>
    %12 = arith.mulf %9, %11 : vector<66x32xf32>
    %13 = arith.truncf %12 : vector<66x32xf32> to vector<66x32xbf16>
    %c0_5 = arith.constant 0 : index
    %c0_6 = arith.constant 0 : index
    %c0_7 = arith.constant 0 : index
    %14 = vector.load %arg3[%c0_5, %c0_6, %c0_7] : memref<1x32x128xbf16, #tpu.memory_space<vmem>>, vector<1x32x128xbf16>
    %15 = vector.shape_cast %14 : vector<1x32x128xbf16> to vector<32x128xbf16>
    %cst_8 = arith.constant dense<0.000000e+00> : vector<66x128xf32>
    %16 = tpu.matmul %13, %15, %cst_8 {dimension_numbers = #tpu.dot_dimension_numbers<[1], [0], [0], [1], [0, 0, 1, 1], [], []>} : vector<66x32xbf16>, vector<32x128xbf16>, vector<66x128xf32> -> vector<66x128xf32>
    %c0_9 = arith.constant 0 : index
    %c0_10 = arith.constant 0 : index
    %c0_11 = arith.constant 0 : index
    %17 = vector.load %arg4[%c0_9, %c0_10, %c0_11] : memref<1x1x128xf32, #tpu.memory_space<vmem>>, vector<1x1x128xf32>
    %18 = vector.shape_cast %17 : vector<1x1x128xf32> to vector<1x128xf32>
    %19 = vector.broadcast %18 : vector<1x128xf32> to vector<66x128xf32>
    %20 = arith.addf %16, %19 : vector<66x128xf32>
    %21 = math.tanh %20 : vector<66x128xf32>
    %22 = arith.truncf %21 : vector<66x128xf32> to vector<66x128xbf16>
    %c0_12 = arith.constant 0 : index
    %c0_13 = arith.constant 0 : index
    %c0_14 = arith.constant 0 : index
    %23 = vector.load %arg5[%c0_12, %c0_13, %c0_14] : memref<1x128x12xbf16, #tpu.memory_space<vmem>>, vector<1x128x12xbf16>
    %24 = vector.shape_cast %23 : vector<1x128x12xbf16> to vector<128x12xbf16>
    %cst_15 = arith.constant dense<0.000000e+00> : vector<66x12xf32>
    %25 = tpu.matmul %22, %24, %cst_15 {dimension_numbers = #tpu.dot_dimension_numbers<[1], [0], [0], [1], [0, 0, 1, 1], [], []>} : vector<66x128xbf16>, vector<128x12xbf16>, vector<66x12xf32> -> vector<66x12xf32>
    %c0_16 = arith.constant 0 : index
    %c0_17 = arith.constant 0 : index
    %c0_18 = arith.constant 0 : index
    %26 = vector.load %arg6[%c0_16, %c0_17, %c0_18] : memref<1x1x12xf32, #tpu.memory_space<vmem>>, vector<1x1x12xf32>
    %27 = vector.shape_cast %26 : vector<1x1x12xf32> to vector<1x12xf32>
    %28 = vector.broadcast %27 : vector<1x12xf32> to vector<66x12xf32>
    %29 = arith.addf %25, %28 : vector<66x12xf32>
    %30 = vector.extract_strided_slice %29 {offsets = [0, 0], sizes = [66, 6], strides = [1, 1]} : vector<66x12xf32> to vector<66x6xf32>
    %31 = vector.extract_strided_slice %29 {offsets = [0, 6], sizes = [66, 6], strides = [1, 1]} : vector<66x12xf32> to vector<66x6xf32>
    %32 = arith.negf %31 : vector<66x6xf32>
    %33 = math.exp %32 : vector<66x6xf32>
    %cst_19 = arith.constant 1.000000e+00 : f32
    %34 = vector.broadcast %cst_19 : f32 to vector<66x6xf32>
    %35 = arith.addf %34, %33 : vector<66x6xf32>
    %36 = arith.divf %34, %35 : vector<66x6xf32>
    %37 = arith.mulf %30, %36 : vector<66x6xf32>
    %c0_20 = arith.constant 0 : index
    %c0_21 = arith.constant 0 : index
    %c0_22 = arith.constant 0 : index
    %38 = vector.load %arg7[%c0_20, %c0_21, %c0_22] : memref<1x66x6xf32, #tpu.memory_space<vmem>>, vector<1x66x6xf32>
    %39 = vector.shape_cast %38 : vector<1x66x6xf32> to vector<66x6xf32>
    %40 = vector.shape_cast %37 : vector<66x6xf32> to vector<1x66x6xf32>
    tpu.vector_store %arg7[%c0_20, %c0_21, %c0_22], %40 {strides = array<i32>} : memref<1x66x6xf32, #tpu.memory_space<vmem>>, vector<1x66x6xf32>,
    return
  }
  func.func @transform_0(%arg0: i32) -> (i32, i32, i32) {
    %c0_i32 = arith.constant 0 : i32
    %c0_i32_0 = arith.constant 0 : i32
    %c0_i32_1 = arith.constant 0 : i32
    return %arg0, %c0_i32, %c0_i32_0 : i32, i32, i32
  }
  func.func @transform_1(%arg0: i32) -> (i32, i32) {
    %c0_i32 = arith.constant 0 : i32
    %c0_i32_0 = arith.constant 0 : i32
    %c0_i32_1 = arith.constant 0 : i32
    return %c0_i32, %c0_i32_0 : i32, i32
  }
  func.func @transform_2(%arg0: i32) -> (i32, i32, i32) {
    %c0_i32 = arith.constant 0 : i32
    %c0_i32_0 = arith.constant 0 : i32
    %c0_i32_1 = arith.constant 0 : i32
    return %arg0, %c0_i32, %c0_i32_0 : i32, i32, i32
  }
  func.func @transform_3(%arg0: i32) -> (i32, i32, i32) {
    %c0_i32 = arith.constant 0 : i32
    %c0_i32_0 = arith.constant 0 : i32
    %c0_i32_1 = arith.constant 0 : i32
    return %arg0, %c0_i32, %c0_i32_0 : i32, i32, i32
  }
  func.func @transform_4(%arg0: i32) -> (i32, i32, i32) {
    %c0_i32 = arith.constant 0 : i32
    %c0_i32_0 = arith.constant 0 : i32
    %c0_i32_1 = arith.constant 0 : i32
    return %arg0, %c0_i32, %c0_i32_0 : i32, i32, i32
  }
  func.func @transform_5(%arg0: i32) -> (i32, i32, i32) {
    %c0_i32 = arith.constant 0 : i32
    %c0_i32_0 = arith.constant 0 : i32
    %c0_i32_1 = arith.constant 0 : i32
    return %arg0, %c0_i32, %c0_i32_0 : i32, i32, i32
  }
  func.func @transform_6(%arg0: i32) -> (i32, i32, i32) {
    %c0_i32 = arith.constant 0 : i32
    %c0_i32_0 = arith.constant 0 : i32
    %c0_i32_1 = arith.constant 0 : i32
    return %arg0, %c0_i32, %c0_i32_0 : i32, i32, i32
  }
}

</mosaic_0001>

<llo_original>
// kernel: bs_roformer_forward.10
$region0: #{bs_roformer_forward.10}
  #allocation0 [shape = 'u32[]', space=smem, size = 0x4, offset = 0x4, fixed_abs, tag = 'smem constant byte address 0x4 - core index']
  #allocation1 [shape = 'u32[144,128]{1,0:T(1,128)}', space=vmem, size = 0x12000, scoped, tag = 'internal scratch']
  %s0 = inlined_call_operand.vmem [shape: f32[8,66,6], index: 0, kind: input, shape index: {}]
  %s1 = inlined_call_operand.vmem [shape: f32[8,1,6], index: 1, kind: input, shape index: {}]
  %s2 = inlined_call_operand.vmem [shape: bf16[8,6,32], index: 2, kind: input, shape index: {}]
  %s3 = inlined_call_operand.vmem [shape: f32[8,1,32], index: 3, kind: input, shape index: {}]
  %s4 = inlined_call_operand.vmem [shape: f32[8,66,32], index: 4, kind: output, shape index: {}]
  %s5 = sld [smem:[#allocation0]]
  $region49: #{bs_roformer_forward.10} parent=0
    _
  %s7 = ssub.s32 1, %s5
  %s8 = scalar_select 0, %s7, %s5
  loop: start=0, step=1, limit=10
  $region2: #{bs_roformer_forward.10} parent=0 // loop_pre_header
    _
  $region3: #{bs_roformer_forward.10} parent=0 // loop_header
    %s10 = sphi 0, %s14
    %p11 = scmp.ge.s32.totalorder %s10, 10
    %s20 = sphi 0, %s22
    %s23 = sphi 0, %s20
    %s24 = sphi 0, %s23
    %s40 = sphi 0, %s24
    %s46 = sphi 0, %s48
    %s49 = sphi 0, %s46
    %s50 = sphi 0, %s49
    %s66 = sphi 0, %s50
    %s72 = sphi 0, %s74
    %s75 = sphi 0, %s72
    %s76 = sphi 0, %s75
    %s92 = sphi 0, %s76
    %s98 = sphi 0, %s100
    %s101 = sphi 0, %s98
    %s102 = sphi 0, %s101
    %s118 = sphi 0, %s102
    %s124 = sphi 0, %s126
    %s127 = sphi 0, %s124
    %s128 = sphi 0, %s127
    %s144 = sphi 0, %s128
  $region4: #{bs_roformer_forward.10} parent=0 // loop_header_branch
    %13 = sbr.rel (%p11) target = $region8
  $region5: #{bs_roformer_forward.10} parent=0 // loop_body
    %s15 = ssub.s32 %s10, 1
    %s16 = ssub.s32 %s10, 2
    %s17 = sadd.s32 %s10, 1
    %s18 = ssub.s32 %s10, %s17
    %p19 = scmp.eq.s32.totalorder %s18, 0
    %s21 = sadd.s32 %s20, 1
    %s22 = scalar_select %p19, %s20, %s21
    %p25 = pneg %p19
    %p26 = scmp.eq.s32.totalorder %s10, 7
    %p27 = por %p25, %p26
    %p28 = scmp.ne.s32.totalorder %s20, %s23
    %p29 = scmp.eq.s32.totalorder %s10, 0
    %p30 = por %p28, %p29
    %p31 = scmp.ne.s32.totalorder %s20, %s23
    %p32 = scmp.eq.s32.totalorder %s15, 7
    %p33 = por %p31, %p32
    %p34 = scmp.ne.s32.totalorder %s23, %s24
    %p35 = scmp.eq.s32.totalorder %s15, 0
    %p36 = por %p34, %p35
    %p37 = scmp.ne.s32.totalorder %s23, %s24
    %p38 = scmp.eq.s32.totalorder %s16, 7
    %p39 = por %p37, %p38
    %p41 = scmp.ne.s32.totalorder %s24, %s40
    %p42 = scmp.eq.s32.totalorder %s16, 0
    %p43 = por %p41, %p42
    %s44 = ssub.s32 %s10, %s17
    %p45 = scmp.eq.s32.totalorder %s44, 0
    %s47 = sadd.s32 %s46, 1
    %s48 = scalar_select %p45, %s46, %s47
    %p51 = pneg %p45
    %p52 = scmp.eq.s32.totalorder %s10, 7
    %p53 = por %p51, %p52
    %p54 = scmp.ne.s32.totalorder %s46, %s49
    %p55 = scmp.eq.s32.totalorder %s10, 0
    %p56 = por %p54, %p55
    %p57 = scmp.ne.s32.totalorder %s46, %s49
    %p58 = scmp.eq.s32.totalorder %s15, 7
    %p59 = por %p57, %p58
    %p60 = scmp.ne.s32.totalorder %s49, %s50
    %p61 = scmp.eq.s32.totalorder %s15, 0
    %p62 = por %p60, %p61
    %p63 = scmp.ne.s32.totalorder %s49, %s50
    %p64 = scmp.eq.s32.totalorder %s16, 7
    %p65 = por %p63, %p64
    %p67 = scmp.ne.s32.totalorder %s50, %s66
    %p68 = scmp.eq.s32.totalorder %s16, 0
    %p69 = por %p67, %p68
    %s70 = ssub.s32 %s10, %s17
    %p71 = scmp.eq.s32.totalorder %s70, 0
    %s73 = sadd.s32 %s72, 1
    %s74 = scalar_select %p71, %s72, %s73
    %p77 = pneg %p71
    %p78 = scmp.eq.s32.totalorder %s10, 7
    %p79 = por %p77, %p78
    %p80 = scmp.ne.s32.totalorder %s72, %s75
    %p81 = scmp.eq.s32.totalorder %s10, 0
    %p82 = por %p80, %p81
    %p83 = scmp.ne.s32.totalorder %s72, %s75
    %p84 = scmp.eq.s32.totalorder %s15, 7
    %p85 = por %p83, %p84
    %p86 = scmp.ne.s32.totalorder %s75, %s76
    %p87 = scmp.eq.s32.totalorder %s15, 0
    %p88 = por %p86, %p87
    %p89 = scmp.ne.s32.totalorder %s75, %s76
    %p90 = scmp.eq.s32.totalorder %s16, 7
    %p91 = por %p89, %p90
    %p93 = scmp.ne.s32.totalorder %s76, %s92
    %p94 = scmp.eq.s32.totalorder %s16, 0
    %p95 = por %p93, %p94
    %s96 = ssub.s32 %s10, %s17
    %p97 = scmp.eq.s32.totalorder %s96, 0
    %s99 = sadd.s32 %s98, 1
    %s100 = scalar_select %p97, %s98, %s99
    %p103 = pneg %p97
    %p104 = scmp.eq.s32.totalorder %s10, 7
    %p105 = por %p103, %p104
    %p106 = scmp.ne.s32.totalorder %s98, %s101
    %p107 = scmp.eq.s32.totalorder %s10, 0
    %p108 = por %p106, %p107
    %p109 = scmp.ne.s32.totalorder %s98, %s101
    %p110 = scmp.eq.s32.totalorder %s15, 7
    %p111 = por %p109, %p110
    %p112 = scmp.ne.s32.totalorder %s101, %s102
    %p113 = scmp.eq.s32.totalorder %s15, 0
    %p114 = por %p112, %p113
    %p115 = scmp.ne.s32.totalorder %s101, %s102
    %p116 = scmp.eq.s32.totalorder %s16, 7
    %p117 = por %p115, %p116
    %p119 = scmp.ne.s32.totalorder %s102, %s118
    %p120 = scmp.eq.s32.totalorder %s16, 0
    %p121 = por %p119, %p120
    %s122 = ssub.s32 %s10, %s17
    %p123 = scmp.eq.s32.totalorder %s122, 0
    %s125 = sadd.s32 %s124, 1
    %s126 = scalar_select %p123, %s124, %s125
    %p129 = pneg %p123
    %p130 = scmp.eq.s32.totalorder %s10, 7
    %p131 = por %p129, %p130
    %p132 = scmp.ne.s32.totalorder %s124, %s127
    %p133 = scmp.eq.s32.totalorder %s10, 0
    %p134 = por %p132, %p133
    %p135 = scmp.ne.s32.totalorder %s124, %s127
    %p136 = scmp.eq.s32.totalorder %s15, 7
    %p137 = por %p135, %p136
    %p138 = scmp.ne.s32.totalorder %s127, %s128
    %p139 = scmp.eq.s32.totalorder %s15, 0
    %p140 = por %p138, %p139
    %p141 = scmp.ne.s32.totalorder %s127, %s128
    %p142 = scmp.eq.s32.totalorder %s16, 7
    %p143 = por %p141, %p142
    %p145 = scmp.ne.s32.totalorder %s128, %s144
    %p146 = scmp.eq.s32.totalorder %s16, 0
    %p147 = por %p145, %p146
    %p148 = scmp.le.s32.totalorder 1, %s10
    %p149 = scmp.lt.s32.totalorder %s10, 9
    %p150 = pnand %p148, %p149
    %p151 = pneg %p150
    // Predicated region
    $region9: #{bs_roformer_forward.10} parent=5 // pred_check
      _
    $region10: #{bs_roformer_forward.10} parent=5 // pred_check_branch
      %153 = sbr.rel (%p150) target = $region12
    $region11: #{bs_roformer_forward.10} parent=5 // pred_region
      %s154 = ssub.s32 %s10, 1
    $region12: #{bs_roformer_forward.10} parent=5 // pred_fallthru
      _
    %p155 = scmp.lt.s32.totalorder %s10, 8
    // Predicated region
    $region13: #{bs_roformer_forward.10} parent=5 // pred_check
      %p156 = pneg %p155
    $region14: #{bs_roformer_forward.10} parent=5 // pred_check_branch
      %158 = sbr.rel (%p156) target = $region16
    $region15: #{bs_roformer_forward.10} parent=5 // pred_region
      // Predicated region
      $region17: #{bs_roformer_forward.10} parent=15 // pred_check
        %p159 = pneg %p30
      $region18: #{bs_roformer_forward.10} parent=15 // pred_check_branch
        %161 = sbr.rel (%p159) target = $region20
      $region19: #{bs_roformer_forward.10} parent=15 // pred_region
        %p162 = scmp.lt.s32.totalorder %s10, 7
        %s163 = scalar_select %p162, %s10, 7
        %s164 = smul.addr %s163, 9
        %s165 = smul.addr %s164, 8
        %s166 = scalar_lea.vmem %s0, %s165
      $region20: #{bs_roformer_forward.10} parent=15 // pred_fallthru
        _
      // Predicated region
      $region21: #{bs_roformer_forward.10} parent=15 // pred_check
        %p167 = pneg %p56
      $region22: #{bs_roformer_forward.10} parent=15 // pred_check_branch
        %169 = sbr.rel (%p167) target = $region24
      $region23: #{bs_roformer_forward.10} parent=15 // pred_region
        %p170 = scmp.lt.s32.totalorder %s10, 7
        %s171 = scalar_select %p170, %s10, 7
        %s172 = scalar_lea.vmem %s1, %s171
      $region24: #{bs_roformer_forward.10} parent=15 // pred_fallthru
        _
      // Predicated region
      $region25: #{bs_roformer_forward.10} parent=15 // pred_check
        %p173 = pneg %p82
      $region26: #{bs_roformer_forward.10} parent=15 // pred_check_branch
        %175 = sbr.rel (%p173) target = $region28
      $region27: #{bs_roformer_forward.10} parent=15 // pred_region
        %p176 = scmp.lt.s32.totalorder %s10, 7
        %s177 = scalar_select %p176, %s10, 7
        %s178 = smul.addr %s177, 4
        %s179 = scalar_lea.vmem %s2, %s178
      $region28: #{bs_roformer_forward.10} parent=15 // pred_fallthru
        _
      // Predicated region
      $region29: #{bs_roformer_forward.10} parent=15 // pred_check
        %p180 = pneg %p108
      $region30: #{bs_roformer_forward.10} parent=15 // pred_check_branch
        %182 = sbr.rel (%p180) target = $region32
      $region31: #{bs_roformer_forward.10} parent=15 // pred_region
        %p183 = scmp.lt.s32.totalorder %s10, 7
        %s184 = scalar_select %p183, %s10, 7
        %s185 = scalar_lea.vmem %s3, %s184
      $region32: #{bs_roformer_forward.10} parent=15 // pred_fallthru
        _
    $region16: #{bs_roformer_forward.10} parent=5 // pred_fallthru
      _
    %p186 = scmp.le.s32.totalorder 1, %s10
    %p187 = scmp.lt.s32.totalorder %s10, 9
    %p188 = pnand %p186, %p187
    %p189 = pneg %p188
    // Predicated region
    $region33: #{bs_roformer_forward.10} parent=5 // pred_check
      _
    $region34: #{bs_roformer_forward.10} parent=5 // pred_check_branch
      %191 = sbr.rel (%p188) target = $region36
    $region35: #{bs_roformer_forward.10} parent=5 // pred_region
      %s192 = ssub.s32 %s10, 1
      %p193 = scmp.lt.s32.totalorder %s15, 7
      %s194 = scalar_select %p193, %s15, 7
      %s195 = smul.addr %s194, 9
      %s196 = smul.addr %s195, 8
      %s197 = scalar_lea.vmem %s0, %s196
      %p198 = pneg %p36
      %p199 = pneg %p33
      %p200 = scmp.lt.s32.totalorder %s15, 7
      %s201 = scalar_select %p200, %s15, 7
      %s202 = scalar_lea.vmem %s1, %s201
      %p203 = pneg %p62
      %p204 = pneg %p59
      %p205 = scmp.lt.s32.totalorder %s15, 7
      %s206 = scalar_select %p205, %s15, 7
      %s207 = smul.addr %s206, 4
      %s208 = scalar_lea.vmem %s2, %s207
      %p209 = pneg %p88
      %p210 = pneg %p85
      %p211 = scmp.lt.s32.totalorder %s15, 7
      %s212 = scalar_select %p211, %s15, 7
      %s213 = scalar_lea.vmem %s3, %s212
      %p214 = pneg %p114
      %p215 = pneg %p111
      %p216 = pneg %p140
      %p217 = pneg %p137
      %p218 = scmp.lt.s32.totalorder %s15, 7
      %s219 = scalar_select %p218, %s15, 7
      %s220 = smul.addr %s219, 9
      %s221 = smul.addr %s220, 8
      %s222 = scalar_lea.vmem %s4, %s221
      %p223 = scmp.lt.s32.totalorder %s15, 7
      %s224 = scalar_select %p223, %s15, 7
      %s225 = smul.addr %s224, 9
      %s226 = smul.addr %s225, 8
      %s227 = scalar_lea.vmem %s0, %s226
      %p228 = scmp.lt.s32.totalorder %s15, 7
      %s229 = scalar_select %p228, %s15, 7
      %s230 = scalar_lea.vmem %s1, %s229
      %p231 = scmp.lt.s32.totalorder %s15, 7
      %s232 = scalar_select %p231, %s15, 7
      %s233 = smul.addr %s232, 4
      %s234 = scalar_lea.vmem %s2, %s233
      %p235 = scmp.lt.s32.totalorder %s15, 7
      %s236 = scalar_select %p235, %s15, 7
      %s237 = scalar_lea.vmem %s3, %s236
      %p238 = scmp.lt.s32.totalorder %s15, 7
      %s239 = scalar_select %p238, %s15, 7
      %s240 = smul.addr %s239, 9
      %s241 = smul.addr %s240, 8
      %s242 = scalar_lea.vmem %s4, %s241
      %v244 = vld [vmem:[%s227] sm:$0xff]
      %v245 = vld [vmem:[%s227 + $0x8] sm:$0xff]
      %v246 = vld [vmem:[%s227 + $0x10] sm:$0xff]
      %v247 = vld [vmem:[%s227 + $0x18] sm:$0xff]
      %v248 = vld [vmem:[%s227 + $0x20] sm:$0xff]
      %v249 = vld [vmem:[%s227 + $0x28] sm:$0xff]
      %v250 = vld [vmem:[%s227 + $0x30] sm:$0xff]
      %v251 = vld [vmem:[%s227 + $0x38] sm:$0xff]
      %v252 = vld [vmem:[%s227 + $0x40] sm:$0x3]
      %v253 = vmul.f32 %v244, %v244
      %v254 = vmul.f32 %v245, %v245
      %v255 = vmul.f32 %v246, %v246
      %v256 = vmul.f32 %v247, %v247
      %v257 = vmul.f32 %v248, %v248
      %v258 = vmul.f32 %v249, %v249
      %v259 = vmul.f32 %v250, %v250
      %v260 = vmul.f32 %v251, %v251
      %v261 = vmul.f32 %v252, %v252
      %vm262 = vcmask 48128
      %v263 = vsel %vm262, %v253, 0.0
      %264 = vadd.xlane.f32.xlu0 %v263
      %v265 = vpop.xlane.xlu0 %264
      %v266 = vsel %vm262, %v254, 0.0
      %267 = vadd.xlane.f32.xlu0 %v266
      %v268 = vpop.xlane.xlu0 %267
      %v269 = vsel %vm262, %v255, 0.0
      %270 = vadd.xlane.f32.xlu0 %v269
      %v271 = vpop.xlane.xlu0 %270
      %v272 = vsel %vm262, %v256, 0.0
      %273 = vadd.xlane.f32.xlu0 %v272
      %v274 = vpop.xlane.xlu0 %273
      %v275 = vsel %vm262, %v257, 0.0
      %276 = vadd.xlane.f32.xlu0 %v275
      %v277 = vpop.xlane.xlu0 %276
      %v278 = vsel %vm262, %v258, 0.0
      %279 = vadd.xlane.f32.xlu0 %v278
      %v280 = vpop.xlane.xlu0 %279
      %v281 = vsel %vm262, %v259, 0.0
      %282 = vadd.xlane.f32.xlu0 %v281
      %v283 = vpop.xlane.xlu0 %282
      %v284 = vsel %vm262, %v260, 0.0
      %285 = vadd.xlane.f32.xlu0 %v284
      %v286 = vpop.xlane.xlu0 %285
      %vm287 = vcmask 41984
      %v288 = vsel %vm287, %v261, 0.0
      %289 = vadd.xlane.f32.xlu0 %v288
      %v290 = vpop.xlane.xlu0 %289
      %v291 = vrsqrt.pop %v265
      %v292 = vmul.f32 %v265, %v291
      %vm293 = vcmp.eq.f32.partialorder %v265, inf
      %v294 = vsel %vm293, %v265, %v292
      %vm295 = vcmp.eq.f32.partialorder %v265, 0.0
      %v296 = vand.u32 %v265, 2147483648
      %v297 = vsel %vm295, %v296, %v294
      %v298 = vrsqrt.pop %v268
      %v299 = vmul.f32 %v268, %v298
      %vm300 = vcmp.eq.f32.partialorder %v268, inf
      %v301 = vsel %vm300, %v268, %v299
      %vm302 = vcmp.eq.f32.partialorder %v268, 0.0
      %v303 = vand.u32 %v268, 2147483648
      %v304 = vsel %vm302, %v303, %v301
      %v305 = vrsqrt.pop %v271
      %v306 = vmul.f32 %v271, %v305
      %vm307 = vcmp.eq.f32.partialorder %v271, inf
      %v308 = vsel %vm307, %v271, %v306
      %vm309 = vcmp.eq.f32.partialorder %v271, 0.0
      %v310 = vand.u32 %v271, 2147483648
      %v311 = vsel %vm309, %v310, %v308
      %v312 = vrsqrt.pop %v274
      %v313 = vmul.f32 %v274, %v312
      %vm314 = vcmp.eq.f32.partialorder %v274, inf
      %v315 = vsel %vm314, %v274, %v313
      %vm316 = vcmp.eq.f32.partialorder %v274, 0.0
      %v317 = vand.u32 %v274, 2147483648
      %v318 = vsel %vm316, %v317, %v315
      %v319 = vrsqrt.pop %v277
      %v320 = vmul.f32 %v277, %v319
      %vm321 = vcmp.eq.f32.partialorder %v277, inf
      %v322 = vsel %vm321, %v277, %v320
      %vm323 = vcmp.eq.f32.partialorder %v277, 0.0
      %v324 = vand.u32 %v277, 2147483648
      %v325 = vsel %vm323, %v324, %v322
      %v326 = vrsqrt.pop %v280
      %v327 = vmul.f32 %v280, %v326
      %vm328 = vcmp.eq.f32.partialorder %v280, inf
      %v329 = vsel %vm328, %v280, %v327
      %vm330 = vcmp.eq.f32.partialorder %v280, 0.0
      %v331 = vand.u32 %v280, 2147483648
      %v332 = vsel %vm330, %v331, %v329
      %v333 = vrsqrt.pop %v283
      %v334 = vmul.f32 %v283, %v333
      %vm335 = vcmp.eq.f32.partialorder %v283, inf
      %v336 = vsel %vm335, %v283, %v334
      %vm337 = vcmp.eq.f32.partialorder %v283, 0.0
      %v338 = vand.u32 %v283, 2147483648
      %v339 = vsel %vm337, %v338, %v336
      %v340 = vrsqrt.pop %v286
      %v341 = vmul.f32 %v286, %v340
      %vm342 = vcmp.eq.f32.partialorder %v286, inf
      %v343 = vsel %vm342, %v286, %v341
      %vm344 = vcmp.eq.f32.partialorder %v286, 0.0
      %v345 = vand.u32 %v286, 2147483648
      %v346 = vsel %vm344, %v345, %v343
      %v347 = vrsqrt.pop %v290
      %v348 = vmul.f32 %v290, %v347
      %vm349 = vcmp.eq.f32.partialorder %v290, inf
      %v350 = vsel %vm349, %v290, %v348
      %vm351 = vcmp.eq.f32.partialorder %v290, 0.0
      %v352 = vand.u32 %v290, 2147483648
      %v353 = vsel %vm351, %v352, %v350
      %v354 = vmax.f32 %v297, 1e-12
      %v355 = vmax.f32 %v304, 1e-12
      %v356 = vmax.f32 %v311, 1e-12
      %v357 = vmax.f32 %v318, 1e-12
      %v358 = vmax.f32 %v325, 1e-12
      %v359 = vmax.f32 %v332, 1e-12
      %v360 = vmax.f32 %v339, 1e-12
      %v361 = vmax.f32 %v346, 1e-12
      %v362 = vmax.f32 %v353, 1e-12
      %v363 = vrcp.pop %v354
      %v364 = vmul.f32 %v244, %v363
      %v365 = vrcp.pop %v355
      %v366 = vmul.f32 %v245, %v365
      %v367 = vrcp.pop %v356
      %v368 = vmul.f32 %v246, %v367
      %v369 = vrcp.pop %v357
      %v370 = vmul.f32 %v247, %v369
      %v371 = vrcp.pop %v358
      %v372 = vmul.f32 %v248, %v371
      %v373 = vrcp.pop %v359
      %v374 = vmul.f32 %v249, %v373
      %v375 = vrcp.pop %v360
      %v376 = vmul.f32 %v250, %v375
      %v377 = vrcp.pop %v361
      %v378 = vmul.f32 %v251, %v377
      %v379 = vrcp.pop %v362
      %v380 = vmul.f32 %v252, %v379
      %v381 = vld [vmem:[%s230] sm:$0x1]
      %v383 = vlaneseq
      %v384 = vshrl.u32 %v383, 7
      %v385 = vsub.s32 0, %v384
      %v386 = vrot.slane %v381, %v385
      %v388 = vmul.f32 %v364, %v386
      %v389 = vmul.f32 %v366, %v386
      %v390 = vmul.f32 %v368, %v386
      %v391 = vmul.f32 %v370, %v386
      %v392 = vmul.f32 %v372, %v386
      %v393 = vmul.f32 %v374, %v386
      %v394 = vmul.f32 %v376, %v386
      %v395 = vmul.f32 %v378, %v386
      %v396 = vmul.f32 %v380, %v386
      %v397 = vpack.c.bf16 %v389, %v388
      %v398 = vpack.c.bf16 %v391, %v390
      %v399 = vpack.c.bf16 %v393, %v392
      %v400 = vpack.c.bf16 %v395, %v394
      %v401 = vpack.c.bf16 %v396, %v396
      %v402 = vld [vmem:[%s234] sm:$0x7]
      %v403 = vld [vmem:[%s237] sm:$0x1]
      %v405 = vlaneseq
      %v406 = vshrl.u32 %v405, 7
      %v407 = vsub.s32 0, %v406
      %v408 = vrot.slane %v403, %v407
      %v411 = vsel %vm262, %v397, 0
      %v414 = vsel %vm262, %v398, 0
      %v417 = vsel %vm262, %v399, 0
      %v420 = vsel %vm262, %v400, 0
      %v423 = vsel %vm262, %v401, 0
      %vm425 = vcmask 1042432
      %v427 = vsel %vm425, %v402, 0
      %429 = vmatprep.subr.bf16.mxu0 0
      %430 = vmatpush1.bf16.msra.mxu0 %v427
      %431 = vmatprep.subr.bf16.mxu0 0
      %432 = vmatpush1.bf16.msra.mxu0 0
      %433 = vmatprep.subr.bf16.mxu0 0
      %434 = vmatpush1.bf16.msra.mxu0 0
      %435 = vmatprep.subr.bf16.mxu0 0
      %436 = vmatpush1.bf16.msra.mxu0 0
      %437 = vmatprep.subr.bf16.mxu0 0
      %438 = vmatpush1.bf16.msra.mxu0 0
      %439 = vmatprep.subr.bf16.mxu0 0
      %440 = vmatpush1.bf16.msra.mxu0 0
      %441 = vmatprep.subr.bf16.mxu0 0
      %442 = vmatpush1.bf16.msra.mxu0 0
      %443 = vmatprep.subr.bf16.mxu0 0
      %444 = vmatpush1.bf16.msra.mxu0 0
      %445 = vmatprep.subr.bf16.mxu0 0
      %446 = vmatpush1.bf16.msra.mxu0 0
      %447 = vmatprep.subr.bf16.mxu0 0
      %448 = vmatpush1.bf16.msra.mxu0 0
      %449 = vmatprep.subr.bf16.mxu0 0
      %450 = vmatpush1.bf16.msra.mxu0 0
      %451 = vmatprep.subr.bf16.mxu0 0
      %452 = vmatpush1.bf16.msra.mxu0 0
      %453 = vmatprep.subr.bf16.mxu0 0
      %454 = vmatpush1.bf16.msra.mxu0 0
      %455 = vmatprep.subr.bf16.mxu0 0
      %456 = vmatpush1.bf16.msra.mxu0 0
      %457 = vmatprep.subr.bf16.mxu0 0
      %458 = vmatpush1.bf16.msra.mxu0 0
      %459 = vmatprep.subr.bf16.mxu0 0
      %460 = vmatpush1.bf16.msra.mxu0 0
      %461 = vmatprep.mubr.bf16.mxu0 0
      %462 = vmatmul.mubr.bf16.gmra.mrb[0].mxu0 %v411
      %v463 = vpop.f32.mrb[0].mxu0
      %v464 = vadd.f32 %v408, %v463
      %v465 = vpop.f32.mrb[0].mxu0
      %v466 = vpop.f32.mrb[0].mxu0
      %v467 = vadd.f32 %v408, %v466
      %v468 = vpop.f32.mrb[0].mxu0
      %469 = vmatprep.mubr.bf16.mxu0 0
      %470 = vmatmul.mubr.bf16.gmra.mrb[0].mxu0 %v414
      %v471 = vpop.f32.mrb[0].mxu0
      %v472 = vadd.f32 %v408, %v471
      %v473 = vpop.f32.mrb[0].mxu0
      %v474 = vpop.f32.mrb[0].mxu0
      %v475 = vadd.f32 %v408, %v474
      %v476 = vpop.f32.mrb[0].mxu0
      %477 = vmatprep.mubr.bf16.mxu0 0
      %478 = vmatmul.mubr.bf16.gmra.mrb[0].mxu0 %v417
      %v479 = vpop.f32.mrb[0].mxu0
      %v480 = vadd.f32 %v408, %v479
      %v481 = vpop.f32.mrb[0].mxu0
      %v482 = vpop.f32.mrb[0].mxu0
      %v483 = vadd.f32 %v408, %v482
      %v484 = vpop.f32.mrb[0].mxu0
      %485 = vmatprep.mubr.bf16.mxu0 0
      %486 = vmatmul.mubr.bf16.gmra.mrb[0].mxu0 %v420
      %v487 = vpop.f32.mrb[0].mxu0
      %v488 = vadd.f32 %v408, %v487
      %v489 = vpop.f32.mrb[0].mxu0
      %v490 = vpop.f32.mrb[0].mxu0
      %v491 = vadd.f32 %v408, %v490
      %v492 = vpop.f32.mrb[0].mxu0
      %493 = vmatprep.mubr.bf16.mxu0 0
      %494 = vmatmul.mubr.bf16.gmra.mrb[0].mxu0 %v423
      %v495 = vpop.f32.mrb[0].mxu0
      %v496 = vadd.f32 %v408, %v495
      %v497 = vpop.f32.mrb[0].mxu0
      %v498 = vpop.f32.mrb[0].mxu0
      %v499 = vpop.f32.mrb[0].mxu0
      %500 = vdwg.mxu0
      %vm501 = vcmask 261120
      %502 = vst.msk [vmem:[%s242] sm:$0xff] %vm501, %v464
      %503 = vst.msk [vmem:[%s242 + $0x8] sm:$0xff] %vm501, %v467
      %504 = vst.msk [vmem:[%s242 + $0x10] sm:$0xff] %vm501, %v472
      %505 = vst.msk [vmem:[%s242 + $0x18] sm:$0xff] %vm501, %v475
      %506 = vst.msk [vmem:[%s242 + $0x20] sm:$0xff] %vm501, %v480
      %507 = vst.msk [vmem:[%s242 + $0x28] sm:$0xff] %vm501, %v483
      %508 = vst.msk [vmem:[%s242 + $0x30] sm:$0xff] %vm501, %v488
      %509 = vst.msk [vmem:[%s242 + $0x38] sm:$0xff] %vm501, %v491
      %vm510 = vcmask 254976
      %511 = vst.msk [vmem:[%s242 + $0x40] sm:$0x3] %vm510, %v496
      %p512 = scmp.lt.s32.totalorder %s15, 7
      %s513 = scalar_select %p512, %s15, 7
      %s514 = smul.addr %s513, 9
      %s515 = smul.addr %s514, 8
      %s516 = scalar_lea.vmem %s4, %s515
      // Predicated region
      $region37: #{bs_roformer_forward.10} parent=35 // pred_check
        %p517 = pneg %p137
      $region38: #{bs_roformer_forward.10} parent=35 // pred_check_branch
        %519 = sbr.rel (%p517) target = $region40
      $region39: #{bs_roformer_forward.10} parent=35 // pred_region
        _
      $region40: #{bs_roformer_forward.10} parent=35 // pred_fallthru
        _
    $region36: #{bs_roformer_forward.10} parent=5 // pred_fallthru
      _
    %p520 = scmp.le.s32.totalorder 2, %s10
    // Predicated region
    $region41: #{bs_roformer_forward.10} parent=5 // pred_check
      %p521 = pneg %p520
    $region42: #{bs_roformer_forward.10} parent=5 // pred_check_branch
      %523 = sbr.rel (%p521) target = $region44
    $region43: #{bs_roformer_forward.10} parent=5 // pred_region
      %s524 = ssub.s32 %s10, 2
      // Predicated region
      $region45: #{bs_roformer_forward.10} parent=43 // pred_check
        %p525 = pneg %p143
      $region46: #{bs_roformer_forward.10} parent=43 // pred_check_branch
        %527 = sbr.rel (%p525) target = $region48
      $region47: #{bs_roformer_forward.10} parent=43 // pred_region
        %p528 = scmp.lt.s32.totalorder %s16, 7
        %s529 = scalar_select %p528, %s16, 7
        %s530 = smul.addr %s529, 9
        %s531 = smul.addr %s530, 8
        %s532 = scalar_lea.vmem %s4, %s531
      $region48: #{bs_roformer_forward.10} parent=43 // pred_fallthru
        _
    $region44: #{bs_roformer_forward.10} parent=5 // pred_fallthru
      _
  $region6: #{bs_roformer_forward.10} parent=0 // loop_footer
    %s14 = sadd.s32 1, %s10
  $region7: #{bs_roformer_forward.10} parent=0 // loop_footer_branch
    %9 = sbr.rel target = $region3
  $region8: #{bs_roformer_forward.10} parent=0 // loop_exit
    _

// kernel: bs_roformer_forward.11
$region0: #{bs_roformer_forward.11}
  #allocation0 [shape = 'u32[]', space=smem, size = 0x4, offset = 0x4, fixed_abs, tag = 'smem constant byte address 0x4 - core index']
  #allocation1 [shape = 'u32[144,128]{1,0:T(1,128)}', space=vmem, size = 0x12000, scoped, tag = 'internal scratch']
  %s0 = inlined_call_operand.vmem [shape: f32[528,32], index: 0, kind: input, shape index: {}]
  %s1 = inlined_call_operand.vmem [shape: f32[1,32], index: 1, kind: input, shape index: {}]
  %s2 = inlined_call_operand.vmem [shape: bf16[32,128], index: 2, kind: input, shape index: {}]
  %s3 = inlined_call_operand.vmem [shape: f32[1,128], index: 3, kind: input, shape index: {}]
  %s4 = inlined_call_operand.vmem [shape: f32[528,128], index: 4, kind: output, shape index: {}]
  %s5 = sld [smem:[#allocation0]]
  $region49: #{bs_roformer_forward.11} parent=0
    _
  %s7 = ssub.s32 1, %s5
  %s8 = scalar_select 0, %s7, %s5
  loop: start=0, step=1, limit=5
  $region2: #{bs_roformer_forward.11} parent=0 // loop_pre_header
    _
  $region3: #{bs_roformer_forward.11} parent=0 // loop_header
    %s10 = sphi 0, %s14
    %p11 = scmp.ge.s32.totalorder %s10, 5
    %s20 = sphi 0, %s22
    %s23 = sphi 0, %s20
    %s24 = sphi 0, %s23
    %s40 = sphi 0, %s24
    %s44 = sphi 0, %s44
    %s46 = sphi 0, %s44
    %s47 = sphi 0, %s46
    %s61 = sphi 0, %s47
    %s65 = sphi 0, %s65
    %s67 = sphi 0, %s65
    %s68 = sphi 0, %s67
    %s82 = sphi 0, %s68
    %s86 = sphi 0, %s86
    %s88 = sphi 0, %s86
    %s89 = sphi 0, %s88
    %s103 = sphi 0, %s89
    %s109 = sphi 0, %s111
    %s112 = sphi 0, %s109
    %s113 = sphi 0, %s112
    %s129 = sphi 0, %s113
  $region4: #{bs_roformer_forward.11} parent=0 // loop_header_branch
    %13 = sbr.rel (%p11) target = $region8
  $region5: #{bs_roformer_forward.11} parent=0 // loop_body
    %s15 = ssub.s32 %s10, 1
    %s16 = ssub.s32 %s10, 2
    %s17 = sadd.s32 %s10, 1
    %s18 = ssub.s32 %s10, %s17
    %p19 = scmp.eq.s32.totalorder %s18, 0
    %s21 = sadd.s32 %s20, 1
    %s22 = scalar_select %p19, %s20, %s21
    %p25 = pneg %p19
    %p26 = scmp.eq.s32.totalorder %s10, 2
    %p27 = por %p25, %p26
    %p28 = scmp.ne.s32.totalorder %s20, %s23
    %p29 = scmp.eq.s32.totalorder %s10, 0
    %p30 = por %p28, %p29
    %p31 = scmp.ne.s32.totalorder %s20, %s23
    %p32 = scmp.eq.s32.totalorder %s15, 2
    %p33 = por %p31, %p32
    %p34 = scmp.ne.s32.totalorder %s23, %s24
    %p35 = scmp.eq.s32.totalorder %s15, 0
    %p36 = por %p34, %p35
    %p37 = scmp.ne.s32.totalorder %s23, %s24
    %p38 = scmp.eq.s32.totalorder %s16, 2
    %p39 = por %p37, %p38
    %p41 = scmp.ne.s32.totalorder %s24, %s40
    %p42 = scmp.eq.s32.totalorder %s16, 0
    %p43 = por %p41, %p42
    %s45 = sadd.s32 %s44, 1
    %p48 = scmp.eq.s32.totalorder %s10, 2
    %p49 = scmp.ne.s32.totalorder %s44, %s46
    %p50 = scmp.eq.s32.totalorder %s10, 0
    %p51 = por %p49, %p50
    %p52 = scmp.ne.s32.totalorder %s44, %s46
    %p53 = scmp.eq.s32.totalorder %s15, 2
    %p54 = por %p52, %p53
    %p55 = scmp.ne.s32.totalorder %s46, %s47
    %p56 = scmp.eq.s32.totalorder %s15, 0
    %p57 = por %p55, %p56
    %p58 = scmp.ne.s32.totalorder %s46, %s47
    %p59 = scmp.eq.s32.totalorder %s16, 2
    %p60 = por %p58, %p59
    %p62 = scmp.ne.s32.totalorder %s47, %s61
    %p63 = scmp.eq.s32.totalorder %s16, 0
    %p64 = por %p62, %p63
    %s66 = sadd.s32 %s65, 1
    %p69 = scmp.eq.s32.totalorder %s10, 2
    %p70 = scmp.ne.s32.totalorder %s65, %s67
    %p71 = scmp.eq.s32.totalorder %s10, 0
    %p72 = por %p70, %p71
    %p73 = scmp.ne.s32.totalorder %s65, %s67
    %p74 = scmp.eq.s32.totalorder %s15, 2
    %p75 = por %p73, %p74
    %p76 = scmp.ne.s32.totalorder %s67, %s68
    %p77 = scmp.eq.s32.totalorder %s15, 0
    %p78 = por %p76, %p77
    %p79 = scmp.ne.s32.totalorder %s67, %s68
    %p80 = scmp.eq.s32.totalorder %s16, 2
    %p81 = por %p79, %p80
    %p83 = scmp.ne.s32.totalorder %s68, %s82
    %p84 = scmp.eq.s32.totalorder %s16, 0
    %p85 = por %p83, %p84
    %s87 = sadd.s32 %s86, 1
    %p90 = scmp.eq.s32.totalorder %s10, 2
    %p91 = scmp.ne.s32.totalorder %s86, %s88
    %p92 = scmp.eq.s32.totalorder %s10, 0
    %p93 = por %p91, %p92
    %p94 = scmp.ne.s32.totalorder %s86, %s88
    %p95 = scmp.eq.s32.totalorder %s15, 2
    %p96 = por %p94, %p95
    %p97 = scmp.ne.s32.totalorder %s88, %s89
    %p98 = scmp.eq.s32.totalorder %s15, 0
    %p99 = por %p97, %p98
    %p100 = scmp.ne.s32.totalorder %s88, %s89
    %p101 = scmp.eq.s32.totalorder %s16, 2
    %p102 = por %p100, %p101
    %p104 = scmp.ne.s32.totalorder %s89, %s103
    %p105 = scmp.eq.s32.totalorder %s16, 0
    %p106 = por %p104, %p105
    %s107 = ssub.s32 %s10, %s17
    %p108 = scmp.eq.s32.totalorder %s107, 0
    %s110 = sadd.s32 %s109, 1
    %s111 = scalar_select %p108, %s109, %s110
    %p114 = pneg %p108
    %p115 = scmp.eq.s32.totalorder %s10, 2
    %p116 = por %p114, %p115
    %p117 = scmp.ne.s32.totalorder %s109, %s112
    %p118 = scmp.eq.s32.totalorder %s10, 0
    %p119 = por %p117, %p118
    %p120 = scmp.ne.s32.totalorder %s109, %s112
    %p121 = scmp.eq.s32.totalorder %s15, 2
    %p122 = por %p120, %p121
    %p123 = scmp.ne.s32.totalorder %s112, %s113
    %p124 = scmp.eq.s32.totalorder %s15, 0
    %p125 = por %p123, %p124
    %p126 = scmp.ne.s32.totalorder %s112, %s113
    %p127 = scmp.eq.s32.totalorder %s16, 2
    %p128 = por %p126, %p127
    %p130 = scmp.ne.s32.totalorder %s113, %s129
    %p131 = scmp.eq.s32.totalorder %s16, 0
    %p132 = por %p130, %p131
    %p133 = scmp.le.s32.totalorder 1, %s10
    %p134 = scmp.lt.s32.totalorder %s10, 4
    %p135 = pnand %p133, %p134
    %p136 = pneg %p135
    // Predicated region
    $region9: #{bs_roformer_forward.11} parent=5 // pred_check
      _
    $region10: #{bs_roformer_forward.11} parent=5 // pred_check_branch
      %138 = sbr.rel (%p135) target = $region12
    $region11: #{bs_roformer_forward.11} parent=5 // pred_region
      %s139 = ssub.s32 %s10, 1
      // Predicated region
      $region13: #{bs_roformer_forward.11} parent=11 // pred_check
        %p140 = pneg %p57
      $region14: #{bs_roformer_forward.11} parent=11 // pred_check_branch
        %142 = sbr.rel (%p140) target = $region16
      $region15: #{bs_roformer_forward.11} parent=11 // pred_region
        _
      $region16: #{bs_roformer_forward.11} parent=11 // pred_fallthru
        _
      // Predicated region
      $region17: #{bs_roformer_forward.11} parent=11 // pred_check
        %p143 = pneg %p78
      $region18: #{bs_roformer_forward.11} parent=11 // pred_check_branch
        %145 = sbr.rel (%p143) target = $region20
      $region19: #{bs_roformer_forward.11} parent=11 // pred_region
        _
      $region20: #{bs_roformer_forward.11} parent=11 // pred_fallthru
        _
      // Predicated region
      $region21: #{bs_roformer_forward.11} parent=11 // pred_check
        %p146 = pneg %p99
      $region22: #{bs_roformer_forward.11} parent=11 // pred_check_branch
        %148 = sbr.rel (%p146) target = $region24
      $region23: #{bs_roformer_forward.11} parent=11 // pred_region
        _
      $region24: #{bs_roformer_forward.11} parent=11 // pred_fallthru
        _
    $region12: #{bs_roformer_forward.11} parent=5 // pred_fallthru
      _
    %p149 = scmp.lt.s32.totalorder %s10, 3
    // Predicated region
    $region25: #{bs_roformer_forward.11} parent=5 // pred_check
      %p150 = pneg %p149
    $region26: #{bs_roformer_forward.11} parent=5 // pred_check_branch
      %152 = sbr.rel (%p150) target = $region28
    $region27: #{bs_roformer_forward.11} parent=5 // pred_region
      // Predicated region
      $region29: #{bs_roformer_forward.11} parent=27 // pred_check
        %p153 = pneg %p30
      $region30: #{bs_roformer_forward.11} parent=27 // pred_check_branch
        %155 = sbr.rel (%p153) target = $region32
      $region31: #{bs_roformer_forward.11} parent=27 // pred_region
        %s156 = smul.u32 22, %s10
        %p157 = scmp.lt.s32.totalorder %s156, 65
        %s158 = scalar_select %p157, %s156, 65
        %s159 = smul.addr %s158, 8
        %s160 = scalar_lea.vmem %s0, %s159
        %s161 = smul.u32 22, %s10
      $region32: #{bs_roformer_forward.11} parent=27 // pred_fallthru
        _
    $region28: #{bs_roformer_forward.11} parent=5 // pred_fallthru
      _
    %p162 = scmp.le.s32.totalorder 1, %s10
    %p163 = scmp.lt.s32.totalorder %s10, 4
    %p164 = pnand %p162, %p163
    %p165 = pneg %p164
    // Predicated region
    $region33: #{bs_roformer_forward.11} parent=5 // pred_check
      _
    $region34: #{bs_roformer_forward.11} parent=5 // pred_check_branch
      %167 = sbr.rel (%p164) target = $region36
    $region35: #{bs_roformer_forward.11} parent=5 // pred_region
      %s168 = ssub.s32 %s10, 1
      %s169 = smul.u32 22, %s15
      %p170 = scmp.lt.s32.totalorder %s169, 65
      %s171 = scalar_select %p170, %s169, 65
      %s172 = smul.addr %s171, 8
      %s173 = scalar_lea.vmem %s0, %s172
      %p174 = pneg %p36
      %p175 = pneg %p33
      %p176 = pneg %p57
      %p177 = pneg %p54
      %p178 = pneg %p78
      %p179 = pneg %p75
      %p180 = pneg %p99
      %p181 = pneg %p96
      %p182 = pneg %p125
      %p183 = pneg %p122
      %s184 = smul.u32 22, %s15
      %p185 = scmp.lt.s32.totalorder %s184, 65
      %s186 = scalar_select %p185, %s184, 65
      %s187 = smul.addr %s186, 8
      %s188 = scalar_lea.vmem %s4, %s187
      %s189 = smul.u32 22, %s15
      %p190 = scmp.lt.s32.totalorder %s189, 65
      %s191 = scalar_select %p190, %s189, 65
      %s192 = smul.addr %s191, 8
      %s193 = scalar_lea.vmem %s0, %s192
      %s194 = smul.u32 22, %s15
      %s195 = smul.u32 22, %s15
      %p196 = scmp.lt.s32.totalorder %s195, 65
      %s197 = scalar_select %p196, %s195, 65
      %s198 = smul.addr %s197, 8
      %s199 = scalar_lea.vmem %s4, %s198
      %s200 = smul.u32 22, %s15
      %v202 = vld [vmem:[%s193] sm:$0xff]
      %v203 = vld [vmem:[%s193 + $0x8] sm:$0xff]
      %v204 = vld [vmem:[%s193 + $0x10] sm:$0xff]
      %v205 = vld [vmem:[%s193 + $0x18] sm:$0xff]
      %v206 = vld [vmem:[%s193 + $0x20] sm:$0xff]
      %v207 = vld [vmem:[%s193 + $0x28] sm:$0xff]
      %v208 = vld [vmem:[%s193 + $0x30] sm:$0xff]
      %v209 = vld [vmem:[%s193 + $0x38] sm:$0xff]
      %v210 = vld [vmem:[%s193 + $0x40] sm:$0xff]
      %v211 = vld [vmem:[%s193 + $0x48] sm:$0xff]
      %v212 = vld [vmem:[%s193 + $0x50] sm:$0xff]
      %v213 = vld [vmem:[%s193 + $0x58] sm:$0xff]
      %v214 = vld [vmem:[%s193 + $0x60] sm:$0xff]
      %v215 = vld [vmem:[%s193 + $0x68] sm:$0xff]
      %v216 = vld [vmem:[%s193 + $0x70] sm:$0xff]
      %v217 = vld [vmem:[%s193 + $0x78] sm:$0xff]
      %v218 = vld [vmem:[%s193 + $0x80] sm:$0xff]
      %v219 = vld [vmem:[%s193 + $0x88] sm:$0xff]
      %v220 = vld [vmem:[%s193 + $0x90] sm:$0xff]
      %v221 = vld [vmem:[%s193 + $0x98] sm:$0xff]
      %v222 = vld [vmem:[%s193 + $0xa0] sm:$0xff]
      %v223 = vld [vmem:[%s193 + $0xa8] sm:$0xff]
      %v224 = vmul.f32 %v202, %v202
      %v225 = vmul.f32 %v203, %v203
      %v226 = vmul.f32 %v204, %v204
      %v227 = vmul.f32 %v205, %v205
      %v228 = vmul.f32 %v206, %v206
      %v229 = vmul.f32 %v207, %v207
      %v230 = vmul.f32 %v208, %v208
      %v231 = vmul.f32 %v209, %v209
      %v232 = vmul.f32 %v210, %v210
      %v233 = vmul.f32 %v211, %v211
      %v234 = vmul.f32 %v212, %v212
      %v235 = vmul.f32 %v213, %v213
      %v236 = vmul.f32 %v214, %v214
      %v237 = vmul.f32 %v215, %v215
      %v238 = vmul.f32 %v216, %v216
      %v239 = vmul.f32 %v217, %v217
      %v240 = vmul.f32 %v218, %v218
      %v241 = vmul.f32 %v219, %v219
      %v242 = vmul.f32 %v220, %v220
      %v243 = vmul.f32 %v221, %v221
      %v244 = vmul.f32 %v222, %v222
      %v245 = vmul.f32 %v223, %v223
      %vm246 = vcmask 261120
      %v247 = vsel %vm246, %v224, 0.0
      %248 = vadd.xlane.f32.xlu0 %v247
      %v249 = vpop.xlane.xlu0 %248
      %v250 = vsel %vm246, %v225, 0.0
      %251 = vadd.xlane.f32.xlu0 %v250
      %v252 = vpop.xlane.xlu0 %251
      %v253 = vsel %vm246, %v226, 0.0
      %254 = vadd.xlane.f32.xlu0 %v253
      %v255 = vpop.xlane.xlu0 %254
      %v256 = vsel %vm246, %v227, 0.0
      %257 = vadd.xlane.f32.xlu0 %v256
      %v258 = vpop.xlane.xlu0 %257
      %v259 = vsel %vm246, %v228, 0.0
      %260 = vadd.xlane.f32.xlu0 %v259
      %v261 = vpop.xlane.xlu0 %260
      %v262 = vsel %vm246, %v229, 0.0
      %263 = vadd.xlane.f32.xlu0 %v262
      %v264 = vpop.xlane.xlu0 %263
      %v265 = vsel %vm246, %v230, 0.0
      %266 = vadd.xlane.f32.xlu0 %v265
      %v267 = vpop.xlane.xlu0 %266
      %v268 = vsel %vm246, %v231, 0.0
      %269 = vadd.xlane.f32.xlu0 %v268
      %v270 = vpop.xlane.xlu0 %269
      %v271 = vsel %vm246, %v232, 0.0
      %272 = vadd.xlane.f32.xlu0 %v271
      %v273 = vpop.xlane.xlu0 %272
      %v274 = vsel %vm246, %v233, 0.0
      %275 = vadd.xlane.f32.xlu0 %v274
      %v276 = vpop.xlane.xlu0 %275
      %v277 = vsel %vm246, %v234, 0.0
      %278 = vadd.xlane.f32.xlu0 %v277
      %v279 = vpop.xlane.xlu0 %278
      %v280 = vsel %vm246, %v235, 0.0
      %281 = vadd.xlane.f32.xlu0 %v280
      %v282 = vpop.xlane.xlu0 %281
      %v283 = vsel %vm246, %v236, 0.0
      %284 = vadd.xlane.f32.xlu0 %v283
      %v285 = vpop.xlane.xlu0 %284
      %v286 = vsel %vm246, %v237, 0.0
      %287 = vadd.xlane.f32.xlu0 %v286
      %v288 = vpop.xlane.xlu0 %287
      %v289 = vsel %vm246, %v238, 0.0
      %290 = vadd.xlane.f32.xlu0 %v289
      %v291 = vpop.xlane.xlu0 %290
      %v292 = vsel %vm246, %v239, 0.0
      %293 = vadd.xlane.f32.xlu0 %v292
      %v294 = vpop.xlane.xlu0 %293
      %v295 = vsel %vm246, %v240, 0.0
      %296 = vadd.xlane.f32.xlu0 %v295
      %v297 = vpop.xlane.xlu0 %296
      %v298 = vsel %vm246, %v241, 0.0
      %299 = vadd.xlane.f32.xlu0 %v298
      %v300 = vpop.xlane.xlu0 %299
      %v301 = vsel %vm246, %v242, 0.0
      %302 = vadd.xlane.f32.xlu0 %v301
      %v303 = vpop.xlane.xlu0 %302
      %v304 = vsel %vm246, %v243, 0.0
      %305 = vadd.xlane.f32.xlu0 %v304
      %v306 = vpop.xlane.xlu0 %305
      %v307 = vsel %vm246, %v244, 0.0
      %308 = vadd.xlane.f32.xlu0 %v307
      %v309 = vpop.xlane.xlu0 %308
      %v310 = vsel %vm246, %v245, 0.0
      %311 = vadd.xlane.f32.xlu0 %v310
      %v312 = vpop.xlane.xlu0 %311
      %v313 = vrsqrt.pop %v249
      %v314 = vmul.f32 %v249, %v313
      %vm315 = vcmp.eq.f32.partialorder %v249, inf
      %v316 = vsel %vm315, %v249, %v314
      %vm317 = vcmp.eq.f32.partialorder %v249, 0.0
      %v318 = vand.u32 %v249, 2147483648
      %v319 = vsel %vm317, %v318, %v316
      %v320 = vrsqrt.pop %v252
      %v321 = vmul.f32 %v252, %v320
      %vm322 = vcmp.eq.f32.partialorder %v252, inf
      %v323 = vsel %vm322, %v252, %v321
      %vm324 = vcmp.eq.f32.partialorder %v252, 0.0
      %v325 = vand.u32 %v252, 2147483648
      %v326 = vsel %vm324, %v325, %v323
      %v327 = vrsqrt.pop %v255
      %v328 = vmul.f32 %v255, %v327
      %vm329 = vcmp.eq.f32.partialorder %v255, inf
      %v330 = vsel %vm329, %v255, %v328
      %vm331 = vcmp.eq.f32.partialorder %v255, 0.0
      %v332 = vand.u32 %v255, 2147483648
      %v333 = vsel %vm331, %v332, %v330
      %v334 = vrsqrt.pop %v258
      %v335 = vmul.f32 %v258, %v334
      %vm336 = vcmp.eq.f32.partialorder %v258, inf
      %v337 = vsel %vm336, %v258, %v335
      %vm338 = vcmp.eq.f32.partialorder %v258, 0.0
      %v339 = vand.u32 %v258, 2147483648
      %v340 = vsel %vm338, %v339, %v337
      %v341 = vrsqrt.pop %v261
      %v342 = vmul.f32 %v261, %v341
      %vm343 = vcmp.eq.f32.partialorder %v261, inf
      %v344 = vsel %vm343, %v261, %v342
      %vm345 = vcmp.eq.f32.partialorder %v261, 0.0
      %v346 = vand.u32 %v261, 2147483648
      %v347 = vsel %vm345, %v346, %v344
      %v348 = vrsqrt.pop %v264
      %v349 = vmul.f32 %v264, %v348
      %vm350 = vcmp.eq.f32.partialorder %v264, inf
      %v351 = vsel %vm350, %v264, %v349
      %vm352 = vcmp.eq.f32.partialorder %v264, 0.0
      %v353 = vand.u32 %v264, 2147483648
      %v354 = vsel %vm352, %v353, %v351
      %v355 = vrsqrt.pop %v267
      %v356 = vmul.f32 %v267, %v355
      %vm357 = vcmp.eq.f32.partialorder %v267, inf
      %v358 = vsel %vm357, %v267, %v356
      %vm359 = vcmp.eq.f32.partialorder %v267, 0.0
      %v360 = vand.u32 %v267, 2147483648
      %v361 = vsel %vm359, %v360, %v358
      %v362 = vrsqrt.pop %v270
      %v363 = vmul.f32 %v270, %v362
      %vm364 = vcmp.eq.f32.partialorder %v270, inf
      %v365 = vsel %vm364, %v270, %v363
      %vm366 = vcmp.eq.f32.partialorder %v270, 0.0
      %v367 = vand.u32 %v270, 2147483648
      %v368 = vsel %vm366, %v367, %v365
      %v369 = vrsqrt.pop %v273
      %v370 = vmul.f32 %v273, %v369
      %vm371 = vcmp.eq.f32.partialorder %v273, inf
      %v372 = vsel %vm371, %v273, %v370
      %vm373 = vcmp.eq.f32.partialorder %v273, 0.0
      %v374 = vand.u32 %v273, 2147483648
      %v375 = vsel %vm373, %v374, %v372
      %v376 = vrsqrt.pop %v276
      %v377 = vmul.f32 %v276, %v376
      %vm378 = vcmp.eq.f32.partialorder %v276, inf
      %v379 = vsel %vm378, %v276, %v377
      %vm380 = vcmp.eq.f32.partialorder %v276, 0.0
      %v381 = vand.u32 %v276, 2147483648
      %v382 = vsel %vm380, %v381, %v379
      %v383 = vrsqrt.pop %v279
      %v384 = vmul.f32 %v279, %v383
      %vm385 = vcmp.eq.f32.partialorder %v279, inf
      %v386 = vsel %vm385, %v279, %v384
      %vm387 = vcmp.eq.f32.partialorder %v279, 0.0
      %v388 = vand.u32 %v279, 2147483648
      %v389 = vsel %vm387, %v388, %v386
      %v390 = vrsqrt.pop %v282
      %v391 = vmul.f32 %v282, %v390
      %vm392 = vcmp.eq.f32.partialorder %v282, inf
      %v393 = vsel %vm392, %v282, %v391
      %vm394 = vcmp.eq.f32.partialorder %v282, 0.0
      %v395 = vand.u32 %v282, 2147483648
      %v396 = vsel %vm394, %v395, %v393
      %v397 = vrsqrt.pop %v285
      %v398 = vmul.f32 %v285, %v397
      %vm399 = vcmp.eq.f32.partialorder %v285, inf
      %v400 = vsel %vm399, %v285, %v398
      %vm401 = vcmp.eq.f32.partialorder %v285, 0.0
      %v402 = vand.u32 %v285, 2147483648
      %v403 = vsel %vm401, %v402, %v400
      %v404 = vrsqrt.pop %v288
      %v405 = vmul.f32 %v288, %v404
      %vm406 = vcmp.eq.f32.partialorder %v288, inf
      %v407 = vsel %vm406, %v288, %v405
      %vm408 = vcmp.eq.f32.partialorder %v288, 0.0
      %v409 = vand.u32 %v288, 2147483648
      %v410 = vsel %vm408, %v409, %v407
      %v411 = vrsqrt.pop %v291
      %v412 = vmul.f32 %v291, %v411
      %vm413 = vcmp.eq.f32.partialorder %v291, inf
      %v414 = vsel %vm413, %v291, %v412
      %vm415 = vcmp.eq.f32.partialorder %v291, 0.0
      %v416 = vand.u32 %v291, 2147483648
      %v417 = vsel %vm415, %v416, %v414
      %v418 = vrsqrt.pop %v294
      %v419 = vmul.f32 %v294, %v418
      %vm420 = vcmp.eq.f32.partialorder %v294, inf
      %v421 = vsel %vm420, %v294, %v419
      %vm422 = vcmp.eq.f32.partialorder %v294, 0.0
      %v423 = vand.u32 %v294, 2147483648
      %v424 = vsel %vm422, %v423, %v421
      %v425 = vrsqrt.pop %v297
      %v426 = vmul.f32 %v297, %v425
      %vm427 = vcmp.eq.f32.partialorder %v297, inf
      %v428 = vsel %vm427, %v297, %v426
      %vm429 = vcmp.eq.f32.partialorder %v297, 0.0
      %v430 = vand.u32 %v297, 2147483648
      %v431 = vsel %vm429, %v430, %v428
      %v432 = vrsqrt.pop %v300
      %v433 = vmul.f32 %v300, %v432
      %vm434 = vcmp.eq.f32.partialorder %v300, inf
      %v435 = vsel %vm434, %v300, %v433
      %vm436 = vcmp.eq.f32.partialorder %v300, 0.0
      %v437 = vand.u32 %v300, 2147483648
      %v438 = vsel %vm436, %v437, %v435
      %v439 = vrsqrt.pop %v303
      %v440 = vmul.f32 %v303, %v439
      %vm441 = vcmp.eq.f32.partialorder %v303, inf
      %v442 = vsel %vm441, %v303, %v440
      %vm443 = vcmp.eq.f32.partialorder %v303, 0.0
      %v444 = vand.u32 %v303, 2147483648
      %v445 = vsel %vm443, %v444, %v442
      %v446 = vrsqrt.pop %v306
      %v447 = vmul.f32 %v306, %v446
      %vm448 = vcmp.eq.f32.partialorder %v306, inf
      %v449 = vsel %vm448, %v306, %v447
      %vm450 = vcmp.eq.f32.partialorder %v306, 0.0
      %v451 = vand.u32 %v306, 2147483648
      %v452 = vsel %vm450, %v451, %v449
      %v453 = vrsqrt.pop %v309
      %v454 = vmul.f32 %v309, %v453
      %vm455 = vcmp.eq.f32.partialorder %v309, inf
      %v456 = vsel %vm455, %v309, %v454
      %vm457 = vcmp.eq.f32.partialorder %v309, 0.0
      %v458 = vand.u32 %v309, 2147483648
      %v459 = vsel %vm457, %v458, %v456
      %v460 = vrsqrt.pop %v312
      %v461 = vmul.f32 %v312, %v460
      %vm462 = vcmp.eq.f32.partialorder %v312, inf
      %v463 = vsel %vm462, %v312, %v461
      %vm464 = vcmp.eq.f32.partialorder %v312, 0.0
      %v465 = vand.u32 %v312, 2147483648
      %v466 = vsel %vm464, %v465, %v463
      %v467 = vmax.f32 %v319, 1e-12
      %v468 = vmax.f32 %v326, 1e-12
      %v469 = vmax.f32 %v333, 1e-12
      %v470 = vmax.f32 %v340, 1e-12
      %v471 = vmax.f32 %v347, 1e-12
      %v472 = vmax.f32 %v354, 1e-12
      %v473 = vmax.f32 %v361, 1e-12
      %v474 = vmax.f32 %v368, 1e-12
      %v475 = vmax.f32 %v375, 1e-12
      %v476 = vmax.f32 %v382, 1e-12
      %v477 = vmax.f32 %v389, 1e-12
      %v478 = vmax.f32 %v396, 1e-12
      %v479 = vmax.f32 %v403, 1e-12
      %v480 = vmax.f32 %v410, 1e-12
      %v481 = vmax.f32 %v417, 1e-12
      %v482 = vmax.f32 %v424, 1e-12
      %v483 = vmax.f32 %v431, 1e-12
      %v484 = vmax.f32 %v438, 1e-12
      %v485 = vmax.f32 %v445, 1e-12
      %v486 = vmax.f32 %v452, 1e-12
      %v487 = vmax.f32 %v459, 1e-12
      %v488 = vmax.f32 %v466, 1e-12
      %v489 = vrcp.pop %v467
      %v490 = vmul.f32 %v202, %v489
      %v491 = vrcp.pop %v468
      %v492 = vmul.f32 %v203, %v491
      %v493 = vrcp.pop %v469
      %v494 = vmul.f32 %v204, %v493
      %v495 = vrcp.pop %v470
      %v496 = vmul.f32 %v205, %v495
      %v497 = vrcp.pop %v471
      %v498 = vmul.f32 %v206, %v497
      %v499 = vrcp.pop %v472
      %v500 = vmul.f32 %v207, %v499
      %v501 = vrcp.pop %v473
      %v502 = vmul.f32 %v208, %v501
      %v503 = vrcp.pop %v474
      %v504 = vmul.f32 %v209, %v503
      %v505 = vrcp.pop %v475
      %v506 = vmul.f32 %v210, %v505
      %v507 = vrcp.pop %v476
      %v508 = vmul.f32 %v211, %v507
      %v509 = vrcp.pop %v477
      %v510 = vmul.f32 %v212, %v509
      %v511 = vrcp.pop %v478
      %v512 = vmul.f32 %v213, %v511
      %v513 = vrcp.pop %v479
      %v514 = vmul.f32 %v214, %v513
      %v515 = vrcp.pop %v480
      %v516 = vmul.f32 %v215, %v515
      %v517 = vrcp.pop %v481
      %v518 = vmul.f32 %v216, %v517
      %v519 = vrcp.pop %v482
      %v520 = vmul.f32 %v217, %v519
      %v521 = vrcp.pop %v483
      %v522 = vmul.f32 %v218, %v521
      %v523 = vrcp.pop %v484
      %v524 = vmul.f32 %v219, %v523
      %v525 = vrcp.pop %v485
      %v526 = vmul.f32 %v220, %v525
      %v527 = vrcp.pop %v486
      %v528 = vmul.f32 %v221, %v527
      %v529 = vrcp.pop %v487
      %v530 = vmul.f32 %v222, %v529
      %v531 = vrcp.pop %v488
      %v532 = vmul.f32 %v223, %v531
      %v533 = vld [vmem:[%s1] sm:$0x1]
      %v535 = vlaneseq
      %v536 = vshrl.u32 %v535, 7
      %v537 = vsub.s32 0, %v536
      %v538 = vrot.slane %v533, %v537
      %v540 = vmul.f32 %v490, %v538
      %v541 = vmul.f32 %v492, %v538
      %v542 = vmul.f32 %v494, %v538
      %v543 = vmul.f32 %v496, %v538
      %v544 = vmul.f32 %v498, %v538
      %v545 = vmul.f32 %v500, %v538
      %v546 = vmul.f32 %v502, %v538
      %v547 = vmul.f32 %v504, %v538
      %v548 = vmul.f32 %v506, %v538
      %v549 = vmul.f32 %v508, %v538
      %v550 = vmul.f32 %v510, %v538
      %v551 = vmul.f32 %v512, %v538
      %v552 = vmul.f32 %v514, %v538
      %v553 = vmul.f32 %v516, %v538
      %v554 = vmul.f32 %v518, %v538
      %v555 = vmul.f32 %v520, %v538
      %v556 = vmul.f32 %v522, %v538
      %v557 = vmul.f32 %v524, %v538
      %v558 = vmul.f32 %v526, %v538
      %v559 = vmul.f32 %v528, %v538
      %v560 = vmul.f32 %v530, %v538
      %v561 = vmul.f32 %v532, %v538
      %v562 = vpack.c.bf16 %v541, %v540
      %v563 = vpack.c.bf16 %v543, %v542
      %v564 = vpack.c.bf16 %v545, %v544
      %v565 = vpack.c.bf16 %v547, %v546
      %v566 = vpack.c.bf16 %v549, %v548
      %v567 = vpack.c.bf16 %v551, %v550
      %v568 = vpack.c.bf16 %v553, %v552
      %v569 = vpack.c.bf16 %v555, %v554
      %v570 = vpack.c.bf16 %v557, %v556
      %v571 = vpack.c.bf16 %v559, %v558
      %v572 = vpack.c.bf16 %v561, %v560
      %v573 = vld [vmem:[%s2] sm:$0xf]
      %v574 = vld [vmem:[%s2 + $0x4] sm:$0xf]
      %v575 = vld [vmem:[%s2 + $0x8] sm:$0xf]
      %v576 = vld [vmem:[%s2 + $0xc] sm:$0xf]
      %v577 = vld [vmem:[%s3] sm:$0x1]
      %v579 = vlaneseq
      %v580 = vshrl.u32 %v579, 7
      %v581 = vsub.s32 0, %v580
      %v582 = vrot.slane %v577, %v581
      %v588 = vunpack.c.l.b16 %v573
      %v589 = vunpack.c.l.b16 %v574
      %v590 = vunpack.c.l.b16 %v575
      %v591 = vunpack.c.l.b16 %v576
      %v592 = vpack.c.b16 %v589, %v588
      %v593 = vpack.c.b16 %v591, %v590
      %v597 = vsel %vm246, %v562, 0
      %v600 = vsel %vm246, %v563, 0
      %v603 = vsel %vm246, %v564, 0
      %v606 = vsel %vm246, %v565, 0
      %v609 = vsel %vm246, %v566, 0
      %v612 = vsel %vm246, %v567, 0
      %v615 = vsel %vm246, %v568, 0
      %v618 = vsel %vm246, %v569, 0
      %v621 = vsel %vm246, %v570, 0
      %v624 = vsel %vm246, %v571, 0
      %v627 = vsel %vm246, %v572, 0
      %629 = vmatprep.subr.bf16.mxu0 0
      %630 = vmatpush1.bf16.msra.mxu0 %v592
      %631 = vmatprep.subr.bf16.mxu0 0
      %632 = vmatpush1.bf16.msra.mxu0 %v593
      %633 = vmatprep.subr.bf16.mxu0 0
      %634 = vmatpush1.bf16.msra.mxu0 0
      %635 = vmatprep.subr.bf16.mxu0 0
      %636 = vmatpush1.bf16.msra.mxu0 0
      %637 = vmatprep.subr.bf16.mxu0 0
      %638 = vmatpush1.bf16.msra.mxu0 0
      %639 = vmatprep.subr.bf16.mxu0 0
      %640 = vmatpush1.bf16.msra.mxu0 0
      %641 = vmatprep.subr.bf16.mxu0 0
      %642 = vmatpush1.bf16.msra.mxu0 0
      %643 = vmatprep.subr.bf16.mxu0 0
      %644 = vmatpush1.bf16.msra.mxu0 0
      %645 = vmatprep.subr.bf16.mxu0 0
      %646 = vmatpush1.bf16.msra.mxu0 0
      %647 = vmatprep.subr.bf16.mxu0 0
      %648 = vmatpush1.bf16.msra.mxu0 0
      %649 = vmatprep.subr.bf16.mxu0 0
      %650 = vmatpush1.bf16.msra.mxu0 0
      %651 = vmatprep.subr.bf16.mxu0 0
      %652 = vmatpush1.bf16.msra.mxu0 0
      %653 = vmatprep.subr.bf16.mxu0 0
      %654 = vmatpush1.bf16.msra.mxu0 0
      %655 = vmatprep.subr.bf16.mxu0 0
      %656 = vmatpush1.bf16.msra.mxu0 0
      %657 = vmatprep.subr.bf16.mxu0 0
      %658 = vmatpush1.bf16.msra.mxu0 0
      %659 = vmatprep.subr.bf16.mxu0 0
      %660 = vmatpush1.bf16.msra.mxu0 0
      %661 = vmatprep.mubr.bf16.mxu0 0
      %662 = vmatmul.mubr.bf16.gmra.mrb[0].mxu0 %v597
      %v663 = vpop.f32.mrb[0].mxu0
      %v664 = vadd.f32 %v582, %v663
      %v665 = vpop.f32.mrb[0].mxu0
      %v666 = vpop.f32.mrb[0].mxu0
      %v667 = vadd.f32 %v582, %v666
      %v668 = vpop.f32.mrb[0].mxu0
      %669 = vmatprep.mubr.bf16.mxu0 0
      %670 = vmatmul.mubr.bf16.gmra.mrb[0].mxu0 %v600
      %v671 = vpop.f32.mrb[0].mxu0
      %v672 = vadd.f32 %v582, %v671
      %v673 = vpop.f32.mrb[0].mxu0
      %v674 = vpop.f32.mrb[0].mxu0
      %v675 = vadd.f32 %v582, %v674
      %v676 = vpop.f32.mrb[0].mxu0
      %677 = vmatprep.mubr.bf16.mxu0 0
      %678 = vmatmul.mubr.bf16.gmra.mrb[0].mxu0 %v603
      %v679 = vpop.f32.mrb[0].mxu0
      %v680 = vadd.f32 %v582, %v679
      %v681 = vpop.f32.mrb[0].mxu0
      %v682 = vpop.f32.mrb[0].mxu0
      %v683 = vadd.f32 %v582, %v682
      %v684 = vpop.f32.mrb[0].mxu0
      %685 = vmatprep.mubr.bf16.mxu0 0
      %686 = vmatmul.mubr.bf16.gmra.mrb[0].mxu0 %v606
      %v687 = vpop.f32.mrb[0].mxu0
      %v688 = vadd.f32 %v582, %v687
      %v689 = vpop.f32.mrb[0].mxu0
      %v690 = vpop.f32.mrb[0].mxu0
      %v691 = vadd.f32 %v582, %v690
      %v692 = vpop.f32.mrb[0].mxu0
      %693 = vmatprep.mubr.bf16.mxu0 0
      %694 = vmatmul.mubr.bf16.gmra.mrb[0].mxu0 %v609
      %v695 = vpop.f32.mrb[0].mxu0
      %v696 = vadd.f32 %v582, %v695
      %v697 = vpop.f32.mrb[0].mxu0
      %v698 = vpop.f32.mrb[0].mxu0
      %v699 = vadd.f32 %v582, %v698
      %v700 = vpop.f32.mrb[0].mxu0
      %701 = vmatprep.mubr.bf16.mxu0 0
      %702 = vmatmul.mubr.bf16.gmra.mrb[0].mxu0 %v612
      %v703 = vpop.f32.mrb[0].mxu0
      %v704 = vadd.f32 %v582, %v703
      %v705 = vpop.f32.mrb[0].mxu0
      %v706 = vpop.f32.mrb[0].mxu0
      %v707 = vadd.f32 %v582, %v706
      %v708 = vpop.f32.mrb[0].mxu0
      %709 = vmatprep.mubr.bf16.mxu0 0
      %710 = vmatmul.mubr.bf16.gmra.mrb[0].mxu0 %v615
      %v711 = vpop.f32.mrb[0].mxu0
      %v712 = vadd.f32 %v582, %v711
      %v713 = vpop.f32.mrb[0].mxu0
      %v714 = vpop.f32.mrb[0].mxu0
      %v715 = vadd.f32 %v582, %v714
      %v716 = vpop.f32.mrb[0].mxu0
      %717 = vmatprep.mubr.bf16.mxu0 0
      %718 = vmatmul.mubr.bf16.gmra.mrb[0].mxu0 %v618
      %v719 = vpop.f32.mrb[0].mxu0
      %v720 = vadd.f32 %v582, %v719
      %v721 = vpop.f32.mrb[0].mxu0
      %v722 = vpop.f32.mrb[0].mxu0
      %v723 = vadd.f32 %v582, %v722
      %v724 = vpop.f32.mrb[0].mxu0
      %725 = vmatprep.mubr.bf16.mxu0 0
      %726 = vmatmul.mubr.bf16.gmra.mrb[0].mxu0 %v621
      %v727 = vpop.f32.mrb[0].mxu0
      %v728 = vadd.f32 %v582, %v727
      %v729 = vpop.f32.mrb[0].mxu0
      %v730 = vpop.f32.mrb[0].mxu0
      %v731 = vadd.f32 %v582, %v730
      %v732 = vpop.f32.mrb[0].mxu0
      %733 = vmatprep.mubr.bf16.mxu0 0
      %734 = vmatmul.mubr.bf16.gmra.mrb[0].mxu0 %v624
      %v735 = vpop.f32.mrb[0].mxu0
      %v736 = vadd.f32 %v582, %v735
      %v737 = vpop.f32.mrb[0].mxu0
      %v738 = vpop.f32.mrb[0].mxu0
      %v739 = vadd.f32 %v582, %v738
      %v740 = vpop.f32.mrb[0].mxu0
      %741 = vmatprep.mubr.bf16.mxu0 0
      %742 = vmatmul.mubr.bf16.gmra.mrb[0].mxu0 %v627
      %v743 = vpop.f32.mrb[0].mxu0
      %v744 = vadd.f32 %v582, %v743
      %v745 = vpop.f32.mrb[0].mxu0
      %v746 = vpop.f32.mrb[0].mxu0
      %v747 = vadd.f32 %v582, %v746
      %v748 = vpop.f32.mrb[0].mxu0
      %749 = vdwg.mxu0
      %750 = vst [vmem:[%s199] sm:$0xff] %v664
      %751 = vst [vmem:[%s199 + $0x8] sm:$0xff] %v667
      %752 = vst [vmem:[%s199 + $0x10] sm:$0xff] %v672
      %753 = vst [vmem:[%s199 + $0x18] sm:$0xff] %v675
      %754 = vst [vmem:[%s199 + $0x20] sm:$0xff] %v680
      %755 = vst [vmem:[%s199 + $0x28] sm:$0xff] %v683
      %756 = vst [vmem:[%s199 + $0x30] sm:$0xff] %v688
      %757 = vst [vmem:[%s199 + $0x38] sm:$0xff] %v691
      %758 = vst [vmem:[%s199 + $0x40] sm:$0xff] %v696
      %759 = vst [vmem:[%s199 + $0x48] sm:$0xff] %v699
      %760 = vst [vmem:[%s199 + $0x50] sm:$0xff] %v704
      %761 = vst [vmem:[%s199 + $0x58] sm:$0xff] %v707
      %762 = vst [vmem:[%s199 + $0x60] sm:$0xff] %v712
      %763 = vst [vmem:[%s199 + $0x68] sm:$0xff] %v715
      %764 = vst [vmem:[%s199 + $0x70] sm:$0xff] %v720
      %765 = vst [vmem:[%s199 + $0x78] sm:$0xff] %v723
      %766 = vst [vmem:[%s199 + $0x80] sm:$0xff] %v728
      %767 = vst [vmem:[%s199 + $0x88] sm:$0xff] %v731
      %768 = vst [vmem:[%s199 + $0x90] sm:$0xff] %v736
      %769 = vst [vmem:[%s199 + $0x98] sm:$0xff] %v739
      %770 = vst [vmem:[%s199 + $0xa0] sm:$0xff] %v744
      %771 = vst [vmem:[%s199 + $0xa8] sm:$0xff] %v747
      %s772 = smul.u32 22, %s15
      %p773 = scmp.lt.s32.totalorder %s772, 65
      %s774 = scalar_select %p773, %s772, 65
      %s775 = smul.addr %s774, 8
      %s776 = scalar_lea.vmem %s4, %s775
      // Predicated region
      $region37: #{bs_roformer_forward.11} parent=35 // pred_check
        %p777 = pneg %p122
      $region38: #{bs_roformer_forward.11} parent=35 // pred_check_branch
        %779 = sbr.rel (%p777) target = $region40
      $region39: #{bs_roformer_forward.11} parent=35 // pred_region
        %s780 = smul.u32 22, %s15
      $region40: #{bs_roformer_forward.11} parent=35 // pred_fallthru
        _
    $region36: #{bs_roformer_forward.11} parent=5 // pred_fallthru
      _
    %p781 = scmp.le.s32.totalorder 2, %s10
    // Predicated region
    $region41: #{bs_roformer_forward.11} parent=5 // pred_check
      %p782 = pneg %p781
    $region42: #{bs_roformer_forward.11} parent=5 // pred_check_branch
      %784 = sbr.rel (%p782) target = $region44
    $region43: #{bs_roformer_forward.11} parent=5 // pred_region
      %s785 = ssub.s32 %s10, 2
      // Predicated region
      $region45: #{bs_roformer_forward.11} parent=43 // pred_check
        %p786 = pneg %p128
      $region46: #{bs_roformer_forward.11} parent=43 // pred_check_branch
        %788 = sbr.rel (%p786) target = $region48
      $region47: #{bs_roformer_forward.11} parent=43 // pred_region
        %s789 = smul.u32 22, %s16
        %p790 = scmp.lt.s32.totalorder %s789, 65
        %s791 = scalar_select %p790, %s789, 65
        %s792 = smul.addr %s791, 8
        %s793 = scalar_lea.vmem %s4, %s792
      $region48: #{bs_roformer_forward.11} parent=43 // pred_fallthru
        _
    $region44: #{bs_roformer_forward.11} parent=5 // pred_fallthru
      _
  $region6: #{bs_roformer_forward.11} parent=0 // loop_footer
    %s14 = sadd.s32 1, %s10
  $region7: #{bs_roformer_forward.11} parent=0 // loop_footer_branch
    %9 = sbr.rel target = $region3
  $region8: #{bs_roformer_forward.11} parent=0 // loop_exit
    _

// kernel: bs_roformer_forward.12
$region0: #{bs_roformer_forward.12}
  #allocation0 [shape = 'u32[]', space=smem, size = 0x4, offset = 0x4, fixed_abs, tag = 'smem constant byte address 0x4 - core index']
  #allocation1 [shape = 'u32[144,128]{1,0:T(1,128)}', space=vmem, size = 0x12000, scoped, tag = 'internal scratch']
  %s0 = inlined_call_operand.vmem [shape: f32[16,4,33,8], index: 0, kind: input, shape index: {}]
  %s1 = inlined_call_operand.vmem [shape: f32[16,4,33,8], index: 1, kind: input, shape index: {}]
  %s2 = inlined_call_operand.vmem [shape: f32[16,4,33,8], index: 2, kind: input, shape index: {}]
  %s3 = inlined_call_operand.vmem [shape: f32[16,4,33], index: 3, kind: input, shape index: {}]
  %s4 = inlined_call_operand.vmem [shape: f32[33,4], index: 4, kind: input, shape index: {}]
  %s5 = inlined_call_operand.vmem [shape: f32[33,4], index: 5, kind: input, shape index: {}]
  %s6 = inlined_call_operand.vmem [shape: bf16[4,8,32], index: 6, kind: input, shape index: {}]
  %s7 = inlined_call_operand.vmem [shape: f32[16,33,32], index: 7, kind: output, shape index: {}]
  %s8 = sld [smem:[#allocation0]]
  $region61: #{bs_roformer_forward.12} parent=0
    _
  %s10 = ssub.s32 1, %s8
  %s11 = scalar_select 0, %s10, %s8
  loop: start=0, step=1, limit=18
  $region2: #{bs_roformer_forward.12} parent=0 // loop_pre_header
    _
  $region3: #{bs_roformer_forward.12} parent=0 // loop_header
    %s13 = sphi 0, %s17
    %p14 = scmp.ge.s32.totalorder %s13, 18
    %s23 = sphi 0, %s25
    %s26 = sphi 0, %s23
    %s27 = sphi 0, %s26
    %s43 = sphi 0, %s27
    %s49 = sphi 0, %s51
    %s52 = sphi 0, %s49
    %s53 = sphi 0, %s52
    %s69 = sphi 0, %s53
    %s75 = sphi 0, %s77
    %s78 = sphi 0, %s75
    %s79 = sphi 0, %s78
    %s95 = sphi 0, %s79
    %s101 = sphi 0, %s103
    %s104 = sphi 0, %s101
    %s105 = sphi 0, %s104
    %s121 = sphi 0, %s105
    %s125 = sphi 0, %s125
    %s127 = sphi 0, %s125
    %s128 = sphi 0, %s127
    %s142 = sphi 0, %s128
    %s146 = sphi 0, %s146
    %s148 = sphi 0, %s146
    %s149 = sphi 0, %s148
    %s163 = sphi 0, %s149
    %s167 = sphi 0, %s167
    %s169 = sphi 0, %s167
    %s170 = sphi 0, %s169
    %s184 = sphi 0, %s170
    %s190 = sphi 0, %s192
    %s193 = sphi 0, %s190
    %s194 = sphi 0, %s193
    %s210 = sphi 0, %s194
  $region4: #{bs_roformer_forward.12} parent=0 // loop_header_branch
    %16 = sbr.rel (%p14) target = $region8
  $region5: #{bs_roformer_forward.12} parent=0 // loop_body
    %s18 = ssub.s32 %s13, 1
    %s19 = ssub.s32 %s13, 2
    %s20 = sadd.s32 %s13, 1
    %s21 = ssub.s32 %s13, %s20
    %p22 = scmp.eq.s32.totalorder %s21, 0
    %s24 = sadd.s32 %s23, 1
    %s25 = scalar_select %p22, %s23, %s24
    %p28 = pneg %p22
    %p29 = scmp.eq.s32.totalorder %s13, 15
    %p30 = por %p28, %p29
    %p31 = scmp.ne.s32.totalorder %s23, %s26
    %p32 = scmp.eq.s32.totalorder %s13, 0
    %p33 = por %p31, %p32
    %p34 = scmp.ne.s32.totalorder %s23, %s26
    %p35 = scmp.eq.s32.totalorder %s18, 15
    %p36 = por %p34, %p35
    %p37 = scmp.ne.s32.totalorder %s26, %s27
    %p38 = scmp.eq.s32.totalorder %s18, 0
    %p39 = por %p37, %p38
    %p40 = scmp.ne.s32.totalorder %s26, %s27
    %p41 = scmp.eq.s32.totalorder %s19, 15
    %p42 = por %p40, %p41
    %p44 = scmp.ne.s32.totalorder %s27, %s43
    %p45 = scmp.eq.s32.totalorder %s19, 0
    %p46 = por %p44, %p45
    %s47 = ssub.s32 %s13, %s20
    %p48 = scmp.eq.s32.totalorder %s47, 0
    %s50 = sadd.s32 %s49, 1
    %s51 = scalar_select %p48, %s49, %s50
    %p54 = pneg %p48
    %p55 = scmp.eq.s32.totalorder %s13, 15
    %p56 = por %p54, %p55
    %p57 = scmp.ne.s32.totalorder %s49, %s52
    %p58 = scmp.eq.s32.totalorder %s13, 0
    %p59 = por %p57, %p58
    %p60 = scmp.ne.s32.totalorder %s49, %s52
    %p61 = scmp.eq.s32.totalorder %s18, 15
    %p62 = por %p60, %p61
    %p63 = scmp.ne.s32.totalorder %s52, %s53
    %p64 = scmp.eq.s32.totalorder %s18, 0
    %p65 = por %p63, %p64
    %p66 = scmp.ne.s32.totalorder %s52, %s53
    %p67 = scmp.eq.s32.totalorder %s19, 15
    %p68 = por %p66, %p67
    %p70 = scmp.ne.s32.totalorder %s53, %s69
    %p71 = scmp.eq.s32.totalorder %s19, 0
    %p72 = por %p70, %p71
    %s73 = ssub.s32 %s13, %s20
    %p74 = scmp.eq.s32.totalorder %s73, 0
    %s76 = sadd.s32 %s75, 1
    %s77 = scalar_select %p74, %s75, %s76
    %p80 = pneg %p74
    %p81 = scmp.eq.s32.totalorder %s13, 15
    %p82 = por %p80, %p81
    %p83 = scmp.ne.s32.totalorder %s75, %s78
    %p84 = scmp.eq.s32.totalorder %s13, 0
    %p85 = por %p83, %p84
    %p86 = scmp.ne.s32.totalorder %s75, %s78
    %p87 = scmp.eq.s32.totalorder %s18, 15
    %p88 = por %p86, %p87
    %p89 = scmp.ne.s32.totalorder %s78, %s79
    %p90 = scmp.eq.s32.totalorder %s18, 0
    %p91 = por %p89, %p90
    %p92 = scmp.ne.s32.totalorder %s78, %s79
    %p93 = scmp.eq.s32.totalorder %s19, 15
    %p94 = por %p92, %p93
    %p96 = scmp.ne.s32.totalorder %s79, %s95
    %p97 = scmp.eq.s32.totalorder %s19, 0
    %p98 = por %p96, %p97
    %s99 = ssub.s32 %s13, %s20
    %p100 = scmp.eq.s32.totalorder %s99, 0
    %s102 = sadd.s32 %s101, 1
    %s103 = scalar_select %p100, %s101, %s102
    %p106 = pneg %p100
    %p107 = scmp.eq.s32.totalorder %s13, 15
    %p108 = por %p106, %p107
    %p109 = scmp.ne.s32.totalorder %s101, %s104
    %p110 = scmp.eq.s32.totalorder %s13, 0
    %p111 = por %p109, %p110
    %p112 = scmp.ne.s32.totalorder %s101, %s104
    %p113 = scmp.eq.s32.totalorder %s18, 15
    %p114 = por %p112, %p113
    %p115 = scmp.ne.s32.totalorder %s104, %s105
    %p116 = scmp.eq.s32.totalorder %s18, 0
    %p117 = por %p115, %p116
    %p118 = scmp.ne.s32.totalorder %s104, %s105
    %p119 = scmp.eq.s32.totalorder %s19, 15
    %p120 = por %p118, %p119
    %p122 = scmp.ne.s32.totalorder %s105, %s121
    %p123 = scmp.eq.s32.totalorder %s19, 0
    %p124 = por %p122, %p123
    %s126 = sadd.s32 %s125, 1
    %p129 = scmp.eq.s32.totalorder %s13, 15
    %p130 = scmp.ne.s32.totalorder %s125, %s127
    %p131 = scmp.eq.s32.totalorder %s13, 0
    %p132 = por %p130, %p131
    %p133 = scmp.ne.s32.totalorder %s125, %s127
    %p134 = scmp.eq.s32.totalorder %s18, 15
    %p135 = por %p133, %p134
    %p136 = scmp.ne.s32.totalorder %s127, %s128
    %p137 = scmp.eq.s32.totalorder %s18, 0
    %p138 = por %p136, %p137
    %p139 = scmp.ne.s32.totalorder %s127, %s128
    %p140 = scmp.eq.s32.totalorder %s19, 15
    %p141 = por %p139, %p140
    %p143 = scmp.ne.s32.totalorder %s128, %s142
    %p144 = scmp.eq.s32.totalorder %s19, 0
    %p145 = por %p143, %p144
    %s147 = sadd.s32 %s146, 1
    %p150 = scmp.eq.s32.totalorder %s13, 15
    %p151 = scmp.ne.s32.totalorder %s146, %s148
    %p152 = scmp.eq.s32.totalorder %s13, 0
    %p153 = por %p151, %p152
    %p154 = scmp.ne.s32.totalorder %s146, %s148
    %p155 = scmp.eq.s32.totalorder %s18, 15
    %p156 = por %p154, %p155
    %p157 = scmp.ne.s32.totalorder %s148, %s149
    %p158 = scmp.eq.s32.totalorder %s18, 0
    %p159 = por %p157, %p158
    %p160 = scmp.ne.s32.totalorder %s148, %s149
    %p161 = scmp.eq.s32.totalorder %s19, 15
    %p162 = por %p160, %p161
    %p164 = scmp.ne.s32.totalorder %s149, %s163
    %p165 = scmp.eq.s32.totalorder %s19, 0
    %p166 = por %p164, %p165
    %s168 = sadd.s32 %s167, 1
    %p171 = scmp.eq.s32.totalorder %s13, 15
    %p172 = scmp.ne.s32.totalorder %s167, %s169
    %p173 = scmp.eq.s32.totalorder %s13, 0
    %p174 = por %p172, %p173
    %p175 = scmp.ne.s32.totalorder %s167, %s169
    %p176 = scmp.eq.s32.totalorder %s18, 15
    %p177 = por %p175, %p176
    %p178 = scmp.ne.s32.totalorder %s169, %s170
    %p179 = scmp.eq.s32.totalorder %s18, 0
    %p180 = por %p178, %p179
    %p181 = scmp.ne.s32.totalorder %s169, %s170
    %p182 = scmp.eq.s32.totalorder %s19, 15
    %p183 = por %p181, %p182
    %p185 = scmp.ne.s32.totalorder %s170, %s184
    %p186 = scmp.eq.s32.totalorder %s19, 0
    %p187 = por %p185, %p186
    %s188 = ssub.s32 %s13, %s20
    %p189 = scmp.eq.s32.totalorder %s188, 0
    %s191 = sadd.s32 %s190, 1
    %s192 = scalar_select %p189, %s190, %s191
    %p195 = pneg %p189
    %p196 = scmp.eq.s32.totalorder %s13, 15
    %p197 = por %p195, %p196
    %p198 = scmp.ne.s32.totalorder %s190, %s193
    %p199 = scmp.eq.s32.totalorder %s13, 0
    %p200 = por %p198, %p199
    %p201 = scmp.ne.s32.totalorder %s190, %s193
    %p202 = scmp.eq.s32.totalorder %s18, 15
    %p203 = por %p201, %p202
    %p204 = scmp.ne.s32.totalorder %s193, %s194
    %p205 = scmp.eq.s32.totalorder %s18, 0
    %p206 = por %p204, %p205
    %p207 = scmp.ne.s32.totalorder %s193, %s194
    %p208 = scmp.eq.s32.totalorder %s19, 15
    %p209 = por %p207, %p208
    %p211 = scmp.ne.s32.totalorder %s194, %s210
    %p212 = scmp.eq.s32.totalorder %s19, 0
    %p213 = por %p211, %p212
    %p214 = scmp.le.s32.totalorder 1, %s13
    %p215 = scmp.lt.s32.totalorder %s13, 17
    %p216 = pnand %p214, %p215
    %p217 = pneg %p216
    // Predicated region
    $region9: #{bs_roformer_forward.12} parent=5 // pred_check
      _
    $region10: #{bs_roformer_forward.12} parent=5 // pred_check_branch
      %219 = sbr.rel (%p216) target = $region12
    $region11: #{bs_roformer_forward.12} parent=5 // pred_region
      %s220 = ssub.s32 %s13, 1
      // Predicated region
      $region13: #{bs_roformer_forward.12} parent=11 // pred_check
        %p221 = pneg %p138
      $region14: #{bs_roformer_forward.12} parent=11 // pred_check_branch
        %223 = sbr.rel (%p221) target = $region16
      $region15: #{bs_roformer_forward.12} parent=11 // pred_region
        _
      $region16: #{bs_roformer_forward.12} parent=11 // pred_fallthru
        _
      // Predicated region
      $region17: #{bs_roformer_forward.12} parent=11 // pred_check
        %p224 = pneg %p159
      $region18: #{bs_roformer_forward.12} parent=11 // pred_check_branch
        %226 = sbr.rel (%p224) target = $region20
      $region19: #{bs_roformer_forward.12} parent=11 // pred_region
        _
      $region20: #{bs_roformer_forward.12} parent=11 // pred_fallthru
        _
      // Predicated region
      $region21: #{bs_roformer_forward.12} parent=11 // pred_check
        %p227 = pneg %p180
      $region22: #{bs_roformer_forward.12} parent=11 // pred_check_branch
        %229 = sbr.rel (%p227) target = $region24
      $region23: #{bs_roformer_forward.12} parent=11 // pred_region
        _
      $region24: #{bs_roformer_forward.12} parent=11 // pred_fallthru
        _
    $region12: #{bs_roformer_forward.12} parent=5 // pred_fallthru
      _
    %p230 = scmp.lt.s32.totalorder %s13, 16
    // Predicated region
    $region25: #{bs_roformer_forward.12} parent=5 // pred_check
      %p231 = pneg %p230
    $region26: #{bs_roformer_forward.12} parent=5 // pred_check_branch
      %233 = sbr.rel (%p231) target = $region28
    $region27: #{bs_roformer_forward.12} parent=5 // pred_region
      // Predicated region
      $region29: #{bs_roformer_forward.12} parent=27 // pred_check
        %p234 = pneg %p33
      $region30: #{bs_roformer_forward.12} parent=27 // pred_check_branch
        %236 = sbr.rel (%p234) target = $region32
      $region31: #{bs_roformer_forward.12} parent=27 // pred_region
        %p237 = scmp.lt.s32.totalorder %s13, 15
        %s238 = scalar_select %p237, %s13, 15
        %s239 = smul.addr %s238, 20
        %s240 = smul.addr %s239, 8
        %s241 = scalar_lea.vmem %s0, %s240
      $region32: #{bs_roformer_forward.12} parent=27 // pred_fallthru
        _
      // Predicated region
      $region33: #{bs_roformer_forward.12} parent=27 // pred_check
        %p242 = pneg %p59
      $region34: #{bs_roformer_forward.12} parent=27 // pred_check_branch
        %244 = sbr.rel (%p242) target = $region36
      $region35: #{bs_roformer_forward.12} parent=27 // pred_region
        %p245 = scmp.lt.s32.totalorder %s13, 15
        %s246 = scalar_select %p245, %s13, 15
        %s247 = smul.addr %s246, 20
        %s248 = smul.addr %s247, 8
        %s249 = scalar_lea.vmem %s1, %s248
      $region36: #{bs_roformer_forward.12} parent=27 // pred_fallthru
        _
      // Predicated region
      $region37: #{bs_roformer_forward.12} parent=27 // pred_check
        %p250 = pneg %p85
      $region38: #{bs_roformer_forward.12} parent=27 // pred_check_branch
        %252 = sbr.rel (%p250) target = $region40
      $region39: #{bs_roformer_forward.12} parent=27 // pred_region
        %p253 = scmp.lt.s32.totalorder %s13, 15
        %s254 = scalar_select %p253, %s13, 15
        %s255 = smul.addr %s254, 20
        %s256 = smul.addr %s255, 8
        %s257 = scalar_lea.vmem %s2, %s256
      $region40: #{bs_roformer_forward.12} parent=27 // pred_fallthru
        _
      // Predicated region
      $region41: #{bs_roformer_forward.12} parent=27 // pred_check
        %p258 = pneg %p111
      $region42: #{bs_roformer_forward.12} parent=27 // pred_check_branch
        %260 = sbr.rel (%p258) target = $region44
      $region43: #{bs_roformer_forward.12} parent=27 // pred_region
        %p261 = scmp.lt.s32.totalorder %s13, 15
        %s262 = scalar_select %p261, %s13, 15
        %s263 = smul.addr %s262, 4
        %s264 = scalar_lea.vmem %s3, %s263
      $region44: #{bs_roformer_forward.12} parent=27 // pred_fallthru
        _
    $region28: #{bs_roformer_forward.12} parent=5 // pred_fallthru
      _
    %p265 = scmp.le.s32.totalorder 1, %s13
    %p266 = scmp.lt.s32.totalorder %s13, 17
    %p267 = pnand %p265, %p266
    %p268 = pneg %p267
    // Predicated region
    $region45: #{bs_roformer_forward.12} parent=5 // pred_check
      _
    $region46: #{bs_roformer_forward.12} parent=5 // pred_check_branch
      %270 = sbr.rel (%p267) target = $region48
    $region47: #{bs_roformer_forward.12} parent=5 // pred_region
      %s271 = ssub.s32 %s13, 1
      %p272 = scmp.lt.s32.totalorder %s18, 15
      %s273 = scalar_select %p272, %s18, 15
      %s274 = smul.addr %s273, 20
      %s275 = smul.addr %s274, 8
      %s276 = scalar_lea.vmem %s0, %s275
      %p277 = pneg %p39
      %p278 = pneg %p36
      %p279 = scmp.lt.s32.totalorder %s18, 15
      %s280 = scalar_select %p279, %s18, 15
      %s281 = smul.addr %s280, 20
      %s282 = smul.addr %s281, 8
      %s283 = scalar_lea.vmem %s1, %s282
      %p284 = pneg %p65
      %p285 = pneg %p62
      %p286 = scmp.lt.s32.totalorder %s18, 15
      %s287 = scalar_select %p286, %s18, 15
      %s288 = smul.addr %s287, 20
      %s289 = smul.addr %s288, 8
      %s290 = scalar_lea.vmem %s2, %s289
      %p291 = pneg %p91
      %p292 = pneg %p88
      %p293 = scmp.lt.s32.totalorder %s18, 15
      %s294 = scalar_select %p293, %s18, 15
      %s295 = smul.addr %s294, 4
      %s296 = scalar_lea.vmem %s3, %s295
      %p297 = pneg %p117
      %p298 = pneg %p114
      %p299 = pneg %p138
      %p300 = pneg %p135
      %p301 = pneg %p159
      %p302 = pneg %p156
      %p303 = pneg %p180
      %p304 = pneg %p177
      %p305 = pneg %p206
      %p306 = pneg %p203
      %p307 = scmp.lt.s32.totalorder %s18, 15
      %s308 = scalar_select %p307, %s18, 15
      %s309 = smul.addr %s308, 5
      %s310 = smul.addr %s309, 8
      %s311 = scalar_lea.vmem %s7, %s310
      %p312 = scmp.lt.s32.totalorder %s18, 15
      %s313 = scalar_select %p312, %s18, 15
      %s314 = smul.addr %s313, 20
      %s315 = smul.addr %s314, 8
      %s316 = scalar_lea.vmem %s0, %s315
      %p317 = scmp.lt.s32.totalorder %s18, 15
      %s318 = scalar_select %p317, %s18, 15
      %s319 = smul.addr %s318, 20
      %s320 = smul.addr %s319, 8
      %s321 = scalar_lea.vmem %s1, %s320
      %p322 = scmp.lt.s32.totalorder %s18, 15
      %s323 = scalar_select %p322, %s18, 15
      %s324 = smul.addr %s323, 20
      %s325 = smul.addr %s324, 8
      %s326 = scalar_lea.vmem %s2, %s325
      %p327 = scmp.lt.s32.totalorder %s18, 15
      %s328 = scalar_select %p327, %s18, 15
      %s329 = smul.addr %s328, 4
      %s330 = scalar_lea.vmem %s3, %s329
      %p331 = scmp.lt.s32.totalorder %s18, 15
      %s332 = scalar_select %p331, %s18, 15
      %s333 = smul.addr %s332, 5
      %s334 = smul.addr %s333, 8
      %s335 = scalar_lea.vmem %s7, %s334
      %v337 = vld [vmem:[%s4] sm:$0xff]
      %v338 = vld [vmem:[%s4 + $0x8] sm:$0xff]
      %v339 = vld [vmem:[%s4 + $0x10] sm:$0xff]
      %v340 = vld [vmem:[%s4 + $0x18] sm:$0xff]
      %v341 = vld [vmem:[%s4 + $0x20] sm:$0x1]
      %v342 = vld [vmem:[%s5] sm:$0xff]
      %v343 = vld [vmem:[%s5 + $0x8] sm:$0xff]
      %v344 = vld [vmem:[%s5 + $0x10] sm:$0xff]
      %v345 = vld [vmem:[%s5 + $0x18] sm:$0xff]
      %v346 = vld [vmem:[%s5 + $0x20] sm:$0x1]
      %v347 = vld [vmem:[%s316] sm:$0xff]
      %v348 = vld [vmem:[%s316 + $0x8] sm:$0xff]
      %v349 = vld [vmem:[%s316 + $0x10] sm:$0xff]
      %v350 = vld [vmem:[%s316 + $0x18] sm:$0xff]
      %v351 = vld [vmem:[%s316 + $0x20] sm:$0x1]
      %v352 = vld [vmem:[%s316 + $0x28] sm:$0xff]
      %v353 = vld [vmem:[%s316 + $0x30] sm:$0xff]
      %v354 = vld [vmem:[%s316 + $0x38] sm:$0xff]
      %v355 = vld [vmem:[%s316 + $0x40] sm:$0xff]
      %v356 = vld [vmem:[%s316 + $0x48] sm:$0x1]
      %v357 = vld [vmem:[%s316 + $0x50] sm:$0xff]
      %v358 = vld [vmem:[%s316 + $0x58] sm:$0xff]
      %v359 = vld [vmem:[%s316 + $0x60] sm:$0xff]
      %v360 = vld [vmem:[%s316 + $0x68] sm:$0xff]
      %v361 = vld [vmem:[%s316 + $0x70] sm:$0x1]
      %v362 = vld [vmem:[%s316 + $0x78] sm:$0xff]
      %v363 = vld [vmem:[%s316 + $0x80] sm:$0xff]
      %v364 = vld [vmem:[%s316 + $0x88] sm:$0xff]
      %v365 = vld [vmem:[%s316 + $0x90] sm:$0xff]
      %v366 = vld [vmem:[%s316 + $0x98] sm:$0x1]
      %v367 = vmul.f32 %v347, 0.35355338
      %v368 = vmul.f32 %v348, 0.35355338
      %v369 = vmul.f32 %v349, 0.35355338
      %v370 = vmul.f32 %v350, 0.35355338
      %v371 = vmul.f32 %v351, 0.35355338
      %v372 = vmul.f32 %v352, 0.35355338
      %v373 = vmul.f32 %v353, 0.35355338
      %v374 = vmul.f32 %v354, 0.35355338
      %v375 = vmul.f32 %v355, 0.35355338
      %v376 = vmul.f32 %v356, 0.35355338
      %v377 = vmul.f32 %v357, 0.35355338
      %v378 = vmul.f32 %v358, 0.35355338
      %v379 = vmul.f32 %v359, 0.35355338
      %v380 = vmul.f32 %v360, 0.35355338
      %v381 = vmul.f32 %v361, 0.35355338
      %v382 = vmul.f32 %v362, 0.35355338
      %v383 = vmul.f32 %v363, 0.35355338
      %v384 = vmul.f32 %v364, 0.35355338
      %v385 = vmul.f32 %v365, 0.35355338
      %v386 = vmul.f32 %v366, 0.35355338
      %v387 = vld [vmem:[%s321] sm:$0xff]
      %v388 = vld [vmem:[%s321 + $0x8] sm:$0xff]
      %v389 = vld [vmem:[%s321 + $0x10] sm:$0xff]
      %v390 = vld [vmem:[%s321 + $0x18] sm:$0xff]
      %v391 = vld [vmem:[%s321 + $0x20] sm:$0x1]
      %v392 = vld [vmem:[%s321 + $0x28] sm:$0xff]
      %v393 = vld [vmem:[%s321 + $0x30] sm:$0xff]
      %v394 = vld [vmem:[%s321 + $0x38] sm:$0xff]
      %v395 = vld [vmem:[%s321 + $0x40] sm:$0xff]
      %v396 = vld [vmem:[%s321 + $0x48] sm:$0x1]
      %v397 = vld [vmem:[%s321 + $0x50] sm:$0xff]
      %v398 = vld [vmem:[%s321 + $0x58] sm:$0xff]
      %v399 = vld [vmem:[%s321 + $0x60] sm:$0xff]
      %v400 = vld [vmem:[%s321 + $0x68] sm:$0xff]
      %v401 = vld [vmem:[%s321 + $0x70] sm:$0x1]
      %v402 = vld [vmem:[%s321 + $0x78] sm:$0xff]
      %v403 = vld [vmem:[%s321 + $0x80] sm:$0xff]
      %v404 = vld [vmem:[%s321 + $0x88] sm:$0xff]
      %v405 = vld [vmem:[%s321 + $0x90] sm:$0xff]
      %v406 = vld [vmem:[%s321 + $0x98] sm:$0x1]
      %v407 = vld [vmem:[%s326] sm:$0xff]
      %v408 = vld [vmem:[%s326 + $0x8] sm:$0xff]
      %v409 = vld [vmem:[%s326 + $0x10] sm:$0xff]
      %v410 = vld [vmem:[%s326 + $0x18] sm:$0xff]
      %v411 = vld [vmem:[%s326 + $0x20] sm:$0x1]
      %v412 = vld [vmem:[%s326 + $0x28] sm:$0xff]
      %v413 = vld [vmem:[%s326 + $0x30] sm:$0xff]
      %v414 = vld [vmem:[%s326 + $0x38] sm:$0xff]
      %v415 = vld [vmem:[%s326 + $0x40] sm:$0xff]
      %v416 = vld [vmem:[%s326 + $0x48] sm:$0x1]
      %v417 = vld [vmem:[%s326 + $0x50] sm:$0xff]
      %v418 = vld [vmem:[%s326 + $0x58] sm:$0xff]
      %v419 = vld [vmem:[%s326 + $0x60] sm:$0xff]
      %v420 = vld [vmem:[%s326 + $0x68] sm:$0xff]
      %v421 = vld [vmem:[%s326 + $0x70] sm:$0x1]
      %v422 = vld [vmem:[%s326 + $0x78] sm:$0xff]
      %v423 = vld [vmem:[%s326 + $0x80] sm:$0xff]
      %v424 = vld [vmem:[%s326 + $0x88] sm:$0xff]
      %v425 = vld [vmem:[%s326 + $0x90] sm:$0xff]
      %v426 = vld [vmem:[%s326 + $0x98] sm:$0x1]
      %v427 = vpack.c.bf16 %v408, %v407
      %v428 = vpack.c.bf16 %v410, %v409
      %v429 = vpack.c.bf16 %v411, %v411
      %v430 = vpack.c.bf16 %v413, %v412
      %v431 = vpack.c.bf16 %v415, %v414
      %v432 = vpack.c.bf16 %v416, %v416
      %v433 = vpack.c.bf16 %v418, %v417
      %v434 = vpack.c.bf16 %v420, %v419
      %v435 = vpack.c.bf16 %v421, %v421
      %v436 = vpack.c.bf16 %v423, %v422
      %v437 = vpack.c.bf16 %v425, %v424
      %v438 = vpack.c.bf16 %v426, %v426
      %v439 = vmul.f32 %v367, %v337
      %v440 = vmul.f32 %v368, %v338
      %v441 = vmul.f32 %v369, %v339
      %v442 = vmul.f32 %v370, %v340
      %v443 = vmul.f32 %v371, %v341
      %v444 = vmul.f32 %v372, %v337
      %v445 = vmul.f32 %v373, %v338
      %v446 = vmul.f32 %v374, %v339
      %v447 = vmul.f32 %v375, %v340
      %v448 = vmul.f32 %v376, %v341
      %v449 = vmul.f32 %v377, %v337
      %v450 = vmul.f32 %v378, %v338
      %v451 = vmul.f32 %v379, %v339
      %v452 = vmul.f32 %v380, %v340
      %v453 = vmul.f32 %v381, %v341
      %v454 = vmul.f32 %v382, %v337
      %v455 = vmul.f32 %v383, %v338
      %v456 = vmul.f32 %v384, %v339
      %v457 = vmul.f32 %v385, %v340
      %v458 = vmul.f32 %v386, %v341
      %464 = vrot.lane.b32.xlu0 %v342, 4
      %v465 = vpop.permute.xlu0 %464
      %466 = vrot.lane.b32.xlu0 %v343, 4
      %v467 = vpop.permute.xlu0 %466
      %468 = vrot.lane.b32.xlu0 %v344, 4
      %v469 = vpop.permute.xlu0 %468
      %470 = vrot.lane.b32.xlu0 %v345, 4
      %v471 = vpop.permute.xlu0 %470
      %472 = vrot.lane.b32.xlu0 %v346, 4
      %v473 = vpop.permute.xlu0 %472
      %v479 = vmul.f32 %v367, %v465
      %v480 = vmul.f32 %v368, %v467
      %v481 = vmul.f32 %v369, %v469
      %v482 = vmul.f32 %v370, %v471
      %v483 = vmul.f32 %v371, %v473
      %v484 = vmul.f32 %v372, %v465
      %v485 = vmul.f32 %v373, %v467
      %v486 = vmul.f32 %v374, %v469
      %v487 = vmul.f32 %v375, %v471
      %v488 = vmul.f32 %v376, %v473
      %v489 = vmul.f32 %v377, %v465
      %v490 = vmul.f32 %v378, %v467
      %v491 = vmul.f32 %v379, %v469
      %v492 = vmul.f32 %v380, %v471
      %v493 = vmul.f32 %v381, %v473
      %v494 = vmul.f32 %v382, %v465
      %v495 = vmul.f32 %v383, %v467
      %v496 = vmul.f32 %v384, %v469
      %v497 = vmul.f32 %v385, %v471
      %v498 = vmul.f32 %v386, %v473
      %519 = vrot.lane.b32.xlu0 %v479, 124
      %v520 = vpop.permute.xlu0 %519
      %521 = vrot.lane.b32.xlu0 %v480, 124
      %v522 = vpop.permute.xlu0 %521
      %523 = vrot.lane.b32.xlu0 %v481, 124
      %v524 = vpop.permute.xlu0 %523
      %525 = vrot.lane.b32.xlu0 %v482, 124
      %v526 = vpop.permute.xlu0 %525
      %527 = vrot.lane.b32.xlu0 %v483, 124
      %v528 = vpop.permute.xlu0 %527
      %529 = vrot.lane.b32.xlu0 %v484, 124
      %v530 = vpop.permute.xlu0 %529
      %531 = vrot.lane.b32.xlu0 %v485, 124
      %v532 = vpop.permute.xlu0 %531
      %533 = vrot.lane.b32.xlu0 %v486, 124
      %v534 = vpop.permute.xlu0 %533
      %535 = vrot.lane.b32.xlu0 %v487, 124
      %v536 = vpop.permute.xlu0 %535
      %537 = vrot.lane.b32.xlu0 %v488, 124
      %v538 = vpop.permute.xlu0 %537
      %539 = vrot.lane.b32.xlu0 %v489, 124
      %v540 = vpop.permute.xlu0 %539
      %541 = vrot.lane.b32.xlu0 %v490, 124
      %v542 = vpop.permute.xlu0 %541
      %543 = vrot.lane.b32.xlu0 %v491, 124
      %v544 = vpop.permute.xlu0 %543
      %545 = vrot.lane.b32.xlu0 %v492, 124
      %v546 = vpop.permute.xlu0 %545
      %547 = vrot.lane.b32.xlu0 %v493, 124
      %v548 = vpop.permute.xlu0 %547
      %549 = vrot.lane.b32.xlu0 %v494, 124
      %v550 = vpop.permute.xlu0 %549
      %551 = vrot.lane.b32.xlu0 %v495, 124
      %v552 = vpop.permute.xlu0 %551
      %553 = vrot.lane.b32.xlu0 %v496, 124
      %v554 = vpop.permute.xlu0 %553
      %555 = vrot.lane.b32.xlu0 %v497, 124
      %v556 = vpop.permute.xlu0 %555
      %557 = vrot.lane.b32.xlu0 %v498, 124
      %v558 = vpop.permute.xlu0 %557
      %v579 = vsub.f32 %v439, %v520
      %v580 = vsub.f32 %v440, %v522
      %v581 = vsub.f32 %v441, %v524
      %v582 = vsub.f32 %v442, %v526
      %v583 = vsub.f32 %v443, %v528
      %v584 = vsub.f32 %v444, %v530
      %v585 = vsub.f32 %v445, %v532
      %v586 = vsub.f32 %v446, %v534
      %v587 = vsub.f32 %v447, %v536
      %v588 = vsub.f32 %v448, %v538
      %v589 = vsub.f32 %v449, %v540
      %v590 = vsub.f32 %v450, %v542
      %v591 = vsub.f32 %v451, %v544
      %v592 = vsub.f32 %v452, %v546
      %v593 = vsub.f32 %v453, %v548
      %v594 = vsub.f32 %v454, %v550
      %v595 = vsub.f32 %v455, %v552
      %v596 = vsub.f32 %v456, %v554
      %v597 = vsub.f32 %v457, %v556
      %v598 = vsub.f32 %v458, %v558
      %v599 = vpack.c.bf16 %v580, %v579
      %v600 = vpack.c.bf16 %v582, %v581
      %v601 = vpack.c.bf16 %v583, %v583
      %v602 = vpack.c.bf16 %v585, %v584
      %v603 = vpack.c.bf16 %v587, %v586
      %v604 = vpack.c.bf16 %v588, %v588
      %v605 = vpack.c.bf16 %v590, %v589
      %v606 = vpack.c.bf16 %v592, %v591
      %v607 = vpack.c.bf16 %v593, %v593
      %v608 = vpack.c.bf16 %v595, %v594
      %v609 = vpack.c.bf16 %v597, %v596
      %v610 = vpack.c.bf16 %v598, %v598
      %616 = vrot.lane.b32.xlu0 %v337, 4
      %v617 = vpop.permute.xlu0 %616
      %618 = vrot.lane.b32.xlu0 %v338, 4
      %v619 = vpop.permute.xlu0 %618
      %620 = vrot.lane.b32.xlu0 %v339, 4
      %v621 = vpop.permute.xlu0 %620
      %622 = vrot.lane.b32.xlu0 %v340, 4
      %v623 = vpop.permute.xlu0 %622
      %624 = vrot.lane.b32.xlu0 %v341, 4
      %v625 = vpop.permute.xlu0 %624
      %v631 = vmul.f32 %v367, %v617
      %v632 = vmul.f32 %v368, %v619
      %v633 = vmul.f32 %v369, %v621
      %v634 = vmul.f32 %v370, %v623
      %v635 = vmul.f32 %v371, %v625
      %v636 = vmul.f32 %v372, %v617
      %v637 = vmul.f32 %v373, %v619
      %v638 = vmul.f32 %v374, %v621
      %v639 = vmul.f32 %v375, %v623
      %v640 = vmul.f32 %v376, %v625
      %v641 = vmul.f32 %v377, %v617
      %v642 = vmul.f32 %v378, %v619
      %v643 = vmul.f32 %v379, %v621
      %v644 = vmul.f32 %v380, %v623
      %v645 = vmul.f32 %v381, %v625
      %v646 = vmul.f32 %v382, %v617
      %v647 = vmul.f32 %v383, %v619
      %v648 = vmul.f32 %v384, %v621
      %v649 = vmul.f32 %v385, %v623
      %v650 = vmul.f32 %v386, %v625
      %v651 = vmul.f32 %v367, %v342
      %v652 = vmul.f32 %v368, %v343
      %v653 = vmul.f32 %v369, %v344
      %v654 = vmul.f32 %v370, %v345
      %v655 = vmul.f32 %v371, %v346
      %v656 = vmul.f32 %v372, %v342
      %v657 = vmul.f32 %v373, %v343
      %v658 = vmul.f32 %v374, %v344
      %v659 = vmul.f32 %v375, %v345
      %v660 = vmul.f32 %v376, %v346
      %v661 = vmul.f32 %v377, %v342
      %v662 = vmul.f32 %v378, %v343
      %v663 = vmul.f32 %v379, %v344
      %v664 = vmul.f32 %v380, %v345
      %v665 = vmul.f32 %v381, %v346
      %v666 = vmul.f32 %v382, %v342
      %v667 = vmul.f32 %v383, %v343
      %v668 = vmul.f32 %v384, %v344
      %v669 = vmul.f32 %v385, %v345
      %v670 = vmul.f32 %v386, %v346
      %691 = vrot.lane.b32.xlu0 %v651, 4
      %v692 = vpop.permute.xlu0 %691
      %693 = vrot.lane.b32.xlu0 %v652, 4
      %v694 = vpop.permute.xlu0 %693
      %695 = vrot.lane.b32.xlu0 %v653, 4
      %v696 = vpop.permute.xlu0 %695
      %697 = vrot.lane.b32.xlu0 %v654, 4
      %v698 = vpop.permute.xlu0 %697
      %699 = vrot.lane.b32.xlu0 %v655, 4
      %v700 = vpop.permute.xlu0 %699
      %701 = vrot.lane.b32.xlu0 %v656, 4
      %v702 = vpop.permute.xlu0 %701
      %703 = vrot.lane.b32.xlu0 %v657, 4
      %v704 = vpop.permute.xlu0 %703
      %705 = vrot.lane.b32.xlu0 %v658, 4
      %v706 = vpop.permute.xlu0 %705
      %707 = vrot.lane.b32.xlu0 %v659, 4
      %v708 = vpop.permute.xlu0 %707
      %709 = vrot.lane.b32.xlu0 %v660, 4
      %v710 = vpop.permute.xlu0 %709
      %711 = vrot.lane.b32.xlu0 %v661, 4
      %v712 = vpop.permute.xlu0 %711
      %713 = vrot.lane.b32.xlu0 %v662, 4
      %v714 = vpop.permute.xlu0 %713
      %715 = vrot.lane.b32.xlu0 %v663, 4
      %v716 = vpop.permute.xlu0 %715
      %717 = vrot.lane.b32.xlu0 %v664, 4
      %v718 = vpop.permute.xlu0 %717
      %719 = vrot.lane.b32.xlu0 %v665, 4
      %v720 = vpop.permute.xlu0 %719
      %721 = vrot.lane.b32.xlu0 %v666, 4
      %v722 = vpop.permute.xlu0 %721
      %723 = vrot.lane.b32.xlu0 %v667, 4
      %v724 = vpop.permute.xlu0 %723
      %725 = vrot.lane.b32.xlu0 %v668, 4
      %v726 = vpop.permute.xlu0 %725
      %727 = vrot.lane.b32.xlu0 %v669, 4
      %v728 = vpop.permute.xlu0 %727
      %729 = vrot.lane.b32.xlu0 %v670, 4
      %v730 = vpop.permute.xlu0 %729
      %v751 = vadd.f32 %v631, %v692
      %v752 = vadd.f32 %v632, %v694
      %v753 = vadd.f32 %v633, %v696
      %v754 = vadd.f32 %v634, %v698
      %v755 = vadd.f32 %v635, %v700
      %v756 = vadd.f32 %v636, %v702
      %v757 = vadd.f32 %v637, %v704
      %v758 = vadd.f32 %v638, %v706
      %v759 = vadd.f32 %v639, %v708
      %v760 = vadd.f32 %v640, %v710
      %v761 = vadd.f32 %v641, %v712
      %v762 = vadd.f32 %v642, %v714
      %v763 = vadd.f32 %v643, %v716
      %v764 = vadd.f32 %v644, %v718
      %v765 = vadd.f32 %v645, %v720
      %v766 = vadd.f32 %v646, %v722
      %v767 = vadd.f32 %v647, %v724
      %v768 = vadd.f32 %v648, %v726
      %v769 = vadd.f32 %v649, %v728
      %v770 = vadd.f32 %v650, %v730
      %v771 = vpack.c.bf16 %v752, %v751
      %v772 = vpack.c.bf16 %v754, %v753
      %v773 = vpack.c.bf16 %v755, %v755
      %v774 = vpack.c.bf16 %v757, %v756
      %v775 = vpack.c.bf16 %v759, %v758
      %v776 = vpack.c.bf16 %v760, %v760
      %v777 = vpack.c.bf16 %v762, %v761
      %v778 = vpack.c.bf16 %v764, %v763
      %v779 = vpack.c.bf16 %v765, %v765
      %v780 = vpack.c.bf16 %v767, %v766
      %v781 = vpack.c.bf16 %v769, %v768
      %v782 = vpack.c.bf16 %v770, %v770
      %v783 = vmul.f32 %v387, %v337
      %v784 = vmul.f32 %v388, %v338
      %v785 = vmul.f32 %v389, %v339
      %v786 = vmul.f32 %v390, %v340
      %v787 = vmul.f32 %v391, %v341
      %v788 = vmul.f32 %v392, %v337
      %v789 = vmul.f32 %v393, %v338
      %v790 = vmul.f32 %v394, %v339
      %v791 = vmul.f32 %v395, %v340
      %v792 = vmul.f32 %v396, %v341
      %v793 = vmul.f32 %v397, %v337
      %v794 = vmul.f32 %v398, %v338
      %v795 = vmul.f32 %v399, %v339
      %v796 = vmul.f32 %v400, %v340
      %v797 = vmul.f32 %v401, %v341
      %v798 = vmul.f32 %v402, %v337
      %v799 = vmul.f32 %v403, %v338
      %v800 = vmul.f32 %v404, %v339
      %v801 = vmul.f32 %v405, %v340
      %v802 = vmul.f32 %v406, %v341
      %v803 = vmul.f32 %v387, %v465
      %v804 = vmul.f32 %v388, %v467
      %v805 = vmul.f32 %v389, %v469
      %v806 = vmul.f32 %v390, %v471
      %v807 = vmul.f32 %v391, %v473
      %v808 = vmul.f32 %v392, %v465
      %v809 = vmul.f32 %v393, %v467
      %v810 = vmul.f32 %v394, %v469
      %v811 = vmul.f32 %v395, %v471
      %v812 = vmul.f32 %v396, %v473
      %v813 = vmul.f32 %v397, %v465
      %v814 = vmul.f32 %v398, %v467
      %v815 = vmul.f32 %v399, %v469
      %v816 = vmul.f32 %v400, %v471
      %v817 = vmul.f32 %v401, %v473
      %v818 = vmul.f32 %v402, %v465
      %v819 = vmul.f32 %v403, %v467
      %v820 = vmul.f32 %v404, %v469
      %v821 = vmul.f32 %v405, %v471
      %v822 = vmul.f32 %v406, %v473
      %843 = vrot.lane.b32.xlu0 %v803, 124
      %v844 = vpop.permute.xlu0 %843
      %845 = vrot.lane.b32.xlu0 %v804, 124
      %v846 = vpop.permute.xlu0 %845
      %847 = vrot.lane.b32.xlu0 %v805, 124
      %v848 = vpop.permute.xlu0 %847
      %849 = vrot.lane.b32.xlu0 %v806, 124
      %v850 = vpop.permute.xlu0 %849
      %851 = vrot.lane.b32.xlu0 %v807, 124
      %v852 = vpop.permute.xlu0 %851
      %853 = vrot.lane.b32.xlu0 %v808, 124
      %v854 = vpop.permute.xlu0 %853
      %855 = vrot.lane.b32.xlu0 %v809, 124
      %v856 = vpop.permute.xlu0 %855
      %857 = vrot.lane.b32.xlu0 %v810, 124
      %v858 = vpop.permute.xlu0 %857
      %859 = vrot.lane.b32.xlu0 %v811, 124
      %v860 = vpop.permute.xlu0 %859
      %861 = vrot.lane.b32.xlu0 %v812, 124
      %v862 = vpop.permute.xlu0 %861
      %863 = vrot.lane.b32.xlu0 %v813, 124
      %v864 = vpop.permute.xlu0 %863
      %865 = vrot.lane.b32.xlu0 %v814, 124
      %v866 = vpop.permute.xlu0 %865
      %867 = vrot.lane.b32.xlu0 %v815, 124
      %v868 = vpop.permute.xlu0 %867
      %869 = vrot.lane.b32.xlu0 %v816, 124
      %v870 = vpop.permute.xlu0 %869
      %871 = vrot.lane.b32.xlu0 %v817, 124
      %v872 = vpop.permute.xlu0 %871
      %873 = vrot.lane.b32.xlu0 %v818, 124
      %v874 = vpop.permute.xlu0 %873
      %875 = vrot.lane.b32.xlu0 %v819, 124
      %v876 = vpop.permute.xlu0 %875
      %877 = vrot.lane.b32.xlu0 %v820, 124
      %v878 = vpop.permute.xlu0 %877
      %879 = vrot.lane.b32.xlu0 %v821, 124
      %v880 = vpop.permute.xlu0 %879
      %881 = vrot.lane.b32.xlu0 %v822, 124
      %v882 = vpop.permute.xlu0 %881
      %v903 = vsub.f32 %v783, %v844
      %v904 = vsub.f32 %v784, %v846
      %v905 = vsub.f32 %v785, %v848
      %v906 = vsub.f32 %v786, %v850
      %v907 = vsub.f32 %v787, %v852
      %v908 = vsub.f32 %v788, %v854
      %v909 = vsub.f32 %v789, %v856
      %v910 = vsub.f32 %v790, %v858
      %v911 = vsub.f32 %v791, %v860
      %v912 = vsub.f32 %v792, %v862
      %v913 = vsub.f32 %v793, %v864
      %v914 = vsub.f32 %v794, %v866
      %v915 = vsub.f32 %v795, %v868
      %v916 = vsub.f32 %v796, %v870
      %v917 = vsub.f32 %v797, %v872
      %v918 = vsub.f32 %v798, %v874
      %v919 = vsub.f32 %v799, %v876
      %v920 = vsub.f32 %v800, %v878
      %v921 = vsub.f32 %v801, %v880
      %v922 = vsub.f32 %v802, %v882
      %v923 = vpack.c.bf16 %v904, %v903
      %v924 = vpack.c.bf16 %v906, %v905
      %v925 = vpack.c.bf16 %v907, %v907
      %v926 = vpack.c.bf16 %v909, %v908
      %v927 = vpack.c.bf16 %v911, %v910
      %v928 = vpack.c.bf16 %v912, %v912
      %v929 = vpack.c.bf16 %v914, %v913
      %v930 = vpack.c.bf16 %v916, %v915
      %v931 = vpack.c.bf16 %v917, %v917
      %v932 = vpack.c.bf16 %v919, %v918
      %v933 = vpack.c.bf16 %v921, %v920
      %v934 = vpack.c.bf16 %v922, %v922
      %v935 = vmul.f32 %v387, %v617
      %v936 = vmul.f32 %v388, %v619
      %v937 = vmul.f32 %v389, %v621
      %v938 = vmul.f32 %v390, %v623
      %v939 = vmul.f32 %v391, %v625
      %v940 = vmul.f32 %v392, %v617
      %v941 = vmul.f32 %v393, %v619
      %v942 = vmul.f32 %v394, %v621
      %v943 = vmul.f32 %v395, %v623
      %v944 = vmul.f32 %v396, %v625
      %v945 = vmul.f32 %v397, %v617
      %v946 = vmul.f32 %v398, %v619
      %v947 = vmul.f32 %v399, %v621
      %v948 = vmul.f32 %v400, %v623
      %v949 = vmul.f32 %v401, %v625
      %v950 = vmul.f32 %v402, %v617
      %v951 = vmul.f32 %v403, %v619
      %v952 = vmul.f32 %v404, %v621
      %v953 = vmul.f32 %v405, %v623
      %v954 = vmul.f32 %v406, %v625
      %v955 = vmul.f32 %v387, %v342
      %v956 = vmul.f32 %v388, %v343
      %v957 = vmul.f32 %v389, %v344
      %v958 = vmul.f32 %v390, %v345
      %v959 = vmul.f32 %v391, %v346
      %v960 = vmul.f32 %v392, %v342
      %v961 = vmul.f32 %v393, %v343
      %v962 = vmul.f32 %v394, %v344
      %v963 = vmul.f32 %v395, %v345
      %v964 = vmul.f32 %v396, %v346
      %v965 = vmul.f32 %v397, %v342
      %v966 = vmul.f32 %v398, %v343
      %v967 = vmul.f32 %v399, %v344
      %v968 = vmul.f32 %v400, %v345
      %v969 = vmul.f32 %v401, %v346
      %v970 = vmul.f32 %v402, %v342
      %v971 = vmul.f32 %v403, %v343
      %v972 = vmul.f32 %v404, %v344
      %v973 = vmul.f32 %v405, %v345
      %v974 = vmul.f32 %v406, %v346
      %995 = vrot.lane.b32.xlu0 %v955, 4
      %v996 = vpop.permute.xlu0 %995
      %997 = vrot.lane.b32.xlu0 %v956, 4
      %v998 = vpop.permute.xlu0 %997
      %999 = vrot.lane.b32.xlu0 %v957, 4
      %v1000 = vpop.permute.xlu0 %999
      %1001 = vrot.lane.b32.xlu0 %v958, 4
      %v1002 = vpop.permute.xlu0 %1001
      %1003 = vrot.lane.b32.xlu0 %v959, 4
      %v1004 = vpop.permute.xlu0 %1003
      %1005 = vrot.lane.b32.xlu0 %v960, 4
      %v1006 = vpop.permute.xlu0 %1005
      %1007 = vrot.lane.b32.xlu0 %v961, 4
      %v1008 = vpop.permute.xlu0 %1007
      %1009 = vrot.lane.b32.xlu0 %v962, 4
      %v1010 = vpop.permute.xlu0 %1009
      %1011 = vrot.lane.b32.xlu0 %v963, 4
      %v1012 = vpop.permute.xlu0 %1011
      %1013 = vrot.lane.b32.xlu0 %v964, 4
      %v1014 = vpop.permute.xlu0 %1013
      %1015 = vrot.lane.b32.xlu0 %v965, 4
      %v1016 = vpop.permute.xlu0 %1015
      %1017 = vrot.lane.b32.xlu0 %v966, 4
      %v1018 = vpop.permute.xlu0 %1017
      %1019 = vrot.lane.b32.xlu0 %v967, 4
      %v1020 = vpop.permute.xlu0 %1019
      %1021 = vrot.lane.b32.xlu0 %v968, 4
      %v1022 = vpop.permute.xlu0 %1021
      %1023 = vrot.lane.b32.xlu0 %v969, 4
      %v1024 = vpop.permute.xlu0 %1023
      %1025 = vrot.lane.b32.xlu0 %v970, 4
      %v1026 = vpop.permute.xlu0 %1025
      %1027 = vrot.lane.b32.xlu0 %v971, 4
      %v1028 = vpop.permute.xlu0 %1027
      %1029 = vrot.lane.b32.xlu0 %v972, 4
      %v1030 = vpop.permute.xlu0 %1029
      %1031 = vrot.lane.b32.xlu0 %v973, 4
      %v1032 = vpop.permute.xlu0 %1031
      %1033 = vrot.lane.b32.xlu0 %v974, 4
      %v1034 = vpop.permute.xlu0 %1033
      %v1055 = vadd.f32 %v935, %v996
      %v1056 = vadd.f32 %v936, %v998
      %v1057 = vadd.f32 %v937, %v1000
      %v1058 = vadd.f32 %v938, %v1002
      %v1059 = vadd.f32 %v939, %v1004
      %v1060 = vadd.f32 %v940, %v1006
      %v1061 = vadd.f32 %v941, %v1008
      %v1062 = vadd.f32 %v942, %v1010
      %v1063 = vadd.f32 %v943, %v1012
      %v1064 = vadd.f32 %v944, %v1014
      %v1065 = vadd.f32 %v945, %v1016
      %v1066 = vadd.f32 %v946, %v1018
      %v1067 = vadd.f32 %v947, %v1020
      %v1068 = vadd.f32 %v948, %v1022
      %v1069 = vadd.f32 %v949, %v1024
      %v1070 = vadd.f32 %v950, %v1026
      %v1071 = vadd.f32 %v951, %v1028
      %v1072 = vadd.f32 %v952, %v1030
      %v1073 = vadd.f32 %v953, %v1032
      %v1074 = vadd.f32 %v954, %v1034
      %v1075 = vpack.c.bf16 %v1056, %v1055
      %v1076 = vpack.c.bf16 %v1058, %v1057
      %v1077 = vpack.c.bf16 %v1059, %v1059
      %v1078 = vpack.c.bf16 %v1061, %v1060
      %v1079 = vpack.c.bf16 %v1063, %v1062
      %v1080 = vpack.c.bf16 %v1064, %v1064
      %v1081 = vpack.c.bf16 %v1066, %v1065
      %v1082 = vpack.c.bf16 %v1068, %v1067
      %v1083 = vpack.c.bf16 %v1069, %v1069
      %v1084 = vpack.c.bf16 %v1071, %v1070
      %v1085 = vpack.c.bf16 %v1073, %v1072
      %v1086 = vpack.c.bf16 %v1074, %v1074
      %1090 = vrot.lane.b32.xlu0 %v771, 124
      %v1091 = vpop.permute.xlu0 %1090
      %1092 = vrot.lane.b32.xlu0 %v772, 124
      %v1093 = vpop.permute.xlu0 %1092
      %1094 = vrot.lane.b32.xlu0 %v773, 124
      %v1095 = vpop.permute.xlu0 %1094
      %1099 = vrot.lane.b32.xlu0 %v1075, 124
      %v1100 = vpop.permute.xlu0 %1099
      %1101 = vrot.lane.b32.xlu0 %v1076, 124
      %v1102 = vpop.permute.xlu0 %1101
      %1103 = vrot.lane.b32.xlu0 %v1077, 124
      %v1104 = vpop.permute.xlu0 %1103
      %vm1105 = vcmask 31744
      %v1107 = vsel %vm1105, %v1091, 0
      %v1110 = vsel %vm1105, %v1093, 0
      %v1113 = vsel %vm1105, %v1095, 0
      %v1116 = vsel %vm1105, %v1100, 0
      %v1119 = vsel %vm1105, %v1102, 0
      %v1122 = vsel %vm1105, %v1104, 0
      %1124 = vmatprep.subr.bf16.mxu0 0
      %1125 = vmatpush1.bf16.xpose.msra.mxu0 %v1116
      %1126 = vmatprep.subr.bf16.mxu0 0
      %1127 = vmatpush1.bf16.xpose.msra.mxu0 %v1119
      %1128 = vmatprep.subr.bf16.mxu0 0
      %1129 = vmatpush1.bf16.xpose.msra.mxu0 %v1122
      %1130 = vmatprep.subr.bf16.mxu0 0
      %1131 = vmatpush1.bf16.xpose.msra.mxu0 0
      %1132 = vmatprep.subr.bf16.mxu0 0
      %1133 = vmatpush1.bf16.xpose.msra.mxu0 0
      %1134 = vmatprep.subr.bf16.mxu0 0
      %1135 = vmatpush1.bf16.xpose.msra.mxu0 0
      %1136 = vmatprep.subr.bf16.mxu0 0
      %1137 = vmatpush1.bf16.xpose.msra.mxu0 0
      %1138 = vmatprep.subr.bf16.mxu0 0
      %1139 = vmatpush1.bf16.xpose.msra.mxu0 0
      %1140 = vmatprep.subr.bf16.mxu0 0
      %1141 = vmatpush1.bf16.xpose.msra.mxu0 0
      %1142 = vmatprep.subr.bf16.mxu0 0
      %1143 = vmatpush1.bf16.xpose.msra.mxu0 0
      %1144 = vmatprep.subr.bf16.mxu0 0
      %1145 = vmatpush1.bf16.xpose.msra.mxu0 0
      %1146 = vmatprep.subr.bf16.mxu0 0
      %1147 = vmatpush1.bf16.xpose.msra.mxu0 0
      %1148 = vmatprep.subr.bf16.mxu0 0
      %1149 = vmatpush1.bf16.xpose.msra.mxu0 0
      %1150 = vmatprep.subr.bf16.mxu0 0
      %1151 = vmatpush1.bf16.xpose.msra.mxu0 0
      %1152 = vmatprep.subr.bf16.mxu0 0
      %1153 = vmatpush1.bf16.xpose.msra.mxu0 0
      %1154 = vmatprep.subr.bf16.mxu0 0
      %1155 = vmatpush1.bf16.xpose.msra.mxu0 0
      %1156 = vmatprep.mubr.bf16.mxu0 0
      %1157 = vmatmul.mubr.bf16.gmra.mrb[0].mxu0 %v1107
      %v1158 = vpop.f32.mrb[0].mxu0
      %v1159 = vadd.f32 0.0, %v1158
      %v1160 = vpop.f32.mrb[0].mxu0
      %v1161 = vpop.f32.mrb[0].mxu0
      %v1162 = vadd.f32 0.0, %v1161
      %v1163 = vpop.f32.mrb[0].mxu0
      %1164 = vmatprep.mubr.bf16.mxu0 0
      %1165 = vmatmul.mubr.bf16.gmra.mrb[0].mxu0 %v1110
      %v1166 = vpop.f32.mrb[0].mxu0
      %v1167 = vadd.f32 0.0, %v1166
      %v1168 = vpop.f32.mrb[0].mxu0
      %v1169 = vpop.f32.mrb[0].mxu0
      %v1170 = vadd.f32 0.0, %v1169
      %v1171 = vpop.f32.mrb[0].mxu0
      %1172 = vmatprep.mubr.bf16.mxu0 0
      %1173 = vmatmul.mubr.bf16.gmra.mrb[0].mxu0 %v1113
      %v1174 = vpop.f32.mrb[0].mxu0
      %v1175 = vadd.f32 0.0, %v1174
      %v1176 = vpop.f32.mrb[0].mxu0
      %v1177 = vpop.f32.mrb[0].mxu0
      %v1178 = vpop.f32.mrb[0].mxu0
      %1179 = vdwg.mxu0
      %1183 = vrot.lane.b32.xlu0 %v774, 124
      %v1184 = vpop.permute.xlu0 %1183
      %1185 = vrot.lane.b32.xlu0 %v775, 124
      %v1186 = vpop.permute.xlu0 %1185
      %1187 = vrot.lane.b32.xlu0 %v776, 124
      %v1188 = vpop.permute.xlu0 %1187
      %1192 = vrot.lane.b32.xlu0 %v1078, 124
      %v1193 = vpop.permute.xlu0 %1192
      %1194 = vrot.lane.b32.xlu0 %v1079, 124
      %v1195 = vpop.permute.xlu0 %1194
      %1196 = vrot.lane.b32.xlu0 %v1080, 124
      %v1197 = vpop.permute.xlu0 %1196
      %v1199 = vsel %vm1105, %v1184, 0
      %v1202 = vsel %vm1105, %v1186, 0
      %v1205 = vsel %vm1105, %v1188, 0
      %v1208 = vsel %vm1105, %v1193, 0
      %v1211 = vsel %vm1105, %v1195, 0
      %v1214 = vsel %vm1105, %v1197, 0
      %1216 = vmatprep.subr.bf16.mxu0 0
      %1217 = vmatpush1.bf16.xpose.msra.mxu0 %v1208
      %1218 = vmatprep.subr.bf16.mxu0 0
      %1219 = vmatpush1.bf16.xpose.msra.mxu0 %v1211
      %1220 = vmatprep.subr.bf16.mxu0 0
      %1221 = vmatpush1.bf16.xpose.msra.mxu0 %v1214
      %1222 = vmatprep.subr.bf16.mxu0 0
      %1223 = vmatpush1.bf16.xpose.msra.mxu0 0
      %1224 = vmatprep.subr.bf16.mxu0 0
      %1225 = vmatpush1.bf16.xpose.msra.mxu0 0
      %1226 = vmatprep.subr.bf16.mxu0 0
      %1227 = vmatpush1.bf16.xpose.msra.mxu0 0
      %1228 = vmatprep.subr.bf16.mxu0 0
      %1229 = vmatpush1.bf16.xpose.msra.mxu0 0
      %1230 = vmatprep.subr.bf16.mxu0 0
      %1231 = vmatpush1.bf16.xpose.msra.mxu0 0
      %1232 = vmatprep.subr.bf16.mxu0 0
      %1233 = vmatpush1.bf16.xpose.msra.mxu0 0
      %1234 = vmatprep.subr.bf16.mxu0 0
      %1235 = vmatpush1.bf16.xpose.msra.mxu0 0
      %1236 = vmatprep.subr.bf16.mxu0 0
      %1237 = vmatpush1.bf16.xpose.msra.mxu0 0
      %1238 = vmatprep.subr.bf16.mxu0 0
      %1239 = vmatpush1.bf16.xpose.msra.mxu0 0
      %1240 = vmatprep.subr.bf16.mxu0 0
      %1241 = vmatpush1.bf16.xpose.msra.mxu0 0
      %1242 = vmatprep.subr.bf16.mxu0 0
      %1243 = vmatpush1.bf16.xpose.msra.mxu0 0
      %1244 = vmatprep.subr.bf16.mxu0 0
      %1245 = vmatpush1.bf16.xpose.msra.mxu0 0
      %1246 = vmatprep.subr.bf16.mxu0 0
      %1247 = vmatpush1.bf16.xpose.msra.mxu0 0
      %1248 = vmatprep.mubr.bf16.mxu0 0
      %1249 = vmatmul.mubr.bf16.gmra.mrb[0].mxu0 %v1199
      %v1250 = vpop.f32.mrb[0].mxu0
      %v1251 = vadd.f32 0.0, %v1250
      %v1252 = vpop.f32.mrb[0].mxu0
      %v1253 = vpop.f32.mrb[0].mxu0
      %v1254 = vadd.f32 0.0, %v1253
      %v1255 = vpop.f32.mrb[0].mxu0
      %1256 = vmatprep.mubr.bf16.mxu0 0
      %1257 = vmatmul.mubr.bf16.gmra.mrb[0].mxu0 %v1202
      %v1258 = vpop.f32.mrb[0].mxu0
      %v1259 = vadd.f32 0.0, %v1258
      %v1260 = vpop.f32.mrb[0].mxu0
      %v1261 = vpop.f32.mrb[0].mxu0
      %v1262 = vadd.f32 0.0, %v1261
      %v1263 = vpop.f32.mrb[0].mxu0
      %1264 = vmatprep.mubr.bf16.mxu0 0
      %1265 = vmatmul.mubr.bf16.gmra.mrb[0].mxu0 %v1205
      %v1266 = vpop.f32.mrb[0].mxu0
      %v1267 = vadd.f32 0.0, %v1266
      %v1268 = vpop.f32.mrb[0].mxu0
      %v1269 = vpop.f32.mrb[0].mxu0
      %v1270 = vpop.f32.mrb[0].mxu0
      %1271 = vdwg.mxu0
      %1275 = vrot.lane.b32.xlu0 %v777, 124
      %v1276 = vpop.permute.xlu0 %1275
      %1277 = vrot.lane.b32.xlu0 %v778, 124
      %v1278 = vpop.permute.xlu0 %1277
      %1279 = vrot.lane.b32.xlu0 %v779, 124
      %v1280 = vpop.permute.xlu0 %1279
      %1284 = vrot.lane.b32.xlu0 %v1081, 124
      %v1285 = vpop.permute.xlu0 %1284
      %1286 = vrot.lane.b32.xlu0 %v1082, 124
      %v1287 = vpop.permute.xlu0 %1286
      %1288 = vrot.lane.b32.xlu0 %v1083, 124
      %v1289 = vpop.permute.xlu0 %1288
      %v1291 = vsel %vm1105, %v1276, 0
      %v1294 = vsel %vm1105, %v1278, 0
      %v1297 = vsel %vm1105, %v1280, 0
      %v1300 = vsel %vm1105, %v1285, 0
      %v1303 = vsel %vm1105, %v1287, 0
      %v1306 = vsel %vm1105, %v1289, 0
      %1308 = vmatprep.subr.bf16.mxu0 0
      %1309 = vmatpush1.bf16.xpose.msra.mxu0 %v1300
      %1310 = vmatprep.subr.bf16.mxu0 0
      %1311 = vmatpush1.bf16.xpose.msra.mxu0 %v1303
      %1312 = vmatprep.subr.bf16.mxu0 0
      %1313 = vmatpush1.bf16.xpose.msra.mxu0 %v1306
      %1314 = vmatprep.subr.bf16.mxu0 0
      %1315 = vmatpush1.bf16.xpose.msra.mxu0 0
      %1316 = vmatprep.subr.bf16.mxu0 0
      %1317 = vmatpush1.bf16.xpose.msra.mxu0 0
      %1318 = vmatprep.subr.bf16.mxu0 0
      %1319 = vmatpush1.bf16.xpose.msra.mxu0 0
      %1320 = vmatprep.subr.bf16.mxu0 0
      %1321 = vmatpush1.bf16.xpose.msra.mxu0 0
      %1322 = vmatprep.subr.bf16.mxu0 0
      %1323 = vmatpush1.bf16.xpose.msra.mxu0 0
      %1324 = vmatprep.subr.bf16.mxu0 0
      %1325 = vmatpush1.bf16.xpose.msra.mxu0 0
      %1326 = vmatprep.subr.bf16.mxu0 0
      %1327 = vmatpush1.bf16.xpose.msra.mxu0 0
      %1328 = vmatprep.subr.bf16.mxu0 0
      %1329 = vmatpush1.bf16.xpose.msra.mxu0 0
      %1330 = vmatprep.subr.bf16.mxu0 0
      %1331 = vmatpush1.bf16.xpose.msra.mxu0 0
      %1332 = vmatprep.subr.bf16.mxu0 0
      %1333 = vmatpush1.bf16.xpose.msra.mxu0 0
      %1334 = vmatprep.subr.bf16.mxu0 0
      %1335 = vmatpush1.bf16.xpose.msra.mxu0 0
      %1336 = vmatprep.subr.bf16.mxu0 0
      %1337 = vmatpush1.bf16.xpose.msra.mxu0 0
      %1338 = vmatprep.subr.bf16.mxu0 0
      %1339 = vmatpush1.bf16.xpose.msra.mxu0 0
      %1340 = vmatprep.mubr.bf16.mxu0 0
      %1341 = vmatmul.mubr.bf16.gmra.mrb[0].mxu0 %v1291
      %v1342 = vpop.f32.mrb[0].mxu0
      %v1343 = vadd.f32 0.0, %v1342
      %v1344 = vpop.f32.mrb[0].mxu0
      %v1345 = vpop.f32.mrb[0].mxu0
      %v1346 = vadd.f32 0.0, %v1345
      %v1347 = vpop.f32.mrb[0].mxu0
      %1348 = vmatprep.mubr.bf16.mxu0 0
      %1349 = vmatmul.mubr.bf16.gmra.mrb[0].mxu0 %v1294
      %v1350 = vpop.f32.mrb[0].mxu0
      %v1351 = vadd.f32 0.0, %v1350
      %v1352 = vpop.f32.mrb[0].mxu0
      %v1353 = vpop.f32.mrb[0].mxu0
      %v1354 = vadd.f32 0.0, %v1353
      %v1355 = vpop.f32.mrb[0].mxu0
      %1356 = vmatprep.mubr.bf16.mxu0 0
      %1357 = vmatmul.mubr.bf16.gmra.mrb[0].mxu0 %v1297
      %v1358 = vpop.f32.mrb[0].mxu0
      %v1359 = vadd.f32 0.0, %v1358
      %v1360 = vpop.f32.mrb[0].mxu0
      %v1361 = vpop.f32.mrb[0].mxu0
      %v1362 = vpop.f32.mrb[0].mxu0
      %1363 = vdwg.mxu0
      %1367 = vrot.lane.b32.xlu0 %v780, 124
      %v1368 = vpop.permute.xlu0 %1367
      %1369 = vrot.lane.b32.xlu0 %v781, 124
      %v1370 = vpop.permute.xlu0 %1369
      %1371 = vrot.lane.b32.xlu0 %v782, 124
      %v1372 = vpop.permute.xlu0 %1371
      %1376 = vrot.lane.b32.xlu0 %v1084, 124
      %v1377 = vpop.permute.xlu0 %1376
      %1378 = vrot.lane.b32.xlu0 %v1085, 124
      %v1379 = vpop.permute.xlu0 %1378
      %1380 = vrot.lane.b32.xlu0 %v1086, 124
      %v1381 = vpop.permute.xlu0 %1380
      %v1383 = vsel %vm1105, %v1368, 0
      %v1386 = vsel %vm1105, %v1370, 0
      %v1389 = vsel %vm1105, %v1372, 0
      %v1392 = vsel %vm1105, %v1377, 0
      %v1395 = vsel %vm1105, %v1379, 0
      %v1398 = vsel %vm1105, %v1381, 0
      %1400 = vmatprep.subr.bf16.mxu0 0
      %1401 = vmatpush1.bf16.xpose.msra.mxu0 %v1392
      %1402 = vmatprep.subr.bf16.mxu0 0
      %1403 = vmatpush1.bf16.xpose.msra.mxu0 %v1395
      %1404 = vmatprep.subr.bf16.mxu0 0
      %1405 = vmatpush1.bf16.xpose.msra.mxu0 %v1398
      %1406 = vmatprep.subr.bf16.mxu0 0
      %1407 = vmatpush1.bf16.xpose.msra.mxu0 0
      %1408 = vmatprep.subr.bf16.mxu0 0
      %1409 = vmatpush1.bf16.xpose.msra.mxu0 0
      %1410 = vmatprep.subr.bf16.mxu0 0
      %1411 = vmatpush1.bf16.xpose.msra.mxu0 0
      %1412 = vmatprep.subr.bf16.mxu0 0
      %1413 = vmatpush1.bf16.xpose.msra.mxu0 0
      %1414 = vmatprep.subr.bf16.mxu0 0
      %1415 = vmatpush1.bf16.xpose.msra.mxu0 0
      %1416 = vmatprep.subr.bf16.mxu0 0
      %1417 = vmatpush1.bf16.xpose.msra.mxu0 0
      %1418 = vmatprep.subr.bf16.mxu0 0
      %1419 = vmatpush1.bf16.xpose.msra.mxu0 0
      %1420 = vmatprep.subr.bf16.mxu0 0
      %1421 = vmatpush1.bf16.xpose.msra.mxu0 0
      %1422 = vmatprep.subr.bf16.mxu0 0
      %1423 = vmatpush1.bf16.xpose.msra.mxu0 0
      %1424 = vmatprep.subr.bf16.mxu0 0
      %1425 = vmatpush1.bf16.xpose.msra.mxu0 0
      %1426 = vmatprep.subr.bf16.mxu0 0
      %1427 = vmatpush1.bf16.xpose.msra.mxu0 0
      %1428 = vmatprep.subr.bf16.mxu0 0
      %1429 = vmatpush1.bf16.xpose.msra.mxu0 0
      %1430 = vmatprep.subr.bf16.mxu0 0
      %1431 = vmatpush1.bf16.xpose.msra.mxu0 0
      %1432 = vmatprep.mubr.bf16.mxu0 0
      %1433 = vmatmul.mubr.bf16.gmra.mrb[0].mxu0 %v1383
      %v1434 = vpop.f32.mrb[0].mxu0
      %v1435 = vadd.f32 0.0, %v1434
      %v1436 = vpop.f32.mrb[0].mxu0
      %v1437 = vpop.f32.mrb[0].mxu0
      %v1438 = vadd.f32 0.0, %v1437
      %v1439 = vpop.f32.mrb[0].mxu0
      %1440 = vmatprep.mubr.bf16.mxu0 0
      %1441 = vmatmul.mubr.bf16.gmra.mrb[0].mxu0 %v1386
      %v1442 = vpop.f32.mrb[0].mxu0
      %v1443 = vadd.f32 0.0, %v1442
      %v1444 = vpop.f32.mrb[0].mxu0
      %v1445 = vpop.f32.mrb[0].mxu0
      %v1446 = vadd.f32 0.0, %v1445
      %v1447 = vpop.f32.mrb[0].mxu0
      %1448 = vmatprep.mubr.bf16.mxu0 0
      %1449 = vmatmul.mubr.bf16.gmra.mrb[0].mxu0 %v1389
      %v1450 = vpop.f32.mrb[0].mxu0
      %v1451 = vadd.f32 0.0, %v1450
      %v1452 = vpop.f32.mrb[0].mxu0
      %v1453 = vpop.f32.mrb[0].mxu0
      %v1454 = vpop.f32.mrb[0].mxu0
      %1455 = vdwg.mxu0
      %v1457 = vsel %vm1105, %v599, 0
      %v1460 = vsel %vm1105, %v600, 0
      %v1463 = vsel %vm1105, %v601, 0
      %v1466 = vsel %vm1105, %v923, 0
      %v1469 = vsel %vm1105, %v924, 0
      %v1472 = vsel %vm1105, %v925, 0
      %1474 = vmatprep.subr.bf16.mxu0 0
      %1475 = vmatpush1.bf16.xpose.msra.mxu0 %v1466
      %1476 = vmatprep.subr.bf16.mxu0 0
      %1477 = vmatpush1.bf16.xpose.msra.mxu0 %v1469
      %1478 = vmatprep.subr.bf16.mxu0 0
      %1479 = vmatpush1.bf16.xpose.msra.mxu0 %v1472
      %1480 = vmatprep.subr.bf16.mxu0 0
      %1481 = vmatpush1.bf16.xpose.msra.mxu0 0
      %1482 = vmatprep.subr.bf16.mxu0 0
      %1483 = vmatpush1.bf16.xpose.msra.mxu0 0
      %1484 = vmatprep.subr.bf16.mxu0 0
      %1485 = vmatpush1.bf16.xpose.msra.mxu0 0
      %1486 = vmatprep.subr.bf16.mxu0 0
      %1487 = vmatpush1.bf16.xpose.msra.mxu0 0
      %1488 = vmatprep.subr.bf16.mxu0 0
      %1489 = vmatpush1.bf16.xpose.msra.mxu0 0
      %1490 = vmatprep.subr.bf16.mxu0 0
      %1491 = vmatpush1.bf16.xpose.msra.mxu0 0
      %1492 = vmatprep.subr.bf16.mxu0 0
      %1493 = vmatpush1.bf16.xpose.msra.mxu0 0
      %1494 = vmatprep.subr.bf16.mxu0 0
      %1495 = vmatpush1.bf16.xpose.msra.mxu0 0
      %1496 = vmatprep.subr.bf16.mxu0 0
      %1497 = vmatpush1.bf16.xpose.msra.mxu0 0
      %1498 = vmatprep.subr.bf16.mxu0 0
      %1499 = vmatpush1.bf16.xpose.msra.mxu0 0
      %1500 = vmatprep.subr.bf16.mxu0 0
      %1501 = vmatpush1.bf16.xpose.msra.mxu0 0
      %1502 = vmatprep.subr.bf16.mxu0 0
      %1503 = vmatpush1.bf16.xpose.msra.mxu0 0
      %1504 = vmatprep.subr.bf16.mxu0 0
      %1505 = vmatpush1.bf16.xpose.msra.mxu0 0
      %1506 = vmatprep.mubr.bf16.mxu0 0
      %1507 = vmatmul.mubr.bf16.gmra.mrb[0].mxu0 %v1457
      %v1508 = vpop.f32.mrb[0].mxu0
      %v1509 = vadd.f32 %v1159, %v1508
      %v1510 = vpop.f32.mrb[0].mxu0
      %v1511 = vpop.f32.mrb[0].mxu0
      %v1512 = vadd.f32 %v1162, %v1511
      %v1513 = vpop.f32.mrb[0].mxu0
      %1514 = vmatprep.mubr.bf16.mxu0 0
      %1515 = vmatmul.mubr.bf16.gmra.mrb[0].mxu0 %v1460
      %v1516 = vpop.f32.mrb[0].mxu0
      %v1517 = vadd.f32 %v1167, %v1516
      %v1518 = vpop.f32.mrb[0].mxu0
      %v1519 = vpop.f32.mrb[0].mxu0
      %v1520 = vadd.f32 %v1170, %v1519
      %v1521 = vpop.f32.mrb[0].mxu0
      %1522 = vmatprep.mubr.bf16.mxu0 0
      %1523 = vmatmul.mubr.bf16.gmra.mrb[0].mxu0 %v1463
      %v1524 = vpop.f32.mrb[0].mxu0
      %v1525 = vadd.f32 %v1175, %v1524
      %v1526 = vpop.f32.mrb[0].mxu0
      %v1527 = vpop.f32.mrb[0].mxu0
      %v1528 = vpop.f32.mrb[0].mxu0
      %1529 = vdwg.mxu0
      %v1531 = vsel %vm1105, %v602, 0
      %v1534 = vsel %vm1105, %v603, 0
      %v1537 = vsel %vm1105, %v604, 0
      %v1540 = vsel %vm1105, %v926, 0
      %v1543 = vsel %vm1105, %v927, 0
      %v1546 = vsel %vm1105, %v928, 0
      %1548 = vmatprep.subr.bf16.mxu0 0
      %1549 = vmatpush1.bf16.xpose.msra.mxu0 %v1540
      %1550 = vmatprep.subr.bf16.mxu0 0
      %1551 = vmatpush1.bf16.xpose.msra.mxu0 %v1543
      %1552 = vmatprep.subr.bf16.mxu0 0
      %1553 = vmatpush1.bf16.xpose.msra.mxu0 %v1546
      %1554 = vmatprep.subr.bf16.mxu0 0
      %1555 = vmatpush1.bf16.xpose.msra.mxu0 0
      %1556 = vmatprep.subr.bf16.mxu0 0
      %1557 = vmatpush1.bf16.xpose.msra.mxu0 0
      %1558 = vmatprep.subr.bf16.mxu0 0
      %1559 = vmatpush1.bf16.xpose.msra.mxu0 0
      %1560 = vmatprep.subr.bf16.mxu0 0
      %1561 = vmatpush1.bf16.xpose.msra.mxu0 0
      %1562 = vmatprep.subr.bf16.mxu0 0
      %1563 = vmatpush1.bf16.xpose.msra.mxu0 0
      %1564 = vmatprep.subr.bf16.mxu0 0
      %1565 = vmatpush1.bf16.xpose.msra.mxu0 0
      %1566 = vmatprep.subr.bf16.mxu0 0
      %1567 = vmatpush1.bf16.xpose.msra.mxu0 0
      %1568 = vmatprep.subr.bf16.mxu0 0
      %1569 = vmatpush1.bf16.xpose.msra.mxu0 0
      %1570 = vmatprep.subr.bf16.mxu0 0
      %1571 = vmatpush1.bf16.xpose.msra.mxu0 0
      %1572 = vmatprep.subr.bf16.mxu0 0
      %1573 = vmatpush1.bf16.xpose.msra.mxu0 0
      %1574 = vmatprep.subr.bf16.mxu0 0
      %1575 = vmatpush1.bf16.xpose.msra.mxu0 0
      %1576 = vmatprep.subr.bf16.mxu0 0
      %1577 = vmatpush1.bf16.xpose.msra.mxu0 0
      %1578 = vmatprep.subr.bf16.mxu0 0
      %1579 = vmatpush1.bf16.xpose.msra.mxu0 0
      %1580 = vmatprep.mubr.bf16.mxu0 0
      %1581 = vmatmul.mubr.bf16.gmra.mrb[0].mxu0 %v1531
      %v1582 = vpop.f32.mrb[0].mxu0
      %v1583 = vadd.f32 %v1251, %v1582
      %v1584 = vpop.f32.mrb[0].mxu0
      %v1585 = vpop.f32.mrb[0].mxu0
      %v1586 = vadd.f32 %v1254, %v1585
      %v1587 = vpop.f32.mrb[0].mxu0
      %1588 = vmatprep.mubr.bf16.mxu0 0
      %1589 = vmatmul.mubr.bf16.gmra.mrb[0].mxu0 %v1534
      %v1590 = vpop.f32.mrb[0].mxu0
      %v1591 = vadd.f32 %v1259, %v1590
      %v1592 = vpop.f32.mrb[0].mxu0
      %v1593 = vpop.f32.mrb[0].mxu0
      %v1594 = vadd.f32 %v1262, %v1593
      %v1595 = vpop.f32.mrb[0].mxu0
      %1596 = vmatprep.mubr.bf16.mxu0 0
      %1597 = vmatmul.mubr.bf16.gmra.mrb[0].mxu0 %v1537
      %v1598 = vpop.f32.mrb[0].mxu0
      %v1599 = vadd.f32 %v1267, %v1598
      %v1600 = vpop.f32.mrb[0].mxu0
      %v1601 = vpop.f32.mrb[0].mxu0
      %v1602 = vpop.f32.mrb[0].mxu0
      %1603 = vdwg.mxu0
      %v1605 = vsel %vm1105, %v605, 0
      %v1608 = vsel %vm1105, %v606, 0
      %v1611 = vsel %vm1105, %v607, 0
      %v1614 = vsel %vm1105, %v929, 0
      %v1617 = vsel %vm1105, %v930, 0
      %v1620 = vsel %vm1105, %v931, 0
      %1622 = vmatprep.subr.bf16.mxu0 0
      %1623 = vmatpush1.bf16.xpose.msra.mxu0 %v1614
      %1624 = vmatprep.subr.bf16.mxu0 0
      %1625 = vmatpush1.bf16.xpose.msra.mxu0 %v1617
      %1626 = vmatprep.subr.bf16.mxu0 0
      %1627 = vmatpush1.bf16.xpose.msra.mxu0 %v1620
      %1628 = vmatprep.subr.bf16.mxu0 0
      %1629 = vmatpush1.bf16.xpose.msra.mxu0 0
      %1630 = vmatprep.subr.bf16.mxu0 0
      %1631 = vmatpush1.bf16.xpose.msra.mxu0 0
      %1632 = vmatprep.subr.bf16.mxu0 0
      %1633 = vmatpush1.bf16.xpose.msra.mxu0 0
      %1634 = vmatprep.subr.bf16.mxu0 0
      %1635 = vmatpush1.bf16.xpose.msra.mxu0 0
      %1636 = vmatprep.subr.bf16.mxu0 0
      %1637 = vmatpush1.bf16.xpose.msra.mxu0 0
      %1638 = vmatprep.subr.bf16.mxu0 0
      %1639 = vmatpush1.bf16.xpose.msra.mxu0 0
      %1640 = vmatprep.subr.bf16.mxu0 0
      %1641 = vmatpush1.bf16.xpose.msra.mxu0 0
      %1642 = vmatprep.subr.bf16.mxu0 0
      %1643 = vmatpush1.bf16.xpose.msra.mxu0 0
      %1644 = vmatprep.subr.bf16.mxu0 0
      %1645 = vmatpush1.bf16.xpose.msra.mxu0 0
      %1646 = vmatprep.subr.bf16.mxu0 0
      %1647 = vmatpush1.bf16.xpose.msra.mxu0 0
      %1648 = vmatprep.subr.bf16.mxu0 0
      %1649 = vmatpush1.bf16.xpose.msra.mxu0 0
      %1650 = vmatprep.subr.bf16.mxu0 0
      %1651 = vmatpush1.bf16.xpose.msra.mxu0 0
      %1652 = vmatprep.subr.bf16.mxu0 0
      %1653 = vmatpush1.bf16.xpose.msra.mxu0 0
      %1654 = vmatprep.mubr.bf16.mxu0 0
      %1655 = vmatmul.mubr.bf16.gmra.mrb[0].mxu0 %v1605
      %v1656 = vpop.f32.mrb[0].mxu0
      %v1657 = vadd.f32 %v1343, %v1656
      %v1658 = vpop.f32.mrb[0].mxu0
      %v1659 = vpop.f32.mrb[0].mxu0
      %v1660 = vadd.f32 %v1346, %v1659
      %v1661 = vpop.f32.mrb[0].mxu0
      %1662 = vmatprep.mubr.bf16.mxu0 0
      %1663 = vmatmul.mubr.bf16.gmra.mrb[0].mxu0 %v1608
      %v1664 = vpop.f32.mrb[0].mxu0
      %v1665 = vadd.f32 %v1351, %v1664
      %v1666 = vpop.f32.mrb[0].mxu0
      %v1667 = vpop.f32.mrb[0].mxu0
      %v1668 = vadd.f32 %v1354, %v1667
      %v1669 = vpop.f32.mrb[0].mxu0
      %1670 = vmatprep.mubr.bf16.mxu0 0
      %1671 = vmatmul.mubr.bf16.gmra.mrb[0].mxu0 %v1611
      %v1672 = vpop.f32.mrb[0].mxu0
      %v1673 = vadd.f32 %v1359, %v1672
      %v1674 = vpop.f32.mrb[0].mxu0
      %v1675 = vpop.f32.mrb[0].mxu0
      %v1676 = vpop.f32.mrb[0].mxu0
      %1677 = vdwg.mxu0
      %v1679 = vsel %vm1105, %v608, 0
      %v1682 = vsel %vm1105, %v609, 0
      %v1685 = vsel %vm1105, %v610, 0
      %v1688 = vsel %vm1105, %v932, 0
      %v1691 = vsel %vm1105, %v933, 0
      %v1694 = vsel %vm1105, %v934, 0
      %1696 = vmatprep.subr.bf16.mxu0 0
      %1697 = vmatpush1.bf16.xpose.msra.mxu0 %v1688
      %1698 = vmatprep.subr.bf16.mxu0 0
      %1699 = vmatpush1.bf16.xpose.msra.mxu0 %v1691
      %1700 = vmatprep.subr.bf16.mxu0 0
      %1701 = vmatpush1.bf16.xpose.msra.mxu0 %v1694
      %1702 = vmatprep.subr.bf16.mxu0 0
      %1703 = vmatpush1.bf16.xpose.msra.mxu0 0
      %1704 = vmatprep.subr.bf16.mxu0 0
      %1705 = vmatpush1.bf16.xpose.msra.mxu0 0
      %1706 = vmatprep.subr.bf16.mxu0 0
      %1707 = vmatpush1.bf16.xpose.msra.mxu0 0
      %1708 = vmatprep.subr.bf16.mxu0 0
      %1709 = vmatpush1.bf16.xpose.msra.mxu0 0
      %1710 = vmatprep.subr.bf16.mxu0 0
      %1711 = vmatpush1.bf16.xpose.msra.mxu0 0
      %1712 = vmatprep.subr.bf16.mxu0 0
      %1713 = vmatpush1.bf16.xpose.msra.mxu0 0
      %1714 = vmatprep.subr.bf16.mxu0 0
      %1715 = vmatpush1.bf16.xpose.msra.mxu0 0
      %1716 = vmatprep.subr.bf16.mxu0 0
      %1717 = vmatpush1.bf16.xpose.msra.mxu0 0
      %1718 = vmatprep.subr.bf16.mxu0 0
      %1719 = vmatpush1.bf16.xpose.msra.mxu0 0
      %1720 = vmatprep.subr.bf16.mxu0 0
      %1721 = vmatpush1.bf16.xpose.msra.mxu0 0
      %1722 = vmatprep.subr.bf16.mxu0 0
      %1723 = vmatpush1.bf16.xpose.msra.mxu0 0
      %1724 = vmatprep.subr.bf16.mxu0 0
      %1725 = vmatpush1.bf16.xpose.msra.mxu0 0
      %1726 = vmatprep.subr.bf16.mxu0 0
      %1727 = vmatpush1.bf16.xpose.msra.mxu0 0
      %1728 = vmatprep.mubr.bf16.mxu0 0
      %1729 = vmatmul.mubr.bf16.gmra.mrb[0].mxu0 %v1679
      %v1730 = vpop.f32.mrb[0].mxu0
      %v1731 = vadd.f32 %v1435, %v1730
      %v1732 = vpop.f32.mrb[0].mxu0
      %v1733 = vpop.f32.mrb[0].mxu0
      %v1734 = vadd.f32 %v1438, %v1733
      %v1735 = vpop.f32.mrb[0].mxu0
      %1736 = vmatprep.mubr.bf16.mxu0 0
      %1737 = vmatmul.mubr.bf16.gmra.mrb[0].mxu0 %v1682
      %v1738 = vpop.f32.mrb[0].mxu0
      %v1739 = vadd.f32 %v1443, %v1738
      %v1740 = vpop.f32.mrb[0].mxu0
      %v1741 = vpop.f32.mrb[0].mxu0
      %v1742 = vadd.f32 %v1446, %v1741
      %v1743 = vpop.f32.mrb[0].mxu0
      %1744 = vmatprep.mubr.bf16.mxu0 0
      %1745 = vmatmul.mubr.bf16.gmra.mrb[0].mxu0 %v1685
      %v1746 = vpop.f32.mrb[0].mxu0
      %v1747 = vadd.f32 %v1451, %v1746
      %v1748 = vpop.f32.mrb[0].mxu0
      %v1749 = vpop.f32.mrb[0].mxu0
      %v1750 = vpop.f32.mrb[0].mxu0
      %1751 = vdwg.mxu0
      %vm1752 = vcmask 269312
      %v1753 = vsel %vm1752, %v1509, -inf
      %1754 = vmax.xlane.f32.xlu0 %v1753
      %v1755 = vpop.xlane.xlu0 %1754
      %v1756 = vsel %vm1752, %v1512, -inf
      %1757 = vmax.xlane.f32.xlu0 %v1756
      %v1758 = vpop.xlane.xlu0 %1757
      %v1759 = vsel %vm1752, %v1517, -inf
      %1760 = vmax.xlane.f32.xlu0 %v1759
      %v1761 = vpop.xlane.xlu0 %1760
      %v1762 = vsel %vm1752, %v1520, -inf
      %1763 = vmax.xlane.f32.xlu0 %v1762
      %v1764 = vpop.xlane.xlu0 %1763
      %vm1765 = vcmask 262144
      %v1766 = vsel %vm1765, %v1525, -inf
      %1767 = vmax.xlane.f32.xlu0 %v1766
      %v1768 = vpop.xlane.xlu0 %1767
      %v1769 = vsel %vm1752, %v1583, -inf
      %1770 = vmax.xlane.f32.xlu0 %v1769
      %v1771 = vpop.xlane.xlu0 %1770
      %v1772 = vsel %vm1752, %v1586, -inf
      %1773 = vmax.xlane.f32.xlu0 %v1772
      %v1774 = vpop.xlane.xlu0 %1773
      %v1775 = vsel %vm1752, %v1591, -inf
      %1776 = vmax.xlane.f32.xlu0 %v1775
      %v1777 = vpop.xlane.xlu0 %1776
      %v1778 = vsel %vm1752, %v1594, -inf
      %1779 = vmax.xlane.f32.xlu0 %v1778
      %v1780 = vpop.xlane.xlu0 %1779
      %v1781 = vsel %vm1765, %v1599, -inf
      %1782 = vmax.xlane.f32.xlu0 %v1781
      %v1783 = vpop.xlane.xlu0 %1782
      %v1784 = vsel %vm1752, %v1657, -inf
      %1785 = vmax.xlane.f32.xlu0 %v1784
      %v1786 = vpop.xlane.xlu0 %1785
      %v1787 = vsel %vm1752, %v1660, -inf
      %1788 = vmax.xlane.f32.xlu0 %v1787
      %v1789 = vpop.xlane.xlu0 %1788
      %v1790 = vsel %vm1752, %v1665, -inf
      %1791 = vmax.xlane.f32.xlu0 %v1790
      %v1792 = vpop.xlane.xlu0 %1791
      %v1793 = vsel %vm1752, %v1668, -inf
      %1794 = vmax.xlane.f32.xlu0 %v1793
      %v1795 = vpop.xlane.xlu0 %1794
      %v1796 = vsel %vm1765, %v1673, -inf
      %1797 = vmax.xlane.f32.xlu0 %v1796
      %v1798 = vpop.xlane.xlu0 %1797
      %v1799 = vsel %vm1752, %v1731, -inf
      %1800 = vmax.xlane.f32.xlu0 %v1799
      %v1801 = vpop.xlane.xlu0 %1800
      %v1802 = vsel %vm1752, %v1734, -inf
      %1803 = vmax.xlane.f32.xlu0 %v1802
      %v1804 = vpop.xlane.xlu0 %1803
      %v1805 = vsel %vm1752, %v1739, -inf
      %1806 = vmax.xlane.f32.xlu0 %v1805
      %v1807 = vpop.xlane.xlu0 %1806
      %v1808 = vsel %vm1752, %v1742, -inf
      %1809 = vmax.xlane.f32.xlu0 %v1808
      %v1810 = vpop.xlane.xlu0 %1809
      %v1811 = vsel %vm1765, %v1747, -inf
      %1812 = vmax.xlane.f32.xlu0 %v1811
      %v1813 = vpop.xlane.xlu0 %1812
      %v1814 = vsub.f32 %v1509, %v1755
      %v1815 = vsub.f32 %v1512, %v1758
      %v1816 = vsub.f32 %v1517, %v1761
      %v1817 = vsub.f32 %v1520, %v1764
      %v1818 = vsub.f32 %v1525, %v1768
      %v1819 = vsub.f32 %v1583, %v1771
      %v1820 = vsub.f32 %v1586, %v1774
      %v1821 = vsub.f32 %v1591, %v1777
      %v1822 = vsub.f32 %v1594, %v1780
      %v1823 = vsub.f32 %v1599, %v1783
      %v1824 = vsub.f32 %v1657, %v1786
      %v1825 = vsub.f32 %v1660, %v1789
      %v1826 = vsub.f32 %v1665, %v1792
      %v1827 = vsub.f32 %v1668, %v1795
      %v1828 = vsub.f32 %v1673, %v1798
      %v1829 = vsub.f32 %v1731, %v1801
      %v1830 = vsub.f32 %v1734, %v1804
      %v1831 = vsub.f32 %v1739, %v1807
      %v1832 = vsub.f32 %v1742, %v1810
      %v1833 = vsub.f32 %v1747, %v1813
      %v1834 = vmul.f32 %v1814, 1.442695
      %v1835 = vpow.pop %v1834
      %v1836 = vmul.f32 %v1815, 1.442695
      %v1837 = vpow.pop %v1836
      %v1838 = vmul.f32 %v1816, 1.442695
      %v1839 = vpow.pop %v1838
      %v1840 = vmul.f32 %v1817, 1.442695
      %v1841 = vpow.pop %v1840
      %v1842 = vmul.f32 %v1818, 1.442695
      %v1843 = vpow.pop %v1842
      %v1844 = vmul.f32 %v1819, 1.442695
      %v1845 = vpow.pop %v1844
      %v1846 = vmul.f32 %v1820, 1.442695
      %v1847 = vpow.pop %v1846
      %v1848 = vmul.f32 %v1821, 1.442695
      %v1849 = vpow.pop %v1848
      %v1850 = vmul.f32 %v1822, 1.442695
      %v1851 = vpow.pop %v1850
      %v1852 = vmul.f32 %v1823, 1.442695
      %v1853 = vpow.pop %v1852
      %v1854 = vmul.f32 %v1824, 1.442695
      %v1855 = vpow.pop %v1854
      %v1856 = vmul.f32 %v1825, 1.442695
      %v1857 = vpow.pop %v1856
      %v1858 = vmul.f32 %v1826, 1.442695
      %v1859 = vpow.pop %v1858
      %v1860 = vmul.f32 %v1827, 1.442695
      %v1861 = vpow.pop %v1860
      %v1862 = vmul.f32 %v1828, 1.442695
      %v1863 = vpow.pop %v1862
      %v1864 = vmul.f32 %v1829, 1.442695
      %v1865 = vpow.pop %v1864
      %v1866 = vmul.f32 %v1830, 1.442695
      %v1867 = vpow.pop %v1866
      %v1868 = vmul.f32 %v1831, 1.442695
      %v1869 = vpow.pop %v1868
      %v1870 = vmul.f32 %v1832, 1.442695
      %v1871 = vpow.pop %v1870
      %v1872 = vmul.f32 %v1833, 1.442695
      %v1873 = vpow.pop %v1872
      %v1874 = vsel %vm1752, %v1835, 0.0
      %1875 = vadd.xlane.f32.xlu0 %v1874
      %v1876 = vpop.xlane.xlu0 %1875
      %v1877 = vsel %vm1752, %v1837, 0.0
      %1878 = vadd.xlane.f32.xlu0 %v1877
      %v1879 = vpop.xlane.xlu0 %1878
      %v1880 = vsel %vm1752, %v1839, 0.0
      %1881 = vadd.xlane.f32.xlu0 %v1880
      %v1882 = vpop.xlane.xlu0 %1881
      %v1883 = vsel %vm1752, %v1841, 0.0
      %1884 = vadd.xlane.f32.xlu0 %v1883
      %v1885 = vpop.xlane.xlu0 %1884
      %v1886 = vsel %vm1765, %v1843, 0.0
      %1887 = vadd.xlane.f32.xlu0 %v1886
      %v1888 = vpop.xlane.xlu0 %1887
      %v1889 = vsel %vm1752, %v1845, 0.0
      %1890 = vadd.xlane.f32.xlu0 %v1889
      %v1891 = vpop.xlane.xlu0 %1890
      %v1892 = vsel %vm1752, %v1847, 0.0
      %1893 = vadd.xlane.f32.xlu0 %v1892
      %v1894 = vpop.xlane.xlu0 %1893
      %v1895 = vsel %vm1752, %v1849, 0.0
      %1896 = vadd.xlane.f32.xlu0 %v1895
      %v1897 = vpop.xlane.xlu0 %1896
      %v1898 = vsel %vm1752, %v1851, 0.0
      %1899 = vadd.xlane.f32.xlu0 %v1898
      %v1900 = vpop.xlane.xlu0 %1899
      %v1901 = vsel %vm1765, %v1853, 0.0
      %1902 = vadd.xlane.f32.xlu0 %v1901
      %v1903 = vpop.xlane.xlu0 %1902
      %v1904 = vsel %vm1752, %v1855, 0.0
      %1905 = vadd.xlane.f32.xlu0 %v1904
      %v1906 = vpop.xlane.xlu0 %1905
      %v1907 = vsel %vm1752, %v1857, 0.0
      %1908 = vadd.xlane.f32.xlu0 %v1907
      %v1909 = vpop.xlane.xlu0 %1908
      %v1910 = vsel %vm1752, %v1859, 0.0
      %1911 = vadd.xlane.f32.xlu0 %v1910
      %v1912 = vpop.xlane.xlu0 %1911
      %v1913 = vsel %vm1752, %v1861, 0.0
      %1914 = vadd.xlane.f32.xlu0 %v1913
      %v1915 = vpop.xlane.xlu0 %1914
      %v1916 = vsel %vm1765, %v1863, 0.0
      %1917 = vadd.xlane.f32.xlu0 %v1916
      %v1918 = vpop.xlane.xlu0 %1917
      %v1919 = vsel %vm1752, %v1865, 0.0
      %1920 = vadd.xlane.f32.xlu0 %v1919
      %v1921 = vpop.xlane.xlu0 %1920
      %v1922 = vsel %vm1752, %v1867, 0.0
      %1923 = vadd.xlane.f32.xlu0 %v1922
      %v1924 = vpop.xlane.xlu0 %1923
      %v1925 = vsel %vm1752, %v1869, 0.0
      %1926 = vadd.xlane.f32.xlu0 %v1925
      %v1927 = vpop.xlane.xlu0 %1926
      %v1928 = vsel %vm1752, %v1871, 0.0
      %1929 = vadd.xlane.f32.xlu0 %v1928
      %v1930 = vpop.xlane.xlu0 %1929
      %v1931 = vsel %vm1765, %v1873, 0.0
      %1932 = vadd.xlane.f32.xlu0 %v1931
      %v1933 = vpop.xlane.xlu0 %1932
      %v1934 = vpack.c.bf16 %v1837, %v1835
      %v1935 = vpack.c.bf16 %v1841, %v1839
      %v1936 = vpack.c.bf16 %v1843, %v1843
      %v1937 = vpack.c.bf16 %v1847, %v1845
      %v1938 = vpack.c.bf16 %v1851, %v1849
      %v1939 = vpack.c.bf16 %v1853, %v1853
      %v1940 = vpack.c.bf16 %v1857, %v1855
      %v1941 = vpack.c.bf16 %v1861, %v1859
      %v1942 = vpack.c.bf16 %v1863, %v1863
      %v1943 = vpack.c.bf16 %v1867, %v1865
      %v1944 = vpack.c.bf16 %v1871, %v1869
      %v1945 = vpack.c.bf16 %v1873, %v1873
      %v1947 = vsel %vm1752, %v1934, 0
      %v1950 = vsel %vm1752, %v1935, 0
      %v1953 = vsel %vm1752, %v1936, 0
      %vm1955 = vcmask 1040384
      %v1956 = vsel 0, 4294967295, 65535
      %v1957 = vsel %vm1955, %v1956, 0
      %v1959 = vand.u32 %v429, %v1957
      %1961 = vmatprep.subr.bf16.mxu0 0
      %1962 = vmatpush1.bf16.msra.mxu0 %v427
      %1963 = vmatprep.subr.bf16.mxu0 0
      %1964 = vmatpush1.bf16.msra.mxu0 %v428
      %1965 = vmatprep.subr.bf16.mxu0 0
      %1966 = vmatpush1.bf16.msra.mxu0 %v1959
      %1967 = vmatprep.subr.bf16.mxu0 0
      %1968 = vmatpush1.bf16.msra.mxu0 0
      %1969 = vmatprep.subr.bf16.mxu0 0
      %1970 = vmatpush1.bf16.msra.mxu0 0
      %1971 = vmatprep.subr.bf16.mxu0 0
      %1972 = vmatpush1.bf16.msra.mxu0 0
      %1973 = vmatprep.subr.bf16.mxu0 0
      %1974 = vmatpush1.bf16.msra.mxu0 0
      %1975 = vmatprep.subr.bf16.mxu0 0
      %1976 = vmatpush1.bf16.msra.mxu0 0
      %1977 = vmatprep.subr.bf16.mxu0 0
      %1978 = vmatpush1.bf16.msra.mxu0 0
      %1979 = vmatprep.subr.bf16.mxu0 0
      %1980 = vmatpush1.bf16.msra.mxu0 0
      %1981 = vmatprep.subr.bf16.mxu0 0
      %1982 = vmatpush1.bf16.msra.mxu0 0
      %1983 = vmatprep.subr.bf16.mxu0 0
      %1984 = vmatpush1.bf16.msra.mxu0 0
      %1985 = vmatprep.subr.bf16.mxu0 0
      %1986 = vmatpush1.bf16.msra.mxu0 0
      %1987 = vmatprep.subr.bf16.mxu0 0
      %1988 = vmatpush1.bf16.msra.mxu0 0
      %1989 = vmatprep.subr.bf16.mxu0 0
      %1990 = vmatpush1.bf16.msra.mxu0 0
      %1991 = vmatprep.subr.bf16.mxu0 0
      %1992 = vmatpush1.bf16.msra.mxu0 0
      %1993 = vmatprep.mubr.bf16.mxu0 0
      %1994 = vmatmul.mubr.bf16.gmra.mrb[0].mxu0 %v1947
      %v1995 = vpop.f32.mrb[0].mxu0
      %v1996 = vadd.f32 0.0, %v1995
      %v1997 = vpop.f32.mrb[0].mxu0
      %v1998 = vpop.f32.mrb[0].mxu0
      %v1999 = vadd.f32 0.0, %v1998
      %v2000 = vpop.f32.mrb[0].mxu0
      %2001 = vmatprep.mubr.bf16.mxu0 0
      %2002 = vmatmul.mubr.bf16.gmra.mrb[0].mxu0 %v1950
      %v2003 = vpop.f32.mrb[0].mxu0
      %v2004 = vadd.f32 0.0, %v2003
      %v2005 = vpop.f32.mrb[0].mxu0
      %v2006 = vpop.f32.mrb[0].mxu0
      %v2007 = vadd.f32 0.0, %v2006
      %v2008 = vpop.f32.mrb[0].mxu0
      %2009 = vmatprep.mubr.bf16.mxu0 0
      %2010 = vmatmul.mubr.bf16.gmra.mrb[0].mxu0 %v1953
      %v2011 = vpop.f32.mrb[0].mxu0
      %v2012 = vadd.f32 0.0, %v2011
      %v2013 = vpop.f32.mrb[0].mxu0
      %v2014 = vpop.f32.mrb[0].mxu0
      %v2015 = vpop.f32.mrb[0].mxu0
      %2016 = vdwg.mxu0
      %v2018 = vsel %vm1752, %v1937, 0
      %v2021 = vsel %vm1752, %v1938, 0
      %v2024 = vsel %vm1752, %v1939, 0
      %v2027 = vand.u32 %v432, %v1957
      %2029 = vmatprep.subr.bf16.mxu0 0
      %2030 = vmatpush1.bf16.msra.mxu0 %v430
      %2031 = vmatprep.subr.bf16.mxu0 0
      %2032 = vmatpush1.bf16.msra.mxu0 %v431
      %2033 = vmatprep.subr.bf16.mxu0 0
      %2034 = vmatpush1.bf16.msra.mxu0 %v2027
      %2035 = vmatprep.subr.bf16.mxu0 0
      %2036 = vmatpush1.bf16.msra.mxu0 0
      %2037 = vmatprep.subr.bf16.mxu0 0
      %2038 = vmatpush1.bf16.msra.mxu0 0
      %2039 = vmatprep.subr.bf16.mxu0 0
      %2040 = vmatpush1.bf16.msra.mxu0 0
      %2041 = vmatprep.subr.bf16.mxu0 0
      %2042 = vmatpush1.bf16.msra.mxu0 0
      %2043 = vmatprep.subr.bf16.mxu0 0
      %2044 = vmatpush1.bf16.msra.mxu0 0
      %2045 = vmatprep.subr.bf16.mxu0 0
      %2046 = vmatpush1.bf16.msra.mxu0 0
      %2047 = vmatprep.subr.bf16.mxu0 0
      %2048 = vmatpush1.bf16.msra.mxu0 0
      %2049 = vmatprep.subr.bf16.mxu0 0
      %2050 = vmatpush1.bf16.msra.mxu0 0
      %2051 = vmatprep.subr.bf16.mxu0 0
      %2052 = vmatpush1.bf16.msra.mxu0 0
      %2053 = vmatprep.subr.bf16.mxu0 0
      %2054 = vmatpush1.bf16.msra.mxu0 0
      %2055 = vmatprep.subr.bf16.mxu0 0
      %2056 = vmatpush1.bf16.msra.mxu0 0
      %2057 = vmatprep.subr.bf16.mxu0 0
      %2058 = vmatpush1.bf16.msra.mxu0 0
      %2059 = vmatprep.subr.bf16.mxu0 0
      %2060 = vmatpush1.bf16.msra.mxu0 0
      %2061 = vmatprep.mubr.bf16.mxu0 0
      %2062 = vmatmul.mubr.bf16.gmra.mrb[0].mxu0 %v2018
      %v2063 = vpop.f32.mrb[0].mxu0
      %v2064 = vadd.f32 0.0, %v2063
      %v2065 = vpop.f32.mrb[0].mxu0
      %v2066 = vpop.f32.mrb[0].mxu0
      %v2067 = vadd.f32 0.0, %v2066
      %v2068 = vpop.f32.mrb[0].mxu0
      %2069 = vmatprep.mubr.bf16.mxu0 0
      %2070 = vmatmul.mubr.bf16.gmra.mrb[0].mxu0 %v2021
      %v2071 = vpop.f32.mrb[0].mxu0
      %v2072 = vadd.f32 0.0, %v2071
      %v2073 = vpop.f32.mrb[0].mxu0
      %v2074 = vpop.f32.mrb[0].mxu0
      %v2075 = vadd.f32 0.0, %v2074
      %v2076 = vpop.f32.mrb[0].mxu0
      %2077 = vmatprep.mubr.bf16.mxu0 0
      %2078 = vmatmul.mubr.bf16.gmra.mrb[0].mxu0 %v2024
      %v2079 = vpop.f32.mrb[0].mxu0
      %v2080 = vadd.f32 0.0, %v2079
      %v2081 = vpop.f32.mrb[0].mxu0
      %v2082 = vpop.f32.mrb[0].mxu0
      %v2083 = vpop.f32.mrb[0].mxu0
      %2084 = vdwg.mxu0
      %v2086 = vsel %vm1752, %v1940, 0
      %v2089 = vsel %vm1752, %v1941, 0
      %v2092 = vsel %vm1752, %v1942, 0
      %v2095 = vand.u32 %v435, %v1957
      %2097 = vmatprep.subr.bf16.mxu0 0
      %2098 = vmatpush1.bf16.msra.mxu0 %v433
      %2099 = vmatprep.subr.bf16.mxu0 0
      %2100 = vmatpush1.bf16.msra.mxu0 %v434
      %2101 = vmatprep.subr.bf16.mxu0 0
      %2102 = vmatpush1.bf16.msra.mxu0 %v2095
      %2103 = vmatprep.subr.bf16.mxu0 0
      %2104 = vmatpush1.bf16.msra.mxu0 0
      %2105 = vmatprep.subr.bf16.mxu0 0
      %2106 = vmatpush1.bf16.msra.mxu0 0
      %2107 = vmatprep.subr.bf16.mxu0 0
      %2108 = vmatpush1.bf16.msra.mxu0 0
      %2109 = vmatprep.subr.bf16.mxu0 0
      %2110 = vmatpush1.bf16.msra.mxu0 0
      %2111 = vmatprep.subr.bf16.mxu0 0
      %2112 = vmatpush1.bf16.msra.mxu0 0
      %2113 = vmatprep.subr.bf16.mxu0 0
      %2114 = vmatpush1.bf16.msra.mxu0 0
      %2115 = vmatprep.subr.bf16.mxu0 0
      %2116 = vmatpush1.bf16.msra.mxu0 0
      %2117 = vmatprep.subr.bf16.mxu0 0
      %2118 = vmatpush1.bf16.msra.mxu0 0
      %2119 = vmatprep.subr.bf16.mxu0 0
      %2120 = vmatpush1.bf16.msra.mxu0 0
      %2121 = vmatprep.subr.bf16.mxu0 0
      %2122 = vmatpush1.bf16.msra.mxu0 0
      %2123 = vmatprep.subr.bf16.mxu0 0
      %2124 = vmatpush1.bf16.msra.mxu0 0
      %2125 = vmatprep.subr.bf16.mxu0 0
      %2126 = vmatpush1.bf16.msra.mxu0 0
      %2127 = vmatprep.subr.bf16.mxu0 0
      %2128 = vmatpush1.bf16.msra.mxu0 0
      %2129 = vmatprep.mubr.bf16.mxu0 0
      %2130 = vmatmul.mubr.bf16.gmra.mrb[0].mxu0 %v2086
      %v2131 = vpop.f32.mrb[0].mxu0
      %v2132 = vadd.f32 0.0, %v2131
      %v2133 = vpop.f32.mrb[0].mxu0
      %v2134 = vpop.f32.mrb[0].mxu0
      %v2135 = vadd.f32 0.0, %v2134
      %v2136 = vpop.f32.mrb[0].mxu0
      %2137 = vmatprep.mubr.bf16.mxu0 0
      %2138 = vmatmul.mubr.bf16.gmra.mrb[0].mxu0 %v2089
      %v2139 = vpop.f32.mrb[0].mxu0
      %v2140 = vadd.f32 0.0, %v2139
      %v2141 = vpop.f32.mrb[0].mxu0
      %v2142 = vpop.f32.mrb[0].mxu0
      %v2143 = vadd.f32 0.0, %v2142
      %v2144 = vpop.f32.mrb[0].mxu0
      %2145 = vmatprep.mubr.bf16.mxu0 0
      %2146 = vmatmul.mubr.bf16.gmra.mrb[0].mxu0 %v2092
      %v2147 = vpop.f32.mrb[0].mxu0
      %v2148 = vadd.f32 0.0, %v2147
      %v2149 = vpop.f32.mrb[0].mxu0
      %v2150 = vpop.f32.mrb[0].mxu0
      %v2151 = vpop.f32.mrb[0].mxu0
      %2152 = vdwg.mxu0
      %v2154 = vsel %vm1752, %v1943, 0
      %v2157 = vsel %vm1752, %v1944, 0
      %v2160 = vsel %vm1752, %v1945, 0
      %v2163 = vand.u32 %v438, %v1957
      %2165 = vmatprep.subr.bf16.mxu0 0
      %2166 = vmatpush1.bf16.msra.mxu0 %v436
      %2167 = vmatprep.subr.bf16.mxu0 0
      %2168 = vmatpush1.bf16.msra.mxu0 %v437
      %2169 = vmatprep.subr.bf16.mxu0 0
      %2170 = vmatpush1.bf16.msra.mxu0 %v2163
      %2171 = vmatprep.subr.bf16.mxu0 0
      %2172 = vmatpush1.bf16.msra.mxu0 0
      %2173 = vmatprep.subr.bf16.mxu0 0
      %2174 = vmatpush1.bf16.msra.mxu0 0
      %2175 = vmatprep.subr.bf16.mxu0 0
      %2176 = vmatpush1.bf16.msra.mxu0 0
      %2177 = vmatprep.subr.bf16.mxu0 0
      %2178 = vmatpush1.bf16.msra.mxu0 0
      %2179 = vmatprep.subr.bf16.mxu0 0
      %2180 = vmatpush1.bf16.msra.mxu0 0
      %2181 = vmatprep.subr.bf16.mxu0 0
      %2182 = vmatpush1.bf16.msra.mxu0 0
      %2183 = vmatprep.subr.bf16.mxu0 0
      %2184 = vmatpush1.bf16.msra.mxu0 0
      %2185 = vmatprep.subr.bf16.mxu0 0
      %2186 = vmatpush1.bf16.msra.mxu0 0
      %2187 = vmatprep.subr.bf16.mxu0 0
      %2188 = vmatpush1.bf16.msra.mxu0 0
      %2189 = vmatprep.subr.bf16.mxu0 0
      %2190 = vmatpush1.bf16.msra.mxu0 0
      %2191 = vmatprep.subr.bf16.mxu0 0
      %2192 = vmatpush1.bf16.msra.mxu0 0
      %2193 = vmatprep.subr.bf16.mxu0 0
      %2194 = vmatpush1.bf16.msra.mxu0 0
      %2195 = vmatprep.subr.bf16.mxu0 0
      %2196 = vmatpush1.bf16.msra.mxu0 0
      %2197 = vmatprep.mubr.bf16.mxu0 0
      %2198 = vmatmul.mubr.bf16.gmra.mrb[0].mxu0 %v2154
      %v2199 = vpop.f32.mrb[0].mxu0
      %v2200 = vadd.f32 0.0, %v2199
      %v2201 = vpop.f32.mrb[0].mxu0
      %v2202 = vpop.f32.mrb[0].mxu0
      %v2203 = vadd.f32 0.0, %v2202
      %v2204 = vpop.f32.mrb[0].mxu0
      %2205 = vmatprep.mubr.bf16.mxu0 0
      %2206 = vmatmul.mubr.bf16.gmra.mrb[0].mxu0 %v2157
      %v2207 = vpop.f32.mrb[0].mxu0
      %v2208 = vadd.f32 0.0, %v2207
      %v2209 = vpop.f32.mrb[0].mxu0
      %v2210 = vpop.f32.mrb[0].mxu0
      %v2211 = vadd.f32 0.0, %v2210
      %v2212 = vpop.f32.mrb[0].mxu0
      %2213 = vmatprep.mubr.bf16.mxu0 0
      %2214 = vmatmul.mubr.bf16.gmra.mrb[0].mxu0 %v2160
      %v2215 = vpop.f32.mrb[0].mxu0
      %v2216 = vadd.f32 0.0, %v2215
      %v2217 = vpop.f32.mrb[0].mxu0
      %v2218 = vpop.f32.mrb[0].mxu0
      %v2219 = vpop.f32.mrb[0].mxu0
      %2220 = vdwg.mxu0
      %v2221 = vrcp.pop %v1876
      %v2222 = vrcp.pop %v1879
      %v2223 = vrcp.pop %v1882
      %v2224 = vrcp.pop %v1885
      %v2225 = vrcp.pop %v1888
      %v2226 = vrcp.pop %v1891
      %v2227 = vrcp.pop %v1894
      %v2228 = vrcp.pop %v1897
      %v2229 = vrcp.pop %v1900
      %v2230 = vrcp.pop %v1903
      %v2231 = vrcp.pop %v1906
      %v2232 = vrcp.pop %v1909
      %v2233 = vrcp.pop %v1912
      %v2234 = vrcp.pop %v1915
      %v2235 = vrcp.pop %v1918
      %v2236 = vrcp.pop %v1921
      %v2237 = vrcp.pop %v1924
      %v2238 = vrcp.pop %v1927
      %v2239 = vrcp.pop %v1930
      %v2240 = vrcp.pop %v1933
      %v2241 = vmul.f32 %v1996, %v2221
      %v2242 = vmul.f32 %v1999, %v2222
      %v2243 = vmul.f32 %v2004, %v2223
      %v2244 = vmul.f32 %v2007, %v2224
      %v2245 = vmul.f32 %v2012, %v2225
      %v2246 = vmul.f32 %v2064, %v2226
      %v2247 = vmul.f32 %v2067, %v2227
      %v2248 = vmul.f32 %v2072, %v2228
      %v2249 = vmul.f32 %v2075, %v2229
      %v2250 = vmul.f32 %v2080, %v2230
      %v2251 = vmul.f32 %v2132, %v2231
      %v2252 = vmul.f32 %v2135, %v2232
      %v2253 = vmul.f32 %v2140, %v2233
      %v2254 = vmul.f32 %v2143, %v2234
      %v2255 = vmul.f32 %v2148, %v2235
      %v2256 = vmul.f32 %v2200, %v2236
      %v2257 = vmul.f32 %v2203, %v2237
      %v2258 = vmul.f32 %v2208, %v2238
      %v2259 = vmul.f32 %v2211, %v2239
      %v2260 = vmul.f32 %v2216, %v2240
      %v2261 = vld [vmem:[%s330] sm:$0xf]
      %v2262 = vxor.u32 %v2261, 2147483648
      %v2263 = vmul.f32 %v2262, 1.442695
      %v2264 = vpow.pop %v2263
      %v2265 = vadd.f32 %v2264, 1.0
      %v2266 = vrcp.pop %v2265
      %v2267 = vmul.f32 1.0, %v2266
      %v2268 = vlaneseq
      %v2269 = vshrl.u32 %v2268, 7
      %v2270 = vsub.s32 0, %v2269
      %v2271 = vrot.slane %v2267, %v2270
      %2273 = vbcast.lane.b32.xlu0 %v2271, 256
      %v2274 = vpop.permute.xlu0 %2273
      %s2276 = sor.u32 256, 8
      %2277 = vbcast.lane.b32.xlu0 %v2271, %s2276
      %v2278 = vpop.permute.xlu0 %2277
      %s2280 = sor.u32 256, 16
      %2281 = vbcast.lane.b32.xlu0 %v2271, %s2280
      %v2282 = vpop.permute.xlu0 %2281
      %s2284 = sor.u32 256, 24
      %2285 = vbcast.lane.b32.xlu0 %v2271, %s2284
      %v2286 = vpop.permute.xlu0 %2285
      %s2288 = sor.u32 256, 32
      %2289 = vbcast.lane.b32.xlu0 %v2271, %s2288
      %v2290 = vpop.permute.xlu0 %2289
      %v2291 = vlaneseq
      %v2292 = vshrl.u32 %v2291, 7
      %v2293 = vsub.s32 1, %v2292
      %v2294 = vrot.slane %v2267, %v2293
      %2296 = vbcast.lane.b32.xlu0 %v2294, 256
      %v2297 = vpop.permute.xlu0 %2296
      %s2299 = sor.u32 256, 8
      %2300 = vbcast.lane.b32.xlu0 %v2294, %s2299
      %v2301 = vpop.permute.xlu0 %2300
      %s2303 = sor.u32 256, 16
      %2304 = vbcast.lane.b32.xlu0 %v2294, %s2303
      %v2305 = vpop.permute.xlu0 %2304
      %s2307 = sor.u32 256, 24
      %2308 = vbcast.lane.b32.xlu0 %v2294, %s2307
      %v2309 = vpop.permute.xlu0 %2308
      %s2311 = sor.u32 256, 32
      %2312 = vbcast.lane.b32.xlu0 %v2294, %s2311
      %v2313 = vpop.permute.xlu0 %2312
      %v2314 = vlaneseq
      %v2315 = vshrl.u32 %v2314, 7
      %v2316 = vsub.s32 2, %v2315
      %v2317 = vrot.slane %v2267, %v2316
      %2319 = vbcast.lane.b32.xlu0 %v2317, 256
      %v2320 = vpop.permute.xlu0 %2319
      %s2322 = sor.u32 256, 8
      %2323 = vbcast.lane.b32.xlu0 %v2317, %s2322
      %v2324 = vpop.permute.xlu0 %2323
      %s2326 = sor.u32 256, 16
      %2327 = vbcast.lane.b32.xlu0 %v2317, %s2326
      %v2328 = vpop.permute.xlu0 %2327
      %s2330 = sor.u32 256, 24
      %2331 = vbcast.lane.b32.xlu0 %v2317, %s2330
      %v2332 = vpop.permute.xlu0 %2331
      %s2334 = sor.u32 256, 32
      %2335 = vbcast.lane.b32.xlu0 %v2317, %s2334
      %v2336 = vpop.permute.xlu0 %2335
      %v2337 = vlaneseq
      %v2338 = vshrl.u32 %v2337, 7
      %v2339 = vsub.s32 3, %v2338
      %v2340 = vrot.slane %v2267, %v2339
      %2342 = vbcast.lane.b32.xlu0 %v2340, 256
      %v2343 = vpop.permute.xlu0 %2342
      %s2345 = sor.u32 256, 8
      %2346 = vbcast.lane.b32.xlu0 %v2340, %s2345
      %v2347 = vpop.permute.xlu0 %2346
      %s2349 = sor.u32 256, 16
      %2350 = vbcast.lane.b32.xlu0 %v2340, %s2349
      %v2351 = vpop.permute.xlu0 %2350
      %s2353 = sor.u32 256, 24
      %2354 = vbcast.lane.b32.xlu0 %v2340, %s2353
      %v2355 = vpop.permute.xlu0 %2354
      %s2357 = sor.u32 256, 32
      %2358 = vbcast.lane.b32.xlu0 %v2340, %s2357
      %v2359 = vpop.permute.xlu0 %2358
      %v2360 = vmul.f32 %v2241, %v2274
      %v2361 = vmul.f32 %v2242, %v2278
      %v2362 = vmul.f32 %v2243, %v2282
      %v2363 = vmul.f32 %v2244, %v2286
      %v2364 = vmul.f32 %v2245, %v2290
      %v2365 = vmul.f32 %v2246, %v2297
      %v2366 = vmul.f32 %v2247, %v2301
      %v2367 = vmul.f32 %v2248, %v2305
      %v2368 = vmul.f32 %v2249, %v2309
      %v2369 = vmul.f32 %v2250, %v2313
      %v2370 = vmul.f32 %v2251, %v2320
      %v2371 = vmul.f32 %v2252, %v2324
      %v2372 = vmul.f32 %v2253, %v2328
      %v2373 = vmul.f32 %v2254, %v2332
      %v2374 = vmul.f32 %v2255, %v2336
      %v2375 = vmul.f32 %v2256, %v2343
      %v2376 = vmul.f32 %v2257, %v2347
      %v2377 = vmul.f32 %v2258, %v2351
      %v2378 = vmul.f32 %v2259, %v2355
      %v2379 = vmul.f32 %v2260, %v2359
      %v2380 = vpack.c.bf16 %v2361, %v2360
      %v2381 = vpack.c.bf16 %v2363, %v2362
      %v2382 = vpack.c.bf16 %v2364, %v2364
      %v2383 = vpack.c.bf16 %v2366, %v2365
      %v2384 = vpack.c.bf16 %v2368, %v2367
      %v2385 = vpack.c.bf16 %v2369, %v2369
      %v2386 = vpack.c.bf16 %v2371, %v2370
      %v2387 = vpack.c.bf16 %v2373, %v2372
      %v2388 = vpack.c.bf16 %v2374, %v2374
      %v2389 = vpack.c.bf16 %v2376, %v2375
      %v2390 = vpack.c.bf16 %v2378, %v2377
      %v2391 = vpack.c.bf16 %v2379, %v2379
      %v2392 = vld [vmem:[%s6] sm:$0xf]
      %s2393 = scalar_lea.vmem %s6, 4
      %v2394 = vld [vmem:[%s2393] sm:$0xf]
      %vm2395 = vcmask 64512
      %v2397 = vsel %vm2395, %v2383, 0
      %v2400 = vsel %vm2395, %v2384, 0
      %v2403 = vsel %vm2395, %v2385, 0
      %vm2405 = vcmask 1043456
      %v2407 = vsel %vm2405, %v2394, 0
      %2409 = vmatprep.subr.bf16.mxu0 0
      %2410 = vmatpush1.bf16.msra.mxu0 %v2407
      %2411 = vmatprep.subr.bf16.mxu0 0
      %2412 = vmatpush1.bf16.msra.mxu0 0
      %2413 = vmatprep.subr.bf16.mxu0 0
      %2414 = vmatpush1.bf16.msra.mxu0 0
      %2415 = vmatprep.subr.bf16.mxu0 0
      %2416 = vmatpush1.bf16.msra.mxu0 0
      %2417 = vmatprep.subr.bf16.mxu0 0
      %2418 = vmatpush1.bf16.msra.mxu0 0
      %2419 = vmatprep.subr.bf16.mxu0 0
      %2420 = vmatpush1.bf16.msra.mxu0 0
      %2421 = vmatprep.subr.bf16.mxu0 0
      %2422 = vmatpush1.bf16.msra.mxu0 0
      %2423 = vmatprep.subr.bf16.mxu0 0
      %2424 = vmatpush1.bf16.msra.mxu0 0
      %2425 = vmatprep.subr.bf16.mxu0 0
      %2426 = vmatpush1.bf16.msra.mxu0 0
      %2427 = vmatprep.subr.bf16.mxu0 0
      %2428 = vmatpush1.bf16.msra.mxu0 0
      %2429 = vmatprep.subr.bf16.mxu0 0
      %2430 = vmatpush1.bf16.msra.mxu0 0
      %2431 = vmatprep.subr.bf16.mxu0 0
      %2432 = vmatpush1.bf16.msra.mxu0 0
      %2433 = vmatprep.subr.bf16.mxu0 0
      %2434 = vmatpush1.bf16.msra.mxu0 0
      %2435 = vmatprep.subr.bf16.mxu0 0
      %2436 = vmatpush1.bf16.msra.mxu0 0
      %2437 = vmatprep.subr.bf16.mxu0 0
      %2438 = vmatpush1.bf16.msra.mxu0 0
      %2439 = vmatprep.subr.bf16.mxu0 0
      %2440 = vmatpush1.bf16.msra.mxu0 0
      %2441 = vmatprep.mubr.bf16.mxu0 0
      %2442 = vmatmul.mubr.bf16.gmra.mrb[0].mxu0 %v2397
      %v2443 = vpop.f32.mrb[0].mxu0
      %v2444 = vadd.f32 0.0, %v2443
      %v2445 = vpop.f32.mrb[0].mxu0
      %v2446 = vpop.f32.mrb[0].mxu0
      %v2447 = vadd.f32 0.0, %v2446
      %v2448 = vpop.f32.mrb[0].mxu0
      %2449 = vmatprep.mubr.bf16.mxu0 0
      %2450 = vmatmul.mubr.bf16.gmra.mrb[0].mxu0 %v2400
      %v2451 = vpop.f32.mrb[0].mxu0
      %v2452 = vadd.f32 0.0, %v2451
      %v2453 = vpop.f32.mrb[0].mxu0
      %v2454 = vpop.f32.mrb[0].mxu0
      %v2455 = vadd.f32 0.0, %v2454
      %v2456 = vpop.f32.mrb[0].mxu0
      %2457 = vmatprep.mubr.bf16.mxu0 0
      %2458 = vmatmul.mubr.bf16.gmra.mrb[0].mxu0 %v2403
      %v2459 = vpop.f32.mrb[0].mxu0
      %v2460 = vadd.f32 0.0, %v2459
      %v2461 = vpop.f32.mrb[0].mxu0
      %v2462 = vpop.f32.mrb[0].mxu0
      %v2463 = vpop.f32.mrb[0].mxu0
      %2464 = vdwg.mxu0
      %v2466 = vsel %vm2395, %v2380, 0
      %v2469 = vsel %vm2395, %v2381, 0
      %v2472 = vsel %vm2395, %v2382, 0
      %v2475 = vsel %vm2405, %v2392, 0
      %2477 = vmatprep.subr.bf16.mxu0 0
      %2478 = vmatpush1.bf16.msra.mxu0 %v2475
      %2479 = vmatprep.subr.bf16.mxu0 0
      %2480 = vmatpush1.bf16.msra.mxu0 0
      %2481 = vmatprep.subr.bf16.mxu0 0
      %2482 = vmatpush1.bf16.msra.mxu0 0
      %2483 = vmatprep.subr.bf16.mxu0 0
      %2484 = vmatpush1.bf16.msra.mxu0 0
      %2485 = vmatprep.subr.bf16.mxu0 0
      %2486 = vmatpush1.bf16.msra.mxu0 0
      %2487 = vmatprep.subr.bf16.mxu0 0
      %2488 = vmatpush1.bf16.msra.mxu0 0
      %2489 = vmatprep.subr.bf16.mxu0 0
      %2490 = vmatpush1.bf16.msra.mxu0 0
      %2491 = vmatprep.subr.bf16.mxu0 0
      %2492 = vmatpush1.bf16.msra.mxu0 0
      %2493 = vmatprep.subr.bf16.mxu0 0
      %2494 = vmatpush1.bf16.msra.mxu0 0
      %2495 = vmatprep.subr.bf16.mxu0 0
      %2496 = vmatpush1.bf16.msra.mxu0 0
      %2497 = vmatprep.subr.bf16.mxu0 0
      %2498 = vmatpush1.bf16.msra.mxu0 0
      %2499 = vmatprep.subr.bf16.mxu0 0
      %2500 = vmatpush1.bf16.msra.mxu0 0
      %2501 = vmatprep.subr.bf16.mxu0 0
      %2502 = vmatpush1.bf16.msra.mxu0 0
      %2503 = vmatprep.subr.bf16.mxu0 0
      %2504 = vmatpush1.bf16.msra.mxu0 0
      %2505 = vmatprep.subr.bf16.mxu0 0
      %2506 = vmatpush1.bf16.msra.mxu0 0
      %2507 = vmatprep.subr.bf16.mxu0 0
      %2508 = vmatpush1.bf16.msra.mxu0 0
      %2509 = vmatprep.mubr.bf16.mxu0 0
      %2510 = vmatmul.mubr.bf16.gmra.mrb[0].mxu0 %v2466
      %v2511 = vpop.f32.mrb[0].mxu0
      %v2512 = vadd.f32 %v2444, %v2511
      %v2513 = vpop.f32.mrb[0].mxu0
      %v2514 = vpop.f32.mrb[0].mxu0
      %v2515 = vadd.f32 %v2447, %v2514
      %v2516 = vpop.f32.mrb[0].mxu0
      %2517 = vmatprep.mubr.bf16.mxu0 0
      %2518 = vmatmul.mubr.bf16.gmra.mrb[0].mxu0 %v2469
      %v2519 = vpop.f32.mrb[0].mxu0
      %v2520 = vadd.f32 %v2452, %v2519
      %v2521 = vpop.f32.mrb[0].mxu0
      %v2522 = vpop.f32.mrb[0].mxu0
      %v2523 = vadd.f32 %v2455, %v2522
      %v2524 = vpop.f32.mrb[0].mxu0
      %2525 = vmatprep.mubr.bf16.mxu0 0
      %2526 = vmatmul.mubr.bf16.gmra.mrb[0].mxu0 %v2472
      %v2527 = vpop.f32.mrb[0].mxu0
      %v2528 = vadd.f32 %v2460, %v2527
      %v2529 = vpop.f32.mrb[0].mxu0
      %v2530 = vpop.f32.mrb[0].mxu0
      %v2531 = vpop.f32.mrb[0].mxu0
      %2532 = vdwg.mxu0
      %s2533 = scalar_lea.vmem %s6, 8
      %v2534 = vld [vmem:[%s2533] sm:$0xf]
      %v2536 = vsel %vm2395, %v2386, 0
      %v2539 = vsel %vm2395, %v2387, 0
      %v2542 = vsel %vm2395, %v2388, 0
      %v2545 = vsel %vm2405, %v2534, 0
      %2547 = vmatprep.subr.bf16.mxu0 0
      %2548 = vmatpush1.bf16.msra.mxu0 %v2545
      %2549 = vmatprep.subr.bf16.mxu0 0
      %2550 = vmatpush1.bf16.msra.mxu0 0
      %2551 = vmatprep.subr.bf16.mxu0 0
      %2552 = vmatpush1.bf16.msra.mxu0 0
      %2553 = vmatprep.subr.bf16.mxu0 0
      %2554 = vmatpush1.bf16.msra.mxu0 0
      %2555 = vmatprep.subr.bf16.mxu0 0
      %2556 = vmatpush1.bf16.msra.mxu0 0
      %2557 = vmatprep.subr.bf16.mxu0 0
      %2558 = vmatpush1.bf16.msra.mxu0 0
      %2559 = vmatprep.subr.bf16.mxu0 0
      %2560 = vmatpush1.bf16.msra.mxu0 0
      %2561 = vmatprep.subr.bf16.mxu0 0
      %2562 = vmatpush1.bf16.msra.mxu0 0
      %2563 = vmatprep.subr.bf16.mxu0 0
      %2564 = vmatpush1.bf16.msra.mxu0 0
      %2565 = vmatprep.subr.bf16.mxu0 0
      %2566 = vmatpush1.bf16.msra.mxu0 0
      %2567 = vmatprep.subr.bf16.mxu0 0
      %2568 = vmatpush1.bf16.msra.mxu0 0
      %2569 = vmatprep.subr.bf16.mxu0 0
      %2570 = vmatpush1.bf16.msra.mxu0 0
      %2571 = vmatprep.subr.bf16.mxu0 0
      %2572 = vmatpush1.bf16.msra.mxu0 0
      %2573 = vmatprep.subr.bf16.mxu0 0
      %2574 = vmatpush1.bf16.msra.mxu0 0
      %2575 = vmatprep.subr.bf16.mxu0 0
      %2576 = vmatpush1.bf16.msra.mxu0 0
      %2577 = vmatprep.subr.bf16.mxu0 0
      %2578 = vmatpush1.bf16.msra.mxu0 0
      %2579 = vmatprep.mubr.bf16.mxu0 0
      %2580 = vmatmul.mubr.bf16.gmra.mrb[0].mxu0 %v2536
      %v2581 = vpop.f32.mrb[0].mxu0
      %v2582 = vadd.f32 0.0, %v2581
      %v2583 = vpop.f32.mrb[0].mxu0
      %v2584 = vpop.f32.mrb[0].mxu0
      %v2585 = vadd.f32 0.0, %v2584
      %v2586 = vpop.f32.mrb[0].mxu0
      %2587 = vmatprep.mubr.bf16.mxu0 0
      %2588 = vmatmul.mubr.bf16.gmra.mrb[0].mxu0 %v2539
      %v2589 = vpop.f32.mrb[0].mxu0
      %v2590 = vadd.f32 0.0, %v2589
      %v2591 = vpop.f32.mrb[0].mxu0
      %v2592 = vpop.f32.mrb[0].mxu0
      %v2593 = vadd.f32 0.0, %v2592
      %v2594 = vpop.f32.mrb[0].mxu0
      %2595 = vmatprep.mubr.bf16.mxu0 0
      %2596 = vmatmul.mubr.bf16.gmra.mrb[0].mxu0 %v2542
      %v2597 = vpop.f32.mrb[0].mxu0
      %v2598 = vadd.f32 0.0, %v2597
      %v2599 = vpop.f32.mrb[0].mxu0
      %v2600 = vpop.f32.mrb[0].mxu0
      %v2601 = vpop.f32.mrb[0].mxu0
      %2602 = vdwg.mxu0
      %v2603 = vadd.f32 %v2512, %v2582
      %v2604 = vadd.f32 %v2515, %v2585
      %v2605 = vadd.f32 %v2520, %v2590
      %v2606 = vadd.f32 %v2523, %v2593
      %v2607 = vadd.f32 %v2528, %v2598
      %s2608 = scalar_lea.vmem %s6, 12
      %v2609 = vld [vmem:[%s2608] sm:$0xf]
      %v2611 = vsel %vm2395, %v2389, 0
      %v2614 = vsel %vm2395, %v2390, 0
      %v2617 = vsel %vm2395, %v2391, 0
      %v2620 = vsel %vm2405, %v2609, 0
      %2622 = vmatprep.subr.bf16.mxu0 0
      %2623 = vmatpush1.bf16.msra.mxu0 %v2620
      %2624 = vmatprep.subr.bf16.mxu0 0
      %2625 = vmatpush1.bf16.msra.mxu0 0
      %2626 = vmatprep.subr.bf16.mxu0 0
      %2627 = vmatpush1.bf16.msra.mxu0 0
      %2628 = vmatprep.subr.bf16.mxu0 0
      %2629 = vmatpush1.bf16.msra.mxu0 0
      %2630 = vmatprep.subr.bf16.mxu0 0
      %2631 = vmatpush1.bf16.msra.mxu0 0
      %2632 = vmatprep.subr.bf16.mxu0 0
      %2633 = vmatpush1.bf16.msra.mxu0 0
      %2634 = vmatprep.subr.bf16.mxu0 0
      %2635 = vmatpush1.bf16.msra.mxu0 0
      %2636 = vmatprep.subr.bf16.mxu0 0
      %2637 = vmatpush1.bf16.msra.mxu0 0
      %2638 = vmatprep.subr.bf16.mxu0 0
      %2639 = vmatpush1.bf16.msra.mxu0 0
      %2640 = vmatprep.subr.bf16.mxu0 0
      %2641 = vmatpush1.bf16.msra.mxu0 0
      %2642 = vmatprep.subr.bf16.mxu0 0
      %2643 = vmatpush1.bf16.msra.mxu0 0
      %2644 = vmatprep.subr.bf16.mxu0 0
      %2645 = vmatpush1.bf16.msra.mxu0 0
      %2646 = vmatprep.subr.bf16.mxu0 0
      %2647 = vmatpush1.bf16.msra.mxu0 0
      %2648 = vmatprep.subr.bf16.mxu0 0
      %2649 = vmatpush1.bf16.msra.mxu0 0
      %2650 = vmatprep.subr.bf16.mxu0 0
      %2651 = vmatpush1.bf16.msra.mxu0 0
      %2652 = vmatprep.subr.bf16.mxu0 0
      %2653 = vmatpush1.bf16.msra.mxu0 0
      %2654 = vmatprep.mubr.bf16.mxu0 0
      %2655 = vmatmul.mubr.bf16.gmra.mrb[0].mxu0 %v2611
      %v2656 = vpop.f32.mrb[0].mxu0
      %v2657 = vadd.f32 0.0, %v2656
      %v2658 = vpop.f32.mrb[0].mxu0
      %v2659 = vpop.f32.mrb[0].mxu0
      %v2660 = vadd.f32 0.0, %v2659
      %v2661 = vpop.f32.mrb[0].mxu0
      %2662 = vmatprep.mubr.bf16.mxu0 0
      %2663 = vmatmul.mubr.bf16.gmra.mrb[0].mxu0 %v2614
      %v2664 = vpop.f32.mrb[0].mxu0
      %v2665 = vadd.f32 0.0, %v2664
      %v2666 = vpop.f32.mrb[0].mxu0
      %v2667 = vpop.f32.mrb[0].mxu0
      %v2668 = vadd.f32 0.0, %v2667
      %v2669 = vpop.f32.mrb[0].mxu0
      %2670 = vmatprep.mubr.bf16.mxu0 0
      %2671 = vmatmul.mubr.bf16.gmra.mrb[0].mxu0 %v2617
      %v2672 = vpop.f32.mrb[0].mxu0
      %v2673 = vadd.f32 0.0, %v2672
      %v2674 = vpop.f32.mrb[0].mxu0
      %v2675 = vpop.f32.mrb[0].mxu0
      %v2676 = vpop.f32.mrb[0].mxu0
      %2677 = vdwg.mxu0
      %v2678 = vadd.f32 %v2603, %v2657
      %v2679 = vadd.f32 %v2604, %v2660
      %v2680 = vadd.f32 %v2605, %v2665
      %v2681 = vadd.f32 %v2606, %v2668
      %v2682 = vadd.f32 %v2607, %v2673
      %vm2683 = vcmask 261120
      %2684 = vst.msk [vmem:[%s335] sm:$0xff] %vm2683, %v2678
      %2685 = vst.msk [vmem:[%s335 + $0x8] sm:$0xff] %vm2683, %v2679
      %2686 = vst.msk [vmem:[%s335 + $0x10] sm:$0xff] %vm2683, %v2680
      %2687 = vst.msk [vmem:[%s335 + $0x18] sm:$0xff] %vm2683, %v2681
      %vm2688 = vcmask 253952
      %2689 = vst.msk [vmem:[%s335 + $0x20] sm:$0x1] %vm2688, %v2682
      %p2690 = scmp.lt.s32.totalorder %s18, 15
      %s2691 = scalar_select %p2690, %s18, 15
      %s2692 = smul.addr %s2691, 5
      %s2693 = smul.addr %s2692, 8
      %s2694 = scalar_lea.vmem %s7, %s2693
      // Predicated region
      $region49: #{bs_roformer_forward.12} parent=47 // pred_check
        %p2695 = pneg %p203
      $region50: #{bs_roformer_forward.12} parent=47 // pred_check_branch
        %2697 = sbr.rel (%p2695) target = $region52
      $region51: #{bs_roformer_forward.12} parent=47 // pred_region
        _
      $region52: #{bs_roformer_forward.12} parent=47 // pred_fallthru
        _
    $region48: #{bs_roformer_forward.12} parent=5 // pred_fallthru
      _
    %p2698 = scmp.le.s32.totalorder 2, %s13
    // Predicated region
    $region53: #{bs_roformer_forward.12} parent=5 // pred_check
      %p2699 = pneg %p2698
    $region54: #{bs_roformer_forward.12} parent=5 // pred_check_branch
      %2701 = sbr.rel (%p2699) target = $region56
    $region55: #{bs_roformer_forward.12} parent=5 // pred_region
      %s2702 = ssub.s32 %s13, 2
      // Predicated region
      $region57: #{bs_roformer_forward.12} parent=55 // pred_check
        %p2703 = pneg %p209
      $region58: #{bs_roformer_forward.12} parent=55 // pred_check_branch
        %2705 = sbr.rel (%p2703) target = $region60
      $region59: #{bs_roformer_forward.12} parent=55 // pred_region
        %p2706 = scmp.lt.s32.totalorder %s19, 15
        %s2707 = scalar_select %p2706, %s19, 15
        %s2708 = smul.addr %s2707, 5
        %s2709 = smul.addr %s2708, 8
        %s2710 = scalar_lea.vmem %s7, %s2709
      $region60: #{bs_roformer_forward.12} parent=55 // pred_fallthru
        _
    $region56: #{bs_roformer_forward.12} parent=5 // pred_fallthru
      _
  $region6: #{bs_roformer_forward.12} parent=0 // loop_footer
    %s17 = sadd.s32 1, %s13
  $region7: #{bs_roformer_forward.12} parent=0 // loop_footer_branch
    %12 = sbr.rel target = $region3
  $region8: #{bs_roformer_forward.12} parent=0 // loop_exit
    _

// kernel: bs_roformer_forward.14
$region0: #{bs_roformer_forward.14}
  #allocation0 [shape = 'u32[]', space=smem, size = 0x4, offset = 0x4, fixed_abs, tag = 'smem constant byte address 0x4 - core index']
  #allocation1 [shape = 'u32[144,128]{1,0:T(1,128)}', space=vmem, size = 0x12000, scoped, tag = 'internal scratch']
  %s0 = inlined_call_operand.vmem [shape: f32[528,128], index: 0, kind: input, shape index: {}]
  %s1 = inlined_call_operand.vmem [shape: f32[1,128], index: 1, kind: input, shape index: {}]
  %s2 = inlined_call_operand.vmem [shape: bf16[128,32], index: 2, kind: input, shape index: {}]
  %s3 = inlined_call_operand.vmem [shape: f32[1,32], index: 3, kind: input, shape index: {}]
  %s4 = inlined_call_operand.vmem [shape: f32[528,32], index: 4, kind: output, shape index: {}]
  %s5 = sld [smem:[#allocation0]]
  $region49: #{bs_roformer_forward.14} parent=0
    _
  %s7 = ssub.s32 1, %s5
  %s8 = scalar_select 0, %s7, %s5
  loop: start=0, step=1, limit=5
  $region2: #{bs_roformer_forward.14} parent=0 // loop_pre_header
    _
  $region3: #{bs_roformer_forward.14} parent=0 // loop_header
    %s10 = sphi 0, %s14
    %p11 = scmp.ge.s32.totalorder %s10, 5
    %s20 = sphi 0, %s22
    %s23 = sphi 0, %s20
    %s24 = sphi 0, %s23
    %s40 = sphi 0, %s24
    %s44 = sphi 0, %s44
    %s46 = sphi 0, %s44
    %s47 = sphi 0, %s46
    %s61 = sphi 0, %s47
    %s65 = sphi 0, %s65
    %s67 = sphi 0, %s65
    %s68 = sphi 0, %s67
    %s82 = sphi 0, %s68
    %s86 = sphi 0, %s86
    %s88 = sphi 0, %s86
    %s89 = sphi 0, %s88
    %s103 = sphi 0, %s89
    %s109 = sphi 0, %s111
    %s112 = sphi 0, %s109
    %s113 = sphi 0, %s112
    %s129 = sphi 0, %s113
  $region4: #{bs_roformer_forward.14} parent=0 // loop_header_branch
    %13 = sbr.rel (%p11) target = $region8
  $region5: #{bs_roformer_forward.14} parent=0 // loop_body
    %s15 = ssub.s32 %s10, 1
    %s16 = ssub.s32 %s10, 2
    %s17 = sadd.s32 %s10, 1
    %s18 = ssub.s32 %s10, %s17
    %p19 = scmp.eq.s32.totalorder %s18, 0
    %s21 = sadd.s32 %s20, 1
    %s22 = scalar_select %p19, %s20, %s21
    %p25 = pneg %p19
    %p26 = scmp.eq.s32.totalorder %s10, 2
    %p27 = por %p25, %p26
    %p28 = scmp.ne.s32.totalorder %s20, %s23
    %p29 = scmp.eq.s32.totalorder %s10, 0
    %p30 = por %p28, %p29
    %p31 = scmp.ne.s32.totalorder %s20, %s23
    %p32 = scmp.eq.s32.totalorder %s15, 2
    %p33 = por %p31, %p32
    %p34 = scmp.ne.s32.totalorder %s23, %s24
    %p35 = scmp.eq.s32.totalorder %s15, 0
    %p36 = por %p34, %p35
    %p37 = scmp.ne.s32.totalorder %s23, %s24
    %p38 = scmp.eq.s32.totalorder %s16, 2
    %p39 = por %p37, %p38
    %p41 = scmp.ne.s32.totalorder %s24, %s40
    %p42 = scmp.eq.s32.totalorder %s16, 0
    %p43 = por %p41, %p42
    %s45 = sadd.s32 %s44, 1
    %p48 = scmp.eq.s32.totalorder %s10, 2
    %p49 = scmp.ne.s32.totalorder %s44, %s46
    %p50 = scmp.eq.s32.totalorder %s10, 0
    %p51 = por %p49, %p50
    %p52 = scmp.ne.s32.totalorder %s44, %s46
    %p53 = scmp.eq.s32.totalorder %s15, 2
    %p54 = por %p52, %p53
    %p55 = scmp.ne.s32.totalorder %s46, %s47
    %p56 = scmp.eq.s32.totalorder %s15, 0
    %p57 = por %p55, %p56
    %p58 = scmp.ne.s32.totalorder %s46, %s47
    %p59 = scmp.eq.s32.totalorder %s16, 2
    %p60 = por %p58, %p59
    %p62 = scmp.ne.s32.totalorder %s47, %s61
    %p63 = scmp.eq.s32.totalorder %s16, 0
    %p64 = por %p62, %p63
    %s66 = sadd.s32 %s65, 1
    %p69 = scmp.eq.s32.totalorder %s10, 2
    %p70 = scmp.ne.s32.totalorder %s65, %s67
    %p71 = scmp.eq.s32.totalorder %s10, 0
    %p72 = por %p70, %p71
    %p73 = scmp.ne.s32.totalorder %s65, %s67
    %p74 = scmp.eq.s32.totalorder %s15, 2
    %p75 = por %p73, %p74
    %p76 = scmp.ne.s32.totalorder %s67, %s68
    %p77 = scmp.eq.s32.totalorder %s15, 0
    %p78 = por %p76, %p77
    %p79 = scmp.ne.s32.totalorder %s67, %s68
    %p80 = scmp.eq.s32.totalorder %s16, 2
    %p81 = por %p79, %p80
    %p83 = scmp.ne.s32.totalorder %s68, %s82
    %p84 = scmp.eq.s32.totalorder %s16, 0
    %p85 = por %p83, %p84
    %s87 = sadd.s32 %s86, 1
    %p90 = scmp.eq.s32.totalorder %s10, 2
    %p91 = scmp.ne.s32.totalorder %s86, %s88
    %p92 = scmp.eq.s32.totalorder %s10, 0
    %p93 = por %p91, %p92
    %p94 = scmp.ne.s32.totalorder %s86, %s88
    %p95 = scmp.eq.s32.totalorder %s15, 2
    %p96 = por %p94, %p95
    %p97 = scmp.ne.s32.totalorder %s88, %s89
    %p98 = scmp.eq.s32.totalorder %s15, 0
    %p99 = por %p97, %p98
    %p100 = scmp.ne.s32.totalorder %s88, %s89
    %p101 = scmp.eq.s32.totalorder %s16, 2
    %p102 = por %p100, %p101
    %p104 = scmp.ne.s32.totalorder %s89, %s103
    %p105 = scmp.eq.s32.totalorder %s16, 0
    %p106 = por %p104, %p105
    %s107 = ssub.s32 %s10, %s17
    %p108 = scmp.eq.s32.totalorder %s107, 0
    %s110 = sadd.s32 %s109, 1
    %s111 = scalar_select %p108, %s109, %s110
    %p114 = pneg %p108
    %p115 = scmp.eq.s32.totalorder %s10, 2
    %p116 = por %p114, %p115
    %p117 = scmp.ne.s32.totalorder %s109, %s112
    %p118 = scmp.eq.s32.totalorder %s10, 0
    %p119 = por %p117, %p118
    %p120 = scmp.ne.s32.totalorder %s109, %s112
    %p121 = scmp.eq.s32.totalorder %s15, 2
    %p122 = por %p120, %p121
    %p123 = scmp.ne.s32.totalorder %s112, %s113
    %p124 = scmp.eq.s32.totalorder %s15, 0
    %p125 = por %p123, %p124
    %p126 = scmp.ne.s32.totalorder %s112, %s113
    %p127 = scmp.eq.s32.totalorder %s16, 2
    %p128 = por %p126, %p127
    %p130 = scmp.ne.s32.totalorder %s113, %s129
    %p131 = scmp.eq.s32.totalorder %s16, 0
    %p132 = por %p130, %p131
    %p133 = scmp.le.s32.totalorder 1, %s10
    %p134 = scmp.lt.s32.totalorder %s10, 4
    %p135 = pnand %p133, %p134
    %p136 = pneg %p135
    // Predicated region
    $region9: #{bs_roformer_forward.14} parent=5 // pred_check
      _
    $region10: #{bs_roformer_forward.14} parent=5 // pred_check_branch
      %138 = sbr.rel (%p135) target = $region12
    $region11: #{bs_roformer_forward.14} parent=5 // pred_region
      %s139 = ssub.s32 %s10, 1
      // Predicated region
      $region13: #{bs_roformer_forward.14} parent=11 // pred_check
        %p140 = pneg %p57
      $region14: #{bs_roformer_forward.14} parent=11 // pred_check_branch
        %142 = sbr.rel (%p140) target = $region16
      $region15: #{bs_roformer_forward.14} parent=11 // pred_region
        _
      $region16: #{bs_roformer_forward.14} parent=11 // pred_fallthru
        _
      // Predicated region
      $region17: #{bs_roformer_forward.14} parent=11 // pred_check
        %p143 = pneg %p78
      $region18: #{bs_roformer_forward.14} parent=11 // pred_check_branch
        %145 = sbr.rel (%p143) target = $region20
      $region19: #{bs_roformer_forward.14} parent=11 // pred_region
        _
      $region20: #{bs_roformer_forward.14} parent=11 // pred_fallthru
        _
      // Predicated region
      $region21: #{bs_roformer_forward.14} parent=11 // pred_check
        %p146 = pneg %p99
      $region22: #{bs_roformer_forward.14} parent=11 // pred_check_branch
        %148 = sbr.rel (%p146) target = $region24
      $region23: #{bs_roformer_forward.14} parent=11 // pred_region
        _
      $region24: #{bs_roformer_forward.14} parent=11 // pred_fallthru
        _
    $region12: #{bs_roformer_forward.14} parent=5 // pred_fallthru
      _
    %p149 = scmp.lt.s32.totalorder %s10, 3
    // Predicated region
    $region25: #{bs_roformer_forward.14} parent=5 // pred_check
      %p150 = pneg %p149
    $region26: #{bs_roformer_forward.14} parent=5 // pred_check_branch
      %152 = sbr.rel (%p150) target = $region28
    $region27: #{bs_roformer_forward.14} parent=5 // pred_region
      // Predicated region
      $region29: #{bs_roformer_forward.14} parent=27 // pred_check
        %p153 = pneg %p30
      $region30: #{bs_roformer_forward.14} parent=27 // pred_check_branch
        %155 = sbr.rel (%p153) target = $region32
      $region31: #{bs_roformer_forward.14} parent=27 // pred_region
        %s156 = smul.u32 22, %s10
        %p157 = scmp.lt.s32.totalorder %s156, 65
        %s158 = scalar_select %p157, %s156, 65
        %s159 = smul.addr %s158, 8
        %s160 = scalar_lea.vmem %s0, %s159
        %s161 = smul.u32 22, %s10
      $region32: #{bs_roformer_forward.14} parent=27 // pred_fallthru
        _
    $region28: #{bs_roformer_forward.14} parent=5 // pred_fallthru
      _
    %p162 = scmp.le.s32.totalorder 1, %s10
    %p163 = scmp.lt.s32.totalorder %s10, 4
    %p164 = pnand %p162, %p163
    %p165 = pneg %p164
    // Predicated region
    $region33: #{bs_roformer_forward.14} parent=5 // pred_check
      _
    $region34: #{bs_roformer_forward.14} parent=5 // pred_check_branch
      %167 = sbr.rel (%p164) target = $region36
    $region35: #{bs_roformer_forward.14} parent=5 // pred_region
      %s168 = ssub.s32 %s10, 1
      %s169 = smul.u32 22, %s15
      %p170 = scmp.lt.s32.totalorder %s169, 65
      %s171 = scalar_select %p170, %s169, 65
      %s172 = smul.addr %s171, 8
      %s173 = scalar_lea.vmem %s0, %s172
      %p174 = pneg %p36
      %p175 = pneg %p33
      %p176 = pneg %p57
      %p177 = pneg %p54
      %p178 = pneg %p78
      %p179 = pneg %p75
      %p180 = pneg %p99
      %p181 = pneg %p96
      %p182 = pneg %p125
      %p183 = pneg %p122
      %s184 = smul.u32 22, %s15
      %p185 = scmp.lt.s32.totalorder %s184, 65
      %s186 = scalar_select %p185, %s184, 65
      %s187 = smul.addr %s186, 8
      %s188 = scalar_lea.vmem %s4, %s187
      %s189 = smul.u32 22, %s15
      %p190 = scmp.lt.s32.totalorder %s189, 65
      %s191 = scalar_select %p190, %s189, 65
      %s192 = smul.addr %s191, 8
      %s193 = scalar_lea.vmem %s0, %s192
      %s194 = smul.u32 22, %s15
      %s195 = smul.u32 22, %s15
      %p196 = scmp.lt.s32.totalorder %s195, 65
      %s197 = scalar_select %p196, %s195, 65
      %s198 = smul.addr %s197, 8
      %s199 = scalar_lea.vmem %s4, %s198
      %s200 = smul.u32 22, %s15
      %v202 = vld [vmem:[%s193] sm:$0xff]
      %v203 = vld [vmem:[%s193 + $0x8] sm:$0xff]
      %v204 = vld [vmem:[%s193 + $0x10] sm:$0xff]
      %v205 = vld [vmem:[%s193 + $0x18] sm:$0xff]
      %v206 = vld [vmem:[%s193 + $0x20] sm:$0xff]
      %v207 = vld [vmem:[%s193 + $0x28] sm:$0xff]
      %v208 = vld [vmem:[%s193 + $0x30] sm:$0xff]
      %v209 = vld [vmem:[%s193 + $0x38] sm:$0xff]
      %v210 = vld [vmem:[%s193 + $0x40] sm:$0xff]
      %v211 = vld [vmem:[%s193 + $0x48] sm:$0xff]
      %v212 = vld [vmem:[%s193 + $0x50] sm:$0xff]
      %v213 = vld [vmem:[%s193 + $0x58] sm:$0xff]
      %v214 = vld [vmem:[%s193 + $0x60] sm:$0xff]
      %v215 = vld [vmem:[%s193 + $0x68] sm:$0xff]
      %v216 = vld [vmem:[%s193 + $0x70] sm:$0xff]
      %v217 = vld [vmem:[%s193 + $0x78] sm:$0xff]
      %v218 = vld [vmem:[%s193 + $0x80] sm:$0xff]
      %v219 = vld [vmem:[%s193 + $0x88] sm:$0xff]
      %v220 = vld [vmem:[%s193 + $0x90] sm:$0xff]
      %v221 = vld [vmem:[%s193 + $0x98] sm:$0xff]
      %v222 = vld [vmem:[%s193 + $0xa0] sm:$0xff]
      %v223 = vld [vmem:[%s193 + $0xa8] sm:$0xff]
      %v224 = vpack.c.bf16 %v203, %v202
      %v225 = vpack.c.bf16 %v205, %v204
      %v226 = vpack.c.bf16 %v207, %v206
      %v227 = vpack.c.bf16 %v209, %v208
      %v228 = vpack.c.bf16 %v211, %v210
      %v229 = vpack.c.bf16 %v213, %v212
      %v230 = vpack.c.bf16 %v215, %v214
      %v231 = vpack.c.bf16 %v217, %v216
      %v232 = vpack.c.bf16 %v219, %v218
      %v233 = vpack.c.bf16 %v221, %v220
      %v234 = vpack.c.bf16 %v223, %v222
      %v235 = vld [vmem:[%s2] sm:$0xf]
      %v236 = vld [vmem:[%s2 + $0x4] sm:$0xf]
      %v237 = vld [vmem:[%s2 + $0x8] sm:$0xf]
      %v238 = vld [vmem:[%s2 + $0xc] sm:$0xf]
      %v239 = vld [vmem:[%s2 + $0x10] sm:$0xf]
      %v240 = vld [vmem:[%s2 + $0x14] sm:$0xf]
      %v241 = vld [vmem:[%s2 + $0x18] sm:$0xf]
      %v242 = vld [vmem:[%s2 + $0x1c] sm:$0xf]
      %v243 = vld [vmem:[%s2 + $0x20] sm:$0xf]
      %v244 = vld [vmem:[%s2 + $0x24] sm:$0xf]
      %v245 = vld [vmem:[%s2 + $0x28] sm:$0xf]
      %v246 = vld [vmem:[%s2 + $0x2c] sm:$0xf]
      %v247 = vld [vmem:[%s2 + $0x30] sm:$0xf]
      %v248 = vld [vmem:[%s2 + $0x34] sm:$0xf]
      %v249 = vld [vmem:[%s2 + $0x38] sm:$0xf]
      %v250 = vld [vmem:[%s2 + $0x3c] sm:$0xf]
      %v251 = vld [vmem:[%s3] sm:$0x1]
      %v253 = vlaneseq
      %v254 = vshrl.u32 %v253, 7
      %v255 = vsub.s32 0, %v254
      %v256 = vrot.slane %v251, %v255
      %v274 = vunpack.c.l.b16 %v235
      %v275 = vunpack.c.l.b16 %v236
      %v276 = vunpack.c.l.b16 %v237
      %v277 = vunpack.c.l.b16 %v238
      %v278 = vunpack.c.l.b16 %v239
      %v279 = vunpack.c.l.b16 %v240
      %v280 = vunpack.c.l.b16 %v241
      %v281 = vunpack.c.l.b16 %v242
      %v282 = vunpack.c.l.b16 %v243
      %v283 = vunpack.c.l.b16 %v244
      %v284 = vunpack.c.l.b16 %v245
      %v285 = vunpack.c.l.b16 %v246
      %v286 = vunpack.c.l.b16 %v247
      %v287 = vunpack.c.l.b16 %v248
      %v288 = vunpack.c.l.b16 %v249
      %v289 = vunpack.c.l.b16 %v250
      %v290 = vpack.c.b16 %v275, %v274
      %v291 = vpack.c.b16 %v277, %v276
      %v292 = vpack.c.b16 %v279, %v278
      %v293 = vpack.c.b16 %v281, %v280
      %v294 = vpack.c.b16 %v283, %v282
      %v295 = vpack.c.b16 %v285, %v284
      %v296 = vpack.c.b16 %v287, %v286
      %v297 = vpack.c.b16 %v289, %v288
      %306 = vmatprep.subr.bf16.mxu0 0
      %307 = vmatpush1.bf16.msra.mxu0 %v290
      %308 = vmatprep.subr.bf16.mxu0 0
      %309 = vmatpush1.bf16.msra.mxu0 %v291
      %310 = vmatprep.subr.bf16.mxu0 0
      %311 = vmatpush1.bf16.msra.mxu0 %v292
      %312 = vmatprep.subr.bf16.mxu0 0
      %313 = vmatpush1.bf16.msra.mxu0 %v293
      %314 = vmatprep.subr.bf16.mxu0 0
      %315 = vmatpush1.bf16.msra.mxu0 %v294
      %316 = vmatprep.subr.bf16.mxu0 0
      %317 = vmatpush1.bf16.msra.mxu0 %v295
      %318 = vmatprep.subr.bf16.mxu0 0
      %319 = vmatpush1.bf16.msra.mxu0 %v296
      %320 = vmatprep.subr.bf16.mxu0 0
      %321 = vmatpush1.bf16.msra.mxu0 %v297
      %322 = vmatprep.subr.bf16.mxu0 0
      %323 = vmatpush1.bf16.msra.mxu0 0
      %324 = vmatprep.subr.bf16.mxu0 0
      %325 = vmatpush1.bf16.msra.mxu0 0
      %326 = vmatprep.subr.bf16.mxu0 0
      %327 = vmatpush1.bf16.msra.mxu0 0
      %328 = vmatprep.subr.bf16.mxu0 0
      %329 = vmatpush1.bf16.msra.mxu0 0
      %330 = vmatprep.subr.bf16.mxu0 0
      %331 = vmatpush1.bf16.msra.mxu0 0
      %332 = vmatprep.subr.bf16.mxu0 0
      %333 = vmatpush1.bf16.msra.mxu0 0
      %334 = vmatprep.subr.bf16.mxu0 0
      %335 = vmatpush1.bf16.msra.mxu0 0
      %336 = vmatprep.subr.bf16.mxu0 0
      %337 = vmatpush1.bf16.msra.mxu0 0
      %338 = vmatprep.mubr.bf16.mxu0 0
      %339 = vmatmul.mubr.bf16.gmra.mrb[0].mxu0 %v224
      %v340 = vpop.f32.mrb[0].mxu0
      %v341 = vadd.f32 %v256, %v340
      %v342 = vpop.f32.mrb[0].mxu0
      %v343 = vpop.f32.mrb[0].mxu0
      %v344 = vadd.f32 %v256, %v343
      %v345 = vpop.f32.mrb[0].mxu0
      %346 = vmatprep.mubr.bf16.mxu0 0
      %347 = vmatmul.mubr.bf16.gmra.mrb[0].mxu0 %v225
      %v348 = vpop.f32.mrb[0].mxu0
      %v349 = vadd.f32 %v256, %v348
      %v350 = vpop.f32.mrb[0].mxu0
      %v351 = vpop.f32.mrb[0].mxu0
      %v352 = vadd.f32 %v256, %v351
      %v353 = vpop.f32.mrb[0].mxu0
      %354 = vmatprep.mubr.bf16.mxu0 0
      %355 = vmatmul.mubr.bf16.gmra.mrb[0].mxu0 %v226
      %v356 = vpop.f32.mrb[0].mxu0
      %v357 = vadd.f32 %v256, %v356
      %v358 = vpop.f32.mrb[0].mxu0
      %v359 = vpop.f32.mrb[0].mxu0
      %v360 = vadd.f32 %v256, %v359
      %v361 = vpop.f32.mrb[0].mxu0
      %362 = vmatprep.mubr.bf16.mxu0 0
      %363 = vmatmul.mubr.bf16.gmra.mrb[0].mxu0 %v227
      %v364 = vpop.f32.mrb[0].mxu0
      %v365 = vadd.f32 %v256, %v364
      %v366 = vpop.f32.mrb[0].mxu0
      %v367 = vpop.f32.mrb[0].mxu0
      %v368 = vadd.f32 %v256, %v367
      %v369 = vpop.f32.mrb[0].mxu0
      %370 = vmatprep.mubr.bf16.mxu0 0
      %371 = vmatmul.mubr.bf16.gmra.mrb[0].mxu0 %v228
      %v372 = vpop.f32.mrb[0].mxu0
      %v373 = vadd.f32 %v256, %v372
      %v374 = vpop.f32.mrb[0].mxu0
      %v375 = vpop.f32.mrb[0].mxu0
      %v376 = vadd.f32 %v256, %v375
      %v377 = vpop.f32.mrb[0].mxu0
      %378 = vmatprep.mubr.bf16.mxu0 0
      %379 = vmatmul.mubr.bf16.gmra.mrb[0].mxu0 %v229
      %v380 = vpop.f32.mrb[0].mxu0
      %v381 = vadd.f32 %v256, %v380
      %v382 = vpop.f32.mrb[0].mxu0
      %v383 = vpop.f32.mrb[0].mxu0
      %v384 = vadd.f32 %v256, %v383
      %v385 = vpop.f32.mrb[0].mxu0
      %386 = vmatprep.mubr.bf16.mxu0 0
      %387 = vmatmul.mubr.bf16.gmra.mrb[0].mxu0 %v230
      %v388 = vpop.f32.mrb[0].mxu0
      %v389 = vadd.f32 %v256, %v388
      %v390 = vpop.f32.mrb[0].mxu0
      %v391 = vpop.f32.mrb[0].mxu0
      %v392 = vadd.f32 %v256, %v391
      %v393 = vpop.f32.mrb[0].mxu0
      %394 = vmatprep.mubr.bf16.mxu0 0
      %395 = vmatmul.mubr.bf16.gmra.mrb[0].mxu0 %v231
      %v396 = vpop.f32.mrb[0].mxu0
      %v397 = vadd.f32 %v256, %v396
      %v398 = vpop.f32.mrb[0].mxu0
      %v399 = vpop.f32.mrb[0].mxu0
      %v400 = vadd.f32 %v256, %v399
      %v401 = vpop.f32.mrb[0].mxu0
      %402 = vmatprep.mubr.bf16.mxu0 0
      %403 = vmatmul.mubr.bf16.gmra.mrb[0].mxu0 %v232
      %v404 = vpop.f32.mrb[0].mxu0
      %v405 = vadd.f32 %v256, %v404
      %v406 = vpop.f32.mrb[0].mxu0
      %v407 = vpop.f32.mrb[0].mxu0
      %v408 = vadd.f32 %v256, %v407
      %v409 = vpop.f32.mrb[0].mxu0
      %410 = vmatprep.mubr.bf16.mxu0 0
      %411 = vmatmul.mubr.bf16.gmra.mrb[0].mxu0 %v233
      %v412 = vpop.f32.mrb[0].mxu0
      %v413 = vadd.f32 %v256, %v412
      %v414 = vpop.f32.mrb[0].mxu0
      %v415 = vpop.f32.mrb[0].mxu0
      %v416 = vadd.f32 %v256, %v415
      %v417 = vpop.f32.mrb[0].mxu0
      %418 = vmatprep.mubr.bf16.mxu0 0
      %419 = vmatmul.mubr.bf16.gmra.mrb[0].mxu0 %v234
      %v420 = vpop.f32.mrb[0].mxu0
      %v421 = vadd.f32 %v256, %v420
      %v422 = vpop.f32.mrb[0].mxu0
      %v423 = vpop.f32.mrb[0].mxu0
      %v424 = vadd.f32 %v256, %v423
      %v425 = vpop.f32.mrb[0].mxu0
      %426 = vdwg.mxu0
      %vm427 = vcmask 261120
      %428 = vst.msk [vmem:[%s199] sm:$0xff] %vm427, %v341
      %429 = vst.msk [vmem:[%s199 + $0x8] sm:$0xff] %vm427, %v344
      %430 = vst.msk [vmem:[%s199 + $0x10] sm:$0xff] %vm427, %v349
      %431 = vst.msk [vmem:[%s199 + $0x18] sm:$0xff] %vm427, %v352
      %432 = vst.msk [vmem:[%s199 + $0x20] sm:$0xff] %vm427, %v357
      %433 = vst.msk [vmem:[%s199 + $0x28] sm:$0xff] %vm427, %v360
      %434 = vst.msk [vmem:[%s199 + $0x30] sm:$0xff] %vm427, %v365
      %435 = vst.msk [vmem:[%s199 + $0x38] sm:$0xff] %vm427, %v368
      %436 = vst.msk [vmem:[%s199 + $0x40] sm:$0xff] %vm427, %v373
      %437 = vst.msk [vmem:[%s199 + $0x48] sm:$0xff] %vm427, %v376
      %438 = vst.msk [vmem:[%s199 + $0x50] sm:$0xff] %vm427, %v381
      %439 = vst.msk [vmem:[%s199 + $0x58] sm:$0xff] %vm427, %v384
      %440 = vst.msk [vmem:[%s199 + $0x60] sm:$0xff] %vm427, %v389
      %441 = vst.msk [vmem:[%s199 + $0x68] sm:$0xff] %vm427, %v392
      %442 = vst.msk [vmem:[%s199 + $0x70] sm:$0xff] %vm427, %v397
      %443 = vst.msk [vmem:[%s199 + $0x78] sm:$0xff] %vm427, %v400
      %444 = vst.msk [vmem:[%s199 + $0x80] sm:$0xff] %vm427, %v405
      %445 = vst.msk [vmem:[%s199 + $0x88] sm:$0xff] %vm427, %v408
      %446 = vst.msk [vmem:[%s199 + $0x90] sm:$0xff] %vm427, %v413
      %447 = vst.msk [vmem:[%s199 + $0x98] sm:$0xff] %vm427, %v416
      %448 = vst.msk [vmem:[%s199 + $0xa0] sm:$0xff] %vm427, %v421
      %449 = vst.msk [vmem:[%s199 + $0xa8] sm:$0xff] %vm427, %v424
      %s450 = smul.u32 22, %s15
      %p451 = scmp.lt.s32.totalorder %s450, 65
      %s452 = scalar_select %p451, %s450, 65
      %s453 = smul.addr %s452, 8
      %s454 = scalar_lea.vmem %s4, %s453
      // Predicated region
      $region37: #{bs_roformer_forward.14} parent=35 // pred_check
        %p455 = pneg %p122
      $region38: #{bs_roformer_forward.14} parent=35 // pred_check_branch
        %457 = sbr.rel (%p455) target = $region40
      $region39: #{bs_roformer_forward.14} parent=35 // pred_region
        %s458 = smul.u32 22, %s15
      $region40: #{bs_roformer_forward.14} parent=35 // pred_fallthru
        _
    $region36: #{bs_roformer_forward.14} parent=5 // pred_fallthru
      _
    %p459 = scmp.le.s32.totalorder 2, %s10
    // Predicated region
    $region41: #{bs_roformer_forward.14} parent=5 // pred_check
      %p460 = pneg %p459
    $region42: #{bs_roformer_forward.14} parent=5 // pred_check_branch
      %462 = sbr.rel (%p460) target = $region44
    $region43: #{bs_roformer_forward.14} parent=5 // pred_region
      %s463 = ssub.s32 %s10, 2
      // Predicated region
      $region45: #{bs_roformer_forward.14} parent=43 // pred_check
        %p464 = pneg %p128
      $region46: #{bs_roformer_forward.14} parent=43 // pred_check_branch
        %466 = sbr.rel (%p464) target = $region48
      $region47: #{bs_roformer_forward.14} parent=43 // pred_region
        %s467 = smul.u32 22, %s16
        %p468 = scmp.lt.s32.totalorder %s467, 65
        %s469 = scalar_select %p468, %s467, 65
        %s470 = smul.addr %s469, 8
        %s471 = scalar_lea.vmem %s4, %s470
      $region48: #{bs_roformer_forward.14} parent=43 // pred_fallthru
        _
    $region44: #{bs_roformer_forward.14} parent=5 // pred_fallthru
      _
  $region6: #{bs_roformer_forward.14} parent=0 // loop_footer
    %s14 = sadd.s32 1, %s10
  $region7: #{bs_roformer_forward.14} parent=0 // loop_footer_branch
    %9 = sbr.rel target = $region3
  $region8: #{bs_roformer_forward.14} parent=0 // loop_exit
    _

// kernel: bs_roformer_forward.16
$region0: #{bs_roformer_forward.16}
  #allocation0 [shape = 'u32[]', space=smem, size = 0x4, offset = 0x4, fixed_abs, tag = 'smem constant byte address 0x4 - core index']
  #allocation1 [shape = 'u32[144,128]{1,0:T(1,128)}', space=vmem, size = 0x12000, scoped, tag = 'internal scratch']
  %s0 = inlined_call_operand.vmem [shape: f32[66,4,8,8], index: 0, kind: input, shape index: {}]
  %s1 = inlined_call_operand.vmem [shape: f32[66,4,8,8], index: 1, kind: input, shape index: {}]
  %s2 = inlined_call_operand.vmem [shape: f32[66,4,8,8], index: 2, kind: input, shape index: {}]
  %s3 = inlined_call_operand.vmem [shape: f32[66,4,8], index: 3, kind: input, shape index: {}]
  %s4 = inlined_call_operand.vmem [shape: f32[8,4], index: 4, kind: input, shape index: {}]
  %s5 = inlined_call_operand.vmem [shape: f32[8,4], index: 5, kind: input, shape index: {}]
  %s6 = inlined_call_operand.vmem [shape: bf16[4,8,32], index: 6, kind: input, shape index: {}]
  %s7 = inlined_call_operand.vmem [shape: f32[66,8,32], index: 7, kind: output, shape index: {}]
  %s8 = sld [smem:[#allocation0]]
  $region61: #{bs_roformer_forward.16} parent=0
    _
  %s10 = ssub.s32 1, %s8
  %s11 = scalar_select 0, %s10, %s8
  loop: start=0, step=1, limit=68
  $region2: #{bs_roformer_forward.16} parent=0 // loop_pre_header
    _
  $region3: #{bs_roformer_forward.16} parent=0 // loop_header
    %s13 = sphi 0, %s17
    %p14 = scmp.ge.s32.totalorder %s13, 68
    %s23 = sphi 0, %s25
    %s26 = sphi 0, %s23
    %s27 = sphi 0, %s26
    %s43 = sphi 0, %s27
    %s49 = sphi 0, %s51
    %s52 = sphi 0, %s49
    %s53 = sphi 0, %s52
    %s69 = sphi 0, %s53
    %s75 = sphi 0, %s77
    %s78 = sphi 0, %s75
    %s79 = sphi 0, %s78
    %s95 = sphi 0, %s79
    %s101 = sphi 0, %s103
    %s104 = sphi 0, %s101
    %s105 = sphi 0, %s104
    %s121 = sphi 0, %s105
    %s125 = sphi 0, %s125
    %s127 = sphi 0, %s125
    %s128 = sphi 0, %s127
    %s142 = sphi 0, %s128
    %s146 = sphi 0, %s146
    %s148 = sphi 0, %s146
    %s149 = sphi 0, %s148
    %s163 = sphi 0, %s149
    %s167 = sphi 0, %s167
    %s169 = sphi 0, %s167
    %s170 = sphi 0, %s169
    %s184 = sphi 0, %s170
    %s190 = sphi 0, %s192
    %s193 = sphi 0, %s190
    %s194 = sphi 0, %s193
    %s210 = sphi 0, %s194
  $region4: #{bs_roformer_forward.16} parent=0 // loop_header_branch
    %16 = sbr.rel (%p14) target = $region8
  $region5: #{bs_roformer_forward.16} parent=0 // loop_body
    %s18 = ssub.s32 %s13, 1
    %s19 = ssub.s32 %s13, 2
    %s20 = sadd.s32 %s13, 1
    %s21 = ssub.s32 %s13, %s20
    %p22 = scmp.eq.s32.totalorder %s21, 0
    %s24 = sadd.s32 %s23, 1
    %s25 = scalar_select %p22, %s23, %s24
    %p28 = pneg %p22
    %p29 = scmp.eq.s32.totalorder %s13, 65
    %p30 = por %p28, %p29
    %p31 = scmp.ne.s32.totalorder %s23, %s26
    %p32 = scmp.eq.s32.totalorder %s13, 0
    %p33 = por %p31, %p32
    %p34 = scmp.ne.s32.totalorder %s23, %s26
    %p35 = scmp.eq.s32.totalorder %s18, 65
    %p36 = por %p34, %p35
    %p37 = scmp.ne.s32.totalorder %s26, %s27
    %p38 = scmp.eq.s32.totalorder %s18, 0
    %p39 = por %p37, %p38
    %p40 = scmp.ne.s32.totalorder %s26, %s27
    %p41 = scmp.eq.s32.totalorder %s19, 65
    %p42 = por %p40, %p41
    %p44 = scmp.ne.s32.totalorder %s27, %s43
    %p45 = scmp.eq.s32.totalorder %s19, 0
    %p46 = por %p44, %p45
    %s47 = ssub.s32 %s13, %s20
    %p48 = scmp.eq.s32.totalorder %s47, 0
    %s50 = sadd.s32 %s49, 1
    %s51 = scalar_select %p48, %s49, %s50
    %p54 = pneg %p48
    %p55 = scmp.eq.s32.totalorder %s13, 65
    %p56 = por %p54, %p55
    %p57 = scmp.ne.s32.totalorder %s49, %s52
    %p58 = scmp.eq.s32.totalorder %s13, 0
    %p59 = por %p57, %p58
    %p60 = scmp.ne.s32.totalorder %s49, %s52
    %p61 = scmp.eq.s32.totalorder %s18, 65
    %p62 = por %p60, %p61
    %p63 = scmp.ne.s32.totalorder %s52, %s53
    %p64 = scmp.eq.s32.totalorder %s18, 0
    %p65 = por %p63, %p64
    %p66 = scmp.ne.s32.totalorder %s52, %s53
    %p67 = scmp.eq.s32.totalorder %s19, 65
    %p68 = por %p66, %p67
    %p70 = scmp.ne.s32.totalorder %s53, %s69
    %p71 = scmp.eq.s32.totalorder %s19, 0
    %p72 = por %p70, %p71
    %s73 = ssub.s32 %s13, %s20
    %p74 = scmp.eq.s32.totalorder %s73, 0
    %s76 = sadd.s32 %s75, 1
    %s77 = scalar_select %p74, %s75, %s76
    %p80 = pneg %p74
    %p81 = scmp.eq.s32.totalorder %s13, 65
    %p82 = por %p80, %p81
    %p83 = scmp.ne.s32.totalorder %s75, %s78
    %p84 = scmp.eq.s32.totalorder %s13, 0
    %p85 = por %p83, %p84
    %p86 = scmp.ne.s32.totalorder %s75, %s78
    %p87 = scmp.eq.s32.totalorder %s18, 65
    %p88 = por %p86, %p87
    %p89 = scmp.ne.s32.totalorder %s78, %s79
    %p90 = scmp.eq.s32.totalorder %s18, 0
    %p91 = por %p89, %p90
    %p92 = scmp.ne.s32.totalorder %s78, %s79
    %p93 = scmp.eq.s32.totalorder %s19, 65
    %p94 = por %p92, %p93
    %p96 = scmp.ne.s32.totalorder %s79, %s95
    %p97 = scmp.eq.s32.totalorder %s19, 0
    %p98 = por %p96, %p97
    %s99 = ssub.s32 %s13, %s20
    %p100 = scmp.eq.s32.totalorder %s99, 0
    %s102 = sadd.s32 %s101, 1
    %s103 = scalar_select %p100, %s101, %s102
    %p106 = pneg %p100
    %p107 = scmp.eq.s32.totalorder %s13, 65
    %p108 = por %p106, %p107
    %p109 = scmp.ne.s32.totalorder %s101, %s104
    %p110 = scmp.eq.s32.totalorder %s13, 0
    %p111 = por %p109, %p110
    %p112 = scmp.ne.s32.totalorder %s101, %s104
    %p113 = scmp.eq.s32.totalorder %s18, 65
    %p114 = por %p112, %p113
    %p115 = scmp.ne.s32.totalorder %s104, %s105
    %p116 = scmp.eq.s32.totalorder %s18, 0
    %p117 = por %p115, %p116
    %p118 = scmp.ne.s32.totalorder %s104, %s105
    %p119 = scmp.eq.s32.totalorder %s19, 65
    %p120 = por %p118, %p119
    %p122 = scmp.ne.s32.totalorder %s105, %s121
    %p123 = scmp.eq.s32.totalorder %s19, 0
    %p124 = por %p122, %p123
    %s126 = sadd.s32 %s125, 1
    %p129 = scmp.eq.s32.totalorder %s13, 65
    %p130 = scmp.ne.s32.totalorder %s125, %s127
    %p131 = scmp.eq.s32.totalorder %s13, 0
    %p132 = por %p130, %p131
    %p133 = scmp.ne.s32.totalorder %s125, %s127
    %p134 = scmp.eq.s32.totalorder %s18, 65
    %p135 = por %p133, %p134
    %p136 = scmp.ne.s32.totalorder %s127, %s128
    %p137 = scmp.eq.s32.totalorder %s18, 0
    %p138 = por %p136, %p137
    %p139 = scmp.ne.s32.totalorder %s127, %s128
    %p140 = scmp.eq.s32.totalorder %s19, 65
    %p141 = por %p139, %p140
    %p143 = scmp.ne.s32.totalorder %s128, %s142
    %p144 = scmp.eq.s32.totalorder %s19, 0
    %p145 = por %p143, %p144
    %s147 = sadd.s32 %s146, 1
    %p150 = scmp.eq.s32.totalorder %s13, 65
    %p151 = scmp.ne.s32.totalorder %s146, %s148
    %p152 = scmp.eq.s32.totalorder %s13, 0
    %p153 = por %p151, %p152
    %p154 = scmp.ne.s32.totalorder %s146, %s148
    %p155 = scmp.eq.s32.totalorder %s18, 65
    %p156 = por %p154, %p155
    %p157 = scmp.ne.s32.totalorder %s148, %s149
    %p158 = scmp.eq.s32.totalorder %s18, 0
    %p159 = por %p157, %p158
    %p160 = scmp.ne.s32.totalorder %s148, %s149
    %p161 = scmp.eq.s32.totalorder %s19, 65
    %p162 = por %p160, %p161
    %p164 = scmp.ne.s32.totalorder %s149, %s163
    %p165 = scmp.eq.s32.totalorder %s19, 0
    %p166 = por %p164, %p165
    %s168 = sadd.s32 %s167, 1
    %p171 = scmp.eq.s32.totalorder %s13, 65
    %p172 = scmp.ne.s32.totalorder %s167, %s169
    %p173 = scmp.eq.s32.totalorder %s13, 0
    %p174 = por %p172, %p173
    %p175 = scmp.ne.s32.totalorder %s167, %s169
    %p176 = scmp.eq.s32.totalorder %s18, 65
    %p177 = por %p175, %p176
    %p178 = scmp.ne.s32.totalorder %s169, %s170
    %p179 = scmp.eq.s32.totalorder %s18, 0
    %p180 = por %p178, %p179
    %p181 = scmp.ne.s32.totalorder %s169, %s170
    %p182 = scmp.eq.s32.totalorder %s19, 65
    %p183 = por %p181, %p182
    %p185 = scmp.ne.s32.totalorder %s170, %s184
    %p186 = scmp.eq.s32.totalorder %s19, 0
    %p187 = por %p185, %p186
    %s188 = ssub.s32 %s13, %s20
    %p189 = scmp.eq.s32.totalorder %s188, 0
    %s191 = sadd.s32 %s190, 1
    %s192 = scalar_select %p189, %s190, %s191
    %p195 = pneg %p189
    %p196 = scmp.eq.s32.totalorder %s13, 65
    %p197 = por %p195, %p196
    %p198 = scmp.ne.s32.totalorder %s190, %s193
    %p199 = scmp.eq.s32.totalorder %s13, 0
    %p200 = por %p198, %p199
    %p201 = scmp.ne.s32.totalorder %s190, %s193
    %p202 = scmp.eq.s32.totalorder %s18, 65
    %p203 = por %p201, %p202
    %p204 = scmp.ne.s32.totalorder %s193, %s194
    %p205 = scmp.eq.s32.totalorder %s18, 0
    %p206 = por %p204, %p205
    %p207 = scmp.ne.s32.totalorder %s193, %s194
    %p208 = scmp.eq.s32.totalorder %s19, 65
    %p209 = por %p207, %p208
    %p211 = scmp.ne.s32.totalorder %s194, %s210
    %p212 = scmp.eq.s32.totalorder %s19, 0
    %p213 = por %p211, %p212
    %p214 = scmp.le.s32.totalorder 1, %s13
    %p215 = scmp.lt.s32.totalorder %s13, 67
    %p216 = pnand %p214, %p215
    %p217 = pneg %p216
    // Predicated region
    $region9: #{bs_roformer_forward.16} parent=5 // pred_check
      _
    $region10: #{bs_roformer_forward.16} parent=5 // pred_check_branch
      %219 = sbr.rel (%p216) target = $region12
    $region11: #{bs_roformer_forward.16} parent=5 // pred_region
      %s220 = ssub.s32 %s13, 1
      // Predicated region
      $region13: #{bs_roformer_forward.16} parent=11 // pred_check
        %p221 = pneg %p138
      $region14: #{bs_roformer_forward.16} parent=11 // pred_check_branch
        %223 = sbr.rel (%p221) target = $region16
      $region15: #{bs_roformer_forward.16} parent=11 // pred_region
        _
      $region16: #{bs_roformer_forward.16} parent=11 // pred_fallthru
        _
      // Predicated region
      $region17: #{bs_roformer_forward.16} parent=11 // pred_check
        %p224 = pneg %p159
      $region18: #{bs_roformer_forward.16} parent=11 // pred_check_branch
        %226 = sbr.rel (%p224) target = $region20
      $region19: #{bs_roformer_forward.16} parent=11 // pred_region
        _
      $region20: #{bs_roformer_forward.16} parent=11 // pred_fallthru
        _
      // Predicated region
      $region21: #{bs_roformer_forward.16} parent=11 // pred_check
        %p227 = pneg %p180
      $region22: #{bs_roformer_forward.16} parent=11 // pred_check_branch
        %229 = sbr.rel (%p227) target = $region24
      $region23: #{bs_roformer_forward.16} parent=11 // pred_region
        _
      $region24: #{bs_roformer_forward.16} parent=11 // pred_fallthru
        _
    $region12: #{bs_roformer_forward.16} parent=5 // pred_fallthru
      _
    %p230 = scmp.lt.s32.totalorder %s13, 66
    // Predicated region
    $region25: #{bs_roformer_forward.16} parent=5 // pred_check
      %p231 = pneg %p230
    $region26: #{bs_roformer_forward.16} parent=5 // pred_check_branch
      %233 = sbr.rel (%p231) target = $region28
    $region27: #{bs_roformer_forward.16} parent=5 // pred_region
      // Predicated region
      $region29: #{bs_roformer_forward.16} parent=27 // pred_check
        %p234 = pneg %p33
      $region30: #{bs_roformer_forward.16} parent=27 // pred_check_branch
        %236 = sbr.rel (%p234) target = $region32
      $region31: #{bs_roformer_forward.16} parent=27 // pred_region
        %p237 = scmp.lt.s32.totalorder %s13, 65
        %s238 = scalar_select %p237, %s13, 65
        %s239 = smul.addr %s238, 4
        %s240 = smul.addr %s239, 8
        %s241 = scalar_lea.vmem %s0, %s240
      $region32: #{bs_roformer_forward.16} parent=27 // pred_fallthru
        _
      // Predicated region
      $region33: #{bs_roformer_forward.16} parent=27 // pred_check
        %p242 = pneg %p59
      $region34: #{bs_roformer_forward.16} parent=27 // pred_check_branch
        %244 = sbr.rel (%p242) target = $region36
      $region35: #{bs_roformer_forward.16} parent=27 // pred_region
        %p245 = scmp.lt.s32.totalorder %s13, 65
        %s246 = scalar_select %p245, %s13, 65
        %s247 = smul.addr %s246, 4
        %s248 = smul.addr %s247, 8
        %s249 = scalar_lea.vmem %s1, %s248
      $region36: #{bs_roformer_forward.16} parent=27 // pred_fallthru
        _
      // Predicated region
      $region37: #{bs_roformer_forward.16} parent=27 // pred_check
        %p250 = pneg %p85
      $region38: #{bs_roformer_forward.16} parent=27 // pred_check_branch
        %252 = sbr.rel (%p250) target = $region40
      $region39: #{bs_roformer_forward.16} parent=27 // pred_region
        %p253 = scmp.lt.s32.totalorder %s13, 65
        %s254 = scalar_select %p253, %s13, 65
        %s255 = smul.addr %s254, 4
        %s256 = smul.addr %s255, 8
        %s257 = scalar_lea.vmem %s2, %s256
      $region40: #{bs_roformer_forward.16} parent=27 // pred_fallthru
        _
      // Predicated region
      $region41: #{bs_roformer_forward.16} parent=27 // pred_check
        %p258 = pneg %p111
      $region42: #{bs_roformer_forward.16} parent=27 // pred_check_branch
        %260 = sbr.rel (%p258) target = $region44
      $region43: #{bs_roformer_forward.16} parent=27 // pred_region
        %p261 = scmp.lt.s32.totalorder %s13, 65
        %s262 = scalar_select %p261, %s13, 65
        %s263 = smul.addr %s262, 4
        %s264 = scalar_lea.vmem %s3, %s263
      $region44: #{bs_roformer_forward.16} parent=27 // pred_fallthru
        _
    $region28: #{bs_roformer_forward.16} parent=5 // pred_fallthru
      _
    %p265 = scmp.le.s32.totalorder 1, %s13
    %p266 = scmp.lt.s32.totalorder %s13, 67
    %p267 = pnand %p265, %p266
    %p268 = pneg %p267
    // Predicated region
    $region45: #{bs_roformer_forward.16} parent=5 // pred_check
      _
    $region46: #{bs_roformer_forward.16} parent=5 // pred_check_branch
      %270 = sbr.rel (%p267) target = $region48
    $region47: #{bs_roformer_forward.16} parent=5 // pred_region
      %s271 = ssub.s32 %s13, 1
      %p272 = scmp.lt.s32.totalorder %s18, 65
      %s273 = scalar_select %p272, %s18, 65
      %s274 = smul.addr %s273, 4
      %s275 = smul.addr %s274, 8
      %s276 = scalar_lea.vmem %s0, %s275
      %p277 = pneg %p39
      %p278 = pneg %p36
      %p279 = scmp.lt.s32.totalorder %s18, 65
      %s280 = scalar_select %p279, %s18, 65
      %s281 = smul.addr %s280, 4
      %s282 = smul.addr %s281, 8
      %s283 = scalar_lea.vmem %s1, %s282
      %p284 = pneg %p65
      %p285 = pneg %p62
      %p286 = scmp.lt.s32.totalorder %s18, 65
      %s287 = scalar_select %p286, %s18, 65
      %s288 = smul.addr %s287, 4
      %s289 = smul.addr %s288, 8
      %s290 = scalar_lea.vmem %s2, %s289
      %p291 = pneg %p91
      %p292 = pneg %p88
      %p293 = scmp.lt.s32.totalorder %s18, 65
      %s294 = scalar_select %p293, %s18, 65
      %s295 = smul.addr %s294, 4
      %s296 = scalar_lea.vmem %s3, %s295
      %p297 = pneg %p117
      %p298 = pneg %p114
      %p299 = pneg %p138
      %p300 = pneg %p135
      %p301 = pneg %p159
      %p302 = pneg %p156
      %p303 = pneg %p180
      %p304 = pneg %p177
      %p305 = pneg %p206
      %p306 = pneg %p203
      %p307 = scmp.lt.s32.totalorder %s18, 65
      %s308 = scalar_select %p307, %s18, 65
      %s309 = smul.addr %s308, 8
      %s310 = scalar_lea.vmem %s7, %s309
      %p311 = scmp.lt.s32.totalorder %s18, 65
      %s312 = scalar_select %p311, %s18, 65
      %s313 = smul.addr %s312, 4
      %s314 = smul.addr %s313, 8
      %s315 = scalar_lea.vmem %s0, %s314
      %p316 = scmp.lt.s32.totalorder %s18, 65
      %s317 = scalar_select %p316, %s18, 65
      %s318 = smul.addr %s317, 4
      %s319 = smul.addr %s318, 8
      %s320 = scalar_lea.vmem %s1, %s319
      %p321 = scmp.lt.s32.totalorder %s18, 65
      %s322 = scalar_select %p321, %s18, 65
      %s323 = smul.addr %s322, 4
      %s324 = smul.addr %s323, 8
      %s325 = scalar_lea.vmem %s2, %s324
      %p326 = scmp.lt.s32.totalorder %s18, 65
      %s327 = scalar_select %p326, %s18, 65
      %s328 = smul.addr %s327, 4
      %s329 = scalar_lea.vmem %s3, %s328
      %p330 = scmp.lt.s32.totalorder %s18, 65
      %s331 = scalar_select %p330, %s18, 65
      %s332 = smul.addr %s331, 8
      %s333 = scalar_lea.vmem %s7, %s332
      %v335 = vld [vmem:[%s4] sm:$0xff]
      %v336 = vld [vmem:[%s5] sm:$0xff]
      %v337 = vld [vmem:[%s315] sm:$0xff]
      %v338 = vld [vmem:[%s315 + $0x8] sm:$0xff]
      %v339 = vld [vmem:[%s315 + $0x10] sm:$0xff]
      %v340 = vld [vmem:[%s315 + $0x18] sm:$0xff]
      %v341 = vmul.f32 %v337, 0.35355338
      %v342 = vmul.f32 %v338, 0.35355338
      %v343 = vmul.f32 %v339, 0.35355338
      %v344 = vmul.f32 %v340, 0.35355338
      %v345 = vld [vmem:[%s320] sm:$0xff]
      %v346 = vld [vmem:[%s320 + $0x8] sm:$0xff]
      %v347 = vld [vmem:[%s320 + $0x10] sm:$0xff]
      %v348 = vld [vmem:[%s320 + $0x18] sm:$0xff]
      %v349 = vld [vmem:[%s325] sm:$0xff]
      %v350 = vld [vmem:[%s325 + $0x8] sm:$0xff]
      %v351 = vld [vmem:[%s325 + $0x10] sm:$0xff]
      %v352 = vld [vmem:[%s325 + $0x18] sm:$0xff]
      %v353 = vpack.c.bf16 %v349, %v349
      %v354 = vpack.c.bf16 %v350, %v350
      %v355 = vpack.c.bf16 %v351, %v351
      %v356 = vpack.c.bf16 %v352, %v352
      %v357 = vmul.f32 %v341, %v335
      %v358 = vmul.f32 %v342, %v335
      %v359 = vmul.f32 %v343, %v335
      %v360 = vmul.f32 %v344, %v335
      %362 = vrot.lane.b32.xlu0 %v336, 4
      %v363 = vpop.permute.xlu0 %362
      %v365 = vmul.f32 %v341, %v363
      %v366 = vmul.f32 %v342, %v363
      %v367 = vmul.f32 %v343, %v363
      %v368 = vmul.f32 %v344, %v363
      %373 = vrot.lane.b32.xlu0 %v365, 124
      %v374 = vpop.permute.xlu0 %373
      %375 = vrot.lane.b32.xlu0 %v366, 124
      %v376 = vpop.permute.xlu0 %375
      %377 = vrot.lane.b32.xlu0 %v367, 124
      %v378 = vpop.permute.xlu0 %377
      %379 = vrot.lane.b32.xlu0 %v368, 124
      %v380 = vpop.permute.xlu0 %379
      %v385 = vsub.f32 %v357, %v374
      %v386 = vsub.f32 %v358, %v376
      %v387 = vsub.f32 %v359, %v378
      %v388 = vsub.f32 %v360, %v380
      %v389 = vpack.c.bf16 %v385, %v385
      %v390 = vpack.c.bf16 %v386, %v386
      %v391 = vpack.c.bf16 %v387, %v387
      %v392 = vpack.c.bf16 %v388, %v388
      %394 = vrot.lane.b32.xlu0 %v335, 4
      %v395 = vpop.permute.xlu0 %394
      %v397 = vmul.f32 %v341, %v395
      %v398 = vmul.f32 %v342, %v395
      %v399 = vmul.f32 %v343, %v395
      %v400 = vmul.f32 %v344, %v395
      %v401 = vmul.f32 %v341, %v336
      %v402 = vmul.f32 %v342, %v336
      %v403 = vmul.f32 %v343, %v336
      %v404 = vmul.f32 %v344, %v336
      %409 = vrot.lane.b32.xlu0 %v401, 4
      %v410 = vpop.permute.xlu0 %409
      %411 = vrot.lane.b32.xlu0 %v402, 4
      %v412 = vpop.permute.xlu0 %411
      %413 = vrot.lane.b32.xlu0 %v403, 4
      %v414 = vpop.permute.xlu0 %413
      %415 = vrot.lane.b32.xlu0 %v404, 4
      %v416 = vpop.permute.xlu0 %415
      %v421 = vadd.f32 %v397, %v410
      %v422 = vadd.f32 %v398, %v412
      %v423 = vadd.f32 %v399, %v414
      %v424 = vadd.f32 %v400, %v416
      %v425 = vpack.c.bf16 %v421, %v421
      %v426 = vpack.c.bf16 %v422, %v422
      %v427 = vpack.c.bf16 %v423, %v423
      %v428 = vpack.c.bf16 %v424, %v424
      %v429 = vmul.f32 %v345, %v335
      %v430 = vmul.f32 %v346, %v335
      %v431 = vmul.f32 %v347, %v335
      %v432 = vmul.f32 %v348, %v335
      %v433 = vmul.f32 %v345, %v363
      %v434 = vmul.f32 %v346, %v363
      %v435 = vmul.f32 %v347, %v363
      %v436 = vmul.f32 %v348, %v363
      %441 = vrot.lane.b32.xlu0 %v433, 124
      %v442 = vpop.permute.xlu0 %441
      %443 = vrot.lane.b32.xlu0 %v434, 124
      %v444 = vpop.permute.xlu0 %443
      %445 = vrot.lane.b32.xlu0 %v435, 124
      %v446 = vpop.permute.xlu0 %445
      %447 = vrot.lane.b32.xlu0 %v436, 124
      %v448 = vpop.permute.xlu0 %447
      %v453 = vsub.f32 %v429, %v442
      %v454 = vsub.f32 %v430, %v444
      %v455 = vsub.f32 %v431, %v446
      %v456 = vsub.f32 %v432, %v448
      %v457 = vpack.c.bf16 %v453, %v453
      %v458 = vpack.c.bf16 %v454, %v454
      %v459 = vpack.c.bf16 %v455, %v455
      %v460 = vpack.c.bf16 %v456, %v456
      %v461 = vmul.f32 %v345, %v395
      %v462 = vmul.f32 %v346, %v395
      %v463 = vmul.f32 %v347, %v395
      %v464 = vmul.f32 %v348, %v395
      %v465 = vmul.f32 %v345, %v336
      %v466 = vmul.f32 %v346, %v336
      %v467 = vmul.f32 %v347, %v336
      %v468 = vmul.f32 %v348, %v336
      %473 = vrot.lane.b32.xlu0 %v465, 4
      %v474 = vpop.permute.xlu0 %473
      %475 = vrot.lane.b32.xlu0 %v466, 4
      %v476 = vpop.permute.xlu0 %475
      %477 = vrot.lane.b32.xlu0 %v467, 4
      %v478 = vpop.permute.xlu0 %477
      %479 = vrot.lane.b32.xlu0 %v468, 4
      %v480 = vpop.permute.xlu0 %479
      %v485 = vadd.f32 %v461, %v474
      %v486 = vadd.f32 %v462, %v476
      %v487 = vadd.f32 %v463, %v478
      %v488 = vadd.f32 %v464, %v480
      %v489 = vpack.c.bf16 %v485, %v485
      %v490 = vpack.c.bf16 %v486, %v486
      %v491 = vpack.c.bf16 %v487, %v487
      %v492 = vpack.c.bf16 %v488, %v488
      %494 = vrot.lane.b32.xlu0 %v425, 124
      %v495 = vpop.permute.xlu0 %494
      %497 = vrot.lane.b32.xlu0 %v489, 124
      %v498 = vpop.permute.xlu0 %497
      %vm499 = vcmask 31744
      %v501 = vsel %vm499, %v495, 0
      %v504 = vsel %vm499, %v498, 0
      %506 = vmatprep.subr.bf16.mxu0 0
      %507 = vmatpush1.bf16.xpose.msra.mxu0 %v504
      %508 = vmatprep.subr.bf16.mxu0 0
      %509 = vmatpush1.bf16.xpose.msra.mxu0 0
      %510 = vmatprep.subr.bf16.mxu0 0
      %511 = vmatpush1.bf16.xpose.msra.mxu0 0
      %512 = vmatprep.subr.bf16.mxu0 0
      %513 = vmatpush1.bf16.xpose.msra.mxu0 0
      %514 = vmatprep.subr.bf16.mxu0 0
      %515 = vmatpush1.bf16.xpose.msra.mxu0 0
      %516 = vmatprep.subr.bf16.mxu0 0
      %517 = vmatpush1.bf16.xpose.msra.mxu0 0
      %518 = vmatprep.subr.bf16.mxu0 0
      %519 = vmatpush1.bf16.xpose.msra.mxu0 0
      %520 = vmatprep.subr.bf16.mxu0 0
      %521 = vmatpush1.bf16.xpose.msra.mxu0 0
      %522 = vmatprep.subr.bf16.mxu0 0
      %523 = vmatpush1.bf16.xpose.msra.mxu0 0
      %524 = vmatprep.subr.bf16.mxu0 0
      %525 = vmatpush1.bf16.xpose.msra.mxu0 0
      %526 = vmatprep.subr.bf16.mxu0 0
      %527 = vmatpush1.bf16.xpose.msra.mxu0 0
      %528 = vmatprep.subr.bf16.mxu0 0
      %529 = vmatpush1.bf16.xpose.msra.mxu0 0
      %530 = vmatprep.subr.bf16.mxu0 0
      %531 = vmatpush1.bf16.xpose.msra.mxu0 0
      %532 = vmatprep.subr.bf16.mxu0 0
      %533 = vmatpush1.bf16.xpose.msra.mxu0 0
      %534 = vmatprep.subr.bf16.mxu0 0
      %535 = vmatpush1.bf16.xpose.msra.mxu0 0
      %536 = vmatprep.subr.bf16.mxu0 0
      %537 = vmatpush1.bf16.xpose.msra.mxu0 0
      %538 = vmatprep.mubr.bf16.mxu0 0
      %539 = vmatmul.mubr.bf16.gmra.mrb[0].mxu0 %v501
      %v540 = vpop.f32.mrb[0].mxu0
      %v541 = vadd.f32 0.0, %v540
      %v542 = vpop.f32.mrb[0].mxu0
      %v543 = vpop.f32.mrb[0].mxu0
      %v544 = vpop.f32.mrb[0].mxu0
      %545 = vdwg.mxu0
      %547 = vrot.lane.b32.xlu0 %v426, 124
      %v548 = vpop.permute.xlu0 %547
      %550 = vrot.lane.b32.xlu0 %v490, 124
      %v551 = vpop.permute.xlu0 %550
      %v553 = vsel %vm499, %v548, 0
      %v556 = vsel %vm499, %v551, 0
      %558 = vmatprep.subr.bf16.mxu0 0
      %559 = vmatpush1.bf16.xpose.msra.mxu0 %v556
      %560 = vmatprep.subr.bf16.mxu0 0
      %561 = vmatpush1.bf16.xpose.msra.mxu0 0
      %562 = vmatprep.subr.bf16.mxu0 0
      %563 = vmatpush1.bf16.xpose.msra.mxu0 0
      %564 = vmatprep.subr.bf16.mxu0 0
      %565 = vmatpush1.bf16.xpose.msra.mxu0 0
      %566 = vmatprep.subr.bf16.mxu0 0
      %567 = vmatpush1.bf16.xpose.msra.mxu0 0
      %568 = vmatprep.subr.bf16.mxu0 0
      %569 = vmatpush1.bf16.xpose.msra.mxu0 0
      %570 = vmatprep.subr.bf16.mxu0 0
      %571 = vmatpush1.bf16.xpose.msra.mxu0 0
      %572 = vmatprep.subr.bf16.mxu0 0
      %573 = vmatpush1.bf16.xpose.msra.mxu0 0
      %574 = vmatprep.subr.bf16.mxu0 0
      %575 = vmatpush1.bf16.xpose.msra.mxu0 0
      %576 = vmatprep.subr.bf16.mxu0 0
      %577 = vmatpush1.bf16.xpose.msra.mxu0 0
      %578 = vmatprep.subr.bf16.mxu0 0
      %579 = vmatpush1.bf16.xpose.msra.mxu0 0
      %580 = vmatprep.subr.bf16.mxu0 0
      %581 = vmatpush1.bf16.xpose.msra.mxu0 0
      %582 = vmatprep.subr.bf16.mxu0 0
      %583 = vmatpush1.bf16.xpose.msra.mxu0 0
      %584 = vmatprep.subr.bf16.mxu0 0
      %585 = vmatpush1.bf16.xpose.msra.mxu0 0
      %586 = vmatprep.subr.bf16.mxu0 0
      %587 = vmatpush1.bf16.xpose.msra.mxu0 0
      %588 = vmatprep.subr.bf16.mxu0 0
      %589 = vmatpush1.bf16.xpose.msra.mxu0 0
      %590 = vmatprep.mubr.bf16.mxu0 0
      %591 = vmatmul.mubr.bf16.gmra.mrb[0].mxu0 %v553
      %v592 = vpop.f32.mrb[0].mxu0
      %v593 = vadd.f32 0.0, %v592
      %v594 = vpop.f32.mrb[0].mxu0
      %v595 = vpop.f32.mrb[0].mxu0
      %v596 = vpop.f32.mrb[0].mxu0
      %597 = vdwg.mxu0
      %599 = vrot.lane.b32.xlu0 %v427, 124
      %v600 = vpop.permute.xlu0 %599
      %602 = vrot.lane.b32.xlu0 %v491, 124
      %v603 = vpop.permute.xlu0 %602
      %v605 = vsel %vm499, %v600, 0
      %v608 = vsel %vm499, %v603, 0
      %610 = vmatprep.subr.bf16.mxu0 0
      %611 = vmatpush1.bf16.xpose.msra.mxu0 %v608
      %612 = vmatprep.subr.bf16.mxu0 0
      %613 = vmatpush1.bf16.xpose.msra.mxu0 0
      %614 = vmatprep.subr.bf16.mxu0 0
      %615 = vmatpush1.bf16.xpose.msra.mxu0 0
      %616 = vmatprep.subr.bf16.mxu0 0
      %617 = vmatpush1.bf16.xpose.msra.mxu0 0
      %618 = vmatprep.subr.bf16.mxu0 0
      %619 = vmatpush1.bf16.xpose.msra.mxu0 0
      %620 = vmatprep.subr.bf16.mxu0 0
      %621 = vmatpush1.bf16.xpose.msra.mxu0 0
      %622 = vmatprep.subr.bf16.mxu0 0
      %623 = vmatpush1.bf16.xpose.msra.mxu0 0
      %624 = vmatprep.subr.bf16.mxu0 0
      %625 = vmatpush1.bf16.xpose.msra.mxu0 0
      %626 = vmatprep.subr.bf16.mxu0 0
      %627 = vmatpush1.bf16.xpose.msra.mxu0 0
      %628 = vmatprep.subr.bf16.mxu0 0
      %629 = vmatpush1.bf16.xpose.msra.mxu0 0
      %630 = vmatprep.subr.bf16.mxu0 0
      %631 = vmatpush1.bf16.xpose.msra.mxu0 0
      %632 = vmatprep.subr.bf16.mxu0 0
      %633 = vmatpush1.bf16.xpose.msra.mxu0 0
      %634 = vmatprep.subr.bf16.mxu0 0
      %635 = vmatpush1.bf16.xpose.msra.mxu0 0
      %636 = vmatprep.subr.bf16.mxu0 0
      %637 = vmatpush1.bf16.xpose.msra.mxu0 0
      %638 = vmatprep.subr.bf16.mxu0 0
      %639 = vmatpush1.bf16.xpose.msra.mxu0 0
      %640 = vmatprep.subr.bf16.mxu0 0
      %641 = vmatpush1.bf16.xpose.msra.mxu0 0
      %642 = vmatprep.mubr.bf16.mxu0 0
      %643 = vmatmul.mubr.bf16.gmra.mrb[0].mxu0 %v605
      %v644 = vpop.f32.mrb[0].mxu0
      %v645 = vadd.f32 0.0, %v644
      %v646 = vpop.f32.mrb[0].mxu0
      %v647 = vpop.f32.mrb[0].mxu0
      %v648 = vpop.f32.mrb[0].mxu0
      %649 = vdwg.mxu0
      %651 = vrot.lane.b32.xlu0 %v428, 124
      %v652 = vpop.permute.xlu0 %651
      %654 = vrot.lane.b32.xlu0 %v492, 124
      %v655 = vpop.permute.xlu0 %654
      %v657 = vsel %vm499, %v652, 0
      %v660 = vsel %vm499, %v655, 0
      %662 = vmatprep.subr.bf16.mxu0 0
      %663 = vmatpush1.bf16.xpose.msra.mxu0 %v660
      %664 = vmatprep.subr.bf16.mxu0 0
      %665 = vmatpush1.bf16.xpose.msra.mxu0 0
      %666 = vmatprep.subr.bf16.mxu0 0
      %667 = vmatpush1.bf16.xpose.msra.mxu0 0
      %668 = vmatprep.subr.bf16.mxu0 0
      %669 = vmatpush1.bf16.xpose.msra.mxu0 0
      %670 = vmatprep.subr.bf16.mxu0 0
      %671 = vmatpush1.bf16.xpose.msra.mxu0 0
      %672 = vmatprep.subr.bf16.mxu0 0
      %673 = vmatpush1.bf16.xpose.msra.mxu0 0
      %674 = vmatprep.subr.bf16.mxu0 0
      %675 = vmatpush1.bf16.xpose.msra.mxu0 0
      %676 = vmatprep.subr.bf16.mxu0 0
      %677 = vmatpush1.bf16.xpose.msra.mxu0 0
      %678 = vmatprep.subr.bf16.mxu0 0
      %679 = vmatpush1.bf16.xpose.msra.mxu0 0
      %680 = vmatprep.subr.bf16.mxu0 0
      %681 = vmatpush1.bf16.xpose.msra.mxu0 0
      %682 = vmatprep.subr.bf16.mxu0 0
      %683 = vmatpush1.bf16.xpose.msra.mxu0 0
      %684 = vmatprep.subr.bf16.mxu0 0
      %685 = vmatpush1.bf16.xpose.msra.mxu0 0
      %686 = vmatprep.subr.bf16.mxu0 0
      %687 = vmatpush1.bf16.xpose.msra.mxu0 0
      %688 = vmatprep.subr.bf16.mxu0 0
      %689 = vmatpush1.bf16.xpose.msra.mxu0 0
      %690 = vmatprep.subr.bf16.mxu0 0
      %691 = vmatpush1.bf16.xpose.msra.mxu0 0
      %692 = vmatprep.subr.bf16.mxu0 0
      %693 = vmatpush1.bf16.xpose.msra.mxu0 0
      %694 = vmatprep.mubr.bf16.mxu0 0
      %695 = vmatmul.mubr.bf16.gmra.mrb[0].mxu0 %v657
      %v696 = vpop.f32.mrb[0].mxu0
      %v697 = vadd.f32 0.0, %v696
      %v698 = vpop.f32.mrb[0].mxu0
      %v699 = vpop.f32.mrb[0].mxu0
      %v700 = vpop.f32.mrb[0].mxu0
      %701 = vdwg.mxu0
      %v703 = vsel %vm499, %v389, 0
      %v706 = vsel %vm499, %v457, 0
      %708 = vmatprep.subr.bf16.mxu0 0
      %709 = vmatpush1.bf16.xpose.msra.mxu0 %v706
      %710 = vmatprep.subr.bf16.mxu0 0
      %711 = vmatpush1.bf16.xpose.msra.mxu0 0
      %712 = vmatprep.subr.bf16.mxu0 0
      %713 = vmatpush1.bf16.xpose.msra.mxu0 0
      %714 = vmatprep.subr.bf16.mxu0 0
      %715 = vmatpush1.bf16.xpose.msra.mxu0 0
      %716 = vmatprep.subr.bf16.mxu0 0
      %717 = vmatpush1.bf16.xpose.msra.mxu0 0
      %718 = vmatprep.subr.bf16.mxu0 0
      %719 = vmatpush1.bf16.xpose.msra.mxu0 0
      %720 = vmatprep.subr.bf16.mxu0 0
      %721 = vmatpush1.bf16.xpose.msra.mxu0 0
      %722 = vmatprep.subr.bf16.mxu0 0
      %723 = vmatpush1.bf16.xpose.msra.mxu0 0
      %724 = vmatprep.subr.bf16.mxu0 0
      %725 = vmatpush1.bf16.xpose.msra.mxu0 0
      %726 = vmatprep.subr.bf16.mxu0 0
      %727 = vmatpush1.bf16.xpose.msra.mxu0 0
      %728 = vmatprep.subr.bf16.mxu0 0
      %729 = vmatpush1.bf16.xpose.msra.mxu0 0
      %730 = vmatprep.subr.bf16.mxu0 0
      %731 = vmatpush1.bf16.xpose.msra.mxu0 0
      %732 = vmatprep.subr.bf16.mxu0 0
      %733 = vmatpush1.bf16.xpose.msra.mxu0 0
      %734 = vmatprep.subr.bf16.mxu0 0
      %735 = vmatpush1.bf16.xpose.msra.mxu0 0
      %736 = vmatprep.subr.bf16.mxu0 0
      %737 = vmatpush1.bf16.xpose.msra.mxu0 0
      %738 = vmatprep.subr.bf16.mxu0 0
      %739 = vmatpush1.bf16.xpose.msra.mxu0 0
      %740 = vmatprep.mubr.bf16.mxu0 0
      %741 = vmatmul.mubr.bf16.gmra.mrb[0].mxu0 %v703
      %v742 = vpop.f32.mrb[0].mxu0
      %v743 = vadd.f32 %v541, %v742
      %v744 = vpop.f32.mrb[0].mxu0
      %v745 = vpop.f32.mrb[0].mxu0
      %v746 = vpop.f32.mrb[0].mxu0
      %747 = vdwg.mxu0
      %v749 = vsel %vm499, %v390, 0
      %v752 = vsel %vm499, %v458, 0
      %754 = vmatprep.subr.bf16.mxu0 0
      %755 = vmatpush1.bf16.xpose.msra.mxu0 %v752
      %756 = vmatprep.subr.bf16.mxu0 0
      %757 = vmatpush1.bf16.xpose.msra.mxu0 0
      %758 = vmatprep.subr.bf16.mxu0 0
      %759 = vmatpush1.bf16.xpose.msra.mxu0 0
      %760 = vmatprep.subr.bf16.mxu0 0
      %761 = vmatpush1.bf16.xpose.msra.mxu0 0
      %762 = vmatprep.subr.bf16.mxu0 0
      %763 = vmatpush1.bf16.xpose.msra.mxu0 0
      %764 = vmatprep.subr.bf16.mxu0 0
      %765 = vmatpush1.bf16.xpose.msra.mxu0 0
      %766 = vmatprep.subr.bf16.mxu0 0
      %767 = vmatpush1.bf16.xpose.msra.mxu0 0
      %768 = vmatprep.subr.bf16.mxu0 0
      %769 = vmatpush1.bf16.xpose.msra.mxu0 0
      %770 = vmatprep.subr.bf16.mxu0 0
      %771 = vmatpush1.bf16.xpose.msra.mxu0 0
      %772 = vmatprep.subr.bf16.mxu0 0
      %773 = vmatpush1.bf16.xpose.msra.mxu0 0
      %774 = vmatprep.subr.bf16.mxu0 0
      %775 = vmatpush1.bf16.xpose.msra.mxu0 0
      %776 = vmatprep.subr.bf16.mxu0 0
      %777 = vmatpush1.bf16.xpose.msra.mxu0 0
      %778 = vmatprep.subr.bf16.mxu0 0
      %779 = vmatpush1.bf16.xpose.msra.mxu0 0
      %780 = vmatprep.subr.bf16.mxu0 0
      %781 = vmatpush1.bf16.xpose.msra.mxu0 0
      %782 = vmatprep.subr.bf16.mxu0 0
      %783 = vmatpush1.bf16.xpose.msra.mxu0 0
      %784 = vmatprep.subr.bf16.mxu0 0
      %785 = vmatpush1.bf16.xpose.msra.mxu0 0
      %786 = vmatprep.mubr.bf16.mxu0 0
      %787 = vmatmul.mubr.bf16.gmra.mrb[0].mxu0 %v749
      %v788 = vpop.f32.mrb[0].mxu0
      %v789 = vadd.f32 %v593, %v788
      %v790 = vpop.f32.mrb[0].mxu0
      %v791 = vpop.f32.mrb[0].mxu0
      %v792 = vpop.f32.mrb[0].mxu0
      %793 = vdwg.mxu0
      %v795 = vsel %vm499, %v391, 0
      %v798 = vsel %vm499, %v459, 0
      %800 = vmatprep.subr.bf16.mxu0 0
      %801 = vmatpush1.bf16.xpose.msra.mxu0 %v798
      %802 = vmatprep.subr.bf16.mxu0 0
      %803 = vmatpush1.bf16.xpose.msra.mxu0 0
      %804 = vmatprep.subr.bf16.mxu0 0
      %805 = vmatpush1.bf16.xpose.msra.mxu0 0
      %806 = vmatprep.subr.bf16.mxu0 0
      %807 = vmatpush1.bf16.xpose.msra.mxu0 0
      %808 = vmatprep.subr.bf16.mxu0 0
      %809 = vmatpush1.bf16.xpose.msra.mxu0 0
      %810 = vmatprep.subr.bf16.mxu0 0
      %811 = vmatpush1.bf16.xpose.msra.mxu0 0
      %812 = vmatprep.subr.bf16.mxu0 0
      %813 = vmatpush1.bf16.xpose.msra.mxu0 0
      %814 = vmatprep.subr.bf16.mxu0 0
      %815 = vmatpush1.bf16.xpose.msra.mxu0 0
      %816 = vmatprep.subr.bf16.mxu0 0
      %817 = vmatpush1.bf16.xpose.msra.mxu0 0
      %818 = vmatprep.subr.bf16.mxu0 0
      %819 = vmatpush1.bf16.xpose.msra.mxu0 0
      %820 = vmatprep.subr.bf16.mxu0 0
      %821 = vmatpush1.bf16.xpose.msra.mxu0 0
      %822 = vmatprep.subr.bf16.mxu0 0
      %823 = vmatpush1.bf16.xpose.msra.mxu0 0
      %824 = vmatprep.subr.bf16.mxu0 0
      %825 = vmatpush1.bf16.xpose.msra.mxu0 0
      %826 = vmatprep.subr.bf16.mxu0 0
      %827 = vmatpush1.bf16.xpose.msra.mxu0 0
      %828 = vmatprep.subr.bf16.mxu0 0
      %829 = vmatpush1.bf16.xpose.msra.mxu0 0
      %830 = vmatprep.subr.bf16.mxu0 0
      %831 = vmatpush1.bf16.xpose.msra.mxu0 0
      %832 = vmatprep.mubr.bf16.mxu0 0
      %833 = vmatmul.mubr.bf16.gmra.mrb[0].mxu0 %v795
      %v834 = vpop.f32.mrb[0].mxu0
      %v835 = vadd.f32 %v645, %v834
      %v836 = vpop.f32.mrb[0].mxu0
      %v837 = vpop.f32.mrb[0].mxu0
      %v838 = vpop.f32.mrb[0].mxu0
      %839 = vdwg.mxu0
      %v841 = vsel %vm499, %v392, 0
      %v844 = vsel %vm499, %v460, 0
      %846 = vmatprep.subr.bf16.mxu0 0
      %847 = vmatpush1.bf16.xpose.msra.mxu0 %v844
      %848 = vmatprep.subr.bf16.mxu0 0
      %849 = vmatpush1.bf16.xpose.msra.mxu0 0
      %850 = vmatprep.subr.bf16.mxu0 0
      %851 = vmatpush1.bf16.xpose.msra.mxu0 0
      %852 = vmatprep.subr.bf16.mxu0 0
      %853 = vmatpush1.bf16.xpose.msra.mxu0 0
      %854 = vmatprep.subr.bf16.mxu0 0
      %855 = vmatpush1.bf16.xpose.msra.mxu0 0
      %856 = vmatprep.subr.bf16.mxu0 0
      %857 = vmatpush1.bf16.xpose.msra.mxu0 0
      %858 = vmatprep.subr.bf16.mxu0 0
      %859 = vmatpush1.bf16.xpose.msra.mxu0 0
      %860 = vmatprep.subr.bf16.mxu0 0
      %861 = vmatpush1.bf16.xpose.msra.mxu0 0
      %862 = vmatprep.subr.bf16.mxu0 0
      %863 = vmatpush1.bf16.xpose.msra.mxu0 0
      %864 = vmatprep.subr.bf16.mxu0 0
      %865 = vmatpush1.bf16.xpose.msra.mxu0 0
      %866 = vmatprep.subr.bf16.mxu0 0
      %867 = vmatpush1.bf16.xpose.msra.mxu0 0
      %868 = vmatprep.subr.bf16.mxu0 0
      %869 = vmatpush1.bf16.xpose.msra.mxu0 0
      %870 = vmatprep.subr.bf16.mxu0 0
      %871 = vmatpush1.bf16.xpose.msra.mxu0 0
      %872 = vmatprep.subr.bf16.mxu0 0
      %873 = vmatpush1.bf16.xpose.msra.mxu0 0
      %874 = vmatprep.subr.bf16.mxu0 0
      %875 = vmatpush1.bf16.xpose.msra.mxu0 0
      %876 = vmatprep.subr.bf16.mxu0 0
      %877 = vmatpush1.bf16.xpose.msra.mxu0 0
      %878 = vmatprep.mubr.bf16.mxu0 0
      %879 = vmatmul.mubr.bf16.gmra.mrb[0].mxu0 %v841
      %v880 = vpop.f32.mrb[0].mxu0
      %v881 = vadd.f32 %v697, %v880
      %v882 = vpop.f32.mrb[0].mxu0
      %v883 = vpop.f32.mrb[0].mxu0
      %v884 = vpop.f32.mrb[0].mxu0
      %885 = vdwg.mxu0
      %vm886 = vcmask 64512
      %v887 = vsel %vm886, %v743, -inf
      %888 = vmax.xlane.f32.xlu0 %v887
      %v889 = vpop.xlane.xlu0 %888
      %v890 = vsel %vm886, %v789, -inf
      %891 = vmax.xlane.f32.xlu0 %v890
      %v892 = vpop.xlane.xlu0 %891
      %v893 = vsel %vm886, %v835, -inf
      %894 = vmax.xlane.f32.xlu0 %v893
      %v895 = vpop.xlane.xlu0 %894
      %v896 = vsel %vm886, %v881, -inf
      %897 = vmax.xlane.f32.xlu0 %v896
      %v898 = vpop.xlane.xlu0 %897
      %v899 = vsub.f32 %v743, %v889
      %v900 = vsub.f32 %v789, %v892
      %v901 = vsub.f32 %v835, %v895
      %v902 = vsub.f32 %v881, %v898
      %v903 = vmul.f32 %v899, 1.442695
      %v904 = vpow.pop %v903
      %v905 = vmul.f32 %v900, 1.442695
      %v906 = vpow.pop %v905
      %v907 = vmul.f32 %v901, 1.442695
      %v908 = vpow.pop %v907
      %v909 = vmul.f32 %v902, 1.442695
      %v910 = vpow.pop %v909
      %v911 = vsel %vm886, %v904, 0.0
      %912 = vadd.xlane.f32.xlu0 %v911
      %v913 = vpop.xlane.xlu0 %912
      %v914 = vsel %vm886, %v906, 0.0
      %915 = vadd.xlane.f32.xlu0 %v914
      %v916 = vpop.xlane.xlu0 %915
      %v917 = vsel %vm886, %v908, 0.0
      %918 = vadd.xlane.f32.xlu0 %v917
      %v919 = vpop.xlane.xlu0 %918
      %v920 = vsel %vm886, %v910, 0.0
      %921 = vadd.xlane.f32.xlu0 %v920
      %v922 = vpop.xlane.xlu0 %921
      %v923 = vpack.c.bf16 %v904, %v904
      %v924 = vpack.c.bf16 %v906, %v906
      %v925 = vpack.c.bf16 %v908, %v908
      %v926 = vpack.c.bf16 %v910, %v910
      %v928 = vsel %vm886, %v923, 0
      %vm930 = vcmask 1043456
      %v932 = vsel %vm930, %v353, 0
      %934 = vmatprep.subr.bf16.mxu0 0
      %935 = vmatpush1.bf16.msra.mxu0 %v932
      %936 = vmatprep.subr.bf16.mxu0 0
      %937 = vmatpush1.bf16.msra.mxu0 0
      %938 = vmatprep.subr.bf16.mxu0 0
      %939 = vmatpush1.bf16.msra.mxu0 0
      %940 = vmatprep.subr.bf16.mxu0 0
      %941 = vmatpush1.bf16.msra.mxu0 0
      %942 = vmatprep.subr.bf16.mxu0 0
      %943 = vmatpush1.bf16.msra.mxu0 0
      %944 = vmatprep.subr.bf16.mxu0 0
      %945 = vmatpush1.bf16.msra.mxu0 0
      %946 = vmatprep.subr.bf16.mxu0 0
      %947 = vmatpush1.bf16.msra.mxu0 0
      %948 = vmatprep.subr.bf16.mxu0 0
      %949 = vmatpush1.bf16.msra.mxu0 0
      %950 = vmatprep.subr.bf16.mxu0 0
      %951 = vmatpush1.bf16.msra.mxu0 0
      %952 = vmatprep.subr.bf16.mxu0 0
      %953 = vmatpush1.bf16.msra.mxu0 0
      %954 = vmatprep.subr.bf16.mxu0 0
      %955 = vmatpush1.bf16.msra.mxu0 0
      %956 = vmatprep.subr.bf16.mxu0 0
      %957 = vmatpush1.bf16.msra.mxu0 0
      %958 = vmatprep.subr.bf16.mxu0 0
      %959 = vmatpush1.bf16.msra.mxu0 0
      %960 = vmatprep.subr.bf16.mxu0 0
      %961 = vmatpush1.bf16.msra.mxu0 0
      %962 = vmatprep.subr.bf16.mxu0 0
      %963 = vmatpush1.bf16.msra.mxu0 0
      %964 = vmatprep.subr.bf16.mxu0 0
      %965 = vmatpush1.bf16.msra.mxu0 0
      %966 = vmatprep.mubr.bf16.mxu0 0
      %967 = vmatmul.mubr.bf16.gmra.mrb[0].mxu0 %v928
      %v968 = vpop.f32.mrb[0].mxu0
      %v969 = vadd.f32 0.0, %v968
      %v970 = vpop.f32.mrb[0].mxu0
      %v971 = vpop.f32.mrb[0].mxu0
      %v972 = vpop.f32.mrb[0].mxu0
      %973 = vdwg.mxu0
      %v975 = vsel %vm886, %v924, 0
      %v978 = vsel %vm930, %v354, 0
      %980 = vmatprep.subr.bf16.mxu0 0
      %981 = vmatpush1.bf16.msra.mxu0 %v978
      %982 = vmatprep.subr.bf16.mxu0 0
      %983 = vmatpush1.bf16.msra.mxu0 0
      %984 = vmatprep.subr.bf16.mxu0 0
      %985 = vmatpush1.bf16.msra.mxu0 0
      %986 = vmatprep.subr.bf16.mxu0 0
      %987 = vmatpush1.bf16.msra.mxu0 0
      %988 = vmatprep.subr.bf16.mxu0 0
      %989 = vmatpush1.bf16.msra.mxu0 0
      %990 = vmatprep.subr.bf16.mxu0 0
      %991 = vmatpush1.bf16.msra.mxu0 0
      %992 = vmatprep.subr.bf16.mxu0 0
      %993 = vmatpush1.bf16.msra.mxu0 0
      %994 = vmatprep.subr.bf16.mxu0 0
      %995 = vmatpush1.bf16.msra.mxu0 0
      %996 = vmatprep.subr.bf16.mxu0 0
      %997 = vmatpush1.bf16.msra.mxu0 0
      %998 = vmatprep.subr.bf16.mxu0 0
      %999 = vmatpush1.bf16.msra.mxu0 0
      %1000 = vmatprep.subr.bf16.mxu0 0
      %1001 = vmatpush1.bf16.msra.mxu0 0
      %1002 = vmatprep.subr.bf16.mxu0 0
      %1003 = vmatpush1.bf16.msra.mxu0 0
      %1004 = vmatprep.subr.bf16.mxu0 0
      %1005 = vmatpush1.bf16.msra.mxu0 0
      %1006 = vmatprep.subr.bf16.mxu0 0
      %1007 = vmatpush1.bf16.msra.mxu0 0
      %1008 = vmatprep.subr.bf16.mxu0 0
      %1009 = vmatpush1.bf16.msra.mxu0 0
      %1010 = vmatprep.subr.bf16.mxu0 0
      %1011 = vmatpush1.bf16.msra.mxu0 0
      %1012 = vmatprep.mubr.bf16.mxu0 0
      %1013 = vmatmul.mubr.bf16.gmra.mrb[0].mxu0 %v975
      %v1014 = vpop.f32.mrb[0].mxu0
      %v1015 = vadd.f32 0.0, %v1014
      %v1016 = vpop.f32.mrb[0].mxu0
      %v1017 = vpop.f32.mrb[0].mxu0
      %v1018 = vpop.f32.mrb[0].mxu0
      %1019 = vdwg.mxu0
      %v1021 = vsel %vm886, %v925, 0
      %v1024 = vsel %vm930, %v355, 0
      %1026 = vmatprep.subr.bf16.mxu0 0
      %1027 = vmatpush1.bf16.msra.mxu0 %v1024
      %1028 = vmatprep.subr.bf16.mxu0 0
      %1029 = vmatpush1.bf16.msra.mxu0 0
      %1030 = vmatprep.subr.bf16.mxu0 0
      %1031 = vmatpush1.bf16.msra.mxu0 0
      %1032 = vmatprep.subr.bf16.mxu0 0
      %1033 = vmatpush1.bf16.msra.mxu0 0
      %1034 = vmatprep.subr.bf16.mxu0 0
      %1035 = vmatpush1.bf16.msra.mxu0 0
      %1036 = vmatprep.subr.bf16.mxu0 0
      %1037 = vmatpush1.bf16.msra.mxu0 0
      %1038 = vmatprep.subr.bf16.mxu0 0
      %1039 = vmatpush1.bf16.msra.mxu0 0
      %1040 = vmatprep.subr.bf16.mxu0 0
      %1041 = vmatpush1.bf16.msra.mxu0 0
      %1042 = vmatprep.subr.bf16.mxu0 0
      %1043 = vmatpush1.bf16.msra.mxu0 0
      %1044 = vmatprep.subr.bf16.mxu0 0
      %1045 = vmatpush1.bf16.msra.mxu0 0
      %1046 = vmatprep.subr.bf16.mxu0 0
      %1047 = vmatpush1.bf16.msra.mxu0 0
      %1048 = vmatprep.subr.bf16.mxu0 0
      %1049 = vmatpush1.bf16.msra.mxu0 0
      %1050 = vmatprep.subr.bf16.mxu0 0
      %1051 = vmatpush1.bf16.msra.mxu0 0
      %1052 = vmatprep.subr.bf16.mxu0 0
      %1053 = vmatpush1.bf16.msra.mxu0 0
      %1054 = vmatprep.subr.bf16.mxu0 0
      %1055 = vmatpush1.bf16.msra.mxu0 0
      %1056 = vmatprep.subr.bf16.mxu0 0
      %1057 = vmatpush1.bf16.msra.mxu0 0
      %1058 = vmatprep.mubr.bf16.mxu0 0
      %1059 = vmatmul.mubr.bf16.gmra.mrb[0].mxu0 %v1021
      %v1060 = vpop.f32.mrb[0].mxu0
      %v1061 = vadd.f32 0.0, %v1060
      %v1062 = vpop.f32.mrb[0].mxu0
      %v1063 = vpop.f32.mrb[0].mxu0
      %v1064 = vpop.f32.mrb[0].mxu0
      %1065 = vdwg.mxu0
      %v1067 = vsel %vm886, %v926, 0
      %v1070 = vsel %vm930, %v356, 0
      %1072 = vmatprep.subr.bf16.mxu0 0
      %1073 = vmatpush1.bf16.msra.mxu0 %v1070
      %1074 = vmatprep.subr.bf16.mxu0 0
      %1075 = vmatpush1.bf16.msra.mxu0 0
      %1076 = vmatprep.subr.bf16.mxu0 0
      %1077 = vmatpush1.bf16.msra.mxu0 0
      %1078 = vmatprep.subr.bf16.mxu0 0
      %1079 = vmatpush1.bf16.msra.mxu0 0
      %1080 = vmatprep.subr.bf16.mxu0 0
      %1081 = vmatpush1.bf16.msra.mxu0 0
      %1082 = vmatprep.subr.bf16.mxu0 0
      %1083 = vmatpush1.bf16.msra.mxu0 0
      %1084 = vmatprep.subr.bf16.mxu0 0
      %1085 = vmatpush1.bf16.msra.mxu0 0
      %1086 = vmatprep.subr.bf16.mxu0 0
      %1087 = vmatpush1.bf16.msra.mxu0 0
      %1088 = vmatprep.subr.bf16.mxu0 0
      %1089 = vmatpush1.bf16.msra.mxu0 0
      %1090 = vmatprep.subr.bf16.mxu0 0
      %1091 = vmatpush1.bf16.msra.mxu0 0
      %1092 = vmatprep.subr.bf16.mxu0 0
      %1093 = vmatpush1.bf16.msra.mxu0 0
      %1094 = vmatprep.subr.bf16.mxu0 0
      %1095 = vmatpush1.bf16.msra.mxu0 0
      %1096 = vmatprep.subr.bf16.mxu0 0
      %1097 = vmatpush1.bf16.msra.mxu0 0
      %1098 = vmatprep.subr.bf16.mxu0 0
      %1099 = vmatpush1.bf16.msra.mxu0 0
      %1100 = vmatprep.subr.bf16.mxu0 0
      %1101 = vmatpush1.bf16.msra.mxu0 0
      %1102 = vmatprep.subr.bf16.mxu0 0
      %1103 = vmatpush1.bf16.msra.mxu0 0
      %1104 = vmatprep.mubr.bf16.mxu0 0
      %1105 = vmatmul.mubr.bf16.gmra.mrb[0].mxu0 %v1067
      %v1106 = vpop.f32.mrb[0].mxu0
      %v1107 = vadd.f32 0.0, %v1106
      %v1108 = vpop.f32.mrb[0].mxu0
      %v1109 = vpop.f32.mrb[0].mxu0
      %v1110 = vpop.f32.mrb[0].mxu0
      %1111 = vdwg.mxu0
      %v1112 = vrcp.pop %v913
      %v1113 = vrcp.pop %v916
      %v1114 = vrcp.pop %v919
      %v1115 = vrcp.pop %v922
      %v1116 = vmul.f32 %v969, %v1112
      %v1117 = vmul.f32 %v1015, %v1113
      %v1118 = vmul.f32 %v1061, %v1114
      %v1119 = vmul.f32 %v1107, %v1115
      %v1120 = vld [vmem:[%s329] sm:$0xf]
      %v1121 = vxor.u32 %v1120, 2147483648
      %v1122 = vmul.f32 %v1121, 1.442695
      %v1123 = vpow.pop %v1122
      %v1124 = vadd.f32 %v1123, 1.0
      %v1125 = vrcp.pop %v1124
      %v1126 = vmul.f32 1.0, %v1125
      %v1127 = vlaneseq
      %v1128 = vshrl.u32 %v1127, 7
      %v1129 = vsub.s32 0, %v1128
      %v1130 = vrot.slane %v1126, %v1129
      %1132 = vbcast.lane.b32.xlu0 %v1130, 256
      %v1133 = vpop.permute.xlu0 %1132
      %v1134 = vlaneseq
      %v1135 = vshrl.u32 %v1134, 7
      %v1136 = vsub.s32 1, %v1135
      %v1137 = vrot.slane %v1126, %v1136
      %1139 = vbcast.lane.b32.xlu0 %v1137, 256
      %v1140 = vpop.permute.xlu0 %1139
      %v1141 = vlaneseq
      %v1142 = vshrl.u32 %v1141, 7
      %v1143 = vsub.s32 2, %v1142
      %v1144 = vrot.slane %v1126, %v1143
      %1146 = vbcast.lane.b32.xlu0 %v1144, 256
      %v1147 = vpop.permute.xlu0 %1146
      %v1148 = vlaneseq
      %v1149 = vshrl.u32 %v1148, 7
      %v1150 = vsub.s32 3, %v1149
      %v1151 = vrot.slane %v1126, %v1150
      %1153 = vbcast.lane.b32.xlu0 %v1151, 256
      %v1154 = vpop.permute.xlu0 %1153
      %v1155 = vmul.f32 %v1116, %v1133
      %v1156 = vmul.f32 %v1117, %v1140
      %v1157 = vmul.f32 %v1118, %v1147
      %v1158 = vmul.f32 %v1119, %v1154
      %v1159 = vpack.c.bf16 %v1155, %v1155
      %v1160 = vpack.c.bf16 %v1156, %v1156
      %v1161 = vpack.c.bf16 %v1157, %v1157
      %v1162 = vpack.c.bf16 %v1158, %v1158
      %v1163 = vld [vmem:[%s6] sm:$0xf]
      %s1164 = scalar_lea.vmem %s6, 4
      %v1165 = vld [vmem:[%s1164] sm:$0xf]
      %v1167 = vsel %vm886, %v1160, 0
      %v1170 = vsel %vm930, %v1165, 0
      %1172 = vmatprep.subr.bf16.mxu0 0
      %1173 = vmatpush1.bf16.msra.mxu0 %v1170
      %1174 = vmatprep.subr.bf16.mxu0 0
      %1175 = vmatpush1.bf16.msra.mxu0 0
      %1176 = vmatprep.subr.bf16.mxu0 0
      %1177 = vmatpush1.bf16.msra.mxu0 0
      %1178 = vmatprep.subr.bf16.mxu0 0
      %1179 = vmatpush1.bf16.msra.mxu0 0
      %1180 = vmatprep.subr.bf16.mxu0 0
      %1181 = vmatpush1.bf16.msra.mxu0 0
      %1182 = vmatprep.subr.bf16.mxu0 0
      %1183 = vmatpush1.bf16.msra.mxu0 0
      %1184 = vmatprep.subr.bf16.mxu0 0
      %1185 = vmatpush1.bf16.msra.mxu0 0
      %1186 = vmatprep.subr.bf16.mxu0 0
      %1187 = vmatpush1.bf16.msra.mxu0 0
      %1188 = vmatprep.subr.bf16.mxu0 0
      %1189 = vmatpush1.bf16.msra.mxu0 0
      %1190 = vmatprep.subr.bf16.mxu0 0
      %1191 = vmatpush1.bf16.msra.mxu0 0
      %1192 = vmatprep.subr.bf16.mxu0 0
      %1193 = vmatpush1.bf16.msra.mxu0 0
      %1194 = vmatprep.subr.bf16.mxu0 0
      %1195 = vmatpush1.bf16.msra.mxu0 0
      %1196 = vmatprep.subr.bf16.mxu0 0
      %1197 = vmatpush1.bf16.msra.mxu0 0
      %1198 = vmatprep.subr.bf16.mxu0 0
      %1199 = vmatpush1.bf16.msra.mxu0 0
      %1200 = vmatprep.subr.bf16.mxu0 0
      %1201 = vmatpush1.bf16.msra.mxu0 0
      %1202 = vmatprep.subr.bf16.mxu0 0
      %1203 = vmatpush1.bf16.msra.mxu0 0
      %1204 = vmatprep.mubr.bf16.mxu0 0
      %1205 = vmatmul.mubr.bf16.gmra.mrb[0].mxu0 %v1167
      %v1206 = vpop.f32.mrb[0].mxu0
      %v1207 = vadd.f32 0.0, %v1206
      %v1208 = vpop.f32.mrb[0].mxu0
      %v1209 = vpop.f32.mrb[0].mxu0
      %v1210 = vpop.f32.mrb[0].mxu0
      %1211 = vdwg.mxu0
      %v1213 = vsel %vm886, %v1159, 0
      %v1216 = vsel %vm930, %v1163, 0
      %1218 = vmatprep.subr.bf16.mxu0 0
      %1219 = vmatpush1.bf16.msra.mxu0 %v1216
      %1220 = vmatprep.subr.bf16.mxu0 0
      %1221 = vmatpush1.bf16.msra.mxu0 0
      %1222 = vmatprep.subr.bf16.mxu0 0
      %1223 = vmatpush1.bf16.msra.mxu0 0
      %1224 = vmatprep.subr.bf16.mxu0 0
      %1225 = vmatpush1.bf16.msra.mxu0 0
      %1226 = vmatprep.subr.bf16.mxu0 0
      %1227 = vmatpush1.bf16.msra.mxu0 0
      %1228 = vmatprep.subr.bf16.mxu0 0
      %1229 = vmatpush1.bf16.msra.mxu0 0
      %1230 = vmatprep.subr.bf16.mxu0 0
      %1231 = vmatpush1.bf16.msra.mxu0 0
      %1232 = vmatprep.subr.bf16.mxu0 0
      %1233 = vmatpush1.bf16.msra.mxu0 0
      %1234 = vmatprep.subr.bf16.mxu0 0
      %1235 = vmatpush1.bf16.msra.mxu0 0
      %1236 = vmatprep.subr.bf16.mxu0 0
      %1237 = vmatpush1.bf16.msra.mxu0 0
      %1238 = vmatprep.subr.bf16.mxu0 0
      %1239 = vmatpush1.bf16.msra.mxu0 0
      %1240 = vmatprep.subr.bf16.mxu0 0
      %1241 = vmatpush1.bf16.msra.mxu0 0
      %1242 = vmatprep.subr.bf16.mxu0 0
      %1243 = vmatpush1.bf16.msra.mxu0 0
      %1244 = vmatprep.subr.bf16.mxu0 0
      %1245 = vmatpush1.bf16.msra.mxu0 0
      %1246 = vmatprep.subr.bf16.mxu0 0
      %1247 = vmatpush1.bf16.msra.mxu0 0
      %1248 = vmatprep.subr.bf16.mxu0 0
      %1249 = vmatpush1.bf16.msra.mxu0 0
      %1250 = vmatprep.mubr.bf16.mxu0 0
      %1251 = vmatmul.mubr.bf16.gmra.mrb[0].mxu0 %v1213
      %v1252 = vpop.f32.mrb[0].mxu0
      %v1253 = vadd.f32 %v1207, %v1252
      %v1254 = vpop.f32.mrb[0].mxu0
      %v1255 = vpop.f32.mrb[0].mxu0
      %v1256 = vpop.f32.mrb[0].mxu0
      %1257 = vdwg.mxu0
      %s1258 = scalar_lea.vmem %s6, 8
      %v1259 = vld [vmem:[%s1258] sm:$0xf]
      %v1261 = vsel %vm886, %v1161, 0
      %v1264 = vsel %vm930, %v1259, 0
      %1266 = vmatprep.subr.bf16.mxu0 0
      %1267 = vmatpush1.bf16.msra.mxu0 %v1264
      %1268 = vmatprep.subr.bf16.mxu0 0
      %1269 = vmatpush1.bf16.msra.mxu0 0
      %1270 = vmatprep.subr.bf16.mxu0 0
      %1271 = vmatpush1.bf16.msra.mxu0 0
      %1272 = vmatprep.subr.bf16.mxu0 0
      %1273 = vmatpush1.bf16.msra.mxu0 0
      %1274 = vmatprep.subr.bf16.mxu0 0
      %1275 = vmatpush1.bf16.msra.mxu0 0
      %1276 = vmatprep.subr.bf16.mxu0 0
      %1277 = vmatpush1.bf16.msra.mxu0 0
      %1278 = vmatprep.subr.bf16.mxu0 0
      %1279 = vmatpush1.bf16.msra.mxu0 0
      %1280 = vmatprep.subr.bf16.mxu0 0
      %1281 = vmatpush1.bf16.msra.mxu0 0
      %1282 = vmatprep.subr.bf16.mxu0 0
      %1283 = vmatpush1.bf16.msra.mxu0 0
      %1284 = vmatprep.subr.bf16.mxu0 0
      %1285 = vmatpush1.bf16.msra.mxu0 0
      %1286 = vmatprep.subr.bf16.mxu0 0
      %1287 = vmatpush1.bf16.msra.mxu0 0
      %1288 = vmatprep.subr.bf16.mxu0 0
      %1289 = vmatpush1.bf16.msra.mxu0 0
      %1290 = vmatprep.subr.bf16.mxu0 0
      %1291 = vmatpush1.bf16.msra.mxu0 0
      %1292 = vmatprep.subr.bf16.mxu0 0
      %1293 = vmatpush1.bf16.msra.mxu0 0
      %1294 = vmatprep.subr.bf16.mxu0 0
      %1295 = vmatpush1.bf16.msra.mxu0 0
      %1296 = vmatprep.subr.bf16.mxu0 0
      %1297 = vmatpush1.bf16.msra.mxu0 0
      %1298 = vmatprep.mubr.bf16.mxu0 0
      %1299 = vmatmul.mubr.bf16.gmra.mrb[0].mxu0 %v1261
      %v1300 = vpop.f32.mrb[0].mxu0
      %v1301 = vadd.f32 0.0, %v1300
      %v1302 = vpop.f32.mrb[0].mxu0
      %v1303 = vpop.f32.mrb[0].mxu0
      %v1304 = vpop.f32.mrb[0].mxu0
      %1305 = vdwg.mxu0
      %v1306 = vadd.f32 %v1253, %v1301
      %s1307 = scalar_lea.vmem %s6, 12
      %v1308 = vld [vmem:[%s1307] sm:$0xf]
      %v1310 = vsel %vm886, %v1162, 0
      %v1313 = vsel %vm930, %v1308, 0
      %1315 = vmatprep.subr.bf16.mxu0 0
      %1316 = vmatpush1.bf16.msra.mxu0 %v1313
      %1317 = vmatprep.subr.bf16.mxu0 0
      %1318 = vmatpush1.bf16.msra.mxu0 0
      %1319 = vmatprep.subr.bf16.mxu0 0
      %1320 = vmatpush1.bf16.msra.mxu0 0
      %1321 = vmatprep.subr.bf16.mxu0 0
      %1322 = vmatpush1.bf16.msra.mxu0 0
      %1323 = vmatprep.subr.bf16.mxu0 0
      %1324 = vmatpush1.bf16.msra.mxu0 0
      %1325 = vmatprep.subr.bf16.mxu0 0
      %1326 = vmatpush1.bf16.msra.mxu0 0
      %1327 = vmatprep.subr.bf16.mxu0 0
      %1328 = vmatpush1.bf16.msra.mxu0 0
      %1329 = vmatprep.subr.bf16.mxu0 0
      %1330 = vmatpush1.bf16.msra.mxu0 0
      %1331 = vmatprep.subr.bf16.mxu0 0
      %1332 = vmatpush1.bf16.msra.mxu0 0
      %1333 = vmatprep.subr.bf16.mxu0 0
      %1334 = vmatpush1.bf16.msra.mxu0 0
      %1335 = vmatprep.subr.bf16.mxu0 0
      %1336 = vmatpush1.bf16.msra.mxu0 0
      %1337 = vmatprep.subr.bf16.mxu0 0
      %1338 = vmatpush1.bf16.msra.mxu0 0
      %1339 = vmatprep.subr.bf16.mxu0 0
      %1340 = vmatpush1.bf16.msra.mxu0 0
      %1341 = vmatprep.subr.bf16.mxu0 0
      %1342 = vmatpush1.bf16.msra.mxu0 0
      %1343 = vmatprep.subr.bf16.mxu0 0
      %1344 = vmatpush1.bf16.msra.mxu0 0
      %1345 = vmatprep.subr.bf16.mxu0 0
      %1346 = vmatpush1.bf16.msra.mxu0 0
      %1347 = vmatprep.mubr.bf16.mxu0 0
      %1348 = vmatmul.mubr.bf16.gmra.mrb[0].mxu0 %v1310
      %v1349 = vpop.f32.mrb[0].mxu0
      %v1350 = vadd.f32 0.0, %v1349
      %v1351 = vpop.f32.mrb[0].mxu0
      %v1352 = vpop.f32.mrb[0].mxu0
      %v1353 = vpop.f32.mrb[0].mxu0
      %1354 = vdwg.mxu0
      %v1355 = vadd.f32 %v1306, %v1350
      %vm1356 = vcmask 261120
      %1357 = vst.msk [vmem:[%s333] sm:$0xff] %vm1356, %v1355
      %p1358 = scmp.lt.s32.totalorder %s18, 65
      %s1359 = scalar_select %p1358, %s18, 65
      %s1360 = smul.addr %s1359, 8
      %s1361 = scalar_lea.vmem %s7, %s1360
      // Predicated region
      $region49: #{bs_roformer_forward.16} parent=47 // pred_check
        %p1362 = pneg %p203
      $region50: #{bs_roformer_forward.16} parent=47 // pred_check_branch
        %1364 = sbr.rel (%p1362) target = $region52
      $region51: #{bs_roformer_forward.16} parent=47 // pred_region
        _
      $region52: #{bs_roformer_forward.16} parent=47 // pred_fallthru
        _
    $region48: #{bs_roformer_forward.16} parent=5 // pred_fallthru
      _
    %p1365 = scmp.le.s32.totalorder 2, %s13
    // Predicated region
    $region53: #{bs_roformer_forward.16} parent=5 // pred_check
      %p1366 = pneg %p1365
    $region54: #{bs_roformer_forward.16} parent=5 // pred_check_branch
      %1368 = sbr.rel (%p1366) target = $region56
    $region55: #{bs_roformer_forward.16} parent=5 // pred_region
      %s1369 = ssub.s32 %s13, 2
      // Predicated region
      $region57: #{bs_roformer_forward.16} parent=55 // pred_check
        %p1370 = pneg %p209
      $region58: #{bs_roformer_forward.16} parent=55 // pred_check_branch
        %1372 = sbr.rel (%p1370) target = $region60
      $region59: #{bs_roformer_forward.16} parent=55 // pred_region
        %p1373 = scmp.lt.s32.totalorder %s19, 65
        %s1374 = scalar_select %p1373, %s19, 65
        %s1375 = smul.addr %s1374, 8
        %s1376 = scalar_lea.vmem %s7, %s1375
      $region60: #{bs_roformer_forward.16} parent=55 // pred_fallthru
        _
    $region56: #{bs_roformer_forward.16} parent=5 // pred_fallthru
      _
  $region6: #{bs_roformer_forward.16} parent=0 // loop_footer
    %s17 = sadd.s32 1, %s13
  $region7: #{bs_roformer_forward.16} parent=0 // loop_footer_branch
    %12 = sbr.rel target = $region3
  $region8: #{bs_roformer_forward.16} parent=0 // loop_exit
    _

// kernel: bs_roformer_forward.19
$region0: #{bs_roformer_forward.19}
  #allocation0 [shape = 'u32[]', space=smem, size = 0x4, offset = 0x4, fixed_abs, tag = 'smem constant byte address 0x4 - core index']
  #allocation1 [shape = 'u32[144,128]{1,0:T(1,128)}', space=vmem, size = 0x12000, scoped, tag = 'internal scratch']
  %s0 = inlined_call_operand.vmem [shape: f32[8,66,32], index: 0, kind: input, shape index: {}]
  %s1 = inlined_call_operand.vmem [shape: f32[1,32], index: 1, kind: input, shape index: {}]
  %s2 = inlined_call_operand.vmem [shape: bf16[8,32,128], index: 2, kind: input, shape index: {}]
  %s3 = inlined_call_operand.vmem [shape: f32[8,1,128], index: 3, kind: input, shape index: {}]
  %s4 = inlined_call_operand.vmem [shape: bf16[8,128,12], index: 4, kind: input, shape index: {}]
  %s5 = inlined_call_operand.vmem [shape: f32[8,1,12], index: 5, kind: input, shape index: {}]
  %s6 = inlined_call_operand.vmem [shape: f32[8,66,6], index: 6, kind: output, shape index: {}]
  %s7 = sld [smem:[#allocation0]]
  $region57: #{bs_roformer_forward.19} parent=0
    _
  %s9 = ssub.s32 1, %s7
  %s10 = scalar_select 0, %s9, %s7
  loop: start=0, step=1, limit=10
  $region2: #{bs_roformer_forward.19} parent=0 // loop_pre_header
    _
  $region3: #{bs_roformer_forward.19} parent=0 // loop_header
    %s12 = sphi 0, %s16
    %p13 = scmp.ge.s32.totalorder %s12, 10
    %s22 = sphi 0, %s24
    %s25 = sphi 0, %s22
    %s26 = sphi 0, %s25
    %s42 = sphi 0, %s26
    %s46 = sphi 0, %s46
    %s48 = sphi 0, %s46
    %s49 = sphi 0, %s48
    %s63 = sphi 0, %s49
    %s69 = sphi 0, %s71
    %s72 = sphi 0, %s69
    %s73 = sphi 0, %s72
    %s89 = sphi 0, %s73
    %s95 = sphi 0, %s97
    %s98 = sphi 0, %s95
    %s99 = sphi 0, %s98
    %s115 = sphi 0, %s99
    %s121 = sphi 0, %s123
    %s124 = sphi 0, %s121
    %s125 = sphi 0, %s124
    %s141 = sphi 0, %s125
    %s147 = sphi 0, %s149
    %s150 = sphi 0, %s147
    %s151 = sphi 0, %s150
    %s167 = sphi 0, %s151
    %s173 = sphi 0, %s175
    %s176 = sphi 0, %s173
    %s177 = sphi 0, %s176
    %s193 = sphi 0, %s177
  $region4: #{bs_roformer_forward.19} parent=0 // loop_header_branch
    %15 = sbr.rel (%p13) target = $region8
  $region5: #{bs_roformer_forward.19} parent=0 // loop_body
    %s17 = ssub.s32 %s12, 1
    %s18 = ssub.s32 %s12, 2
    %s19 = sadd.s32 %s12, 1
    %s20 = ssub.s32 %s12, %s19
    %p21 = scmp.eq.s32.totalorder %s20, 0
    %s23 = sadd.s32 %s22, 1
    %s24 = scalar_select %p21, %s22, %s23
    %p27 = pneg %p21
    %p28 = scmp.eq.s32.totalorder %s12, 7
    %p29 = por %p27, %p28
    %p30 = scmp.ne.s32.totalorder %s22, %s25
    %p31 = scmp.eq.s32.totalorder %s12, 0
    %p32 = por %p30, %p31
    %p33 = scmp.ne.s32.totalorder %s22, %s25
    %p34 = scmp.eq.s32.totalorder %s17, 7
    %p35 = por %p33, %p34
    %p36 = scmp.ne.s32.totalorder %s25, %s26
    %p37 = scmp.eq.s32.totalorder %s17, 0
    %p38 = por %p36, %p37
    %p39 = scmp.ne.s32.totalorder %s25, %s26
    %p40 = scmp.eq.s32.totalorder %s18, 7
    %p41 = por %p39, %p40
    %p43 = scmp.ne.s32.totalorder %s26, %s42
    %p44 = scmp.eq.s32.totalorder %s18, 0
    %p45 = por %p43, %p44
    %s47 = sadd.s32 %s46, 1
    %p50 = scmp.eq.s32.totalorder %s12, 7
    %p51 = scmp.ne.s32.totalorder %s46, %s48
    %p52 = scmp.eq.s32.totalorder %s12, 0
    %p53 = por %p51, %p52
    %p54 = scmp.ne.s32.totalorder %s46, %s48
    %p55 = scmp.eq.s32.totalorder %s17, 7
    %p56 = por %p54, %p55
    %p57 = scmp.ne.s32.totalorder %s48, %s49
    %p58 = scmp.eq.s32.totalorder %s17, 0
    %p59 = por %p57, %p58
    %p60 = scmp.ne.s32.totalorder %s48, %s49
    %p61 = scmp.eq.s32.totalorder %s18, 7
    %p62 = por %p60, %p61
    %p64 = scmp.ne.s32.totalorder %s49, %s63
    %p65 = scmp.eq.s32.totalorder %s18, 0
    %p66 = por %p64, %p65
    %s67 = ssub.s32 %s12, %s19
    %p68 = scmp.eq.s32.totalorder %s67, 0
    %s70 = sadd.s32 %s69, 1
    %s71 = scalar_select %p68, %s69, %s70
    %p74 = pneg %p68
    %p75 = scmp.eq.s32.totalorder %s12, 7
    %p76 = por %p74, %p75
    %p77 = scmp.ne.s32.totalorder %s69, %s72
    %p78 = scmp.eq.s32.totalorder %s12, 0
    %p79 = por %p77, %p78
    %p80 = scmp.ne.s32.totalorder %s69, %s72
    %p81 = scmp.eq.s32.totalorder %s17, 7
    %p82 = por %p80, %p81
    %p83 = scmp.ne.s32.totalorder %s72, %s73
    %p84 = scmp.eq.s32.totalorder %s17, 0
    %p85 = por %p83, %p84
    %p86 = scmp.ne.s32.totalorder %s72, %s73
    %p87 = scmp.eq.s32.totalorder %s18, 7
    %p88 = por %p86, %p87
    %p90 = scmp.ne.s32.totalorder %s73, %s89
    %p91 = scmp.eq.s32.totalorder %s18, 0
    %p92 = por %p90, %p91
    %s93 = ssub.s32 %s12, %s19
    %p94 = scmp.eq.s32.totalorder %s93, 0
    %s96 = sadd.s32 %s95, 1
    %s97 = scalar_select %p94, %s95, %s96
    %p100 = pneg %p94
    %p101 = scmp.eq.s32.totalorder %s12, 7
    %p102 = por %p100, %p101
    %p103 = scmp.ne.s32.totalorder %s95, %s98
    %p104 = scmp.eq.s32.totalorder %s12, 0
    %p105 = por %p103, %p104
    %p106 = scmp.ne.s32.totalorder %s95, %s98
    %p107 = scmp.eq.s32.totalorder %s17, 7
    %p108 = por %p106, %p107
    %p109 = scmp.ne.s32.totalorder %s98, %s99
    %p110 = scmp.eq.s32.totalorder %s17, 0
    %p111 = por %p109, %p110
    %p112 = scmp.ne.s32.totalorder %s98, %s99
    %p113 = scmp.eq.s32.totalorder %s18, 7
    %p114 = por %p112, %p113
    %p116 = scmp.ne.s32.totalorder %s99, %s115
    %p117 = scmp.eq.s32.totalorder %s18, 0
    %p118 = por %p116, %p117
    %s119 = ssub.s32 %s12, %s19
    %p120 = scmp.eq.s32.totalorder %s119, 0
    %s122 = sadd.s32 %s121, 1
    %s123 = scalar_select %p120, %s121, %s122
    %p126 = pneg %p120
    %p127 = scmp.eq.s32.totalorder %s12, 7
    %p128 = por %p126, %p127
    %p129 = scmp.ne.s32.totalorder %s121, %s124
    %p130 = scmp.eq.s32.totalorder %s12, 0
    %p131 = por %p129, %p130
    %p132 = scmp.ne.s32.totalorder %s121, %s124
    %p133 = scmp.eq.s32.totalorder %s17, 7
    %p134 = por %p132, %p133
    %p135 = scmp.ne.s32.totalorder %s124, %s125
    %p136 = scmp.eq.s32.totalorder %s17, 0
    %p137 = por %p135, %p136
    %p138 = scmp.ne.s32.totalorder %s124, %s125
    %p139 = scmp.eq.s32.totalorder %s18, 7
    %p140 = por %p138, %p139
    %p142 = scmp.ne.s32.totalorder %s125, %s141
    %p143 = scmp.eq.s32.totalorder %s18, 0
    %p144 = por %p142, %p143
    %s145 = ssub.s32 %s12, %s19
    %p146 = scmp.eq.s32.totalorder %s145, 0
    %s148 = sadd.s32 %s147, 1
    %s149 = scalar_select %p146, %s147, %s148
    %p152 = pneg %p146
    %p153 = scmp.eq.s32.totalorder %s12, 7
    %p154 = por %p152, %p153
    %p155 = scmp.ne.s32.totalorder %s147, %s150
    %p156 = scmp.eq.s32.totalorder %s12, 0
    %p157 = por %p155, %p156
    %p158 = scmp.ne.s32.totalorder %s147, %s150
    %p159 = scmp.eq.s32.totalorder %s17, 7
    %p160 = por %p158, %p159
    %p161 = scmp.ne.s32.totalorder %s150, %s151
    %p162 = scmp.eq.s32.totalorder %s17, 0
    %p163 = por %p161, %p162
    %p164 = scmp.ne.s32.totalorder %s150, %s151
    %p165 = scmp.eq.s32.totalorder %s18, 7
    %p166 = por %p164, %p165
    %p168 = scmp.ne.s32.totalorder %s151, %s167
    %p169 = scmp.eq.s32.totalorder %s18, 0
    %p170 = por %p168, %p169
    %s171 = ssub.s32 %s12, %s19
    %p172 = scmp.eq.s32.totalorder %s171, 0
    %s174 = sadd.s32 %s173, 1
    %s175 = scalar_select %p172, %s173, %s174
    %p178 = pneg %p172
    %p179 = scmp.eq.s32.totalorder %s12, 7
    %p180 = por %p178, %p179
    %p181 = scmp.ne.s32.totalorder %s173, %s176
    %p182 = scmp.eq.s32.totalorder %s12, 0
    %p183 = por %p181, %p182
    %p184 = scmp.ne.s32.totalorder %s173, %s176
    %p185 = scmp.eq.s32.totalorder %s17, 7
    %p186 = por %p184, %p185
    %p187 = scmp.ne.s32.totalorder %s176, %s177
    %p188 = scmp.eq.s32.totalorder %s17, 0
    %p189 = por %p187, %p188
    %p190 = scmp.ne.s32.totalorder %s176, %s177
    %p191 = scmp.eq.s32.totalorder %s18, 7
    %p192 = por %p190, %p191
    %p194 = scmp.ne.s32.totalorder %s177, %s193
    %p195 = scmp.eq.s32.totalorder %s18, 0
    %p196 = por %p194, %p195
    %p197 = scmp.le.s32.totalorder 1, %s12
    %p198 = scmp.lt.s32.totalorder %s12, 9
    %p199 = pnand %p197, %p198
    %p200 = pneg %p199
    // Predicated region
    $region9: #{bs_roformer_forward.19} parent=5 // pred_check
      _
    $region10: #{bs_roformer_forward.19} parent=5 // pred_check_branch
      %202 = sbr.rel (%p199) target = $region12
    $region11: #{bs_roformer_forward.19} parent=5 // pred_region
      %s203 = ssub.s32 %s12, 1
      // Predicated region
      $region13: #{bs_roformer_forward.19} parent=11 // pred_check
        %p204 = pneg %p59
      $region14: #{bs_roformer_forward.19} parent=11 // pred_check_branch
        %206 = sbr.rel (%p204) target = $region16
      $region15: #{bs_roformer_forward.19} parent=11 // pred_region
        _
      $region16: #{bs_roformer_forward.19} parent=11 // pred_fallthru
        _
    $region12: #{bs_roformer_forward.19} parent=5 // pred_fallthru
      _
    %p207 = scmp.lt.s32.totalorder %s12, 8
    // Predicated region
    $region17: #{bs_roformer_forward.19} parent=5 // pred_check
      %p208 = pneg %p207
    $region18: #{bs_roformer_forward.19} parent=5 // pred_check_branch
      %210 = sbr.rel (%p208) target = $region20
    $region19: #{bs_roformer_forward.19} parent=5 // pred_region
      // Predicated region
      $region21: #{bs_roformer_forward.19} parent=19 // pred_check
        %p211 = pneg %p32
      $region22: #{bs_roformer_forward.19} parent=19 // pred_check_branch
        %213 = sbr.rel (%p211) target = $region24
      $region23: #{bs_roformer_forward.19} parent=19 // pred_region
        %p214 = scmp.lt.s32.totalorder %s12, 7
        %s215 = scalar_select %p214, %s12, 7
        %s216 = smul.addr %s215, 9
        %s217 = smul.addr %s216, 8
        %s218 = scalar_lea.vmem %s0, %s217
      $region24: #{bs_roformer_forward.19} parent=19 // pred_fallthru
        _
      // Predicated region
      $region25: #{bs_roformer_forward.19} parent=19 // pred_check
        %p219 = pneg %p79
      $region26: #{bs_roformer_forward.19} parent=19 // pred_check_branch
        %221 = sbr.rel (%p219) target = $region28
      $region27: #{bs_roformer_forward.19} parent=19 // pred_region
        %p222 = scmp.lt.s32.totalorder %s12, 7
        %s223 = scalar_select %p222, %s12, 7
        %s224 = smul.addr %s223, 4
        %s225 = smul.addr %s224, 4
        %s226 = scalar_lea.vmem %s2, %s225
      $region28: #{bs_roformer_forward.19} parent=19 // pred_fallthru
        _
      // Predicated region
      $region29: #{bs_roformer_forward.19} parent=19 // pred_check
        %p227 = pneg %p105
      $region30: #{bs_roformer_forward.19} parent=19 // pred_check_branch
        %229 = sbr.rel (%p227) target = $region32
      $region31: #{bs_roformer_forward.19} parent=19 // pred_region
        %p230 = scmp.lt.s32.totalorder %s12, 7
        %s231 = scalar_select %p230, %s12, 7
        %s232 = scalar_lea.vmem %s3, %s231
      $region32: #{bs_roformer_forward.19} parent=19 // pred_fallthru
        _
      // Predicated region
      $region33: #{bs_roformer_forward.19} parent=19 // pred_check
        %p233 = pneg %p131
      $region34: #{bs_roformer_forward.19} parent=19 // pred_check_branch
        %235 = sbr.rel (%p233) target = $region36
      $region35: #{bs_roformer_forward.19} parent=19 // pred_region
        %p236 = scmp.lt.s32.totalorder %s12, 7
        %s237 = scalar_select %p236, %s12, 7
        %s238 = smul.addr %s237, 16
        %s239 = smul.addr %s238, 4
        %s240 = scalar_lea.vmem %s4, %s239
      $region36: #{bs_roformer_forward.19} parent=19 // pred_fallthru
        _
      // Predicated region
      $region37: #{bs_roformer_forward.19} parent=19 // pred_check
        %p241 = pneg %p157
      $region38: #{bs_roformer_forward.19} parent=19 // pred_check_branch
        %243 = sbr.rel (%p241) target = $region40
      $region39: #{bs_roformer_forward.19} parent=19 // pred_region
        %p244 = scmp.lt.s32.totalorder %s12, 7
        %s245 = scalar_select %p244, %s12, 7
        %s246 = scalar_lea.vmem %s5, %s245
      $region40: #{bs_roformer_forward.19} parent=19 // pred_fallthru
        _
    $region20: #{bs_roformer_forward.19} parent=5 // pred_fallthru
      _
    %p247 = scmp.le.s32.totalorder 1, %s12
    %p248 = scmp.lt.s32.totalorder %s12, 9
    %p249 = pnand %p247, %p248
    %p250 = pneg %p249
    // Predicated region
    $region41: #{bs_roformer_forward.19} parent=5 // pred_check
      _
    $region42: #{bs_roformer_forward.19} parent=5 // pred_check_branch
      %252 = sbr.rel (%p249) target = $region44
    $region43: #{bs_roformer_forward.19} parent=5 // pred_region
      %s253 = ssub.s32 %s12, 1
      %p254 = scmp.lt.s32.totalorder %s17, 7
      %s255 = scalar_select %p254, %s17, 7
      %s256 = smul.addr %s255, 9
      %s257 = smul.addr %s256, 8
      %s258 = scalar_lea.vmem %s0, %s257
      %p259 = pneg %p38
      %p260 = pneg %p35
      %p261 = pneg %p59
      %p262 = pneg %p56
      %p263 = scmp.lt.s32.totalorder %s17, 7
      %s264 = scalar_select %p263, %s17, 7
      %s265 = smul.addr %s264, 4
      %s266 = smul.addr %s265, 4
      %s267 = scalar_lea.vmem %s2, %s266
      %p268 = pneg %p85
      %p269 = pneg %p82
      %p270 = scmp.lt.s32.totalorder %s17, 7
      %s271 = scalar_select %p270, %s17, 7
      %s272 = scalar_lea.vmem %s3, %s271
      %p273 = pneg %p111
      %p274 = pneg %p108
      %p275 = scmp.lt.s32.totalorder %s17, 7
      %s276 = scalar_select %p275, %s17, 7
      %s277 = smul.addr %s276, 16
      %s278 = smul.addr %s277, 4
      %s279 = scalar_lea.vmem %s4, %s278
      %p280 = pneg %p137
      %p281 = pneg %p134
      %p282 = scmp.lt.s32.totalorder %s17, 7
      %s283 = scalar_select %p282, %s17, 7
      %s284 = scalar_lea.vmem %s5, %s283
      %p285 = pneg %p163
      %p286 = pneg %p160
      %p287 = pneg %p189
      %p288 = pneg %p186
      %p289 = scmp.lt.s32.totalorder %s17, 7
      %s290 = scalar_select %p289, %s17, 7
      %s291 = smul.addr %s290, 9
      %s292 = smul.addr %s291, 8
      %s293 = scalar_lea.vmem %s6, %s292
      %p294 = scmp.lt.s32.totalorder %s17, 7
      %s295 = scalar_select %p294, %s17, 7
      %s296 = smul.addr %s295, 9
      %s297 = smul.addr %s296, 8
      %s298 = scalar_lea.vmem %s0, %s297
      %p299 = scmp.lt.s32.totalorder %s17, 7
      %s300 = scalar_select %p299, %s17, 7
      %s301 = smul.addr %s300, 4
      %s302 = smul.addr %s301, 4
      %s303 = scalar_lea.vmem %s2, %s302
      %p304 = scmp.lt.s32.totalorder %s17, 7
      %s305 = scalar_select %p304, %s17, 7
      %s306 = scalar_lea.vmem %s3, %s305
      %p307 = scmp.lt.s32.totalorder %s17, 7
      %s308 = scalar_select %p307, %s17, 7
      %s309 = smul.addr %s308, 16
      %s310 = smul.addr %s309, 4
      %s311 = scalar_lea.vmem %s4, %s310
      %p312 = scmp.lt.s32.totalorder %s17, 7
      %s313 = scalar_select %p312, %s17, 7
      %s314 = scalar_lea.vmem %s5, %s313
      %p315 = scmp.lt.s32.totalorder %s17, 7
      %s316 = scalar_select %p315, %s17, 7
      %s317 = smul.addr %s316, 9
      %s318 = smul.addr %s317, 8
      %s319 = scalar_lea.vmem %s6, %s318
      %v321 = vld [vmem:[%s298] sm:$0xff]
      %v322 = vld [vmem:[%s298 + $0x8] sm:$0xff]
      %v323 = vld [vmem:[%s298 + $0x10] sm:$0xff]
      %v324 = vld [vmem:[%s298 + $0x18] sm:$0xff]
      %v325 = vld [vmem:[%s298 + $0x20] sm:$0xff]
      %v326 = vld [vmem:[%s298 + $0x28] sm:$0xff]
      %v327 = vld [vmem:[%s298 + $0x30] sm:$0xff]
      %v328 = vld [vmem:[%s298 + $0x38] sm:$0xff]
      %v329 = vld [vmem:[%s298 + $0x40] sm:$0x3]
      %v330 = vmul.f32 %v321, %v321
      %v331 = vmul.f32 %v322, %v322
      %v332 = vmul.f32 %v323, %v323
      %v333 = vmul.f32 %v324, %v324
      %v334 = vmul.f32 %v325, %v325
      %v335 = vmul.f32 %v326, %v326
      %v336 = vmul.f32 %v327, %v327
      %v337 = vmul.f32 %v328, %v328
      %v338 = vmul.f32 %v329, %v329
      %vm339 = vcmask 261120
      %v340 = vsel %vm339, %v330, 0.0
      %341 = vadd.xlane.f32.xlu0 %v340
      %v342 = vpop.xlane.xlu0 %341
      %v343 = vsel %vm339, %v331, 0.0
      %344 = vadd.xlane.f32.xlu0 %v343
      %v345 = vpop.xlane.xlu0 %344
      %v346 = vsel %vm339, %v332, 0.0
      %347 = vadd.xlane.f32.xlu0 %v346
      %v348 = vpop.xlane.xlu0 %347
      %v349 = vsel %vm339, %v333, 0.0
      %350 = vadd.xlane.f32.xlu0 %v349
      %v351 = vpop.xlane.xlu0 %350
      %v352 = vsel %vm339, %v334, 0.0
      %353 = vadd.xlane.f32.xlu0 %v352
      %v354 = vpop.xlane.xlu0 %353
      %v355 = vsel %vm339, %v335, 0.0
      %356 = vadd.xlane.f32.xlu0 %v355
      %v357 = vpop.xlane.xlu0 %356
      %v358 = vsel %vm339, %v336, 0.0
      %359 = vadd.xlane.f32.xlu0 %v358
      %v360 = vpop.xlane.xlu0 %359
      %v361 = vsel %vm339, %v337, 0.0
      %362 = vadd.xlane.f32.xlu0 %v361
      %v363 = vpop.xlane.xlu0 %362
      %vm364 = vcmask 254976
      %v365 = vsel %vm364, %v338, 0.0
      %366 = vadd.xlane.f32.xlu0 %v365
      %v367 = vpop.xlane.xlu0 %366
      %v368 = vrsqrt.pop %v342
      %v369 = vmul.f32 %v342, %v368
      %vm370 = vcmp.eq.f32.partialorder %v342, inf
      %v371 = vsel %vm370, %v342, %v369
      %vm372 = vcmp.eq.f32.partialorder %v342, 0.0
      %v373 = vand.u32 %v342, 2147483648
      %v374 = vsel %vm372, %v373, %v371
      %v375 = vrsqrt.pop %v345
      %v376 = vmul.f32 %v345, %v375
      %vm377 = vcmp.eq.f32.partialorder %v345, inf
      %v378 = vsel %vm377, %v345, %v376
      %vm379 = vcmp.eq.f32.partialorder %v345, 0.0
      %v380 = vand.u32 %v345, 2147483648
      %v381 = vsel %vm379, %v380, %v378
      %v382 = vrsqrt.pop %v348
      %v383 = vmul.f32 %v348, %v382
      %vm384 = vcmp.eq.f32.partialorder %v348, inf
      %v385 = vsel %vm384, %v348, %v383
      %vm386 = vcmp.eq.f32.partialorder %v348, 0.0
      %v387 = vand.u32 %v348, 2147483648
      %v388 = vsel %vm386, %v387, %v385
      %v389 = vrsqrt.pop %v351
      %v390 = vmul.f32 %v351, %v389
      %vm391 = vcmp.eq.f32.partialorder %v351, inf
      %v392 = vsel %vm391, %v351, %v390
      %vm393 = vcmp.eq.f32.partialorder %v351, 0.0
      %v394 = vand.u32 %v351, 2147483648
      %v395 = vsel %vm393, %v394, %v392
      %v396 = vrsqrt.pop %v354
      %v397 = vmul.f32 %v354, %v396
      %vm398 = vcmp.eq.f32.partialorder %v354, inf
      %v399 = vsel %vm398, %v354, %v397
      %vm400 = vcmp.eq.f32.partialorder %v354, 0.0
      %v401 = vand.u32 %v354, 2147483648
      %v402 = vsel %vm400, %v401, %v399
      %v403 = vrsqrt.pop %v357
      %v404 = vmul.f32 %v357, %v403
      %vm405 = vcmp.eq.f32.partialorder %v357, inf
      %v406 = vsel %vm405, %v357, %v404
      %vm407 = vcmp.eq.f32.partialorder %v357, 0.0
      %v408 = vand.u32 %v357, 2147483648
      %v409 = vsel %vm407, %v408, %v406
      %v410 = vrsqrt.pop %v360
      %v411 = vmul.f32 %v360, %v410
      %vm412 = vcmp.eq.f32.partialorder %v360, inf
      %v413 = vsel %vm412, %v360, %v411
      %vm414 = vcmp.eq.f32.partialorder %v360, 0.0
      %v415 = vand.u32 %v360, 2147483648
      %v416 = vsel %vm414, %v415, %v413
      %v417 = vrsqrt.pop %v363
      %v418 = vmul.f32 %v363, %v417
      %vm419 = vcmp.eq.f32.partialorder %v363, inf
      %v420 = vsel %vm419, %v363, %v418
      %vm421 = vcmp.eq.f32.partialorder %v363, 0.0
      %v422 = vand.u32 %v363, 2147483648
      %v423 = vsel %vm421, %v422, %v420
      %v424 = vrsqrt.pop %v367
      %v425 = vmul.f32 %v367, %v424
      %vm426 = vcmp.eq.f32.partialorder %v367, inf
      %v427 = vsel %vm426, %v367, %v425
      %vm428 = vcmp.eq.f32.partialorder %v367, 0.0
      %v429 = vand.u32 %v367, 2147483648
      %v430 = vsel %vm428, %v429, %v427
      %v431 = vmax.f32 %v374, 1e-12
      %v432 = vmax.f32 %v381, 1e-12
      %v433 = vmax.f32 %v388, 1e-12
      %v434 = vmax.f32 %v395, 1e-12
      %v435 = vmax.f32 %v402, 1e-12
      %v436 = vmax.f32 %v409, 1e-12
      %v437 = vmax.f32 %v416, 1e-12
      %v438 = vmax.f32 %v423, 1e-12
      %v439 = vmax.f32 %v430, 1e-12
      %v440 = vrcp.pop %v431
      %v441 = vmul.f32 %v321, %v440
      %v442 = vrcp.pop %v432
      %v443 = vmul.f32 %v322, %v442
      %v444 = vrcp.pop %v433
      %v445 = vmul.f32 %v323, %v444
      %v446 = vrcp.pop %v434
      %v447 = vmul.f32 %v324, %v446
      %v448 = vrcp.pop %v435
      %v449 = vmul.f32 %v325, %v448
      %v450 = vrcp.pop %v436
      %v451 = vmul.f32 %v326, %v450
      %v452 = vrcp.pop %v437
      %v453 = vmul.f32 %v327, %v452
      %v454 = vrcp.pop %v438
      %v455 = vmul.f32 %v328, %v454
      %v456 = vrcp.pop %v439
      %v457 = vmul.f32 %v329, %v456
      %v458 = vld [vmem:[%s1] sm:$0x1]
      %v460 = vlaneseq
      %v461 = vshrl.u32 %v460, 7
      %v462 = vsub.s32 0, %v461
      %v463 = vrot.slane %v458, %v462
      %v465 = vmul.f32 %v441, %v463
      %v466 = vmul.f32 %v443, %v463
      %v467 = vmul.f32 %v445, %v463
      %v468 = vmul.f32 %v447, %v463
      %v469 = vmul.f32 %v449, %v463
      %v470 = vmul.f32 %v451, %v463
      %v471 = vmul.f32 %v453, %v463
      %v472 = vmul.f32 %v455, %v463
      %v473 = vmul.f32 %v457, %v463
      %v474 = vpack.c.bf16 %v466, %v465
      %v475 = vpack.c.bf16 %v468, %v467
      %v476 = vpack.c.bf16 %v470, %v469
      %v477 = vpack.c.bf16 %v472, %v471
      %v478 = vpack.c.bf16 %v473, %v473
      %v479 = vld [vmem:[%s303] sm:$0xf]
      %v480 = vld [vmem:[%s303 + $0x4] sm:$0xf]
      %v481 = vld [vmem:[%s303 + $0x8] sm:$0xf]
      %v482 = vld [vmem:[%s303 + $0xc] sm:$0xf]
      %v483 = vld [vmem:[%s306] sm:$0x1]
      %v485 = vlaneseq
      %v486 = vshrl.u32 %v485, 7
      %v487 = vsub.s32 0, %v486
      %v488 = vrot.slane %v483, %v487
      %v494 = vunpack.c.l.b16 %v479
      %v495 = vunpack.c.l.b16 %v480
      %v496 = vunpack.c.l.b16 %v481
      %v497 = vunpack.c.l.b16 %v482
      %v498 = vpack.c.b16 %v495, %v494
      %v499 = vpack.c.b16 %v497, %v496
      %v503 = vsel %vm339, %v474, 0
      %v506 = vsel %vm339, %v475, 0
      %v509 = vsel %vm339, %v476, 0
      %v512 = vsel %vm339, %v477, 0
      %v515 = vsel %vm339, %v478, 0
      %517 = vmatprep.subr.bf16.mxu0 0
      %518 = vmatpush1.bf16.msra.mxu0 %v498
      %519 = vmatprep.subr.bf16.mxu0 0
      %520 = vmatpush1.bf16.msra.mxu0 %v499
      %521 = vmatprep.subr.bf16.mxu0 0
      %522 = vmatpush1.bf16.msra.mxu0 0
      %523 = vmatprep.subr.bf16.mxu0 0
      %524 = vmatpush1.bf16.msra.mxu0 0
      %525 = vmatprep.subr.bf16.mxu0 0
      %526 = vmatpush1.bf16.msra.mxu0 0
      %527 = vmatprep.subr.bf16.mxu0 0
      %528 = vmatpush1.bf16.msra.mxu0 0
      %529 = vmatprep.subr.bf16.mxu0 0
      %530 = vmatpush1.bf16.msra.mxu0 0
      %531 = vmatprep.subr.bf16.mxu0 0
      %532 = vmatpush1.bf16.msra.mxu0 0
      %533 = vmatprep.subr.bf16.mxu0 0
      %534 = vmatpush1.bf16.msra.mxu0 0
      %535 = vmatprep.subr.bf16.mxu0 0
      %536 = vmatpush1.bf16.msra.mxu0 0
      %537 = vmatprep.subr.bf16.mxu0 0
      %538 = vmatpush1.bf16.msra.mxu0 0
      %539 = vmatprep.subr.bf16.mxu0 0
      %540 = vmatpush1.bf16.msra.mxu0 0
      %541 = vmatprep.subr.bf16.mxu0 0
      %542 = vmatpush1.bf16.msra.mxu0 0
      %543 = vmatprep.subr.bf16.mxu0 0
      %544 = vmatpush1.bf16.msra.mxu0 0
      %545 = vmatprep.subr.bf16.mxu0 0
      %546 = vmatpush1.bf16.msra.mxu0 0
      %547 = vmatprep.subr.bf16.mxu0 0
      %548 = vmatpush1.bf16.msra.mxu0 0
      %549 = vmatprep.mubr.bf16.mxu0 0
      %550 = vmatmul.mubr.bf16.gmra.mrb[0].mxu0 %v503
      %v551 = vpop.f32.mrb[0].mxu0
      %v552 = vadd.f32 %v488, %v551
      %v553 = vpop.f32.mrb[0].mxu0
      %v554 = vpop.f32.mrb[0].mxu0
      %v555 = vadd.f32 %v488, %v554
      %v556 = vpop.f32.mrb[0].mxu0
      %557 = vmatprep.mubr.bf16.mxu0 0
      %558 = vmatmul.mubr.bf16.gmra.mrb[0].mxu0 %v506
      %v559 = vpop.f32.mrb[0].mxu0
      %v560 = vadd.f32 %v488, %v559
      %v561 = vpop.f32.mrb[0].mxu0
      %v562 = vpop.f32.mrb[0].mxu0
      %v563 = vadd.f32 %v488, %v562
      %v564 = vpop.f32.mrb[0].mxu0
      %565 = vmatprep.mubr.bf16.mxu0 0
      %566 = vmatmul.mubr.bf16.gmra.mrb[0].mxu0 %v509
      %v567 = vpop.f32.mrb[0].mxu0
      %v568 = vadd.f32 %v488, %v567
      %v569 = vpop.f32.mrb[0].mxu0
      %v570 = vpop.f32.mrb[0].mxu0
      %v571 = vadd.f32 %v488, %v570
      %v572 = vpop.f32.mrb[0].mxu0
      %573 = vmatprep.mubr.bf16.mxu0 0
      %574 = vmatmul.mubr.bf16.gmra.mrb[0].mxu0 %v512
      %v575 = vpop.f32.mrb[0].mxu0
      %v576 = vadd.f32 %v488, %v575
      %v577 = vpop.f32.mrb[0].mxu0
      %v578 = vpop.f32.mrb[0].mxu0
      %v579 = vadd.f32 %v488, %v578
      %v580 = vpop.f32.mrb[0].mxu0
      %581 = vmatprep.mubr.bf16.mxu0 0
      %582 = vmatmul.mubr.bf16.gmra.mrb[0].mxu0 %v515
      %v583 = vpop.f32.mrb[0].mxu0
      %v584 = vadd.f32 %v488, %v583
      %v585 = vpop.f32.mrb[0].mxu0
      %v586 = vpop.f32.mrb[0].mxu0
      %v587 = vpop.f32.mrb[0].mxu0
      %588 = vdwg.mxu0
      %v589 = vtanh.pop %v552
      %v590 = vtanh.pop %v555
      %v591 = vtanh.pop %v560
      %v592 = vtanh.pop %v563
      %v593 = vtanh.pop %v568
      %v594 = vtanh.pop %v571
      %v595 = vtanh.pop %v576
      %v596 = vtanh.pop %v579
      %v597 = vtanh.pop %v584
      %v598 = vpack.c.bf16 %v590, %v589
      %v599 = vpack.c.bf16 %v592, %v591
      %v600 = vpack.c.bf16 %v594, %v593
      %v601 = vpack.c.bf16 %v596, %v595
      %v602 = vpack.c.bf16 %v597, %v597
      %v603 = vld [vmem:[%s311] sm:$0xf]
      %v604 = vld [vmem:[%s311 + $0x4] sm:$0xf]
      %v605 = vld [vmem:[%s311 + $0x8] sm:$0xf]
      %v606 = vld [vmem:[%s311 + $0xc] sm:$0xf]
      %v607 = vld [vmem:[%s311 + $0x10] sm:$0xf]
      %v608 = vld [vmem:[%s311 + $0x14] sm:$0xf]
      %v609 = vld [vmem:[%s311 + $0x18] sm:$0xf]
      %v610 = vld [vmem:[%s311 + $0x1c] sm:$0xf]
      %v611 = vld [vmem:[%s311 + $0x20] sm:$0xf]
      %v612 = vld [vmem:[%s311 + $0x24] sm:$0xf]
      %v613 = vld [vmem:[%s311 + $0x28] sm:$0xf]
      %v614 = vld [vmem:[%s311 + $0x2c] sm:$0xf]
      %v615 = vld [vmem:[%s311 + $0x30] sm:$0xf]
      %v616 = vld [vmem:[%s311 + $0x34] sm:$0xf]
      %v617 = vld [vmem:[%s311 + $0x38] sm:$0xf]
      %v618 = vld [vmem:[%s311 + $0x3c] sm:$0xf]
      %v619 = vld [vmem:[%s314] sm:$0x1]
      %v621 = vlaneseq
      %v622 = vshrl.u32 %v621, 7
      %v623 = vsub.s32 0, %v622
      %v624 = vrot.slane %v619, %v623
      %v642 = vunpack.c.l.b16 %v603
      %v643 = vunpack.c.l.b16 %v604
      %v644 = vunpack.c.l.b16 %v605
      %v645 = vunpack.c.l.b16 %v606
      %v646 = vunpack.c.l.b16 %v607
      %v647 = vunpack.c.l.b16 %v608
      %v648 = vunpack.c.l.b16 %v609
      %v649 = vunpack.c.l.b16 %v610
      %v650 = vunpack.c.l.b16 %v611
      %v651 = vunpack.c.l.b16 %v612
      %v652 = vunpack.c.l.b16 %v613
      %v653 = vunpack.c.l.b16 %v614
      %v654 = vunpack.c.l.b16 %v615
      %v655 = vunpack.c.l.b16 %v616
      %v656 = vunpack.c.l.b16 %v617
      %v657 = vunpack.c.l.b16 %v618
      %v658 = vpack.c.b16 %v643, %v642
      %v659 = vpack.c.b16 %v645, %v644
      %v660 = vpack.c.b16 %v647, %v646
      %v661 = vpack.c.b16 %v649, %v648
      %v662 = vpack.c.b16 %v651, %v650
      %v663 = vpack.c.b16 %v653, %v652
      %v664 = vpack.c.b16 %v655, %v654
      %v665 = vpack.c.b16 %v657, %v656
      %674 = vmatprep.subr.bf16.mxu0 0
      %675 = vmatpush1.bf16.msra.mxu0 %v658
      %676 = vmatprep.subr.bf16.mxu0 0
      %677 = vmatpush1.bf16.msra.mxu0 %v659
      %678 = vmatprep.subr.bf16.mxu0 0
      %679 = vmatpush1.bf16.msra.mxu0 %v660
      %680 = vmatprep.subr.bf16.mxu0 0
      %681 = vmatpush1.bf16.msra.mxu0 %v661
      %682 = vmatprep.subr.bf16.mxu0 0
      %683 = vmatpush1.bf16.msra.mxu0 %v662
      %684 = vmatprep.subr.bf16.mxu0 0
      %685 = vmatpush1.bf16.msra.mxu0 %v663
      %686 = vmatprep.subr.bf16.mxu0 0
      %687 = vmatpush1.bf16.msra.mxu0 %v664
      %688 = vmatprep.subr.bf16.mxu0 0
      %689 = vmatpush1.bf16.msra.mxu0 %v665
      %690 = vmatprep.subr.bf16.mxu0 0
      %691 = vmatpush1.bf16.msra.mxu0 0
      %692 = vmatprep.subr.bf16.mxu0 0
      %693 = vmatpush1.bf16.msra.mxu0 0
      %694 = vmatprep.subr.bf16.mxu0 0
      %695 = vmatpush1.bf16.msra.mxu0 0
      %696 = vmatprep.subr.bf16.mxu0 0
      %697 = vmatpush1.bf16.msra.mxu0 0
      %698 = vmatprep.subr.bf16.mxu0 0
      %699 = vmatpush1.bf16.msra.mxu0 0
      %700 = vmatprep.subr.bf16.mxu0 0
      %701 = vmatpush1.bf16.msra.mxu0 0
      %702 = vmatprep.subr.bf16.mxu0 0
      %703 = vmatpush1.bf16.msra.mxu0 0
      %704 = vmatprep.subr.bf16.mxu0 0
      %705 = vmatpush1.bf16.msra.mxu0 0
      %706 = vmatprep.mubr.bf16.mxu0 0
      %707 = vmatmul.mubr.bf16.gmra.mrb[0].mxu0 %v598
      %v708 = vpop.f32.mrb[0].mxu0
      %v709 = vadd.f32 %v624, %v708
      %v710 = vpop.f32.mrb[0].mxu0
      %v711 = vpop.f32.mrb[0].mxu0
      %v712 = vadd.f32 %v624, %v711
      %v713 = vpop.f32.mrb[0].mxu0
      %714 = vmatprep.mubr.bf16.mxu0 0
      %715 = vmatmul.mubr.bf16.gmra.mrb[0].mxu0 %v599
      %v716 = vpop.f32.mrb[0].mxu0
      %v717 = vadd.f32 %v624, %v716
      %v718 = vpop.f32.mrb[0].mxu0
      %v719 = vpop.f32.mrb[0].mxu0
      %v720 = vadd.f32 %v624, %v719
      %v721 = vpop.f32.mrb[0].mxu0
      %722 = vmatprep.mubr.bf16.mxu0 0
      %723 = vmatmul.mubr.bf16.gmra.mrb[0].mxu0 %v600
      %v724 = vpop.f32.mrb[0].mxu0
      %v725 = vadd.f32 %v624, %v724
      %v726 = vpop.f32.mrb[0].mxu0
      %v727 = vpop.f32.mrb[0].mxu0
      %v728 = vadd.f32 %v624, %v727
      %v729 = vpop.f32.mrb[0].mxu0
      %730 = vmatprep.mubr.bf16.mxu0 0
      %731 = vmatmul.mubr.bf16.gmra.mrb[0].mxu0 %v601
      %v732 = vpop.f32.mrb[0].mxu0
      %v733 = vadd.f32 %v624, %v732
      %v734 = vpop.f32.mrb[0].mxu0
      %v735 = vpop.f32.mrb[0].mxu0
      %v736 = vadd.f32 %v624, %v735
      %v737 = vpop.f32.mrb[0].mxu0
      %738 = vmatprep.mubr.bf16.mxu0 0
      %739 = vmatmul.mubr.bf16.gmra.mrb[0].mxu0 %v602
      %v740 = vpop.f32.mrb[0].mxu0
      %v741 = vadd.f32 %v624, %v740
      %v742 = vpop.f32.mrb[0].mxu0
      %v743 = vpop.f32.mrb[0].mxu0
      %v744 = vpop.f32.mrb[0].mxu0
      %745 = vdwg.mxu0
      %v746 = vxor.u32 %v709, 2147483648
      %v747 = vxor.u32 %v712, 2147483648
      %v748 = vxor.u32 %v717, 2147483648
      %v749 = vxor.u32 %v720, 2147483648
      %v750 = vxor.u32 %v725, 2147483648
      %v751 = vxor.u32 %v728, 2147483648
      %v752 = vxor.u32 %v733, 2147483648
      %v753 = vxor.u32 %v736, 2147483648
      %v754 = vxor.u32 %v741, 2147483648
      %v755 = vmul.f32 %v746, 1.442695
      %v756 = vpow.pop %v755
      %v757 = vmul.f32 %v747, 1.442695
      %v758 = vpow.pop %v757
      %v759 = vmul.f32 %v748, 1.442695
      %v760 = vpow.pop %v759
      %v761 = vmul.f32 %v749, 1.442695
      %v762 = vpow.pop %v761
      %v763 = vmul.f32 %v750, 1.442695
      %v764 = vpow.pop %v763
      %v765 = vmul.f32 %v751, 1.442695
      %v766 = vpow.pop %v765
      %v767 = vmul.f32 %v752, 1.442695
      %v768 = vpow.pop %v767
      %v769 = vmul.f32 %v753, 1.442695
      %v770 = vpow.pop %v769
      %v771 = vmul.f32 %v754, 1.442695
      %v772 = vpow.pop %v771
      %v773 = vadd.f32 %v756, 1.0
      %v774 = vadd.f32 %v758, 1.0
      %v775 = vadd.f32 %v760, 1.0
      %v776 = vadd.f32 %v762, 1.0
      %v777 = vadd.f32 %v764, 1.0
      %v778 = vadd.f32 %v766, 1.0
      %v779 = vadd.f32 %v768, 1.0
      %v780 = vadd.f32 %v770, 1.0
      %v781 = vadd.f32 %v772, 1.0
      %v782 = vrcp.pop %v773
      %v783 = vmul.f32 1.0, %v782
      %v784 = vrcp.pop %v774
      %v785 = vmul.f32 1.0, %v784
      %v786 = vrcp.pop %v775
      %v787 = vmul.f32 1.0, %v786
      %v788 = vrcp.pop %v776
      %v789 = vmul.f32 1.0, %v788
      %v790 = vrcp.pop %v777
      %v791 = vmul.f32 1.0, %v790
      %v792 = vrcp.pop %v778
      %v793 = vmul.f32 1.0, %v792
      %v794 = vrcp.pop %v779
      %v795 = vmul.f32 1.0, %v794
      %v796 = vrcp.pop %v780
      %v797 = vmul.f32 1.0, %v796
      %v798 = vrcp.pop %v781
      %v799 = vmul.f32 1.0, %v798
      %809 = vrot.lane.b32.xlu0 %v783, 122
      %v810 = vpop.permute.xlu0 %809
      %811 = vrot.lane.b32.xlu0 %v785, 122
      %v812 = vpop.permute.xlu0 %811
      %813 = vrot.lane.b32.xlu0 %v787, 122
      %v814 = vpop.permute.xlu0 %813
      %815 = vrot.lane.b32.xlu0 %v789, 122
      %v816 = vpop.permute.xlu0 %815
      %817 = vrot.lane.b32.xlu0 %v791, 122
      %v818 = vpop.permute.xlu0 %817
      %819 = vrot.lane.b32.xlu0 %v793, 122
      %v820 = vpop.permute.xlu0 %819
      %821 = vrot.lane.b32.xlu0 %v795, 122
      %v822 = vpop.permute.xlu0 %821
      %823 = vrot.lane.b32.xlu0 %v797, 122
      %v824 = vpop.permute.xlu0 %823
      %825 = vrot.lane.b32.xlu0 %v799, 122
      %v826 = vpop.permute.xlu0 %825
      %v836 = vmul.f32 %v709, %v810
      %v837 = vmul.f32 %v712, %v812
      %v838 = vmul.f32 %v717, %v814
      %v839 = vmul.f32 %v720, %v816
      %v840 = vmul.f32 %v725, %v818
      %v841 = vmul.f32 %v728, %v820
      %v842 = vmul.f32 %v733, %v822
      %v843 = vmul.f32 %v736, %v824
      %v844 = vmul.f32 %v741, %v826
      %vm845 = vcmask 48128
      %846 = vst.msk [vmem:[%s319] sm:$0xff] %vm845, %v836
      %847 = vst.msk [vmem:[%s319 + $0x8] sm:$0xff] %vm845, %v837
      %848 = vst.msk [vmem:[%s319 + $0x10] sm:$0xff] %vm845, %v838
      %849 = vst.msk [vmem:[%s319 + $0x18] sm:$0xff] %vm845, %v839
      %850 = vst.msk [vmem:[%s319 + $0x20] sm:$0xff] %vm845, %v840
      %851 = vst.msk [vmem:[%s319 + $0x28] sm:$0xff] %vm845, %v841
      %852 = vst.msk [vmem:[%s319 + $0x30] sm:$0xff] %vm845, %v842
      %853 = vst.msk [vmem:[%s319 + $0x38] sm:$0xff] %vm845, %v843
      %vm854 = vcmask 41984
      %855 = vst.msk [vmem:[%s319 + $0x40] sm:$0x3] %vm854, %v844
      %p856 = scmp.lt.s32.totalorder %s17, 7
      %s857 = scalar_select %p856, %s17, 7
      %s858 = smul.addr %s857, 9
      %s859 = smul.addr %s858, 8
      %s860 = scalar_lea.vmem %s6, %s859
      // Predicated region
      $region45: #{bs_roformer_forward.19} parent=43 // pred_check
        %p861 = pneg %p186
      $region46: #{bs_roformer_forward.19} parent=43 // pred_check_branch
        %863 = sbr.rel (%p861) target = $region48
      $region47: #{bs_roformer_forward.19} parent=43 // pred_region
        _
      $region48: #{bs_roformer_forward.19} parent=43 // pred_fallthru
        _
    $region44: #{bs_roformer_forward.19} parent=5 // pred_fallthru
      _
    %p864 = scmp.le.s32.totalorder 2, %s12
    // Predicated region
    $region49: #{bs_roformer_forward.19} parent=5 // pred_check
      %p865 = pneg %p864
    $region50: #{bs_roformer_forward.19} parent=5 // pred_check_branch
      %867 = sbr.rel (%p865) target = $region52
    $region51: #{bs_roformer_forward.19} parent=5 // pred_region
      %s868 = ssub.s32 %s12, 2
      // Predicated region
      $region53: #{bs_roformer_forward.19} parent=51 // pred_check
        %p869 = pneg %p192
      $region54: #{bs_roformer_forward.19} parent=51 // pred_check_branch
        %871 = sbr.rel (%p869) target = $region56
      $region55: #{bs_roformer_forward.19} parent=51 // pred_region
        %p872 = scmp.lt.s32.totalorder %s18, 7
        %s873 = scalar_select %p872, %s18, 7
        %s874 = smul.addr %s873, 9
        %s875 = smul.addr %s874, 8
        %s876 = scalar_lea.vmem %s6, %s875
      $region56: #{bs_roformer_forward.19} parent=51 // pred_fallthru
        _
    $region52: #{bs_roformer_forward.19} parent=5 // pred_fallthru
      _
  $region6: #{bs_roformer_forward.19} parent=0 // loop_footer
    %s16 = sadd.s32 1, %s12
  $region7: #{bs_roformer_forward.19} parent=0 // loop_footer_branch
    %11 = sbr.rel target = $region3
  $region8: #{bs_roformer_forward.19} parent=0 // loop_exit
    _

// kernel: reverse.0
$region0: #{reverse.0}
  %s0 = inlined_call_operand.vmem [shape: f32[2,33,15], index: 0, kind: input, shape index: {}]
  %s1 = inlined_call_operand.vmem [shape: f32[2,33,15], index: 1, kind: output, shape index: {}]
  $region1: #{reverse.0} parent=0
    #allocation0 [shape = 'u8[24576]{0}', space=vmem, size = 0x6000, scoped, tag = 'operand span for operand 0']
    #allocation1 [shape = 'u8[16384]{0}', space=vmem, size = 0x4000, scoped, tag = 'operand span for operand 1']
    %s2 = scalar_lea.vmem [#allocation0], 8
    // Predicated region
    $region2: #{reverse.0} parent=1 // pred_check
      _
    $region3: #{reverse.0} parent=1 // pred_check_branch
      %4 = sbr.rel (0) target = $region5
    $region4: #{reverse.0} parent=1 // pred_region
      // Predicated region
      $region6: #{reverse.0} parent=4 // pred_check
        _
      $region7: #{reverse.0} parent=4 // pred_check_branch
        %6 = sbr.rel (0) target = $region9
      $region8: #{reverse.0} parent=4 // pred_region
        // Predicated region
        $region21: #{reverse.0} parent=8 // pred_check
          _
        $region22: #{reverse.0} parent=8 // pred_check_branch
          %27 = sbr.rel (0) target = $region24
        $region23: #{reverse.0} parent=8 // pred_region
          loop: start=0, step=1, limit=1
          $region25: #{reverse.0} parent=23 // loop_pre_header
            _
          $region26: #{reverse.0} parent=23 // loop_header
            %s29 = sphi 0, %s33
            %p30 = scmp.ge.s32.totalorder %s29, 1
            %s34 = sphi %s0, %s0
            %s35 = sphi %s2, %s2
          $region27: #{reverse.0} parent=23 // loop_header_branch
            %32 = sbr.rel (%p30) target = $region31
          $region28: #{reverse.0} parent=23 // loop_body
            %v36 = vld [vmem:[%s34] sm:$0xff]
            %37 = vst [vmem:[%s35] sm:$0xff] %v36
            %v38 = vld [vmem:[%s34 + $0x8] sm:$0xff]
            %39 = vst [vmem:[%s35 + $0x8] sm:$0xff] %v38
            %v40 = vld [vmem:[%s34 + $0x10] sm:$0xff]
            %41 = vst [vmem:[%s35 + $0x18] sm:$0xff] %v40
            %v42 = vld [vmem:[%s34 + $0x18] sm:$0xff]
            %43 = vst [vmem:[%s35 + $0x20] sm:$0xff] %v42
          $region29: #{reverse.0} parent=23 // loop_footer
            %s33 = sadd.s32 1, %s29
          $region30: #{reverse.0} parent=23 // loop_footer_branch
            %28 = sbr.rel target = $region26
          $region31: #{reverse.0} parent=23 // loop_exit
            _
        $region24: #{reverse.0} parent=8 // pred_fallthru
          _
        // Predicated region
        $region32: #{reverse.0} parent=8 // pred_check
          _
        $region33: #{reverse.0} parent=8 // pred_check_branch
          %45 = sbr.rel target = $region35
        $region34: #{reverse.0} parent=8 // pred_region
          _
        $region35: #{reverse.0} parent=8 // pred_fallthru
          _
      $region9: #{reverse.0} parent=4 // pred_fallthru
        _
      // Predicated region
      $region10: #{reverse.0} parent=4 // pred_check
        _
      $region11: #{reverse.0} parent=4 // pred_check_branch
        %8 = sbr.rel target = $region13
      $region12: #{reverse.0} parent=4 // pred_region
        loop: start=0, step=1, limit=1
        $region14: #{reverse.0} parent=12 // loop_pre_header
          _
        $region15: #{reverse.0} parent=12 // loop_header
          %s11 = sphi 0, %s15
          %p12 = scmp.ge.s32.totalorder %s11, 1
          %s16 = sphi %s0, %s0
          %s17 = sphi %s2, %s2
        $region16: #{reverse.0} parent=12 // loop_header_branch
          %14 = sbr.rel (%p12) target = $region20
        $region17: #{reverse.0} parent=12 // loop_body
          %v18 = vld [vmem:[%s16] sm:$0xff]
          %19 = vst [vmem:[%s17] sm:$0xff] %v18
          %v20 = vld [vmem:[%s16 + $0x8] sm:$0xff]
          %21 = vst [vmem:[%s17 + $0x8] sm:$0xff] %v20
          %v22 = vld [vmem:[%s16 + $0x10] sm:$0xff]
          %23 = vst [vmem:[%s17 + $0x18] sm:$0xff] %v22
          %v24 = vld [vmem:[%s16 + $0x18] sm:$0xff]
          %25 = vst [vmem:[%s17 + $0x20] sm:$0xff] %v24
        $region18: #{reverse.0} parent=12 // loop_footer
          %s15 = sadd.s32 1, %s11
        $region19: #{reverse.0} parent=12 // loop_footer_branch
          %10 = sbr.rel target = $region15
        $region20: #{reverse.0} parent=12 // loop_exit
          _
      $region13: #{reverse.0} parent=4 // pred_fallthru
        _
    $region5: #{reverse.0} parent=1 // pred_fallthru
      _
    %46 = vnop
    %s47 = scalar_lea.vmem [#allocation0], 8
    %s48 = scalar_lea.vmem %s47, 7 [#allocation0]
    %v49 = vld [vmem:[%s48] ss:$-1 sm:$0xff]
    %v50 = vrot.slane %v49, 1
    %51 = vst [vmem:[#allocation1] sm:$0xff] %v50
    %s52 = scalar_lea.vmem [#allocation0], 16
    %s53 = scalar_lea.vmem %s52, 7 [#allocation0]
    %v54 = vld [vmem:[%s53] ss:$-1 sm:$0xff]
    %v55 = vrot.slane %v54, 1
    %v56 = vlaneseq
    %v57 = vshrl.u32 %v56, 7
    %vm58 = vcmp.lt.s32.totalorder %v57, 7
    %59 = vst.msk [vmem:[#allocation1] sm:$0xff] %vm58, %v55
    %s60 = scalar_lea.vmem [#allocation1], 8
    %s61 = scalar_lea.vmem [#allocation0], 7
    %v62 = vld [vmem:[%s61] ss:$-1 sm:$0xff]
    %v63 = vrot.slane %v62, 1
    %64 = vst [vmem:[%s60] sm:$0xff] %v63
    %s65 = scalar_lea.vmem [#allocation0], 8
    %s66 = scalar_lea.vmem %s65, 7 [#allocation0]
    %v67 = vld [vmem:[%s66] ss:$-1 sm:$0xff]
    %v68 = vrot.slane %v67, 1
    %v69 = vlaneseq
    %v70 = vshrl.u32 %v69, 7
    %vm71 = vcmp.lt.s32.totalorder %v70, 7
    %72 = vst.msk [vmem:[%s60] sm:$0xff] %vm71, %v68
    %s73 = scalar_lea.vmem [#allocation1], 16
    %s74 = scalar_lea.vmem [#allocation0], 24
    %s75 = scalar_lea.vmem %s74, 8 [#allocation0]
    %s76 = scalar_lea.vmem %s75, 7 [#allocation0]
    %v77 = vld [vmem:[%s76] ss:$-1 sm:$0xff]
    %v78 = vrot.slane %v77, 1
    %79 = vst [vmem:[%s73] sm:$0xff] %v78
    %s80 = scalar_lea.vmem %s74, 16 [#allocation0]
    %s81 = scalar_lea.vmem %s80, 7 [#allocation0]
    %v82 = vld [vmem:[%s81] ss:$-1 sm:$0xff]
    %v83 = vrot.slane %v82, 1
    %v84 = vlaneseq
    %v85 = vshrl.u32 %v84, 7
    %vm86 = vcmp.lt.s32.totalorder %v85, 7
    %87 = vst.msk [vmem:[%s73] sm:$0xff] %vm86, %v83
    %s88 = scalar_lea.vmem %s73, 8 [#allocation1]
    %s89 = scalar_lea.vmem %s74, 7 [#allocation0]
    %v90 = vld [vmem:[%s89] ss:$-1 sm:$0xff]
    %v91 = vrot.slane %v90, 1
    %92 = vst [vmem:[%s88] sm:$0xff] %v91
    %s93 = scalar_lea.vmem %s74, 8 [#allocation0]
    %s94 = scalar_lea.vmem %s93, 7 [#allocation0]
    %v95 = vld [vmem:[%s94] ss:$-1 sm:$0xff]
    %v96 = vrot.slane %v95, 1
    %v97 = vlaneseq
    %v98 = vshrl.u32 %v97, 7
    %vm99 = vcmp.lt.s32.totalorder %v98, 7
    %100 = vst.msk [vmem:[%s88] sm:$0xff] %vm99, %v96
    // Predicated region
    $region36: #{reverse.0} parent=1 // pred_check
      _
    $region37: #{reverse.0} parent=1 // pred_check_branch
      %102 = sbr.rel (0) target = $region39
    $region38: #{reverse.0} parent=1 // pred_region
      // Predicated region
      $region40: #{reverse.0} parent=38 // pred_check
        _
      $region41: #{reverse.0} parent=38 // pred_check_branch
        %104 = sbr.rel (0) target = $region43
      $region42: #{reverse.0} parent=38 // pred_region
        // Predicated region
        $region55: #{reverse.0} parent=42 // pred_check
          _
        $region56: #{reverse.0} parent=42 // pred_check_branch
          %125 = sbr.rel (0) target = $region58
        $region57: #{reverse.0} parent=42 // pred_region
          loop: start=0, step=1, limit=1
          $region59: #{reverse.0} parent=57 // loop_pre_header
            _
          $region60: #{reverse.0} parent=57 // loop_header
            %s127 = sphi 0, %s131
            %p128 = scmp.ge.s32.totalorder %s127, 1
            %s132 = sphi [#allocation1], [#allocation1]
            %s133 = sphi %s1, %s1
          $region61: #{reverse.0} parent=57 // loop_header_branch
            %130 = sbr.rel (%p128) target = $region65
          $region62: #{reverse.0} parent=57 // loop_body
            %v134 = vld [vmem:[%s132] sm:$0xff]
            %135 = vst [vmem:[%s133] sm:$0xff] %v134
            %v136 = vld [vmem:[%s132 + $0x8] sm:$0xff]
            %137 = vst [vmem:[%s133 + $0x8] sm:$0xff] %v136
            %v138 = vld [vmem:[%s132 + $0x10] sm:$0xff]
            %139 = vst [vmem:[%s133 + $0x10] sm:$0xff] %v138
            %v140 = vld [vmem:[%s132 + $0x18] sm:$0xff]
            %141 = vst [vmem:[%s133 + $0x18] sm:$0xff] %v140
          $region63: #{reverse.0} parent=57 // loop_footer
            %s131 = sadd.s32 1, %s127
          $region64: #{reverse.0} parent=57 // loop_footer_branch
            %126 = sbr.rel target = $region60
          $region65: #{reverse.0} parent=57 // loop_exit
            _
        $region58: #{reverse.0} parent=42 // pred_fallthru
          _
        // Predicated region
        $region66: #{reverse.0} parent=42 // pred_check
          _
        $region67: #{reverse.0} parent=42 // pred_check_branch
          %143 = sbr.rel target = $region69
        $region68: #{reverse.0} parent=42 // pred_region
          _
        $region69: #{reverse.0} parent=42 // pred_fallthru
          _
      $region43: #{reverse.0} parent=38 // pred_fallthru
        _
      // Predicated region
      $region44: #{reverse.0} parent=38 // pred_check
        _
      $region45: #{reverse.0} parent=38 // pred_check_branch
        %106 = sbr.rel target = $region47
      $region46: #{reverse.0} parent=38 // pred_region
        loop: start=0, step=1, limit=1
        $region48: #{reverse.0} parent=46 // loop_pre_header
          _
        $region49: #{reverse.0} parent=46 // loop_header
          %s109 = sphi 0, %s113
          %p110 = scmp.ge.s32.totalorder %s109, 1
          %s114 = sphi [#allocation1], [#allocation1]
          %s115 = sphi %s1, %s1
        $region50: #{reverse.0} parent=46 // loop_header_branch
          %112 = sbr.rel (%p110) target = $region54
        $region51: #{reverse.0} parent=46 // loop_body
          %v116 = vld [vmem:[%s114] sm:$0xff]
          %117 = vst [vmem:[%s115] sm:$0xff] %v116
          %v118 = vld [vmem:[%s114 + $0x8] sm:$0xff]
          %119 = vst [vmem:[%s115 + $0x8] sm:$0xff] %v118
          %v120 = vld [vmem:[%s114 + $0x10] sm:$0xff]
          %121 = vst [vmem:[%s115 + $0x10] sm:$0xff] %v120
          %v122 = vld [vmem:[%s114 + $0x18] sm:$0xff]
          %123 = vst [vmem:[%s115 + $0x18] sm:$0xff] %v122
        $region52: #{reverse.0} parent=46 // loop_footer
          %s113 = sadd.s32 1, %s109
        $region53: #{reverse.0} parent=46 // loop_footer_branch
          %108 = sbr.rel target = $region49
        $region54: #{reverse.0} parent=46 // loop_exit
          _
      $region47: #{reverse.0} parent=38 // pred_fallthru
        _
    $region39: #{reverse.0} parent=1 // pred_fallthru
      _
    %144 = vnop

// kernel: tile.8
$region0: #{tile.8}
  #allocation0 [shape = 's32[1]{0}', space=sflag, size = 0x4, scoped, tag = 'scoped memory for tile.8']
  %s0 = inlined_call_operand.vmem [shape: f32[32], index: 0, kind: input, shape index: {}]
  %s1 = inlined_call_operand.vmem [shape: f32[33,32], index: 1, kind: output, shape index: {}]
  // Predicated region
  $region2: #{tile.8} parent=0 // pred_check
    _
  $region3: #{tile.8} parent=0 // pred_check_branch
    %3 = sbr.rel (0) target = $region5
  $region4: #{tile.8} parent=0 // pred_region
    _
  $region5: #{tile.8} parent=0 // pred_fallthru
    _
  %v4 = vld [vmem:[%s0] ss:$0 sm:$0xff]
  %5 = vst [vmem:[%s1] sm:$0xff] %v4
  %s6 = scalar_lea.vmem %s1, 8
  %7 = vst [vmem:[%s6] sm:$0xff] %v4
  %s8 = scalar_lea.vmem %s1, 16
  %9 = vst [vmem:[%s8] sm:$0xff] %v4
  %s10 = scalar_lea.vmem %s1, 24
  %11 = vst [vmem:[%s10] sm:$0xff] %v4
  %s12 = scalar_lea.vmem %s1, 32
  %13 = vst [vmem:[%s12] sm:$0xff] %v4

</llo_original>
